<compile_context>
chip_gen: v7x
topology: tpu7x:2x2x1
jax: 0.10.0
libtpu: 0.0.40
codegen_flags: <defaults>
</compile_context>

<pallas_src>
import functools
import math

import jax
import jax.numpy as jnp
from jax.experimental import pallas as pl
from jax.experimental.pallas import tpu as pltpu


def _round_up(x, m):
    return (x + m - 1) // m * m


# ----------------------------------------------------------------------------
# Fused decoder kernel: one invocation = full decoder for the whole batch.
# Activation for batch element b is resident in buf[b, pad : pad + t, :],
# surrounded by a zero halo; every layer updates it in place.
# ----------------------------------------------------------------------------
def _decoder_kernel(x_ref, w_in_ref, b_in_ref, w3_ref, b3_ref, w1_ref, b1_ref,
                    w_out_ref, b_out_ref, o_ref, buf, *,
                    batch, t_in, c_pad, c_in_pad, c_buf, pad, seg,
                    down_t, depth, growth):
    f32 = jnp.float32
    bf16 = jnp.bfloat16

    def conv3(b, t_len, d, taps, bias_row, cin, relu_in, relu_out):
        """'same' 3-tap conv at dilation d as THREE accumulated MXU matmuls.

        No im2col copy: each tap's shifted window is fed straight to the MXU.
        Zero halo rows (and ReLU(0)=0) make the edge taps exact."""
        acc = None
        for k in range(3):
            win = buf[b, pl.ds(pad + (k - 1) * d, t_len), pl.ds(0, cin)]
            if relu_in:
                win = jnp.maximum(win, 0.0)
            part = jnp.dot(win.astype(bf16), taps[k],
                           preferred_element_type=f32)
            acc = part if acc is None else acc + part
        y = acc + bias_row
        if relu_out:
            y = jnp.maximum(y, 0.0)
        return y

    def res_block(b, t_len, d, i3, i1):
        """ResConv1DBlock: h + Conv1x1(ReLU(ConvDil3(ReLU(h)))), in place, f32 residual."""
        h = buf[b, pl.ds(pad, t_len), pl.ds(0, c_pad)]
        taps = tuple(w3_ref[3 * i3 + k] for k in range(3))
        mid = conv3(b, t_len, d, taps, b3_ref[pl.ds(i3, 1), :], c_pad,
                    relu_in=True, relu_out=True)
        y = jnp.dot(mid.astype(bf16), w1_ref[i1], preferred_element_type=f32)
        y = y + b1_ref[pl.ds(i1, 1), :] + h
        buf[b, pl.ds(pad, t_len), pl.ds(0, c_pad)] = y

    def upsample2x(b, t_len):
        """nearest x2 upsample as pure data movement (no MXU, no masks).

        In-place reverse-order row duplication: at step i only rows >= pad+2*i
        are written, so every not-yet-consumed source row (< pad+i) is intact.
        For production T, replace the unrolled loop with a strided store."""
        for i in reversed(range(t_len)):
            row = buf[b, pl.ds(pad + i, 1), pl.ds(0, c_pad)]
            buf[b, pl.ds(pad + 2 * i, 1), pl.ds(0, c_pad)] = row
            buf[b, pl.ds(pad + 2 * i + 1, 1), pl.ds(0, c_pad)] = row

    in_taps = tuple(w_in_ref[k] for k in range(3))
    out_taps = tuple(w_out_ref[k] for k in range(3))

    for b in range(batch):
        # Zero only the halo rows and the tail region; rows [pad, pad+t_in) are
        # overwritten immediately by the staged input (no full-buffer memset).
        buf[b, pl.ds(0, pad), :] = jnp.zeros((pad, c_buf), f32)
        tail = seg - pad - t_in
        buf[b, pl.ds(pad + t_in, tail), :] = jnp.zeros((tail, c_buf), f32)
        # Stage the (lane-padded) latent input for this batch element.
        buf[b, pl.ds(pad, t_in), pl.ds(0, c_in_pad)] = x_ref[b]

        # Conv1d(output_emb_width, width, 3, 1, 1) -> ReLU
        t = t_in
        y = conv3(b, t, 1, in_taps, b_in_ref[...], c_in_pad,
                  relu_in=False, relu_out=True)
        buf[b, pl.ds(pad, t), pl.ds(0, c_pad)] = y

        i3 = 0
        i1 = 0
        for _level in range(down_t):
            # Resnet1D(width, depth, reverse_dilation=True): g^(depth-1) .. g^0
            for j in range(depth):
                res_block(b, t, growth ** (depth - 1 - j), i3, i1)
                i3 += 1
                i1 += 1
            # Upsample(x2, nearest) + Conv1d(width, width, 3, 1, 1)
            upsample2x(b, t)
            t = 2 * t
            taps = tuple(w3_ref[3 * i3 + k] for k in range(3))
            y = conv3(b, t, 1, taps, b3_ref[pl.ds(i3, 1), :], c_pad,
                      relu_in=False, relu_out=False)
            buf[b, pl.ds(pad, t), pl.ds(0, c_pad)] = y
            i3 += 1

        # Conv1d(width, width, 3, 1, 1) -> ReLU
        taps = tuple(w3_ref[3 * i3 + k] for k in range(3))
        y = conv3(b, t, 1, taps, b3_ref[pl.ds(i3, 1), :], c_pad,
                  relu_in=False, relu_out=True)
        buf[b, pl.ds(pad, t), pl.ds(0, c_pad)] = y
        i3 += 1

        # Conv1d(width, input_emb_width, 3, 1, 1) -> lane-dense (128-padded) output
        y = conv3(b, t, 1, out_taps, b_out_ref[...], c_pad,
                  relu_in=False, relu_out=False)
        o_ref[b] = y.astype(o_ref.dtype)


# ----------------------------------------------------------------------------
# Parameter init (PyTorch Conv1d default U(-1/sqrt(fan_in), +1/sqrt(fan_in))),
# weights stored as (K, Cin, Cout) for the channels-last kernel.
# ----------------------------------------------------------------------------
def _conv_param(key, k, cin, cout):
    kw, kb = jax.random.split(key)
    bound = 1.0 / math.sqrt(cin * k)
    w = jax.random.uniform(kw, (k, cin, cout), jnp.float32, -bound, bound)
    b = jax.random.uniform(kb, (cout,), jnp.float32, -bound, bound)
    return w, b


def init_decoder_params(key, *, input_emb_width, output_emb_width, down_t,
                        width, depth, dilation_growth_rate):
    n_keys = 1 + down_t * (2 * depth + 1) + 2
    keys = iter(jax.random.split(key, n_keys))
    params = {"in_conv": _conv_param(next(keys), 3, output_emb_width, width)}
    blocks = []
    for _ in range(down_t):
        res = []
        for d in reversed(range(depth)):            # reverse_dilation=True
            res.append({"c1": _conv_param(next(keys), 3, width, width),
                        "c2": _conv_param(next(keys), 1, width, width),
                        "dil": dilation_growth_rate ** d})
        blocks.append({"res": res,
                       "up_conv": _conv_param(next(keys), 3, width, width)})
    params["blocks"] = blocks
    params["out_conv1"] = _conv_param(next(keys), 3, width, width)
    params["out_conv2"] = _conv_param(next(keys), 3, width, input_emb_width)
    return params


def pack_decoder_params(params, *, input_emb_width, output_emb_width, width):
    """Channel-pad every conv to a lane-dense multiple of 128 and stack them.

    * in_conv weight is padded only to (3, c_in_pad, c_pad) and out_conv2 only
      to (3, c_pad, c_out_pad) (review: do not pad small channel counts to the
      full width padding).
    * Middle 3-tap convs (dilated res convs, up_convs, out_conv1) are stacked
      as (3*n3, c_pad, c_pad); 1x1 res convs as (n1, c_pad, c_pad).
    * Weights are bf16 (MXU-native, halves weight DMA); biases stay f32.
      Zero-padded channels stay exactly zero through every layer, so the final
      slice is exact.
    """
    c_pad = _round_up(width, 128)
    c_in_pad = _round_up(output_emb_width, 128)
    c_out_pad = _round_up(input_emb_width, 128)

    def pad_w(w, cin_p, cout_p):                     # (K, cin, cout) -> padded
        k, cin, cout = w.shape
        return jnp.zeros((k, cin_p, cout_p), jnp.float32).at[:, :cin, :cout].set(w)

    def pad_b(b, cout_p):
        return jnp.zeros((cout_p,), jnp.float32).at[:b.shape[0]].set(b)

    w_in, b_in = params["in_conv"]
    conv3_list, conv1_list = [], []
    for blk in params["blocks"]:
        for rb in blk["res"]:
            conv3_list.append(rb["c1"])
            conv1_list.append(rb["c2"])
        conv3_list.append(blk["up_conv"])
    conv3_list.append(params["out_conv1"])
    w_out, b_out = params["out_conv2"]

    packed = {
        "w_in": pad_w(w_in, c_in_pad, c_pad).astype(jnp.bfloat16),
        "b_in": pad_b(b_in, c_pad)[None, :],
        "w3": jnp.concatenate([pad_w(w, c_pad, c_pad) for w, _ in conv3_list],
                              axis=0).astype(jnp.bfloat16),
        "b3": jnp.stack([pad_b(b, c_pad) for _, b in conv3_list]),
        "w1": jnp.stack([pad_w(w, c_pad, c_pad)[0] for w, _ in conv1_list]
                        ).astype(jnp.bfloat16),
        "b1": jnp.stack([pad_b(b, c_pad) for _, b in conv1_list]),
        "w_out": pad_w(w_out, c_pad, c_out_pad).astype(jnp.bfloat16),
        "b_out": pad_b(b_out, c_out_pad)[None, :],
        "c_pad": c_pad, "c_in_pad": c_in_pad, "c_out_pad": c_out_pad,
    }
    return packed


# ----------------------------------------------------------------------------
# Decoder forward (takes / returns NCW like the PyTorch module)
# ----------------------------------------------------------------------------
def decoder_forward(x_ncw, packed, *, input_emb_width, output_emb_width,
                    down_t, width, depth, dilation_growth_rate):
    batch, c_in, t_in = x_ncw.shape
    assert c_in == output_emb_width
    c_pad = packed["c_pad"]
    c_in_pad = packed["c_in_pad"]
    c_out_pad = packed["c_out_pad"]
    t_out = t_in * (2 ** down_t)
    max_dil = dilation_growth_rate ** (depth - 1)
    halo = _round_up(max(max_dil, 1), 8)             # sublane-aligned time halo
    seg = _round_up(t_out + 2 * halo, 8)             # per-batch segment rows
    c_buf = max(c_pad, c_in_pad)

    # NCW -> (B, T, C); one-time pad of the latent channels to 128 lanes only.
    x = jnp.transpose(x_ncw, (0, 2, 1))
    if c_in_pad != c_in:
        x = jnp.pad(x, ((0, 0), (0, 0), (0, c_in_pad - c_in)))

    args = (x, packed["w_in"], packed["b_in"], packed["w3"], packed["b3"],
            packed["w1"], packed["b1"], packed["w_out"], packed["b_out"])

    kernel = functools.partial(
        _decoder_kernel, batch=batch, t_in=t_in, c_pad=c_pad,
        c_in_pad=c_in_pad, c_buf=c_buf, pad=halo, seg=seg,
        down_t=down_t, depth=depth, growth=dilation_growth_rate)

    # FLOP / byte estimate for the XLA scheduler (upsample is now 0 MXU flops).
    flops = 2 * t_in * c_in_pad * c_pad * 3
    t = t_in
    for _ in range(down_t):
        flops += depth * (2 * t * c_pad * c_pad * 3 + 2 * t * c_pad * c_pad)
        t *= 2
        flops += 2 * t * c_pad * c_pad * 3
    flops += 2 * t * c_pad * c_pad * 3
    flops += 2 * t * c_pad * c_out_pad * 3
    flops *= batch
    out_bytes = batch * t_out * c_out_pad * 4
    in_bytes = sum(int(a.size) * a.dtype.itemsize for a in args)
    bytes_accessed = in_bytes + out_bytes

    # Generation-aware VMEM budget: actual single-buffered footprint + headroom,
    # capped below the physical VMEM of the current chip (64 MiB v7x, 128 MiB
    # v5e/v6e).  TODO(synk): for production t_out/width exceeding this budget,
    # time-tile the post-upsample stages instead of keeping them fully resident.
    buf_bytes = batch * seg * c_buf * 4
    raw = buf_bytes + in_bytes + out_bytes
    try:
        vmem_cap = int(getattr(pltpu.get_tpu_info(), "vmem_capacity_bytes",
                               64 * 2 ** 20))
    except Exception:
        vmem_cap = 64 * 2 ** 20
    vmem_limit = max(int(1.25 * raw) + (4 << 20), 32 << 20)
    vmem_limit = int(min(vmem_limit, max(vmem_cap - (8 << 20), 16 << 20)))

    vmem_spec = pl.BlockSpec(memory_space=pltpu.MemorySpace.VMEM)
    y = pl.pallas_call(
        kernel,
        out_shape=jax.ShapeDtypeStruct((batch, t_out, c_out_pad), jnp.float32),
        in_specs=[vmem_spec] * len(args),            # whole arrays, single-buffered
        out_specs=vmem_spec,
        scratch_shapes=[pltpu.VMEM((batch, seg, c_buf), jnp.float32)],
        compiler_params=pltpu.CompilerParams(vmem_limit_bytes=vmem_limit),
        cost_estimate=pl.CostEstimate(flops=int(flops), transcendentals=0,
                                      bytes_accessed=int(bytes_accessed)),
    )(*args)

    # Drop the channel padding and return NCW like the PyTorch module.
    return jnp.transpose(y[:, :, :input_emb_width], (0, 2, 1))


if __name__ == "__main__":
    # Small, module-consistent config.
    B = 2
    input_emb_width = 4      # decoder output channels
    output_emb_width = 32    # decoder input (latent) channels
    width = 32
    down_t = 2
    depth = 2
    dilation_growth_rate = 3
    T = 8                    # latent length; output length = T * 2**down_t = 32

    key = jax.random.PRNGKey(0)
    k_params, k_x = jax.random.split(key)

    params = init_decoder_params(
        k_params,
        input_emb_width=input_emb_width,
        output_emb_width=output_emb_width,
        down_t=down_t,
        width=width,
        depth=depth,
        dilation_growth_rate=dilation_growth_rate,
    )
    packed = pack_decoder_params(
        params,
        input_emb_width=input_emb_width,
        output_emb_width=output_emb_width,
        width=width,
    )

    x = jax.random.normal(k_x, (B, output_emb_width, T), jnp.float32)  # NCW

    y = decoder_forward(
        x, packed,
        input_emb_width=input_emb_width,
        output_emb_width=output_emb_width,
        down_t=down_t,
        width=width,
        depth=depth,
        dilation_growth_rate=dilation_growth_rate,
    )
    y = jax.block_until_ready(y)

    expected_shape = (B, input_emb_width, T * (2 ** down_t))
    assert y.shape == expected_shape, (y.shape, expected_shape)
    assert bool(jnp.all(jnp.isfinite(y)))
    print("KERNEL_OK")
</pallas_src>

<mosaic_0001>
module attributes {stable_mosaic.version = 11 : i64} {
  func.func @_decoder_kernel(%arg0: memref<2x8x128xf32, #tpu.memory_space<vmem>>, %arg1: memref<3x128x128xbf16, #tpu.memory_space<vmem>>, %arg2: memref<1x128xf32, #tpu.memory_space<vmem>>, %arg3: memref<21x128x128xbf16, #tpu.memory_space<vmem>>, %arg4: memref<7x128xf32, #tpu.memory_space<vmem>>, %arg5: memref<4x128x128xbf16, #tpu.memory_space<vmem>>, %arg6: memref<4x128xf32, #tpu.memory_space<vmem>>, %arg7: memref<3x128x128xbf16, #tpu.memory_space<vmem>>, %arg8: memref<1x128xf32, #tpu.memory_space<vmem>>, %arg9: memref<2x32x128xf32, #tpu.memory_space<vmem>>, %arg10: memref<2x48x128xf32, #tpu.memory_space<vmem>>) attributes {dimension_semantics = [], scalar_prefetch = 0 : i64, scratch_operands = 1 : i64, tpu.core_type = #tpu.core_type<tc>} {
    %c0 = arith.constant 0 : index
    %c0_0 = arith.constant 0 : index
    %c0_1 = arith.constant 0 : index
    %0 = vector.load %arg1[%c0, %c0_0, %c0_1] : memref<3x128x128xbf16, #tpu.memory_space<vmem>>, vector<1x128x128xbf16>
    %1 = vector.shape_cast %0 : vector<1x128x128xbf16> to vector<128x128xbf16>
    %c1 = arith.constant 1 : index
    %c0_2 = arith.constant 0 : index
    %c0_3 = arith.constant 0 : index
    %2 = vector.load %arg1[%c1, %c0_2, %c0_3] : memref<3x128x128xbf16, #tpu.memory_space<vmem>>, vector<1x128x128xbf16>
    %3 = vector.shape_cast %2 : vector<1x128x128xbf16> to vector<128x128xbf16>
    %c2 = arith.constant 2 : index
    %c0_4 = arith.constant 0 : index
    %c0_5 = arith.constant 0 : index
    %4 = vector.load %arg1[%c2, %c0_4, %c0_5] : memref<3x128x128xbf16, #tpu.memory_space<vmem>>, vector<1x128x128xbf16>
    %5 = vector.shape_cast %4 : vector<1x128x128xbf16> to vector<128x128xbf16>
    %c0_6 = arith.constant 0 : index
    %c0_7 = arith.constant 0 : index
    %c0_8 = arith.constant 0 : index
    %6 = vector.load %arg7[%c0_6, %c0_7, %c0_8] : memref<3x128x128xbf16, #tpu.memory_space<vmem>>, vector<1x128x128xbf16>
    %7 = vector.shape_cast %6 : vector<1x128x128xbf16> to vector<128x128xbf16>
    %c1_9 = arith.constant 1 : index
    %c0_10 = arith.constant 0 : index
    %c0_11 = arith.constant 0 : index
    %8 = vector.load %arg7[%c1_9, %c0_10, %c0_11] : memref<3x128x128xbf16, #tpu.memory_space<vmem>>, vector<1x128x128xbf16>
    %9 = vector.shape_cast %8 : vector<1x128x128xbf16> to vector<128x128xbf16>
    %c2_12 = arith.constant 2 : index
    %c0_13 = arith.constant 0 : index
    %c0_14 = arith.constant 0 : index
    %10 = vector.load %arg7[%c2_12, %c0_13, %c0_14] : memref<3x128x128xbf16, #tpu.memory_space<vmem>>, vector<1x128x128xbf16>
    %11 = vector.shape_cast %10 : vector<1x128x128xbf16> to vector<128x128xbf16>
    %cst = arith.constant 0.000000e+00 : f32
    %12 = vector.broadcast %cst : f32 to vector<8x128xf32>
    %c0_15 = arith.constant 0 : index
    %c0_16 = arith.constant 0 : index
    %c0_17 = arith.constant 0 : index
    %13 = vector.load %arg10[%c0_15, %c0_16, %c0_17] : memref<2x48x128xf32, #tpu.memory_space<vmem>>, vector<1x8x128xf32>
    %14 = vector.shape_cast %13 : vector<1x8x128xf32> to vector<8x128xf32>
    %15 = vector.shape_cast %12 : vector<8x128xf32> to vector<1x8x128xf32>
    tpu.vector_store %arg10[%c0_15, %c0_16, %c0_17], %15 {strides = array<i32>} : memref<2x48x128xf32, #tpu.memory_space<vmem>>, vector<1x8x128xf32>,
    %cst_18 = arith.constant 0.000000e+00 : f32
    %16 = vector.broadcast %cst_18 : f32 to vector<32x128xf32>
    %c0_19 = arith.constant 0 : index
    %c16 = arith.constant 16 : index
    %c0_20 = arith.constant 0 : index
    %17 = vector.load %arg10[%c0_19, %c16, %c0_20] : memref<2x48x128xf32, #tpu.memory_space<vmem>>, vector<1x32x128xf32>
    %18 = vector.shape_cast %17 : vector<1x32x128xf32> to vector<32x128xf32>
    %19 = vector.shape_cast %16 : vector<32x128xf32> to vector<1x32x128xf32>
    tpu.vector_store %arg10[%c0_19, %c16, %c0_20], %19 {strides = array<i32>} : memref<2x48x128xf32, #tpu.memory_space<vmem>>, vector<1x32x128xf32>,
    %c0_21 = arith.constant 0 : index
    %c0_22 = arith.constant 0 : index
    %c0_23 = arith.constant 0 : index
    %20 = vector.load %arg0[%c0_21, %c0_22, %c0_23] : memref<2x8x128xf32, #tpu.memory_space<vmem>>, vector<1x8x128xf32>
    %21 = vector.shape_cast %20 : vector<1x8x128xf32> to vector<8x128xf32>
    %c0_24 = arith.constant 0 : index
    %c8 = arith.constant 8 : index
    %c0_25 = arith.constant 0 : index
    %22 = vector.load %arg10[%c0_24, %c8, %c0_25] : memref<2x48x128xf32, #tpu.memory_space<vmem>>, vector<1x8x128xf32>
    %23 = vector.shape_cast %22 : vector<1x8x128xf32> to vector<8x128xf32>
    %24 = vector.shape_cast %21 : vector<8x128xf32> to vector<1x8x128xf32>
    tpu.vector_store %arg10[%c0_24, %c8, %c0_25], %24 {strides = array<i32>} : memref<2x48x128xf32, #tpu.memory_space<vmem>>, vector<1x8x128xf32>,
    %c0_26 = arith.constant 0 : index
    %c0_27 = arith.constant 0 : index
    %25 = vector.load %arg2[%c0_26, %c0_27] : memref<1x128xf32, #tpu.memory_space<vmem>>, vector<1x128xf32>
    %c0_28 = arith.constant 0 : index
    %c7 = arith.constant 7 : index
    %c0_29 = arith.constant 0 : index
    %26 = vector.load %arg10[%c0_28, %c7, %c0_29] : memref<2x48x128xf32, #tpu.memory_space<vmem>>, vector<1x8x128xf32>
    %27 = vector.shape_cast %26 : vector<1x8x128xf32> to vector<8x128xf32>
    %28 = arith.truncf %27 : vector<8x128xf32> to vector<8x128xbf16>
    %cst_30 = arith.constant dense<0.000000e+00> : vector<8x128xf32>
    %29 = tpu.matmul %28, %1, %cst_30 {dimension_numbers = #tpu.dot_dimension_numbers<[1], [0], [0], [1], [0, 0, 1, 1], [], []>} : vector<8x128xbf16>, vector<128x128xbf16>, vector<8x128xf32> -> vector<8x128xf32>
    %c0_31 = arith.constant 0 : index
    %c8_32 = arith.constant 8 : index
    %c0_33 = arith.constant 0 : index
    %30 = vector.load %arg10[%c0_31, %c8_32, %c0_33] : memref<2x48x128xf32, #tpu.memory_space<vmem>>, vector<1x8x128xf32>
    %31 = vector.shape_cast %30 : vector<1x8x128xf32> to vector<8x128xf32>
    %32 = arith.truncf %31 : vector<8x128xf32> to vector<8x128xbf16>
    %cst_34 = arith.constant dense<0.000000e+00> : vector<8x128xf32>
    %33 = tpu.matmul %32, %3, %cst_34 {dimension_numbers = #tpu.dot_dimension_numbers<[1], [0], [0], [1], [0, 0, 1, 1], [], []>} : vector<8x128xbf16>, vector<128x128xbf16>, vector<8x128xf32> -> vector<8x128xf32>
    %34 = arith.addf %29, %33 : vector<8x128xf32>
    %c0_35 = arith.constant 0 : index
    %c9 = arith.constant 9 : index
    %c0_36 = arith.constant 0 : index
    %35 = vector.load %arg10[%c0_35, %c9, %c0_36] : memref<2x48x128xf32, #tpu.memory_space<vmem>>, vector<1x8x128xf32>
    %36 = vector.shape_cast %35 : vector<1x8x128xf32> to vector<8x128xf32>
    %37 = arith.truncf %36 : vector<8x128xf32> to vector<8x128xbf16>
    %cst_37 = arith.constant dense<0.000000e+00> : vector<8x128xf32>
    %38 = tpu.matmul %37, %5, %cst_37 {dimension_numbers = #tpu.dot_dimension_numbers<[1], [0], [0], [1], [0, 0, 1, 1], [], []>} : vector<8x128xbf16>, vector<128x128xbf16>, vector<8x128xf32> -> vector<8x128xf32>
    %39 = arith.addf %34, %38 : vector<8x128xf32>
    %40 = vector.broadcast %25 : vector<1x128xf32> to vector<8x128xf32>
    %41 = arith.addf %39, %40 : vector<8x128xf32>
    %cst_38 = arith.constant 0.000000e+00 : f32
    %42 = vector.broadcast %cst_38 : f32 to vector<8x128xf32>
    %43 = arith.maximumf %41, %42 : vector<8x128xf32>
    %c0_39 = arith.constant 0 : index
    %c8_40 = arith.constant 8 : index
    %c0_41 = arith.constant 0 : index
    %44 = vector.load %arg10[%c0_39, %c8_40, %c0_41] : memref<2x48x128xf32, #tpu.memory_space<vmem>>, vector<1x8x128xf32>
    %45 = vector.shape_cast %44 : vector<1x8x128xf32> to vector<8x128xf32>
    %46 = vector.shape_cast %43 : vector<8x128xf32> to vector<1x8x128xf32>
    tpu.vector_store %arg10[%c0_39, %c8_40, %c0_41], %46 {strides = array<i32>} : memref<2x48x128xf32, #tpu.memory_space<vmem>>, vector<1x8x128xf32>,
    %c0_42 = arith.constant 0 : index
    %c8_43 = arith.constant 8 : index
    %c0_44 = arith.constant 0 : index
    %47 = vector.load %arg10[%c0_42, %c8_43, %c0_44] : memref<2x48x128xf32, #tpu.memory_space<vmem>>, vector<1x8x128xf32>
    %48 = vector.shape_cast %47 : vector<1x8x128xf32> to vector<8x128xf32>
    %c0_45 = arith.constant 0 : index
    %c0_46 = arith.constant 0 : index
    %c0_47 = arith.constant 0 : index
    %49 = vector.load %arg3[%c0_45, %c0_46, %c0_47] : memref<21x128x128xbf16, #tpu.memory_space<vmem>>, vector<1x128x128xbf16>
    %50 = vector.shape_cast %49 : vector<1x128x128xbf16> to vector<128x128xbf16>
    %c1_48 = arith.constant 1 : index
    %c0_49 = arith.constant 0 : index
    %c0_50 = arith.constant 0 : index
    %51 = vector.load %arg3[%c1_48, %c0_49, %c0_50] : memref<21x128x128xbf16, #tpu.memory_space<vmem>>, vector<1x128x128xbf16>
    %52 = vector.shape_cast %51 : vector<1x128x128xbf16> to vector<128x128xbf16>
    %c2_51 = arith.constant 2 : index
    %c0_52 = arith.constant 0 : index
    %c0_53 = arith.constant 0 : index
    %53 = vector.load %arg3[%c2_51, %c0_52, %c0_53] : memref<21x128x128xbf16, #tpu.memory_space<vmem>>, vector<1x128x128xbf16>
    %54 = vector.shape_cast %53 : vector<1x128x128xbf16> to vector<128x128xbf16>
    %c0_54 = arith.constant 0 : index
    %c0_55 = arith.constant 0 : index
    %55 = vector.load %arg4[%c0_54, %c0_55] : memref<7x128xf32, #tpu.memory_space<vmem>>, vector<1x128xf32>
    %c0_56 = arith.constant 0 : index
    %c5 = arith.constant 5 : index
    %c0_57 = arith.constant 0 : index
    %56 = vector.load %arg10[%c0_56, %c5, %c0_57] : memref<2x48x128xf32, #tpu.memory_space<vmem>>, vector<1x8x128xf32>
    %57 = vector.shape_cast %56 : vector<1x8x128xf32> to vector<8x128xf32>
    %cst_58 = arith.constant 0.000000e+00 : f32
    %58 = vector.broadcast %cst_58 : f32 to vector<8x128xf32>
    %59 = arith.maximumf %57, %58 : vector<8x128xf32>
    %60 = arith.truncf %59 : vector<8x128xf32> to vector<8x128xbf16>
    %cst_59 = arith.constant dense<0.000000e+00> : vector<8x128xf32>
    %61 = tpu.matmul %60, %50, %cst_59 {dimension_numbers = #tpu.dot_dimension_numbers<[1], [0], [0], [1], [0, 0, 1, 1], [], []>} : vector<8x128xbf16>, vector<128x128xbf16>, vector<8x128xf32> -> vector<8x128xf32>
    %c0_60 = arith.constant 0 : index
    %c8_61 = arith.constant 8 : index
    %c0_62 = arith.constant 0 : index
    %62 = vector.load %arg10[%c0_60, %c8_61, %c0_62] : memref<2x48x128xf32, #tpu.memory_space<vmem>>, vector<1x8x128xf32>
    %63 = vector.shape_cast %62 : vector<1x8x128xf32> to vector<8x128xf32>
    %cst_63 = arith.constant 0.000000e+00 : f32
    %64 = vector.broadcast %cst_63 : f32 to vector<8x128xf32>
    %65 = arith.maximumf %63, %64 : vector<8x128xf32>
    %66 = arith.truncf %65 : vector<8x128xf32> to vector<8x128xbf16>
    %cst_64 = arith.constant dense<0.000000e+00> : vector<8x128xf32>
    %67 = tpu.matmul %66, %52, %cst_64 {dimension_numbers = #tpu.dot_dimension_numbers<[1], [0], [0], [1], [0, 0, 1, 1], [], []>} : vector<8x128xbf16>, vector<128x128xbf16>, vector<8x128xf32> -> vector<8x128xf32>
    %68 = arith.addf %61, %67 : vector<8x128xf32>
    %c0_65 = arith.constant 0 : index
    %c11 = arith.constant 11 : index
    %c0_66 = arith.constant 0 : index
    %69 = vector.load %arg10[%c0_65, %c11, %c0_66] : memref<2x48x128xf32, #tpu.memory_space<vmem>>, vector<1x8x128xf32>
    %70 = vector.shape_cast %69 : vector<1x8x128xf32> to vector<8x128xf32>
    %cst_67 = arith.constant 0.000000e+00 : f32
    %71 = vector.broadcast %cst_67 : f32 to vector<8x128xf32>
    %72 = arith.maximumf %70, %71 : vector<8x128xf32>
    %73 = arith.truncf %72 : vector<8x128xf32> to vector<8x128xbf16>
    %cst_68 = arith.constant dense<0.000000e+00> : vector<8x128xf32>
    %74 = tpu.matmul %73, %54, %cst_68 {dimension_numbers = #tpu.dot_dimension_numbers<[1], [0], [0], [1], [0, 0, 1, 1], [], []>} : vector<8x128xbf16>, vector<128x128xbf16>, vector<8x128xf32> -> vector<8x128xf32>
    %75 = arith.addf %68, %74 : vector<8x128xf32>
    %76 = vector.broadcast %55 : vector<1x128xf32> to vector<8x128xf32>
    %77 = arith.addf %75, %76 : vector<8x128xf32>
    %cst_69 = arith.constant 0.000000e+00 : f32
    %78 = vector.broadcast %cst_69 : f32 to vector<8x128xf32>
    %79 = arith.maximumf %77, %78 : vector<8x128xf32>
    %80 = arith.truncf %79 : vector<8x128xf32> to vector<8x128xbf16>
    %c0_70 = arith.constant 0 : index
    %c0_71 = arith.constant 0 : index
    %c0_72 = arith.constant 0 : index
    %81 = vector.load %arg5[%c0_70, %c0_71, %c0_72] : memref<4x128x128xbf16, #tpu.memory_space<vmem>>, vector<1x128x128xbf16>
    %82 = vector.shape_cast %81 : vector<1x128x128xbf16> to vector<128x128xbf16>
    %cst_73 = arith.constant dense<0.000000e+00> : vector<8x128xf32>
    %83 = tpu.matmul %80, %82, %cst_73 {dimension_numbers = #tpu.dot_dimension_numbers<[1], [0], [0], [1], [0, 0, 1, 1], [], []>} : vector<8x128xbf16>, vector<128x128xbf16>, vector<8x128xf32> -> vector<8x128xf32>
    %c0_74 = arith.constant 0 : index
    %c0_75 = arith.constant 0 : index
    %84 = vector.load %arg6[%c0_74, %c0_75] : memref<4x128xf32, #tpu.memory_space<vmem>>, vector<1x128xf32>
    %85 = vector.broadcast %84 : vector<1x128xf32> to vector<8x128xf32>
    %86 = arith.addf %83, %85 : vector<8x128xf32>
    %87 = arith.addf %86, %48 : vector<8x128xf32>
    %c0_76 = arith.constant 0 : index
    %c8_77 = arith.constant 8 : index
    %c0_78 = arith.constant 0 : index
    %88 = vector.load %arg10[%c0_76, %c8_77, %c0_78] : memref<2x48x128xf32, #tpu.memory_space<vmem>>, vector<1x8x128xf32>
    %89 = vector.shape_cast %88 : vector<1x8x128xf32> to vector<8x128xf32>
    %90 = vector.shape_cast %87 : vector<8x128xf32> to vector<1x8x128xf32>
    tpu.vector_store %arg10[%c0_76, %c8_77, %c0_78], %90 {strides = array<i32>} : memref<2x48x128xf32, #tpu.memory_space<vmem>>, vector<1x8x128xf32>,
    %c0_79 = arith.constant 0 : index
    %c8_80 = arith.constant 8 : index
    %c0_81 = arith.constant 0 : index
    %91 = vector.load %arg10[%c0_79, %c8_80, %c0_81] : memref<2x48x128xf32, #tpu.memory_space<vmem>>, vector<1x8x128xf32>
    %92 = vector.shape_cast %91 : vector<1x8x128xf32> to vector<8x128xf32>
    %c3 = arith.constant 3 : index
    %c0_82 = arith.constant 0 : index
    %c0_83 = arith.constant 0 : index
    %93 = vector.load %arg3[%c3, %c0_82, %c0_83] : memref<21x128x128xbf16, #tpu.memory_space<vmem>>, vector<1x128x128xbf16>
    %94 = vector.shape_cast %93 : vector<1x128x128xbf16> to vector<128x128xbf16>
    %c4 = arith.constant 4 : index
    %c0_84 = arith.constant 0 : index
    %c0_85 = arith.constant 0 : index
    %95 = vector.load %arg3[%c4, %c0_84, %c0_85] : memref<21x128x128xbf16, #tpu.memory_space<vmem>>, vector<1x128x128xbf16>
    %96 = vector.shape_cast %95 : vector<1x128x128xbf16> to vector<128x128xbf16>
    %c5_86 = arith.constant 5 : index
    %c0_87 = arith.constant 0 : index
    %c0_88 = arith.constant 0 : index
    %97 = vector.load %arg3[%c5_86, %c0_87, %c0_88] : memref<21x128x128xbf16, #tpu.memory_space<vmem>>, vector<1x128x128xbf16>
    %98 = vector.shape_cast %97 : vector<1x128x128xbf16> to vector<128x128xbf16>
    %c1_89 = arith.constant 1 : index
    %c0_90 = arith.constant 0 : index
    %99 = vector.load %arg4[%c1_89, %c0_90] : memref<7x128xf32, #tpu.memory_space<vmem>>, vector<1x128xf32>
    %c0_91 = arith.constant 0 : index
    %c7_92 = arith.constant 7 : index
    %c0_93 = arith.constant 0 : index
    %100 = vector.load %arg10[%c0_91, %c7_92, %c0_93] : memref<2x48x128xf32, #tpu.memory_space<vmem>>, vector<1x8x128xf32>
    %101 = vector.shape_cast %100 : vector<1x8x128xf32> to vector<8x128xf32>
    %cst_94 = arith.constant 0.000000e+00 : f32
    %102 = vector.broadcast %cst_94 : f32 to vector<8x128xf32>
    %103 = arith.maximumf %101, %102 : vector<8x128xf32>
    %104 = arith.truncf %103 : vector<8x128xf32> to vector<8x128xbf16>
    %cst_95 = arith.constant dense<0.000000e+00> : vector<8x128xf32>
    %105 = tpu.matmul %104, %94, %cst_95 {dimension_numbers = #tpu.dot_dimension_numbers<[1], [0], [0], [1], [0, 0, 1, 1], [], []>} : vector<8x128xbf16>, vector<128x128xbf16>, vector<8x128xf32> -> vector<8x128xf32>
    %c0_96 = arith.constant 0 : index
    %c8_97 = arith.constant 8 : index
    %c0_98 = arith.constant 0 : index
    %106 = vector.load %arg10[%c0_96, %c8_97, %c0_98] : memref<2x48x128xf32, #tpu.memory_space<vmem>>, vector<1x8x128xf32>
    %107 = vector.shape_cast %106 : vector<1x8x128xf32> to vector<8x128xf32>
    %cst_99 = arith.constant 0.000000e+00 : f32
    %108 = vector.broadcast %cst_99 : f32 to vector<8x128xf32>
    %109 = arith.maximumf %107, %108 : vector<8x128xf32>
    %110 = arith.truncf %109 : vector<8x128xf32> to vector<8x128xbf16>
    %cst_100 = arith.constant dense<0.000000e+00> : vector<8x128xf32>
    %111 = tpu.matmul %110, %96, %cst_100 {dimension_numbers = #tpu.dot_dimension_numbers<[1], [0], [0], [1], [0, 0, 1, 1], [], []>} : vector<8x128xbf16>, vector<128x128xbf16>, vector<8x128xf32> -> vector<8x128xf32>
    %112 = arith.addf %105, %111 : vector<8x128xf32>
    %c0_101 = arith.constant 0 : index
    %c9_102 = arith.constant 9 : index
    %c0_103 = arith.constant 0 : index
    %113 = vector.load %arg10[%c0_101, %c9_102, %c0_103] : memref<2x48x128xf32, #tpu.memory_space<vmem>>, vector<1x8x128xf32>
    %114 = vector.shape_cast %113 : vector<1x8x128xf32> to vector<8x128xf32>
    %cst_104 = arith.constant 0.000000e+00 : f32
    %115 = vector.broadcast %cst_104 : f32 to vector<8x128xf32>
    %116 = arith.maximumf %114, %115 : vector<8x128xf32>
    %117 = arith.truncf %116 : vector<8x128xf32> to vector<8x128xbf16>
    %cst_105 = arith.constant dense<0.000000e+00> : vector<8x128xf32>
    %118 = tpu.matmul %117, %98, %cst_105 {dimension_numbers = #tpu.dot_dimension_numbers<[1], [0], [0], [1], [0, 0, 1, 1], [], []>} : vector<8x128xbf16>, vector<128x128xbf16>, vector<8x128xf32> -> vector<8x128xf32>
    %119 = arith.addf %112, %118 : vector<8x128xf32>
    %120 = vector.broadcast %99 : vector<1x128xf32> to vector<8x128xf32>
    %121 = arith.addf %119, %120 : vector<8x128xf32>
    %cst_106 = arith.constant 0.000000e+00 : f32
    %122 = vector.broadcast %cst_106 : f32 to vector<8x128xf32>
    %123 = arith.maximumf %121, %122 : vector<8x128xf32>
    %124 = arith.truncf %123 : vector<8x128xf32> to vector<8x128xbf16>
    %c1_107 = arith.constant 1 : index
    %c0_108 = arith.constant 0 : index
    %c0_109 = arith.constant 0 : index
    %125 = vector.load %arg5[%c1_107, %c0_108, %c0_109] : memref<4x128x128xbf16, #tpu.memory_space<vmem>>, vector<1x128x128xbf16>
    %126 = vector.shape_cast %125 : vector<1x128x128xbf16> to vector<128x128xbf16>
    %cst_110 = arith.constant dense<0.000000e+00> : vector<8x128xf32>
    %127 = tpu.matmul %124, %126, %cst_110 {dimension_numbers = #tpu.dot_dimension_numbers<[1], [0], [0], [1], [0, 0, 1, 1], [], []>} : vector<8x128xbf16>, vector<128x128xbf16>, vector<8x128xf32> -> vector<8x128xf32>
    %c1_111 = arith.constant 1 : index
    %c0_112 = arith.constant 0 : index
    %128 = vector.load %arg6[%c1_111, %c0_112] : memref<4x128xf32, #tpu.memory_space<vmem>>, vector<1x128xf32>
    %129 = vector.broadcast %128 : vector<1x128xf32> to vector<8x128xf32>
    %130 = arith.addf %127, %129 : vector<8x128xf32>
    %131 = arith.addf %130, %92 : vector<8x128xf32>
    %c0_113 = arith.constant 0 : index
    %c8_114 = arith.constant 8 : index
    %c0_115 = arith.constant 0 : index
    %132 = vector.load %arg10[%c0_113, %c8_114, %c0_115] : memref<2x48x128xf32, #tpu.memory_space<vmem>>, vector<1x8x128xf32>
    %133 = vector.shape_cast %132 : vector<1x8x128xf32> to vector<8x128xf32>
    %134 = vector.shape_cast %131 : vector<8x128xf32> to vector<1x8x128xf32>
    tpu.vector_store %arg10[%c0_113, %c8_114, %c0_115], %134 {strides = array<i32>} : memref<2x48x128xf32, #tpu.memory_space<vmem>>, vector<1x8x128xf32>,
    %c0_116 = arith.constant 0 : index
    %c15 = arith.constant 15 : index
    %c0_117 = arith.constant 0 : index
    %135 = vector.load %arg10[%c0_116, %c15, %c0_117] : memref<2x48x128xf32, #tpu.memory_space<vmem>>, vector<1x1x128xf32>
    %136 = vector.shape_cast %135 : vector<1x1x128xf32> to vector<1x128xf32>
    %c0_118 = arith.constant 0 : index
    %c22 = arith.constant 22 : index
    %c0_119 = arith.constant 0 : index
    %137 = vector.load %arg10[%c0_118, %c22, %c0_119] : memref<2x48x128xf32, #tpu.memory_space<vmem>>, vector<1x1x128xf32>
    %138 = vector.shape_cast %137 : vector<1x1x128xf32> to vector<1x128xf32>
    %139 = vector.shape_cast %136 : vector<1x128xf32> to vector<1x1x128xf32>
    tpu.vector_store %arg10[%c0_118, %c22, %c0_119], %139 {strides = array<i32>} : memref<2x48x128xf32, #tpu.memory_space<vmem>>, vector<1x1x128xf32>,
    %c0_120 = arith.constant 0 : index
    %c23 = arith.constant 23 : index
    %c0_121 = arith.constant 0 : index
    %140 = vector.load %arg10[%c0_120, %c23, %c0_121] : memref<2x48x128xf32, #tpu.memory_space<vmem>>, vector<1x1x128xf32>
    %141 = vector.shape_cast %140 : vector<1x1x128xf32> to vector<1x128xf32>
    %142 = vector.shape_cast %136 : vector<1x128xf32> to vector<1x1x128xf32>
    tpu.vector_store %arg10[%c0_120, %c23, %c0_121], %142 {strides = array<i32>} : memref<2x48x128xf32, #tpu.memory_space<vmem>>, vector<1x1x128xf32>,
    %c0_122 = arith.constant 0 : index
    %c14 = arith.constant 14 : index
    %c0_123 = arith.constant 0 : index
    %143 = vector.load %arg10[%c0_122, %c14, %c0_123] : memref<2x48x128xf32, #tpu.memory_space<vmem>>, vector<1x1x128xf32>
    %144 = vector.shape_cast %143 : vector<1x1x128xf32> to vector<1x128xf32>
    %c0_124 = arith.constant 0 : index
    %c20 = arith.constant 20 : index
    %c0_125 = arith.constant 0 : index
    %145 = vector.load %arg10[%c0_124, %c20, %c0_125] : memref<2x48x128xf32, #tpu.memory_space<vmem>>, vector<1x1x128xf32>
    %146 = vector.shape_cast %145 : vector<1x1x128xf32> to vector<1x128xf32>
    %147 = vector.shape_cast %144 : vector<1x128xf32> to vector<1x1x128xf32>
    tpu.vector_store %arg10[%c0_124, %c20, %c0_125], %147 {strides = array<i32>} : memref<2x48x128xf32, #tpu.memory_space<vmem>>, vector<1x1x128xf32>,
    %c0_126 = arith.constant 0 : index
    %c21 = arith.constant 21 : index
    %c0_127 = arith.constant 0 : index
    %148 = vector.load %arg10[%c0_126, %c21, %c0_127] : memref<2x48x128xf32, #tpu.memory_space<vmem>>, vector<1x1x128xf32>
    %149 = vector.shape_cast %148 : vector<1x1x128xf32> to vector<1x128xf32>
    %150 = vector.shape_cast %144 : vector<1x128xf32> to vector<1x1x128xf32>
    tpu.vector_store %arg10[%c0_126, %c21, %c0_127], %150 {strides = array<i32>} : memref<2x48x128xf32, #tpu.memory_space<vmem>>, vector<1x1x128xf32>,
    %c0_128 = arith.constant 0 : index
    %c13 = arith.constant 13 : index
    %c0_129 = arith.constant 0 : index
    %151 = vector.load %arg10[%c0_128, %c13, %c0_129] : memref<2x48x128xf32, #tpu.memory_space<vmem>>, vector<1x1x128xf32>
    %152 = vector.shape_cast %151 : vector<1x1x128xf32> to vector<1x128xf32>
    %c0_130 = arith.constant 0 : index
    %c18 = arith.constant 18 : index
    %c0_131 = arith.constant 0 : index
    %153 = vector.load %arg10[%c0_130, %c18, %c0_131] : memref<2x48x128xf32, #tpu.memory_space<vmem>>, vector<1x1x128xf32>
    %154 = vector.shape_cast %153 : vector<1x1x128xf32> to vector<1x128xf32>
    %155 = vector.shape_cast %152 : vector<1x128xf32> to vector<1x1x128xf32>
    tpu.vector_store %arg10[%c0_130, %c18, %c0_131], %155 {strides = array<i32>} : memref<2x48x128xf32, #tpu.memory_space<vmem>>, vector<1x1x128xf32>,
    %c0_132 = arith.constant 0 : index
    %c19 = arith.constant 19 : index
    %c0_133 = arith.constant 0 : index
    %156 = vector.load %arg10[%c0_132, %c19, %c0_133] : memref<2x48x128xf32, #tpu.memory_space<vmem>>, vector<1x1x128xf32>
    %157 = vector.shape_cast %156 : vector<1x1x128xf32> to vector<1x128xf32>
    %158 = vector.shape_cast %152 : vector<1x128xf32> to vector<1x1x128xf32>
    tpu.vector_store %arg10[%c0_132, %c19, %c0_133], %158 {strides = array<i32>} : memref<2x48x128xf32, #tpu.memory_space<vmem>>, vector<1x1x128xf32>,
    %c0_134 = arith.constant 0 : index
    %c12 = arith.constant 12 : index
    %c0_135 = arith.constant 0 : index
    %159 = vector.load %arg10[%c0_134, %c12, %c0_135] : memref<2x48x128xf32, #tpu.memory_space<vmem>>, vector<1x1x128xf32>
    %160 = vector.shape_cast %159 : vector<1x1x128xf32> to vector<1x128xf32>
    %c0_136 = arith.constant 0 : index
    %c16_137 = arith.constant 16 : index
    %c0_138 = arith.constant 0 : index
    %161 = vector.load %arg10[%c0_136, %c16_137, %c0_138] : memref<2x48x128xf32, #tpu.memory_space<vmem>>, vector<1x1x128xf32>
    %162 = vector.shape_cast %161 : vector<1x1x128xf32> to vector<1x128xf32>
    %163 = vector.shape_cast %160 : vector<1x128xf32> to vector<1x1x128xf32>
    tpu.vector_store %arg10[%c0_136, %c16_137, %c0_138], %163 {strides = array<i32>} : memref<2x48x128xf32, #tpu.memory_space<vmem>>, vector<1x1x128xf32>,
    %c0_139 = arith.constant 0 : index
    %c17 = arith.constant 17 : index
    %c0_140 = arith.constant 0 : index
    %164 = vector.load %arg10[%c0_139, %c17, %c0_140] : memref<2x48x128xf32, #tpu.memory_space<vmem>>, vector<1x1x128xf32>
    %165 = vector.shape_cast %164 : vector<1x1x128xf32> to vector<1x128xf32>
    %166 = vector.shape_cast %160 : vector<1x128xf32> to vector<1x1x128xf32>
    tpu.vector_store %arg10[%c0_139, %c17, %c0_140], %166 {strides = array<i32>} : memref<2x48x128xf32, #tpu.memory_space<vmem>>, vector<1x1x128xf32>,
    %c0_141 = arith.constant 0 : index
    %c11_142 = arith.constant 11 : index
    %c0_143 = arith.constant 0 : index
    %167 = vector.load %arg10[%c0_141, %c11_142, %c0_143] : memref<2x48x128xf32, #tpu.memory_space<vmem>>, vector<1x1x128xf32>
    %168 = vector.shape_cast %167 : vector<1x1x128xf32> to vector<1x128xf32>
    %c0_144 = arith.constant 0 : index
    %c14_145 = arith.constant 14 : index
    %c0_146 = arith.constant 0 : index
    %169 = vector.load %arg10[%c0_144, %c14_145, %c0_146] : memref<2x48x128xf32, #tpu.memory_space<vmem>>, vector<1x1x128xf32>
    %170 = vector.shape_cast %169 : vector<1x1x128xf32> to vector<1x128xf32>
    %171 = vector.shape_cast %168 : vector<1x128xf32> to vector<1x1x128xf32>
    tpu.vector_store %arg10[%c0_144, %c14_145, %c0_146], %171 {strides = array<i32>} : memref<2x48x128xf32, #tpu.memory_space<vmem>>, vector<1x1x128xf32>,
    %c0_147 = arith.constant 0 : index
    %c15_148 = arith.constant 15 : index
    %c0_149 = arith.constant 0 : index
    %172 = vector.load %arg10[%c0_147, %c15_148, %c0_149] : memref<2x48x128xf32, #tpu.memory_space<vmem>>, vector<1x1x128xf32>
    %173 = vector.shape_cast %172 : vector<1x1x128xf32> to vector<1x128xf32>
    %174 = vector.shape_cast %168 : vector<1x128xf32> to vector<1x1x128xf32>
    tpu.vector_store %arg10[%c0_147, %c15_148, %c0_149], %174 {strides = array<i32>} : memref<2x48x128xf32, #tpu.memory_space<vmem>>, vector<1x1x128xf32>,
    %c0_150 = arith.constant 0 : index
    %c10 = arith.constant 10 : index
    %c0_151 = arith.constant 0 : index
    %175 = vector.load %arg10[%c0_150, %c10, %c0_151] : memref<2x48x128xf32, #tpu.memory_space<vmem>>, vector<1x1x128xf32>
    %176 = vector.shape_cast %175 : vector<1x1x128xf32> to vector<1x128xf32>
    %c0_152 = arith.constant 0 : index
    %c12_153 = arith.constant 12 : index
    %c0_154 = arith.constant 0 : index
    %177 = vector.load %arg10[%c0_152, %c12_153, %c0_154] : memref<2x48x128xf32, #tpu.memory_space<vmem>>, vector<1x1x128xf32>
    %178 = vector.shape_cast %177 : vector<1x1x128xf32> to vector<1x128xf32>
    %179 = vector.shape_cast %176 : vector<1x128xf32> to vector<1x1x128xf32>
    tpu.vector_store %arg10[%c0_152, %c12_153, %c0_154], %179 {strides = array<i32>} : memref<2x48x128xf32, #tpu.memory_space<vmem>>, vector<1x1x128xf32>,
    %c0_155 = arith.constant 0 : index
    %c13_156 = arith.constant 13 : index
    %c0_157 = arith.constant 0 : index
    %180 = vector.load %arg10[%c0_155, %c13_156, %c0_157] : memref<2x48x128xf32, #tpu.memory_space<vmem>>, vector<1x1x128xf32>
    %181 = vector.shape_cast %180 : vector<1x1x128xf32> to vector<1x128xf32>
    %182 = vector.shape_cast %176 : vector<1x128xf32> to vector<1x1x128xf32>
    tpu.vector_store %arg10[%c0_155, %c13_156, %c0_157], %182 {strides = array<i32>} : memref<2x48x128xf32, #tpu.memory_space<vmem>>, vector<1x1x128xf32>,
    %c0_158 = arith.constant 0 : index
    %c9_159 = arith.constant 9 : index
    %c0_160 = arith.constant 0 : index
    %183 = vector.load %arg10[%c0_158, %c9_159, %c0_160] : memref<2x48x128xf32, #tpu.memory_space<vmem>>, vector<1x1x128xf32>
    %184 = vector.shape_cast %183 : vector<1x1x128xf32> to vector<1x128xf32>
    %c0_161 = arith.constant 0 : index
    %c10_162 = arith.constant 10 : index
    %c0_163 = arith.constant 0 : index
    %185 = vector.load %arg10[%c0_161, %c10_162, %c0_163] : memref<2x48x128xf32, #tpu.memory_space<vmem>>, vector<1x1x128xf32>
    %186 = vector.shape_cast %185 : vector<1x1x128xf32> to vector<1x128xf32>
    %187 = vector.shape_cast %184 : vector<1x128xf32> to vector<1x1x128xf32>
    tpu.vector_store %arg10[%c0_161, %c10_162, %c0_163], %187 {strides = array<i32>} : memref<2x48x128xf32, #tpu.memory_space<vmem>>, vector<1x1x128xf32>,
    %c0_164 = arith.constant 0 : index
    %c11_165 = arith.constant 11 : index
    %c0_166 = arith.constant 0 : index
    %188 = vector.load %arg10[%c0_164, %c11_165, %c0_166] : memref<2x48x128xf32, #tpu.memory_space<vmem>>, vector<1x1x128xf32>
    %189 = vector.shape_cast %188 : vector<1x1x128xf32> to vector<1x128xf32>
    %190 = vector.shape_cast %184 : vector<1x128xf32> to vector<1x1x128xf32>
    tpu.vector_store %arg10[%c0_164, %c11_165, %c0_166], %190 {strides = array<i32>} : memref<2x48x128xf32, #tpu.memory_space<vmem>>, vector<1x1x128xf32>,
    %c0_167 = arith.constant 0 : index
    %c8_168 = arith.constant 8 : index
    %c0_169 = arith.constant 0 : index
    %191 = vector.load %arg10[%c0_167, %c8_168, %c0_169] : memref<2x48x128xf32, #tpu.memory_space<vmem>>, vector<1x1x128xf32>
    %192 = vector.shape_cast %191 : vector<1x1x128xf32> to vector<1x128xf32>
    %c0_170 = arith.constant 0 : index
    %c8_171 = arith.constant 8 : index
    %c0_172 = arith.constant 0 : index
    %193 = vector.load %arg10[%c0_170, %c8_171, %c0_172] : memref<2x48x128xf32, #tpu.memory_space<vmem>>, vector<1x1x128xf32>
    %194 = vector.shape_cast %193 : vector<1x1x128xf32> to vector<1x128xf32>
    %195 = vector.shape_cast %192 : vector<1x128xf32> to vector<1x1x128xf32>
    tpu.vector_store %arg10[%c0_170, %c8_171, %c0_172], %195 {strides = array<i32>} : memref<2x48x128xf32, #tpu.memory_space<vmem>>, vector<1x1x128xf32>,
    %c0_173 = arith.constant 0 : index
    %c9_174 = arith.constant 9 : index
    %c0_175 = arith.constant 0 : index
    %196 = vector.load %arg10[%c0_173, %c9_174, %c0_175] : memref<2x48x128xf32, #tpu.memory_space<vmem>>, vector<1x1x128xf32>
    %197 = vector.shape_cast %196 : vector<1x1x128xf32> to vector<1x128xf32>
    %198 = vector.shape_cast %192 : vector<1x128xf32> to vector<1x1x128xf32>
    tpu.vector_store %arg10[%c0_173, %c9_174, %c0_175], %198 {strides = array<i32>} : memref<2x48x128xf32, #tpu.memory_space<vmem>>, vector<1x1x128xf32>,
    %c6 = arith.constant 6 : index
    %c0_176 = arith.constant 0 : index
    %c0_177 = arith.constant 0 : index
    %199 = vector.load %arg3[%c6, %c0_176, %c0_177] : memref<21x128x128xbf16, #tpu.memory_space<vmem>>, vector<1x128x128xbf16>
    %200 = vector.shape_cast %199 : vector<1x128x128xbf16> to vector<128x128xbf16>
    %c7_178 = arith.constant 7 : index
    %c0_179 = arith.constant 0 : index
    %c0_180 = arith.constant 0 : index
    %201 = vector.load %arg3[%c7_178, %c0_179, %c0_180] : memref<21x128x128xbf16, #tpu.memory_space<vmem>>, vector<1x128x128xbf16>
    %202 = vector.shape_cast %201 : vector<1x128x128xbf16> to vector<128x128xbf16>
    %c8_181 = arith.constant 8 : index
    %c0_182 = arith.constant 0 : index
    %c0_183 = arith.constant 0 : index
    %203 = vector.load %arg3[%c8_181, %c0_182, %c0_183] : memref<21x128x128xbf16, #tpu.memory_space<vmem>>, vector<1x128x128xbf16>
    %204 = vector.shape_cast %203 : vector<1x128x128xbf16> to vector<128x128xbf16>
    %c2_184 = arith.constant 2 : index
    %c0_185 = arith.constant 0 : index
    %205 = vector.load %arg4[%c2_184, %c0_185] : memref<7x128xf32, #tpu.memory_space<vmem>>, vector<1x128xf32>
    %c0_186 = arith.constant 0 : index
    %c7_187 = arith.constant 7 : index
    %c0_188 = arith.constant 0 : index
    %206 = vector.load %arg10[%c0_186, %c7_187, %c0_188] : memref<2x48x128xf32, #tpu.memory_space<vmem>>, vector<1x16x128xf32>
    %207 = vector.shape_cast %206 : vector<1x16x128xf32> to vector<16x128xf32>
    %208 = arith.truncf %207 : vector<16x128xf32> to vector<16x128xbf16>
    %cst_189 = arith.constant dense<0.000000e+00> : vector<16x128xf32>
    %209 = tpu.matmul %208, %200, %cst_189 {dimension_numbers = #tpu.dot_dimension_numbers<[1], [0], [0], [1], [0, 0, 1, 1], [], []>} : vector<16x128xbf16>, vector<128x128xbf16>, vector<16x128xf32> -> vector<16x128xf32>
    %c0_190 = arith.constant 0 : index
    %c8_191 = arith.constant 8 : index
    %c0_192 = arith.constant 0 : index
    %210 = vector.load %arg10[%c0_190, %c8_191, %c0_192] : memref<2x48x128xf32, #tpu.memory_space<vmem>>, vector<1x16x128xf32>
    %211 = vector.shape_cast %210 : vector<1x16x128xf32> to vector<16x128xf32>
    %212 = arith.truncf %211 : vector<16x128xf32> to vector<16x128xbf16>
    %cst_193 = arith.constant dense<0.000000e+00> : vector<16x128xf32>
    %213 = tpu.matmul %212, %202, %cst_193 {dimension_numbers = #tpu.dot_dimension_numbers<[1], [0], [0], [1], [0, 0, 1, 1], [], []>} : vector<16x128xbf16>, vector<128x128xbf16>, vector<16x128xf32> -> vector<16x128xf32>
    %214 = arith.addf %209, %213 : vector<16x128xf32>
    %c0_194 = arith.constant 0 : index
    %c9_195 = arith.constant 9 : index
    %c0_196 = arith.constant 0 : index
    %215 = vector.load %arg10[%c0_194, %c9_195, %c0_196] : memref<2x48x128xf32, #tpu.memory_space<vmem>>, vector<1x16x128xf32>
    %216 = vector.shape_cast %215 : vector<1x16x128xf32> to vector<16x128xf32>
    %217 = arith.truncf %216 : vector<16x128xf32> to vector<16x128xbf16>
    %cst_197 = arith.constant dense<0.000000e+00> : vector<16x128xf32>
    %218 = tpu.matmul %217, %204, %cst_197 {dimension_numbers = #tpu.dot_dimension_numbers<[1], [0], [0], [1], [0, 0, 1, 1], [], []>} : vector<16x128xbf16>, vector<128x128xbf16>, vector<16x128xf32> -> vector<16x128xf32>
    %219 = arith.addf %214, %218 : vector<16x128xf32>
    %220 = vector.broadcast %205 : vector<1x128xf32> to vector<16x128xf32>
    %221 = arith.addf %219, %220 : vector<16x128xf32>
    %c0_198 = arith.constant 0 : index
    %c8_199 = arith.constant 8 : index
    %c0_200 = arith.constant 0 : index
    %222 = vector.load %arg10[%c0_198, %c8_199, %c0_200] : memref<2x48x128xf32, #tpu.memory_space<vmem>>, vector<1x16x128xf32>
    %223 = vector.shape_cast %222 : vector<1x16x128xf32> to vector<16x128xf32>
    %224 = vector.shape_cast %221 : vector<16x128xf32> to vector<1x16x128xf32>
    tpu.vector_store %arg10[%c0_198, %c8_199, %c0_200], %224 {strides = array<i32>} : memref<2x48x128xf32, #tpu.memory_space<vmem>>, vector<1x16x128xf32>,
    %c0_201 = arith.constant 0 : index
    %c8_202 = arith.constant 8 : index
    %c0_203 = arith.constant 0 : index
    %225 = vector.load %arg10[%c0_201, %c8_202, %c0_203] : memref<2x48x128xf32, #tpu.memory_space<vmem>>, vector<1x16x128xf32>
    %226 = vector.shape_cast %225 : vector<1x16x128xf32> to vector<16x128xf32>
    %c9_204 = arith.constant 9 : index
    %c0_205 = arith.constant 0 : index
    %c0_206 = arith.constant 0 : index
    %227 = vector.load %arg3[%c9_204, %c0_205, %c0_206] : memref<21x128x128xbf16, #tpu.memory_space<vmem>>, vector<1x128x128xbf16>
    %228 = vector.shape_cast %227 : vector<1x128x128xbf16> to vector<128x128xbf16>
    %c10_207 = arith.constant 10 : index
    %c0_208 = arith.constant 0 : index
    %c0_209 = arith.constant 0 : index
    %229 = vector.load %arg3[%c10_207, %c0_208, %c0_209] : memref<21x128x128xbf16, #tpu.memory_space<vmem>>, vector<1x128x128xbf16>
    %230 = vector.shape_cast %229 : vector<1x128x128xbf16> to vector<128x128xbf16>
    %c11_210 = arith.constant 11 : index
    %c0_211 = arith.constant 0 : index
    %c0_212 = arith.constant 0 : index
    %231 = vector.load %arg3[%c11_210, %c0_211, %c0_212] : memref<21x128x128xbf16, #tpu.memory_space<vmem>>, vector<1x128x128xbf16>
    %232 = vector.shape_cast %231 : vector<1x128x128xbf16> to vector<128x128xbf16>
    %c3_213 = arith.constant 3 : index
    %c0_214 = arith.constant 0 : index
    %233 = vector.load %arg4[%c3_213, %c0_214] : memref<7x128xf32, #tpu.memory_space<vmem>>, vector<1x128xf32>
    %c0_215 = arith.constant 0 : index
    %c5_216 = arith.constant 5 : index
    %c0_217 = arith.constant 0 : index
    %234 = vector.load %arg10[%c0_215, %c5_216, %c0_217] : memref<2x48x128xf32, #tpu.memory_space<vmem>>, vector<1x16x128xf32>
    %235 = vector.shape_cast %234 : vector<1x16x128xf32> to vector<16x128xf32>
    %cst_218 = arith.constant 0.000000e+00 : f32
    %236 = vector.broadcast %cst_218 : f32 to vector<16x128xf32>
    %237 = arith.maximumf %235, %236 : vector<16x128xf32>
    %238 = arith.truncf %237 : vector<16x128xf32> to vector<16x128xbf16>
    %cst_219 = arith.constant dense<0.000000e+00> : vector<16x128xf32>
    %239 = tpu.matmul %238, %228, %cst_219 {dimension_numbers = #tpu.dot_dimension_numbers<[1], [0], [0], [1], [0, 0, 1, 1], [], []>} : vector<16x128xbf16>, vector<128x128xbf16>, vector<16x128xf32> -> vector<16x128xf32>
    %c0_220 = arith.constant 0 : index
    %c8_221 = arith.constant 8 : index
    %c0_222 = arith.constant 0 : index
    %240 = vector.load %arg10[%c0_220, %c8_221, %c0_222] : memref<2x48x128xf32, #tpu.memory_space<vmem>>, vector<1x16x128xf32>
    %241 = vector.shape_cast %240 : vector<1x16x128xf32> to vector<16x128xf32>
    %cst_223 = arith.constant 0.000000e+00 : f32
    %242 = vector.broadcast %cst_223 : f32 to vector<16x128xf32>
    %243 = arith.maximumf %241, %242 : vector<16x128xf32>
    %244 = arith.truncf %243 : vector<16x128xf32> to vector<16x128xbf16>
    %cst_224 = arith.constant dense<0.000000e+00> : vector<16x128xf32>
    %245 = tpu.matmul %244, %230, %cst_224 {dimension_numbers = #tpu.dot_dimension_numbers<[1], [0], [0], [1], [0, 0, 1, 1], [], []>} : vector<16x128xbf16>, vector<128x128xbf16>, vector<16x128xf32> -> vector<16x128xf32>
    %246 = arith.addf %239, %245 : vector<16x128xf32>
    %c0_225 = arith.constant 0 : index
    %c11_226 = arith.constant 11 : index
    %c0_227 = arith.constant 0 : index
    %247 = vector.load %arg10[%c0_225, %c11_226, %c0_227] : memref<2x48x128xf32, #tpu.memory_space<vmem>>, vector<1x16x128xf32>
    %248 = vector.shape_cast %247 : vector<1x16x128xf32> to vector<16x128xf32>
    %cst_228 = arith.constant 0.000000e+00 : f32
    %249 = vector.broadcast %cst_228 : f32 to vector<16x128xf32>
    %250 = arith.maximumf %248, %249 : vector<16x128xf32>
    %251 = arith.truncf %250 : vector<16x128xf32> to vector<16x128xbf16>
    %cst_229 = arith.constant dense<0.000000e+00> : vector<16x128xf32>
    %252 = tpu.matmul %251, %232, %cst_229 {dimension_numbers = #tpu.dot_dimension_numbers<[1], [0], [0], [1], [0, 0, 1, 1], [], []>} : vector<16x128xbf16>, vector<128x128xbf16>, vector<16x128xf32> -> vector<16x128xf32>
    %253 = arith.addf %246, %252 : vector<16x128xf32>
    %254 = vector.broadcast %233 : vector<1x128xf32> to vector<16x128xf32>
    %255 = arith.addf %253, %254 : vector<16x128xf32>
    %cst_230 = arith.constant 0.000000e+00 : f32
    %256 = vector.broadcast %cst_230 : f32 to vector<16x128xf32>
    %257 = arith.maximumf %255, %256 : vector<16x128xf32>
    %258 = arith.truncf %257 : vector<16x128xf32> to vector<16x128xbf16>
    %c2_231 = arith.constant 2 : index
    %c0_232 = arith.constant 0 : index
    %c0_233 = arith.constant 0 : index
    %259 = vector.load %arg5[%c2_231, %c0_232, %c0_233] : memref<4x128x128xbf16, #tpu.memory_space<vmem>>, vector<1x128x128xbf16>
    %260 = vector.shape_cast %259 : vector<1x128x128xbf16> to vector<128x128xbf16>
    %cst_234 = arith.constant dense<0.000000e+00> : vector<16x128xf32>
    %261 = tpu.matmul %258, %260, %cst_234 {dimension_numbers = #tpu.dot_dimension_numbers<[1], [0], [0], [1], [0, 0, 1, 1], [], []>} : vector<16x128xbf16>, vector<128x128xbf16>, vector<16x128xf32> -> vector<16x128xf32>
    %c2_235 = arith.constant 2 : index
    %c0_236 = arith.constant 0 : index
    %262 = vector.load %arg6[%c2_235, %c0_236] : memref<4x128xf32, #tpu.memory_space<vmem>>, vector<1x128xf32>
    %263 = vector.broadcast %262 : vector<1x128xf32> to vector<16x128xf32>
    %264 = arith.addf %261, %263 : vector<16x128xf32>
    %265 = arith.addf %264, %226 : vector<16x128xf32>
    %c0_237 = arith.constant 0 : index
    %c8_238 = arith.constant 8 : index
    %c0_239 = arith.constant 0 : index
    %266 = vector.load %arg10[%c0_237, %c8_238, %c0_239] : memref<2x48x128xf32, #tpu.memory_space<vmem>>, vector<1x16x128xf32>
    %267 = vector.shape_cast %266 : vector<1x16x128xf32> to vector<16x128xf32>
    %268 = vector.shape_cast %265 : vector<16x128xf32> to vector<1x16x128xf32>
    tpu.vector_store %arg10[%c0_237, %c8_238, %c0_239], %268 {strides = array<i32>} : memref<2x48x128xf32, #tpu.memory_space<vmem>>, vector<1x16x128xf32>,
    %c0_240 = arith.constant 0 : index
    %c8_241 = arith.constant 8 : index
    %c0_242 = arith.constant 0 : index
    %269 = vector.load %arg10[%c0_240, %c8_241, %c0_242] : memref<2x48x128xf32, #tpu.memory_space<vmem>>, vector<1x16x128xf32>
    %270 = vector.shape_cast %269 : vector<1x16x128xf32> to vector<16x128xf32>
    %c12_243 = arith.constant 12 : index
    %c0_244 = arith.constant 0 : index
    %c0_245 = arith.constant 0 : index
    %271 = vector.load %arg3[%c12_243, %c0_244, %c0_245] : memref<21x128x128xbf16, #tpu.memory_space<vmem>>, vector<1x128x128xbf16>
    %272 = vector.shape_cast %271 : vector<1x128x128xbf16> to vector<128x128xbf16>
    %c13_246 = arith.constant 13 : index
    %c0_247 = arith.constant 0 : index
    %c0_248 = arith.constant 0 : index
    %273 = vector.load %arg3[%c13_246, %c0_247, %c0_248] : memref<21x128x128xbf16, #tpu.memory_space<vmem>>, vector<1x128x128xbf16>
    %274 = vector.shape_cast %273 : vector<1x128x128xbf16> to vector<128x128xbf16>
    %c14_249 = arith.constant 14 : index
    %c0_250 = arith.constant 0 : index
    %c0_251 = arith.constant 0 : index
    %275 = vector.load %arg3[%c14_249, %c0_250, %c0_251] : memref<21x128x128xbf16, #tpu.memory_space<vmem>>, vector<1x128x128xbf16>
    %276 = vector.shape_cast %275 : vector<1x128x128xbf16> to vector<128x128xbf16>
    %c4_252 = arith.constant 4 : index
    %c0_253 = arith.constant 0 : index
    %277 = vector.load %arg4[%c4_252, %c0_253] : memref<7x128xf32, #tpu.memory_space<vmem>>, vector<1x128xf32>
    %c0_254 = arith.constant 0 : index
    %c7_255 = arith.constant 7 : index
    %c0_256 = arith.constant 0 : index
    %278 = vector.load %arg10[%c0_254, %c7_255, %c0_256] : memref<2x48x128xf32, #tpu.memory_space<vmem>>, vector<1x16x128xf32>
    %279 = vector.shape_cast %278 : vector<1x16x128xf32> to vector<16x128xf32>
    %cst_257 = arith.constant 0.000000e+00 : f32
    %280 = vector.broadcast %cst_257 : f32 to vector<16x128xf32>
    %281 = arith.maximumf %279, %280 : vector<16x128xf32>
    %282 = arith.truncf %281 : vector<16x128xf32> to vector<16x128xbf16>
    %cst_258 = arith.constant dense<0.000000e+00> : vector<16x128xf32>
    %283 = tpu.matmul %282, %272, %cst_258 {dimension_numbers = #tpu.dot_dimension_numbers<[1], [0], [0], [1], [0, 0, 1, 1], [], []>} : vector<16x128xbf16>, vector<128x128xbf16>, vector<16x128xf32> -> vector<16x128xf32>
    %c0_259 = arith.constant 0 : index
    %c8_260 = arith.constant 8 : index
    %c0_261 = arith.constant 0 : index
    %284 = vector.load %arg10[%c0_259, %c8_260, %c0_261] : memref<2x48x128xf32, #tpu.memory_space<vmem>>, vector<1x16x128xf32>
    %285 = vector.shape_cast %284 : vector<1x16x128xf32> to vector<16x128xf32>
    %cst_262 = arith.constant 0.000000e+00 : f32
    %286 = vector.broadcast %cst_262 : f32 to vector<16x128xf32>
    %287 = arith.maximumf %285, %286 : vector<16x128xf32>
    %288 = arith.truncf %287 : vector<16x128xf32> to vector<16x128xbf16>
    %cst_263 = arith.constant dense<0.000000e+00> : vector<16x128xf32>
    %289 = tpu.matmul %288, %274, %cst_263 {dimension_numbers = #tpu.dot_dimension_numbers<[1], [0], [0], [1], [0, 0, 1, 1], [], []>} : vector<16x128xbf16>, vector<128x128xbf16>, vector<16x128xf32> -> vector<16x128xf32>
    %290 = arith.addf %283, %289 : vector<16x128xf32>
    %c0_264 = arith.constant 0 : index
    %c9_265 = arith.constant 9 : index
    %c0_266 = arith.constant 0 : index
    %291 = vector.load %arg10[%c0_264, %c9_265, %c0_266] : memref<2x48x128xf32, #tpu.memory_space<vmem>>, vector<1x16x128xf32>
    %292 = vector.shape_cast %291 : vector<1x16x128xf32> to vector<16x128xf32>
    %cst_267 = arith.constant 0.000000e+00 : f32
    %293 = vector.broadcast %cst_267 : f32 to vector<16x128xf32>
    %294 = arith.maximumf %292, %293 : vector<16x128xf32>
    %295 = arith.truncf %294 : vector<16x128xf32> to vector<16x128xbf16>
    %cst_268 = arith.constant dense<0.000000e+00> : vector<16x128xf32>
    %296 = tpu.matmul %295, %276, %cst_268 {dimension_numbers = #tpu.dot_dimension_numbers<[1], [0], [0], [1], [0, 0, 1, 1], [], []>} : vector<16x128xbf16>, vector<128x128xbf16>, vector<16x128xf32> -> vector<16x128xf32>
    %297 = arith.addf %290, %296 : vector<16x128xf32>
    %298 = vector.broadcast %277 : vector<1x128xf32> to vector<16x128xf32>
    %299 = arith.addf %297, %298 : vector<16x128xf32>
    %cst_269 = arith.constant 0.000000e+00 : f32
    %300 = vector.broadcast %cst_269 : f32 to vector<16x128xf32>
    %301 = arith.maximumf %299, %300 : vector<16x128xf32>
    %302 = arith.truncf %301 : vector<16x128xf32> to vector<16x128xbf16>
    %c3_270 = arith.constant 3 : index
    %c0_271 = arith.constant 0 : index
    %c0_272 = arith.constant 0 : index
    %303 = vector.load %arg5[%c3_270, %c0_271, %c0_272] : memref<4x128x128xbf16, #tpu.memory_space<vmem>>, vector<1x128x128xbf16>
    %304 = vector.shape_cast %303 : vector<1x128x128xbf16> to vector<128x128xbf16>
    %cst_273 = arith.constant dense<0.000000e+00> : vector<16x128xf32>
    %305 = tpu.matmul %302, %304, %cst_273 {dimension_numbers = #tpu.dot_dimension_numbers<[1], [0], [0], [1], [0, 0, 1, 1], [], []>} : vector<16x128xbf16>, vector<128x128xbf16>, vector<16x128xf32> -> vector<16x128xf32>
    %c3_274 = arith.constant 3 : index
    %c0_275 = arith.constant 0 : index
    %306 = vector.load %arg6[%c3_274, %c0_275] : memref<4x128xf32, #tpu.memory_space<vmem>>, vector<1x128xf32>
    %307 = vector.broadcast %306 : vector<1x128xf32> to vector<16x128xf32>
    %308 = arith.addf %305, %307 : vector<16x128xf32>
    %309 = arith.addf %308, %270 : vector<16x128xf32>
    %c0_276 = arith.constant 0 : index
    %c8_277 = arith.constant 8 : index
    %c0_278 = arith.constant 0 : index
    %310 = vector.load %arg10[%c0_276, %c8_277, %c0_278] : memref<2x48x128xf32, #tpu.memory_space<vmem>>, vector<1x16x128xf32>
    %311 = vector.shape_cast %310 : vector<1x16x128xf32> to vector<16x128xf32>
    %312 = vector.shape_cast %309 : vector<16x128xf32> to vector<1x16x128xf32>
    tpu.vector_store %arg10[%c0_276, %c8_277, %c0_278], %312 {strides = array<i32>} : memref<2x48x128xf32, #tpu.memory_space<vmem>>, vector<1x16x128xf32>,
    %c0_279 = arith.constant 0 : index
    %c23_280 = arith.constant 23 : index
    %c0_281 = arith.constant 0 : index
    %313 = vector.load %arg10[%c0_279, %c23_280, %c0_281] : memref<2x48x128xf32, #tpu.memory_space<vmem>>, vector<1x1x128xf32>
    %314 = vector.shape_cast %313 : vector<1x1x128xf32> to vector<1x128xf32>
    %c0_282 = arith.constant 0 : index
    %c38 = arith.constant 38 : index
    %c0_283 = arith.constant 0 : index
    %315 = vector.load %arg10[%c0_282, %c38, %c0_283] : memref<2x48x128xf32, #tpu.memory_space<vmem>>, vector<1x1x128xf32>
    %316 = vector.shape_cast %315 : vector<1x1x128xf32> to vector<1x128xf32>
    %317 = vector.shape_cast %314 : vector<1x128xf32> to vector<1x1x128xf32>
    tpu.vector_store %arg10[%c0_282, %c38, %c0_283], %317 {strides = array<i32>} : memref<2x48x128xf32, #tpu.memory_space<vmem>>, vector<1x1x128xf32>,
    %c0_284 = arith.constant 0 : index
    %c39 = arith.constant 39 : index
    %c0_285 = arith.constant 0 : index
    %318 = vector.load %arg10[%c0_284, %c39, %c0_285] : memref<2x48x128xf32, #tpu.memory_space<vmem>>, vector<1x1x128xf32>
    %319 = vector.shape_cast %318 : vector<1x1x128xf32> to vector<1x128xf32>
    %320 = vector.shape_cast %314 : vector<1x128xf32> to vector<1x1x128xf32>
    tpu.vector_store %arg10[%c0_284, %c39, %c0_285], %320 {strides = array<i32>} : memref<2x48x128xf32, #tpu.memory_space<vmem>>, vector<1x1x128xf32>,
    %c0_286 = arith.constant 0 : index
    %c22_287 = arith.constant 22 : index
    %c0_288 = arith.constant 0 : index
    %321 = vector.load %arg10[%c0_286, %c22_287, %c0_288] : memref<2x48x128xf32, #tpu.memory_space<vmem>>, vector<1x1x128xf32>
    %322 = vector.shape_cast %321 : vector<1x1x128xf32> to vector<1x128xf32>
    %c0_289 = arith.constant 0 : index
    %c36 = arith.constant 36 : index
    %c0_290 = arith.constant 0 : index
    %323 = vector.load %arg10[%c0_289, %c36, %c0_290] : memref<2x48x128xf32, #tpu.memory_space<vmem>>, vector<1x1x128xf32>
    %324 = vector.shape_cast %323 : vector<1x1x128xf32> to vector<1x128xf32>
    %325 = vector.shape_cast %322 : vector<1x128xf32> to vector<1x1x128xf32>
    tpu.vector_store %arg10[%c0_289, %c36, %c0_290], %325 {strides = array<i32>} : memref<2x48x128xf32, #tpu.memory_space<vmem>>, vector<1x1x128xf32>,
    %c0_291 = arith.constant 0 : index
    %c37 = arith.constant 37 : index
    %c0_292 = arith.constant 0 : index
    %326 = vector.load %arg10[%c0_291, %c37, %c0_292] : memref<2x48x128xf32, #tpu.memory_space<vmem>>, vector<1x1x128xf32>
    %327 = vector.shape_cast %326 : vector<1x1x128xf32> to vector<1x128xf32>
    %328 = vector.shape_cast %322 : vector<1x128xf32> to vector<1x1x128xf32>
    tpu.vector_store %arg10[%c0_291, %c37, %c0_292], %328 {strides = array<i32>} : memref<2x48x128xf32, #tpu.memory_space<vmem>>, vector<1x1x128xf32>,
    %c0_293 = arith.constant 0 : index
    %c21_294 = arith.constant 21 : index
    %c0_295 = arith.constant 0 : index
    %329 = vector.load %arg10[%c0_293, %c21_294, %c0_295] : memref<2x48x128xf32, #tpu.memory_space<vmem>>, vector<1x1x128xf32>
    %330 = vector.shape_cast %329 : vector<1x1x128xf32> to vector<1x128xf32>
    %c0_296 = arith.constant 0 : index
    %c34 = arith.constant 34 : index
    %c0_297 = arith.constant 0 : index
    %331 = vector.load %arg10[%c0_296, %c34, %c0_297] : memref<2x48x128xf32, #tpu.memory_space<vmem>>, vector<1x1x128xf32>
    %332 = vector.shape_cast %331 : vector<1x1x128xf32> to vector<1x128xf32>
    %333 = vector.shape_cast %330 : vector<1x128xf32> to vector<1x1x128xf32>
    tpu.vector_store %arg10[%c0_296, %c34, %c0_297], %333 {strides = array<i32>} : memref<2x48x128xf32, #tpu.memory_space<vmem>>, vector<1x1x128xf32>,
    %c0_298 = arith.constant 0 : index
    %c35 = arith.constant 35 : index
    %c0_299 = arith.constant 0 : index
    %334 = vector.load %arg10[%c0_298, %c35, %c0_299] : memref<2x48x128xf32, #tpu.memory_space<vmem>>, vector<1x1x128xf32>
    %335 = vector.shape_cast %334 : vector<1x1x128xf32> to vector<1x128xf32>
    %336 = vector.shape_cast %330 : vector<1x128xf32> to vector<1x1x128xf32>
    tpu.vector_store %arg10[%c0_298, %c35, %c0_299], %336 {strides = array<i32>} : memref<2x48x128xf32, #tpu.memory_space<vmem>>, vector<1x1x128xf32>,
    %c0_300 = arith.constant 0 : index
    %c20_301 = arith.constant 20 : index
    %c0_302 = arith.constant 0 : index
    %337 = vector.load %arg10[%c0_300, %c20_301, %c0_302] : memref<2x48x128xf32, #tpu.memory_space<vmem>>, vector<1x1x128xf32>
    %338 = vector.shape_cast %337 : vector<1x1x128xf32> to vector<1x128xf32>
    %c0_303 = arith.constant 0 : index
    %c32 = arith.constant 32 : index
    %c0_304 = arith.constant 0 : index
    %339 = vector.load %arg10[%c0_303, %c32, %c0_304] : memref<2x48x128xf32, #tpu.memory_space<vmem>>, vector<1x1x128xf32>
    %340 = vector.shape_cast %339 : vector<1x1x128xf32> to vector<1x128xf32>
    %341 = vector.shape_cast %338 : vector<1x128xf32> to vector<1x1x128xf32>
    tpu.vector_store %arg10[%c0_303, %c32, %c0_304], %341 {strides = array<i32>} : memref<2x48x128xf32, #tpu.memory_space<vmem>>, vector<1x1x128xf32>,
    %c0_305 = arith.constant 0 : index
    %c33 = arith.constant 33 : index
    %c0_306 = arith.constant 0 : index
    %342 = vector.load %arg10[%c0_305, %c33, %c0_306] : memref<2x48x128xf32, #tpu.memory_space<vmem>>, vector<1x1x128xf32>
    %343 = vector.shape_cast %342 : vector<1x1x128xf32> to vector<1x128xf32>
    %344 = vector.shape_cast %338 : vector<1x128xf32> to vector<1x1x128xf32>
    tpu.vector_store %arg10[%c0_305, %c33, %c0_306], %344 {strides = array<i32>} : memref<2x48x128xf32, #tpu.memory_space<vmem>>, vector<1x1x128xf32>,
    %c0_307 = arith.constant 0 : index
    %c19_308 = arith.constant 19 : index
    %c0_309 = arith.constant 0 : index
    %345 = vector.load %arg10[%c0_307, %c19_308, %c0_309] : memref<2x48x128xf32, #tpu.memory_space<vmem>>, vector<1x1x128xf32>
    %346 = vector.shape_cast %345 : vector<1x1x128xf32> to vector<1x128xf32>
    %c0_310 = arith.constant 0 : index
    %c30 = arith.constant 30 : index
    %c0_311 = arith.constant 0 : index
    %347 = vector.load %arg10[%c0_310, %c30, %c0_311] : memref<2x48x128xf32, #tpu.memory_space<vmem>>, vector<1x1x128xf32>
    %348 = vector.shape_cast %347 : vector<1x1x128xf32> to vector<1x128xf32>
    %349 = vector.shape_cast %346 : vector<1x128xf32> to vector<1x1x128xf32>
    tpu.vector_store %arg10[%c0_310, %c30, %c0_311], %349 {strides = array<i32>} : memref<2x48x128xf32, #tpu.memory_space<vmem>>, vector<1x1x128xf32>,
    %c0_312 = arith.constant 0 : index
    %c31 = arith.constant 31 : index
    %c0_313 = arith.constant 0 : index
    %350 = vector.load %arg10[%c0_312, %c31, %c0_313] : memref<2x48x128xf32, #tpu.memory_space<vmem>>, vector<1x1x128xf32>
    %351 = vector.shape_cast %350 : vector<1x1x128xf32> to vector<1x128xf32>
    %352 = vector.shape_cast %346 : vector<1x128xf32> to vector<1x1x128xf32>
    tpu.vector_store %arg10[%c0_312, %c31, %c0_313], %352 {strides = array<i32>} : memref<2x48x128xf32, #tpu.memory_space<vmem>>, vector<1x1x128xf32>,
    %c0_314 = arith.constant 0 : index
    %c18_315 = arith.constant 18 : index
    %c0_316 = arith.constant 0 : index
    %353 = vector.load %arg10[%c0_314, %c18_315, %c0_316] : memref<2x48x128xf32, #tpu.memory_space<vmem>>, vector<1x1x128xf32>
    %354 = vector.shape_cast %353 : vector<1x1x128xf32> to vector<1x128xf32>
    %c0_317 = arith.constant 0 : index
    %c28 = arith.constant 28 : index
    %c0_318 = arith.constant 0 : index
    %355 = vector.load %arg10[%c0_317, %c28, %c0_318] : memref<2x48x128xf32, #tpu.memory_space<vmem>>, vector<1x1x128xf32>
    %356 = vector.shape_cast %355 : vector<1x1x128xf32> to vector<1x128xf32>
    %357 = vector.shape_cast %354 : vector<1x128xf32> to vector<1x1x128xf32>
    tpu.vector_store %arg10[%c0_317, %c28, %c0_318], %357 {strides = array<i32>} : memref<2x48x128xf32, #tpu.memory_space<vmem>>, vector<1x1x128xf32>,
    %c0_319 = arith.constant 0 : index
    %c29 = arith.constant 29 : index
    %c0_320 = arith.constant 0 : index
    %358 = vector.load %arg10[%c0_319, %c29, %c0_320] : memref<2x48x128xf32, #tpu.memory_space<vmem>>, vector<1x1x128xf32>
    %359 = vector.shape_cast %358 : vector<1x1x128xf32> to vector<1x128xf32>
    %360 = vector.shape_cast %354 : vector<1x128xf32> to vector<1x1x128xf32>
    tpu.vector_store %arg10[%c0_319, %c29, %c0_320], %360 {strides = array<i32>} : memref<2x48x128xf32, #tpu.memory_space<vmem>>, vector<1x1x128xf32>,
    %c0_321 = arith.constant 0 : index
    %c17_322 = arith.constant 17 : index
    %c0_323 = arith.constant 0 : index
    %361 = vector.load %arg10[%c0_321, %c17_322, %c0_323] : memref<2x48x128xf32, #tpu.memory_space<vmem>>, vector<1x1x128xf32>
    %362 = vector.shape_cast %361 : vector<1x1x128xf32> to vector<1x128xf32>
    %c0_324 = arith.constant 0 : index
    %c26 = arith.constant 26 : index
    %c0_325 = arith.constant 0 : index
    %363 = vector.load %arg10[%c0_324, %c26, %c0_325] : memref<2x48x128xf32, #tpu.memory_space<vmem>>, vector<1x1x128xf32>
    %364 = vector.shape_cast %363 : vector<1x1x128xf32> to vector<1x128xf32>
    %365 = vector.shape_cast %362 : vector<1x128xf32> to vector<1x1x128xf32>
    tpu.vector_store %arg10[%c0_324, %c26, %c0_325], %365 {strides = array<i32>} : memref<2x48x128xf32, #tpu.memory_space<vmem>>, vector<1x1x128xf32>,
    %c0_326 = arith.constant 0 : index
    %c27 = arith.constant 27 : index
    %c0_327 = arith.constant 0 : index
    %366 = vector.load %arg10[%c0_326, %c27, %c0_327] : memref<2x48x128xf32, #tpu.memory_space<vmem>>, vector<1x1x128xf32>
    %367 = vector.shape_cast %366 : vector<1x1x128xf32> to vector<1x128xf32>
    %368 = vector.shape_cast %362 : vector<1x128xf32> to vector<1x1x128xf32>
    tpu.vector_store %arg10[%c0_326, %c27, %c0_327], %368 {strides = array<i32>} : memref<2x48x128xf32, #tpu.memory_space<vmem>>, vector<1x1x128xf32>,
    %c0_328 = arith.constant 0 : index
    %c16_329 = arith.constant 16 : index
    %c0_330 = arith.constant 0 : index
    %369 = vector.load %arg10[%c0_328, %c16_329, %c0_330] : memref<2x48x128xf32, #tpu.memory_space<vmem>>, vector<1x1x128xf32>
    %370 = vector.shape_cast %369 : vector<1x1x128xf32> to vector<1x128xf32>
    %c0_331 = arith.constant 0 : index
    %c24 = arith.constant 24 : index
    %c0_332 = arith.constant 0 : index
    %371 = vector.load %arg10[%c0_331, %c24, %c0_332] : memref<2x48x128xf32, #tpu.memory_space<vmem>>, vector<1x1x128xf32>
    %372 = vector.shape_cast %371 : vector<1x1x128xf32> to vector<1x128xf32>
    %373 = vector.shape_cast %370 : vector<1x128xf32> to vector<1x1x128xf32>
    tpu.vector_store %arg10[%c0_331, %c24, %c0_332], %373 {strides = array<i32>} : memref<2x48x128xf32, #tpu.memory_space<vmem>>, vector<1x1x128xf32>,
    %c0_333 = arith.constant 0 : index
    %c25 = arith.constant 25 : index
    %c0_334 = arith.constant 0 : index
    %374 = vector.load %arg10[%c0_333, %c25, %c0_334] : memref<2x48x128xf32, #tpu.memory_space<vmem>>, vector<1x1x128xf32>
    %375 = vector.shape_cast %374 : vector<1x1x128xf32> to vector<1x128xf32>
    %376 = vector.shape_cast %370 : vector<1x128xf32> to vector<1x1x128xf32>
    tpu.vector_store %arg10[%c0_333, %c25, %c0_334], %376 {strides = array<i32>} : memref<2x48x128xf32, #tpu.memory_space<vmem>>, vector<1x1x128xf32>,
    %c0_335 = arith.constant 0 : index
    %c15_336 = arith.constant 15 : index
    %c0_337 = arith.constant 0 : index
    %377 = vector.load %arg10[%c0_335, %c15_336, %c0_337] : memref<2x48x128xf32, #tpu.memory_space<vmem>>, vector<1x1x128xf32>
    %378 = vector.shape_cast %377 : vector<1x1x128xf32> to vector<1x128xf32>
    %c0_338 = arith.constant 0 : index
    %c22_339 = arith.constant 22 : index
    %c0_340 = arith.constant 0 : index
    %379 = vector.load %arg10[%c0_338, %c22_339, %c0_340] : memref<2x48x128xf32, #tpu.memory_space<vmem>>, vector<1x1x128xf32>
    %380 = vector.shape_cast %379 : vector<1x1x128xf32> to vector<1x128xf32>
    %381 = vector.shape_cast %378 : vector<1x128xf32> to vector<1x1x128xf32>
    tpu.vector_store %arg10[%c0_338, %c22_339, %c0_340], %381 {strides = array<i32>} : memref<2x48x128xf32, #tpu.memory_space<vmem>>, vector<1x1x128xf32>,
    %c0_341 = arith.constant 0 : index
    %c23_342 = arith.constant 23 : index
    %c0_343 = arith.constant 0 : index
    %382 = vector.load %arg10[%c0_341, %c23_342, %c0_343] : memref<2x48x128xf32, #tpu.memory_space<vmem>>, vector<1x1x128xf32>
    %383 = vector.shape_cast %382 : vector<1x1x128xf32> to vector<1x128xf32>
    %384 = vector.shape_cast %378 : vector<1x128xf32> to vector<1x1x128xf32>
    tpu.vector_store %arg10[%c0_341, %c23_342, %c0_343], %384 {strides = array<i32>} : memref<2x48x128xf32, #tpu.memory_space<vmem>>, vector<1x1x128xf32>,
    %c0_344 = arith.constant 0 : index
    %c14_345 = arith.constant 14 : index
    %c0_346 = arith.constant 0 : index
    %385 = vector.load %arg10[%c0_344, %c14_345, %c0_346] : memref<2x48x128xf32, #tpu.memory_space<vmem>>, vector<1x1x128xf32>
    %386 = vector.shape_cast %385 : vector<1x1x128xf32> to vector<1x128xf32>
    %c0_347 = arith.constant 0 : index
    %c20_348 = arith.constant 20 : index
    %c0_349 = arith.constant 0 : index
    %387 = vector.load %arg10[%c0_347, %c20_348, %c0_349] : memref<2x48x128xf32, #tpu.memory_space<vmem>>, vector<1x1x128xf32>
    %388 = vector.shape_cast %387 : vector<1x1x128xf32> to vector<1x128xf32>
    %389 = vector.shape_cast %386 : vector<1x128xf32> to vector<1x1x128xf32>
    tpu.vector_store %arg10[%c0_347, %c20_348, %c0_349], %389 {strides = array<i32>} : memref<2x48x128xf32, #tpu.memory_space<vmem>>, vector<1x1x128xf32>,
    %c0_350 = arith.constant 0 : index
    %c21_351 = arith.constant 21 : index
    %c0_352 = arith.constant 0 : index
    %390 = vector.load %arg10[%c0_350, %c21_351, %c0_352] : memref<2x48x128xf32, #tpu.memory_space<vmem>>, vector<1x1x128xf32>
    %391 = vector.shape_cast %390 : vector<1x1x128xf32> to vector<1x128xf32>
    %392 = vector.shape_cast %386 : vector<1x128xf32> to vector<1x1x128xf32>
    tpu.vector_store %arg10[%c0_350, %c21_351, %c0_352], %392 {strides = array<i32>} : memref<2x48x128xf32, #tpu.memory_space<vmem>>, vector<1x1x128xf32>,
    %c0_353 = arith.constant 0 : index
    %c13_354 = arith.constant 13 : index
    %c0_355 = arith.constant 0 : index
    %393 = vector.load %arg10[%c0_353, %c13_354, %c0_355] : memref<2x48x128xf32, #tpu.memory_space<vmem>>, vector<1x1x128xf32>
    %394 = vector.shape_cast %393 : vector<1x1x128xf32> to vector<1x128xf32>
    %c0_356 = arith.constant 0 : index
    %c18_357 = arith.constant 18 : index
    %c0_358 = arith.constant 0 : index
    %395 = vector.load %arg10[%c0_356, %c18_357, %c0_358] : memref<2x48x128xf32, #tpu.memory_space<vmem>>, vector<1x1x128xf32>
    %396 = vector.shape_cast %395 : vector<1x1x128xf32> to vector<1x128xf32>
    %397 = vector.shape_cast %394 : vector<1x128xf32> to vector<1x1x128xf32>
    tpu.vector_store %arg10[%c0_356, %c18_357, %c0_358], %397 {strides = array<i32>} : memref<2x48x128xf32, #tpu.memory_space<vmem>>, vector<1x1x128xf32>,
    %c0_359 = arith.constant 0 : index
    %c19_360 = arith.constant 19 : index
    %c0_361 = arith.constant 0 : index
    %398 = vector.load %arg10[%c0_359, %c19_360, %c0_361] : memref<2x48x128xf32, #tpu.memory_space<vmem>>, vector<1x1x128xf32>
    %399 = vector.shape_cast %398 : vector<1x1x128xf32> to vector<1x128xf32>
    %400 = vector.shape_cast %394 : vector<1x128xf32> to vector<1x1x128xf32>
    tpu.vector_store %arg10[%c0_359, %c19_360, %c0_361], %400 {strides = array<i32>} : memref<2x48x128xf32, #tpu.memory_space<vmem>>, vector<1x1x128xf32>,
    %c0_362 = arith.constant 0 : index
    %c12_363 = arith.constant 12 : index
    %c0_364 = arith.constant 0 : index
    %401 = vector.load %arg10[%c0_362, %c12_363, %c0_364] : memref<2x48x128xf32, #tpu.memory_space<vmem>>, vector<1x1x128xf32>
    %402 = vector.shape_cast %401 : vector<1x1x128xf32> to vector<1x128xf32>
    %c0_365 = arith.constant 0 : index
    %c16_366 = arith.constant 16 : index
    %c0_367 = arith.constant 0 : index
    %403 = vector.load %arg10[%c0_365, %c16_366, %c0_367] : memref<2x48x128xf32, #tpu.memory_space<vmem>>, vector<1x1x128xf32>
    %404 = vector.shape_cast %403 : vector<1x1x128xf32> to vector<1x128xf32>
    %405 = vector.shape_cast %402 : vector<1x128xf32> to vector<1x1x128xf32>
    tpu.vector_store %arg10[%c0_365, %c16_366, %c0_367], %405 {strides = array<i32>} : memref<2x48x128xf32, #tpu.memory_space<vmem>>, vector<1x1x128xf32>,
    %c0_368 = arith.constant 0 : index
    %c17_369 = arith.constant 17 : index
    %c0_370 = arith.constant 0 : index
    %406 = vector.load %arg10[%c0_368, %c17_369, %c0_370] : memref<2x48x128xf32, #tpu.memory_space<vmem>>, vector<1x1x128xf32>
    %407 = vector.shape_cast %406 : vector<1x1x128xf32> to vector<1x128xf32>
    %408 = vector.shape_cast %402 : vector<1x128xf32> to vector<1x1x128xf32>
    tpu.vector_store %arg10[%c0_368, %c17_369, %c0_370], %408 {strides = array<i32>} : memref<2x48x128xf32, #tpu.memory_space<vmem>>, vector<1x1x128xf32>,
    %c0_371 = arith.constant 0 : index
    %c11_372 = arith.constant 11 : index
    %c0_373 = arith.constant 0 : index
    %409 = vector.load %arg10[%c0_371, %c11_372, %c0_373] : memref<2x48x128xf32, #tpu.memory_space<vmem>>, vector<1x1x128xf32>
    %410 = vector.shape_cast %409 : vector<1x1x128xf32> to vector<1x128xf32>
    %c0_374 = arith.constant 0 : index
    %c14_375 = arith.constant 14 : index
    %c0_376 = arith.constant 0 : index
    %411 = vector.load %arg10[%c0_374, %c14_375, %c0_376] : memref<2x48x128xf32, #tpu.memory_space<vmem>>, vector<1x1x128xf32>
    %412 = vector.shape_cast %411 : vector<1x1x128xf32> to vector<1x128xf32>
    %413 = vector.shape_cast %410 : vector<1x128xf32> to vector<1x1x128xf32>
    tpu.vector_store %arg10[%c0_374, %c14_375, %c0_376], %413 {strides = array<i32>} : memref<2x48x128xf32, #tpu.memory_space<vmem>>, vector<1x1x128xf32>,
    %c0_377 = arith.constant 0 : index
    %c15_378 = arith.constant 15 : index
    %c0_379 = arith.constant 0 : index
    %414 = vector.load %arg10[%c0_377, %c15_378, %c0_379] : memref<2x48x128xf32, #tpu.memory_space<vmem>>, vector<1x1x128xf32>
    %415 = vector.shape_cast %414 : vector<1x1x128xf32> to vector<1x128xf32>
    %416 = vector.shape_cast %410 : vector<1x128xf32> to vector<1x1x128xf32>
    tpu.vector_store %arg10[%c0_377, %c15_378, %c0_379], %416 {strides = array<i32>} : memref<2x48x128xf32, #tpu.memory_space<vmem>>, vector<1x1x128xf32>,
    %c0_380 = arith.constant 0 : index
    %c10_381 = arith.constant 10 : index
    %c0_382 = arith.constant 0 : index
    %417 = vector.load %arg10[%c0_380, %c10_381, %c0_382] : memref<2x48x128xf32, #tpu.memory_space<vmem>>, vector<1x1x128xf32>
    %418 = vector.shape_cast %417 : vector<1x1x128xf32> to vector<1x128xf32>
    %c0_383 = arith.constant 0 : index
    %c12_384 = arith.constant 12 : index
    %c0_385 = arith.constant 0 : index
    %419 = vector.load %arg10[%c0_383, %c12_384, %c0_385] : memref<2x48x128xf32, #tpu.memory_space<vmem>>, vector<1x1x128xf32>
    %420 = vector.shape_cast %419 : vector<1x1x128xf32> to vector<1x128xf32>
    %421 = vector.shape_cast %418 : vector<1x128xf32> to vector<1x1x128xf32>
    tpu.vector_store %arg10[%c0_383, %c12_384, %c0_385], %421 {strides = array<i32>} : memref<2x48x128xf32, #tpu.memory_space<vmem>>, vector<1x1x128xf32>,
    %c0_386 = arith.constant 0 : index
    %c13_387 = arith.constant 13 : index
    %c0_388 = arith.constant 0 : index
    %422 = vector.load %arg10[%c0_386, %c13_387, %c0_388] : memref<2x48x128xf32, #tpu.memory_space<vmem>>, vector<1x1x128xf32>
    %423 = vector.shape_cast %422 : vector<1x1x128xf32> to vector<1x128xf32>
    %424 = vector.shape_cast %418 : vector<1x128xf32> to vector<1x1x128xf32>
    tpu.vector_store %arg10[%c0_386, %c13_387, %c0_388], %424 {strides = array<i32>} : memref<2x48x128xf32, #tpu.memory_space<vmem>>, vector<1x1x128xf32>,
    %c0_389 = arith.constant 0 : index
    %c9_390 = arith.constant 9 : index
    %c0_391 = arith.constant 0 : index
    %425 = vector.load %arg10[%c0_389, %c9_390, %c0_391] : memref<2x48x128xf32, #tpu.memory_space<vmem>>, vector<1x1x128xf32>
    %426 = vector.shape_cast %425 : vector<1x1x128xf32> to vector<1x128xf32>
    %c0_392 = arith.constant 0 : index
    %c10_393 = arith.constant 10 : index
    %c0_394 = arith.constant 0 : index
    %427 = vector.load %arg10[%c0_392, %c10_393, %c0_394] : memref<2x48x128xf32, #tpu.memory_space<vmem>>, vector<1x1x128xf32>
    %428 = vector.shape_cast %427 : vector<1x1x128xf32> to vector<1x128xf32>
    %429 = vector.shape_cast %426 : vector<1x128xf32> to vector<1x1x128xf32>
    tpu.vector_store %arg10[%c0_392, %c10_393, %c0_394], %429 {strides = array<i32>} : memref<2x48x128xf32, #tpu.memory_space<vmem>>, vector<1x1x128xf32>,
    %c0_395 = arith.constant 0 : index
    %c11_396 = arith.constant 11 : index
    %c0_397 = arith.constant 0 : index
    %430 = vector.load %arg10[%c0_395, %c11_396, %c0_397] : memref<2x48x128xf32, #tpu.memory_space<vmem>>, vector<1x1x128xf32>
    %431 = vector.shape_cast %430 : vector<1x1x128xf32> to vector<1x128xf32>
    %432 = vector.shape_cast %426 : vector<1x128xf32> to vector<1x1x128xf32>
    tpu.vector_store %arg10[%c0_395, %c11_396, %c0_397], %432 {strides = array<i32>} : memref<2x48x128xf32, #tpu.memory_space<vmem>>, vector<1x1x128xf32>,
    %c0_398 = arith.constant 0 : index
    %c8_399 = arith.constant 8 : index
    %c0_400 = arith.constant 0 : index
    %433 = vector.load %arg10[%c0_398, %c8_399, %c0_400] : memref<2x48x128xf32, #tpu.memory_space<vmem>>, vector<1x1x128xf32>
    %434 = vector.shape_cast %433 : vector<1x1x128xf32> to vector<1x128xf32>
    %c0_401 = arith.constant 0 : index
    %c8_402 = arith.constant 8 : index
    %c0_403 = arith.constant 0 : index
    %435 = vector.load %arg10[%c0_401, %c8_402, %c0_403] : memref<2x48x128xf32, #tpu.memory_space<vmem>>, vector<1x1x128xf32>
    %436 = vector.shape_cast %435 : vector<1x1x128xf32> to vector<1x128xf32>
    %437 = vector.shape_cast %434 : vector<1x128xf32> to vector<1x1x128xf32>
    tpu.vector_store %arg10[%c0_401, %c8_402, %c0_403], %437 {strides = array<i32>} : memref<2x48x128xf32, #tpu.memory_space<vmem>>, vector<1x1x128xf32>,
    %c0_404 = arith.constant 0 : index
    %c9_405 = arith.constant 9 : index
    %c0_406 = arith.constant 0 : index
    %438 = vector.load %arg10[%c0_404, %c9_405, %c0_406] : memref<2x48x128xf32, #tpu.memory_space<vmem>>, vector<1x1x128xf32>
    %439 = vector.shape_cast %438 : vector<1x1x128xf32> to vector<1x128xf32>
    %440 = vector.shape_cast %434 : vector<1x128xf32> to vector<1x1x128xf32>
    tpu.vector_store %arg10[%c0_404, %c9_405, %c0_406], %440 {strides = array<i32>} : memref<2x48x128xf32, #tpu.memory_space<vmem>>, vector<1x1x128xf32>,
    %c15_407 = arith.constant 15 : index
    %c0_408 = arith.constant 0 : index
    %c0_409 = arith.constant 0 : index
    %441 = vector.load %arg3[%c15_407, %c0_408, %c0_409] : memref<21x128x128xbf16, #tpu.memory_space<vmem>>, vector<1x128x128xbf16>
    %442 = vector.shape_cast %441 : vector<1x128x128xbf16> to vector<128x128xbf16>
    %c16_410 = arith.constant 16 : index
    %c0_411 = arith.constant 0 : index
    %c0_412 = arith.constant 0 : index
    %443 = vector.load %arg3[%c16_410, %c0_411, %c0_412] : memref<21x128x128xbf16, #tpu.memory_space<vmem>>, vector<1x128x128xbf16>
    %444 = vector.shape_cast %443 : vector<1x128x128xbf16> to vector<128x128xbf16>
    %c17_413 = arith.constant 17 : index
    %c0_414 = arith.constant 0 : index
    %c0_415 = arith.constant 0 : index
    %445 = vector.load %arg3[%c17_413, %c0_414, %c0_415] : memref<21x128x128xbf16, #tpu.memory_space<vmem>>, vector<1x128x128xbf16>
    %446 = vector.shape_cast %445 : vector<1x128x128xbf16> to vector<128x128xbf16>
    %c5_416 = arith.constant 5 : index
    %c0_417 = arith.constant 0 : index
    %447 = vector.load %arg4[%c5_416, %c0_417] : memref<7x128xf32, #tpu.memory_space<vmem>>, vector<1x128xf32>
    %c0_418 = arith.constant 0 : index
    %c7_419 = arith.constant 7 : index
    %c0_420 = arith.constant 0 : index
    %448 = vector.load %arg10[%c0_418, %c7_419, %c0_420] : memref<2x48x128xf32, #tpu.memory_space<vmem>>, vector<1x32x128xf32>
    %449 = vector.shape_cast %448 : vector<1x32x128xf32> to vector<32x128xf32>
    %450 = arith.truncf %449 : vector<32x128xf32> to vector<32x128xbf16>
    %cst_421 = arith.constant dense<0.000000e+00> : vector<32x128xf32>
    %451 = tpu.matmul %450, %442, %cst_421 {dimension_numbers = #tpu.dot_dimension_numbers<[1], [0], [0], [1], [0, 0, 1, 1], [], []>} : vector<32x128xbf16>, vector<128x128xbf16>, vector<32x128xf32> -> vector<32x128xf32>
    %c0_422 = arith.constant 0 : index
    %c8_423 = arith.constant 8 : index
    %c0_424 = arith.constant 0 : index
    %452 = vector.load %arg10[%c0_422, %c8_423, %c0_424] : memref<2x48x128xf32, #tpu.memory_space<vmem>>, vector<1x32x128xf32>
    %453 = vector.shape_cast %452 : vector<1x32x128xf32> to vector<32x128xf32>
    %454 = arith.truncf %453 : vector<32x128xf32> to vector<32x128xbf16>
    %cst_425 = arith.constant dense<0.000000e+00> : vector<32x128xf32>
    %455 = tpu.matmul %454, %444, %cst_425 {dimension_numbers = #tpu.dot_dimension_numbers<[1], [0], [0], [1], [0, 0, 1, 1], [], []>} : vector<32x128xbf16>, vector<128x128xbf16>, vector<32x128xf32> -> vector<32x128xf32>
    %456 = arith.addf %451, %455 : vector<32x128xf32>
    %c0_426 = arith.constant 0 : index
    %c9_427 = arith.constant 9 : index
    %c0_428 = arith.constant 0 : index
    %457 = vector.load %arg10[%c0_426, %c9_427, %c0_428] : memref<2x48x128xf32, #tpu.memory_space<vmem>>, vector<1x32x128xf32>
    %458 = vector.shape_cast %457 : vector<1x32x128xf32> to vector<32x128xf32>
    %459 = arith.truncf %458 : vector<32x128xf32> to vector<32x128xbf16>
    %cst_429 = arith.constant dense<0.000000e+00> : vector<32x128xf32>
    %460 = tpu.matmul %459, %446, %cst_429 {dimension_numbers = #tpu.dot_dimension_numbers<[1], [0], [0], [1], [0, 0, 1, 1], [], []>} : vector<32x128xbf16>, vector<128x128xbf16>, vector<32x128xf32> -> vector<32x128xf32>
    %461 = arith.addf %456, %460 : vector<32x128xf32>
    %462 = vector.broadcast %447 : vector<1x128xf32> to vector<32x128xf32>
    %463 = arith.addf %461, %462 : vector<32x128xf32>
    %c0_430 = arith.constant 0 : index
    %c8_431 = arith.constant 8 : index
    %c0_432 = arith.constant 0 : index
    %464 = vector.load %arg10[%c0_430, %c8_431, %c0_432] : memref<2x48x128xf32, #tpu.memory_space<vmem>>, vector<1x32x128xf32>
    %465 = vector.shape_cast %464 : vector<1x32x128xf32> to vector<32x128xf32>
    %466 = vector.shape_cast %463 : vector<32x128xf32> to vector<1x32x128xf32>
    tpu.vector_store %arg10[%c0_430, %c8_431, %c0_432], %466 {strides = array<i32>} : memref<2x48x128xf32, #tpu.memory_space<vmem>>, vector<1x32x128xf32>,
    %c18_433 = arith.constant 18 : index
    %c0_434 = arith.constant 0 : index
    %c0_435 = arith.constant 0 : index
    %467 = vector.load %arg3[%c18_433, %c0_434, %c0_435] : memref<21x128x128xbf16, #tpu.memory_space<vmem>>, vector<1x128x128xbf16>
    %468 = vector.shape_cast %467 : vector<1x128x128xbf16> to vector<128x128xbf16>
    %c19_436 = arith.constant 19 : index
    %c0_437 = arith.constant 0 : index
    %c0_438 = arith.constant 0 : index
    %469 = vector.load %arg3[%c19_436, %c0_437, %c0_438] : memref<21x128x128xbf16, #tpu.memory_space<vmem>>, vector<1x128x128xbf16>
    %470 = vector.shape_cast %469 : vector<1x128x128xbf16> to vector<128x128xbf16>
    %c20_439 = arith.constant 20 : index
    %c0_440 = arith.constant 0 : index
    %c0_441 = arith.constant 0 : index
    %471 = vector.load %arg3[%c20_439, %c0_440, %c0_441] : memref<21x128x128xbf16, #tpu.memory_space<vmem>>, vector<1x128x128xbf16>
    %472 = vector.shape_cast %471 : vector<1x128x128xbf16> to vector<128x128xbf16>
    %c6_442 = arith.constant 6 : index
    %c0_443 = arith.constant 0 : index
    %473 = vector.load %arg4[%c6_442, %c0_443] : memref<7x128xf32, #tpu.memory_space<vmem>>, vector<1x128xf32>
    %c0_444 = arith.constant 0 : index
    %c7_445 = arith.constant 7 : index
    %c0_446 = arith.constant 0 : index
    %474 = vector.load %arg10[%c0_444, %c7_445, %c0_446] : memref<2x48x128xf32, #tpu.memory_space<vmem>>, vector<1x32x128xf32>
    %475 = vector.shape_cast %474 : vector<1x32x128xf32> to vector<32x128xf32>
    %476 = arith.truncf %475 : vector<32x128xf32> to vector<32x128xbf16>
    %cst_447 = arith.constant dense<0.000000e+00> : vector<32x128xf32>
    %477 = tpu.matmul %476, %468, %cst_447 {dimension_numbers = #tpu.dot_dimension_numbers<[1], [0], [0], [1], [0, 0, 1, 1], [], []>} : vector<32x128xbf16>, vector<128x128xbf16>, vector<32x128xf32> -> vector<32x128xf32>
    %c0_448 = arith.constant 0 : index
    %c8_449 = arith.constant 8 : index
    %c0_450 = arith.constant 0 : index
    %478 = vector.load %arg10[%c0_448, %c8_449, %c0_450] : memref<2x48x128xf32, #tpu.memory_space<vmem>>, vector<1x32x128xf32>
    %479 = vector.shape_cast %478 : vector<1x32x128xf32> to vector<32x128xf32>
    %480 = arith.truncf %479 : vector<32x128xf32> to vector<32x128xbf16>
    %cst_451 = arith.constant dense<0.000000e+00> : vector<32x128xf32>
    %481 = tpu.matmul %480, %470, %cst_451 {dimension_numbers = #tpu.dot_dimension_numbers<[1], [0], [0], [1], [0, 0, 1, 1], [], []>} : vector<32x128xbf16>, vector<128x128xbf16>, vector<32x128xf32> -> vector<32x128xf32>
    %482 = arith.addf %477, %481 : vector<32x128xf32>
    %c0_452 = arith.constant 0 : index
    %c9_453 = arith.constant 9 : index
    %c0_454 = arith.constant 0 : index
    %483 = vector.load %arg10[%c0_452, %c9_453, %c0_454] : memref<2x48x128xf32, #tpu.memory_space<vmem>>, vector<1x32x128xf32>
    %484 = vector.shape_cast %483 : vector<1x32x128xf32> to vector<32x128xf32>
    %485 = arith.truncf %484 : vector<32x128xf32> to vector<32x128xbf16>
    %cst_455 = arith.constant dense<0.000000e+00> : vector<32x128xf32>
    %486 = tpu.matmul %485, %472, %cst_455 {dimension_numbers = #tpu.dot_dimension_numbers<[1], [0], [0], [1], [0, 0, 1, 1], [], []>} : vector<32x128xbf16>, vector<128x128xbf16>, vector<32x128xf32> -> vector<32x128xf32>
    %487 = arith.addf %482, %486 : vector<32x128xf32>
    %488 = vector.broadcast %473 : vector<1x128xf32> to vector<32x128xf32>
    %489 = arith.addf %487, %488 : vector<32x128xf32>
    %cst_456 = arith.constant 0.000000e+00 : f32
    %490 = vector.broadcast %cst_456 : f32 to vector<32x128xf32>
    %491 = arith.maximumf %489, %490 : vector<32x128xf32>
    %c0_457 = arith.constant 0 : index
    %c8_458 = arith.constant 8 : index
    %c0_459 = arith.constant 0 : index
    %492 = vector.load %arg10[%c0_457, %c8_458, %c0_459] : memref<2x48x128xf32, #tpu.memory_space<vmem>>, vector<1x32x128xf32>
    %493 = vector.shape_cast %492 : vector<1x32x128xf32> to vector<32x128xf32>
    %494 = vector.shape_cast %491 : vector<32x128xf32> to vector<1x32x128xf32>
    tpu.vector_store %arg10[%c0_457, %c8_458, %c0_459], %494 {strides = array<i32>} : memref<2x48x128xf32, #tpu.memory_space<vmem>>, vector<1x32x128xf32>,
    %c0_460 = arith.constant 0 : index
    %c0_461 = arith.constant 0 : index
    %495 = vector.load %arg8[%c0_460, %c0_461] : memref<1x128xf32, #tpu.memory_space<vmem>>, vector<1x128xf32>
    %c0_462 = arith.constant 0 : index
    %c7_463 = arith.constant 7 : index
    %c0_464 = arith.constant 0 : index
    %496 = vector.load %arg10[%c0_462, %c7_463, %c0_464] : memref<2x48x128xf32, #tpu.memory_space<vmem>>, vector<1x32x128xf32>
    %497 = vector.shape_cast %496 : vector<1x32x128xf32> to vector<32x128xf32>
    %498 = arith.truncf %497 : vector<32x128xf32> to vector<32x128xbf16>
    %cst_465 = arith.constant dense<0.000000e+00> : vector<32x128xf32>
    %499 = tpu.matmul %498, %7, %cst_465 {dimension_numbers = #tpu.dot_dimension_numbers<[1], [0], [0], [1], [0, 0, 1, 1], [], []>} : vector<32x128xbf16>, vector<128x128xbf16>, vector<32x128xf32> -> vector<32x128xf32>
    %c0_466 = arith.constant 0 : index
    %c8_467 = arith.constant 8 : index
    %c0_468 = arith.constant 0 : index
    %500 = vector.load %arg10[%c0_466, %c8_467, %c0_468] : memref<2x48x128xf32, #tpu.memory_space<vmem>>, vector<1x32x128xf32>
    %501 = vector.shape_cast %500 : vector<1x32x128xf32> to vector<32x128xf32>
    %502 = arith.truncf %501 : vector<32x128xf32> to vector<32x128xbf16>
    %cst_469 = arith.constant dense<0.000000e+00> : vector<32x128xf32>
    %503 = tpu.matmul %502, %9, %cst_469 {dimension_numbers = #tpu.dot_dimension_numbers<[1], [0], [0], [1], [0, 0, 1, 1], [], []>} : vector<32x128xbf16>, vector<128x128xbf16>, vector<32x128xf32> -> vector<32x128xf32>
    %504 = arith.addf %499, %503 : vector<32x128xf32>
    %c0_470 = arith.constant 0 : index
    %c9_471 = arith.constant 9 : index
    %c0_472 = arith.constant 0 : index
    %505 = vector.load %arg10[%c0_470, %c9_471, %c0_472] : memref<2x48x128xf32, #tpu.memory_space<vmem>>, vector<1x32x128xf32>
    %506 = vector.shape_cast %505 : vector<1x32x128xf32> to vector<32x128xf32>
    %507 = arith.truncf %506 : vector<32x128xf32> to vector<32x128xbf16>
    %cst_473 = arith.constant dense<0.000000e+00> : vector<32x128xf32>
    %508 = tpu.matmul %507, %11, %cst_473 {dimension_numbers = #tpu.dot_dimension_numbers<[1], [0], [0], [1], [0, 0, 1, 1], [], []>} : vector<32x128xbf16>, vector<128x128xbf16>, vector<32x128xf32> -> vector<32x128xf32>
    %509 = arith.addf %504, %508 : vector<32x128xf32>
    %510 = vector.broadcast %495 : vector<1x128xf32> to vector<32x128xf32>
    %511 = arith.addf %509, %510 : vector<32x128xf32>
    %c0_474 = arith.constant 0 : index
    %c0_475 = arith.constant 0 : index
    %c0_476 = arith.constant 0 : index
    %512 = vector.load %arg9[%c0_474, %c0_475, %c0_476] : memref<2x32x128xf32, #tpu.memory_space<vmem>>, vector<1x32x128xf32>
    %513 = vector.shape_cast %512 : vector<1x32x128xf32> to vector<32x128xf32>
    %514 = vector.shape_cast %511 : vector<32x128xf32> to vector<1x32x128xf32>
    tpu.vector_store %arg9[%c0_474, %c0_475, %c0_476], %514 {strides = array<i32>} : memref<2x32x128xf32, #tpu.memory_space<vmem>>, vector<1x32x128xf32>,
    %cst_477 = arith.constant 0.000000e+00 : f32
    %515 = vector.broadcast %cst_477 : f32 to vector<8x128xf32>
    %c1_478 = arith.constant 1 : index
    %c0_479 = arith.constant 0 : index
    %c0_480 = arith.constant 0 : index
    %516 = vector.load %arg10[%c1_478, %c0_479, %c0_480] : memref<2x48x128xf32, #tpu.memory_space<vmem>>, vector<1x8x128xf32>
    %517 = vector.shape_cast %516 : vector<1x8x128xf32> to vector<8x128xf32>
    %518 = vector.shape_cast %515 : vector<8x128xf32> to vector<1x8x128xf32>
    tpu.vector_store %arg10[%c1_478, %c0_479, %c0_480], %518 {strides = array<i32>} : memref<2x48x128xf32, #tpu.memory_space<vmem>>, vector<1x8x128xf32>,
    %cst_481 = arith.constant 0.000000e+00 : f32
    %519 = vector.broadcast %cst_481 : f32 to vector<32x128xf32>
    %c1_482 = arith.constant 1 : index
    %c16_483 = arith.constant 16 : index
    %c0_484 = arith.constant 0 : index
    %520 = vector.load %arg10[%c1_482, %c16_483, %c0_484] : memref<2x48x128xf32, #tpu.memory_space<vmem>>, vector<1x32x128xf32>
    %521 = vector.shape_cast %520 : vector<1x32x128xf32> to vector<32x128xf32>
    %522 = vector.shape_cast %519 : vector<32x128xf32> to vector<1x32x128xf32>
    tpu.vector_store %arg10[%c1_482, %c16_483, %c0_484], %522 {strides = array<i32>} : memref<2x48x128xf32, #tpu.memory_space<vmem>>, vector<1x32x128xf32>,
    %c1_485 = arith.constant 1 : index
    %c0_486 = arith.constant 0 : index
    %c0_487 = arith.constant 0 : index
    %523 = vector.load %arg0[%c1_485, %c0_486, %c0_487] : memref<2x8x128xf32, #tpu.memory_space<vmem>>, vector<1x8x128xf32>
    %524 = vector.shape_cast %523 : vector<1x8x128xf32> to vector<8x128xf32>
    %c1_488 = arith.constant 1 : index
    %c8_489 = arith.constant 8 : index
    %c0_490 = arith.constant 0 : index
    %525 = vector.load %arg10[%c1_488, %c8_489, %c0_490] : memref<2x48x128xf32, #tpu.memory_space<vmem>>, vector<1x8x128xf32>
    %526 = vector.shape_cast %525 : vector<1x8x128xf32> to vector<8x128xf32>
    %527 = vector.shape_cast %524 : vector<8x128xf32> to vector<1x8x128xf32>
    tpu.vector_store %arg10[%c1_488, %c8_489, %c0_490], %527 {strides = array<i32>} : memref<2x48x128xf32, #tpu.memory_space<vmem>>, vector<1x8x128xf32>,
    %c0_491 = arith.constant 0 : index
    %c0_492 = arith.constant 0 : index
    %528 = vector.load %arg2[%c0_491, %c0_492] : memref<1x128xf32, #tpu.memory_space<vmem>>, vector<1x128xf32>
    %c1_493 = arith.constant 1 : index
    %c7_494 = arith.constant 7 : index
    %c0_495 = arith.constant 0 : index
    %529 = vector.load %arg10[%c1_493, %c7_494, %c0_495] : memref<2x48x128xf32, #tpu.memory_space<vmem>>, vector<1x8x128xf32>
    %530 = vector.shape_cast %529 : vector<1x8x128xf32> to vector<8x128xf32>
    %531 = arith.truncf %530 : vector<8x128xf32> to vector<8x128xbf16>
    %cst_496 = arith.constant dense<0.000000e+00> : vector<8x128xf32>
    %532 = tpu.matmul %531, %1, %cst_496 {dimension_numbers = #tpu.dot_dimension_numbers<[1], [0], [0], [1], [0, 0, 1, 1], [], []>} : vector<8x128xbf16>, vector<128x128xbf16>, vector<8x128xf32> -> vector<8x128xf32>
    %c1_497 = arith.constant 1 : index
    %c8_498 = arith.constant 8 : index
    %c0_499 = arith.constant 0 : index
    %533 = vector.load %arg10[%c1_497, %c8_498, %c0_499] : memref<2x48x128xf32, #tpu.memory_space<vmem>>, vector<1x8x128xf32>
    %534 = vector.shape_cast %533 : vector<1x8x128xf32> to vector<8x128xf32>
    %535 = arith.truncf %534 : vector<8x128xf32> to vector<8x128xbf16>
    %cst_500 = arith.constant dense<0.000000e+00> : vector<8x128xf32>
    %536 = tpu.matmul %535, %3, %cst_500 {dimension_numbers = #tpu.dot_dimension_numbers<[1], [0], [0], [1], [0, 0, 1, 1], [], []>} : vector<8x128xbf16>, vector<128x128xbf16>, vector<8x128xf32> -> vector<8x128xf32>
    %537 = arith.addf %532, %536 : vector<8x128xf32>
    %c1_501 = arith.constant 1 : index
    %c9_502 = arith.constant 9 : index
    %c0_503 = arith.constant 0 : index
    %538 = vector.load %arg10[%c1_501, %c9_502, %c0_503] : memref<2x48x128xf32, #tpu.memory_space<vmem>>, vector<1x8x128xf32>
    %539 = vector.shape_cast %538 : vector<1x8x128xf32> to vector<8x128xf32>
    %540 = arith.truncf %539 : vector<8x128xf32> to vector<8x128xbf16>
    %cst_504 = arith.constant dense<0.000000e+00> : vector<8x128xf32>
    %541 = tpu.matmul %540, %5, %cst_504 {dimension_numbers = #tpu.dot_dimension_numbers<[1], [0], [0], [1], [0, 0, 1, 1], [], []>} : vector<8x128xbf16>, vector<128x128xbf16>, vector<8x128xf32> -> vector<8x128xf32>
    %542 = arith.addf %537, %541 : vector<8x128xf32>
    %543 = vector.broadcast %528 : vector<1x128xf32> to vector<8x128xf32>
    %544 = arith.addf %542, %543 : vector<8x128xf32>
    %cst_505 = arith.constant 0.000000e+00 : f32
    %545 = vector.broadcast %cst_505 : f32 to vector<8x128xf32>
    %546 = arith.maximumf %544, %545 : vector<8x128xf32>
    %c1_506 = arith.constant 1 : index
    %c8_507 = arith.constant 8 : index
    %c0_508 = arith.constant 0 : index
    %547 = vector.load %arg10[%c1_506, %c8_507, %c0_508] : memref<2x48x128xf32, #tpu.memory_space<vmem>>, vector<1x8x128xf32>
    %548 = vector.shape_cast %547 : vector<1x8x128xf32> to vector<8x128xf32>
    %549 = vector.shape_cast %546 : vector<8x128xf32> to vector<1x8x128xf32>
    tpu.vector_store %arg10[%c1_506, %c8_507, %c0_508], %549 {strides = array<i32>} : memref<2x48x128xf32, #tpu.memory_space<vmem>>, vector<1x8x128xf32>,
    %c1_509 = arith.constant 1 : index
    %c8_510 = arith.constant 8 : index
    %c0_511 = arith.constant 0 : index
    %550 = vector.load %arg10[%c1_509, %c8_510, %c0_511] : memref<2x48x128xf32, #tpu.memory_space<vmem>>, vector<1x8x128xf32>
    %551 = vector.shape_cast %550 : vector<1x8x128xf32> to vector<8x128xf32>
    %c0_512 = arith.constant 0 : index
    %c0_513 = arith.constant 0 : index
    %c0_514 = arith.constant 0 : index
    %552 = vector.load %arg3[%c0_512, %c0_513, %c0_514] : memref<21x128x128xbf16, #tpu.memory_space<vmem>>, vector<1x128x128xbf16>
    %553 = vector.shape_cast %552 : vector<1x128x128xbf16> to vector<128x128xbf16>
    %c1_515 = arith.constant 1 : index
    %c0_516 = arith.constant 0 : index
    %c0_517 = arith.constant 0 : index
    %554 = vector.load %arg3[%c1_515, %c0_516, %c0_517] : memref<21x128x128xbf16, #tpu.memory_space<vmem>>, vector<1x128x128xbf16>
    %555 = vector.shape_cast %554 : vector<1x128x128xbf16> to vector<128x128xbf16>
    %c2_518 = arith.constant 2 : index
    %c0_519 = arith.constant 0 : index
    %c0_520 = arith.constant 0 : index
    %556 = vector.load %arg3[%c2_518, %c0_519, %c0_520] : memref<21x128x128xbf16, #tpu.memory_space<vmem>>, vector<1x128x128xbf16>
    %557 = vector.shape_cast %556 : vector<1x128x128xbf16> to vector<128x128xbf16>
    %c0_521 = arith.constant 0 : index
    %c0_522 = arith.constant 0 : index
    %558 = vector.load %arg4[%c0_521, %c0_522] : memref<7x128xf32, #tpu.memory_space<vmem>>, vector<1x128xf32>
    %c1_523 = arith.constant 1 : index
    %c5_524 = arith.constant 5 : index
    %c0_525 = arith.constant 0 : index
    %559 = vector.load %arg10[%c1_523, %c5_524, %c0_525] : memref<2x48x128xf32, #tpu.memory_space<vmem>>, vector<1x8x128xf32>
    %560 = vector.shape_cast %559 : vector<1x8x128xf32> to vector<8x128xf32>
    %cst_526 = arith.constant 0.000000e+00 : f32
    %561 = vector.broadcast %cst_526 : f32 to vector<8x128xf32>
    %562 = arith.maximumf %560, %561 : vector<8x128xf32>
    %563 = arith.truncf %562 : vector<8x128xf32> to vector<8x128xbf16>
    %cst_527 = arith.constant dense<0.000000e+00> : vector<8x128xf32>
    %564 = tpu.matmul %563, %553, %cst_527 {dimension_numbers = #tpu.dot_dimension_numbers<[1], [0], [0], [1], [0, 0, 1, 1], [], []>} : vector<8x128xbf16>, vector<128x128xbf16>, vector<8x128xf32> -> vector<8x128xf32>
    %c1_528 = arith.constant 1 : index
    %c8_529 = arith.constant 8 : index
    %c0_530 = arith.constant 0 : index
    %565 = vector.load %arg10[%c1_528, %c8_529, %c0_530] : memref<2x48x128xf32, #tpu.memory_space<vmem>>, vector<1x8x128xf32>
    %566 = vector.shape_cast %565 : vector<1x8x128xf32> to vector<8x128xf32>
    %cst_531 = arith.constant 0.000000e+00 : f32
    %567 = vector.broadcast %cst_531 : f32 to vector<8x128xf32>
    %568 = arith.maximumf %566, %567 : vector<8x128xf32>
    %569 = arith.truncf %568 : vector<8x128xf32> to vector<8x128xbf16>
    %cst_532 = arith.constant dense<0.000000e+00> : vector<8x128xf32>
    %570 = tpu.matmul %569, %555, %cst_532 {dimension_numbers = #tpu.dot_dimension_numbers<[1], [0], [0], [1], [0, 0, 1, 1], [], []>} : vector<8x128xbf16>, vector<128x128xbf16>, vector<8x128xf32> -> vector<8x128xf32>
    %571 = arith.addf %564, %570 : vector<8x128xf32>
    %c1_533 = arith.constant 1 : index
    %c11_534 = arith.constant 11 : index
    %c0_535 = arith.constant 0 : index
    %572 = vector.load %arg10[%c1_533, %c11_534, %c0_535] : memref<2x48x128xf32, #tpu.memory_space<vmem>>, vector<1x8x128xf32>
    %573 = vector.shape_cast %572 : vector<1x8x128xf32> to vector<8x128xf32>
    %cst_536 = arith.constant 0.000000e+00 : f32
    %574 = vector.broadcast %cst_536 : f32 to vector<8x128xf32>
    %575 = arith.maximumf %573, %574 : vector<8x128xf32>
    %576 = arith.truncf %575 : vector<8x128xf32> to vector<8x128xbf16>
    %cst_537 = arith.constant dense<0.000000e+00> : vector<8x128xf32>
    %577 = tpu.matmul %576, %557, %cst_537 {dimension_numbers = #tpu.dot_dimension_numbers<[1], [0], [0], [1], [0, 0, 1, 1], [], []>} : vector<8x128xbf16>, vector<128x128xbf16>, vector<8x128xf32> -> vector<8x128xf32>
    %578 = arith.addf %571, %577 : vector<8x128xf32>
    %579 = vector.broadcast %558 : vector<1x128xf32> to vector<8x128xf32>
    %580 = arith.addf %578, %579 : vector<8x128xf32>
    %cst_538 = arith.constant 0.000000e+00 : f32
    %581 = vector.broadcast %cst_538 : f32 to vector<8x128xf32>
    %582 = arith.maximumf %580, %581 : vector<8x128xf32>
    %583 = arith.truncf %582 : vector<8x128xf32> to vector<8x128xbf16>
    %c0_539 = arith.constant 0 : index
    %c0_540 = arith.constant 0 : index
    %c0_541 = arith.constant 0 : index
    %584 = vector.load %arg5[%c0_539, %c0_540, %c0_541] : memref<4x128x128xbf16, #tpu.memory_space<vmem>>, vector<1x128x128xbf16>
    %585 = vector.shape_cast %584 : vector<1x128x128xbf16> to vector<128x128xbf16>
    %cst_542 = arith.constant dense<0.000000e+00> : vector<8x128xf32>
    %586 = tpu.matmul %583, %585, %cst_542 {dimension_numbers = #tpu.dot_dimension_numbers<[1], [0], [0], [1], [0, 0, 1, 1], [], []>} : vector<8x128xbf16>, vector<128x128xbf16>, vector<8x128xf32> -> vector<8x128xf32>
    %c0_543 = arith.constant 0 : index
    %c0_544 = arith.constant 0 : index
    %587 = vector.load %arg6[%c0_543, %c0_544] : memref<4x128xf32, #tpu.memory_space<vmem>>, vector<1x128xf32>
    %588 = vector.broadcast %587 : vector<1x128xf32> to vector<8x128xf32>
    %589 = arith.addf %586, %588 : vector<8x128xf32>
    %590 = arith.addf %589, %551 : vector<8x128xf32>
    %c1_545 = arith.constant 1 : index
    %c8_546 = arith.constant 8 : index
    %c0_547 = arith.constant 0 : index
    %591 = vector.load %arg10[%c1_545, %c8_546, %c0_547] : memref<2x48x128xf32, #tpu.memory_space<vmem>>, vector<1x8x128xf32>
    %592 = vector.shape_cast %591 : vector<1x8x128xf32> to vector<8x128xf32>
    %593 = vector.shape_cast %590 : vector<8x128xf32> to vector<1x8x128xf32>
    tpu.vector_store %arg10[%c1_545, %c8_546, %c0_547], %593 {strides = array<i32>} : memref<2x48x128xf32, #tpu.memory_space<vmem>>, vector<1x8x128xf32>,
    %c1_548 = arith.constant 1 : index
    %c8_549 = arith.constant 8 : index
    %c0_550 = arith.constant 0 : index
    %594 = vector.load %arg10[%c1_548, %c8_549, %c0_550] : memref<2x48x128xf32, #tpu.memory_space<vmem>>, vector<1x8x128xf32>
    %595 = vector.shape_cast %594 : vector<1x8x128xf32> to vector<8x128xf32>
    %c3_551 = arith.constant 3 : index
    %c0_552 = arith.constant 0 : index
    %c0_553 = arith.constant 0 : index
    %596 = vector.load %arg3[%c3_551, %c0_552, %c0_553] : memref<21x128x128xbf16, #tpu.memory_space<vmem>>, vector<1x128x128xbf16>
    %597 = vector.shape_cast %596 : vector<1x128x128xbf16> to vector<128x128xbf16>
    %c4_554 = arith.constant 4 : index
    %c0_555 = arith.constant 0 : index
    %c0_556 = arith.constant 0 : index
    %598 = vector.load %arg3[%c4_554, %c0_555, %c0_556] : memref<21x128x128xbf16, #tpu.memory_space<vmem>>, vector<1x128x128xbf16>
    %599 = vector.shape_cast %598 : vector<1x128x128xbf16> to vector<128x128xbf16>
    %c5_557 = arith.constant 5 : index
    %c0_558 = arith.constant 0 : index
    %c0_559 = arith.constant 0 : index
    %600 = vector.load %arg3[%c5_557, %c0_558, %c0_559] : memref<21x128x128xbf16, #tpu.memory_space<vmem>>, vector<1x128x128xbf16>
    %601 = vector.shape_cast %600 : vector<1x128x128xbf16> to vector<128x128xbf16>
    %c1_560 = arith.constant 1 : index
    %c0_561 = arith.constant 0 : index
    %602 = vector.load %arg4[%c1_560, %c0_561] : memref<7x128xf32, #tpu.memory_space<vmem>>, vector<1x128xf32>
    %c1_562 = arith.constant 1 : index
    %c7_563 = arith.constant 7 : index
    %c0_564 = arith.constant 0 : index
    %603 = vector.load %arg10[%c1_562, %c7_563, %c0_564] : memref<2x48x128xf32, #tpu.memory_space<vmem>>, vector<1x8x128xf32>
    %604 = vector.shape_cast %603 : vector<1x8x128xf32> to vector<8x128xf32>
    %cst_565 = arith.constant 0.000000e+00 : f32
    %605 = vector.broadcast %cst_565 : f32 to vector<8x128xf32>
    %606 = arith.maximumf %604, %605 : vector<8x128xf32>
    %607 = arith.truncf %606 : vector<8x128xf32> to vector<8x128xbf16>
    %cst_566 = arith.constant dense<0.000000e+00> : vector<8x128xf32>
    %608 = tpu.matmul %607, %597, %cst_566 {dimension_numbers = #tpu.dot_dimension_numbers<[1], [0], [0], [1], [0, 0, 1, 1], [], []>} : vector<8x128xbf16>, vector<128x128xbf16>, vector<8x128xf32> -> vector<8x128xf32>
    %c1_567 = arith.constant 1 : index
    %c8_568 = arith.constant 8 : index
    %c0_569 = arith.constant 0 : index
    %609 = vector.load %arg10[%c1_567, %c8_568, %c0_569] : memref<2x48x128xf32, #tpu.memory_space<vmem>>, vector<1x8x128xf32>
    %610 = vector.shape_cast %609 : vector<1x8x128xf32> to vector<8x128xf32>
    %cst_570 = arith.constant 0.000000e+00 : f32
    %611 = vector.broadcast %cst_570 : f32 to vector<8x128xf32>
    %612 = arith.maximumf %610, %611 : vector<8x128xf32>
    %613 = arith.truncf %612 : vector<8x128xf32> to vector<8x128xbf16>
    %cst_571 = arith.constant dense<0.000000e+00> : vector<8x128xf32>
    %614 = tpu.matmul %613, %599, %cst_571 {dimension_numbers = #tpu.dot_dimension_numbers<[1], [0], [0], [1], [0, 0, 1, 1], [], []>} : vector<8x128xbf16>, vector<128x128xbf16>, vector<8x128xf32> -> vector<8x128xf32>
    %615 = arith.addf %608, %614 : vector<8x128xf32>
    %c1_572 = arith.constant 1 : index
    %c9_573 = arith.constant 9 : index
    %c0_574 = arith.constant 0 : index
    %616 = vector.load %arg10[%c1_572, %c9_573, %c0_574] : memref<2x48x128xf32, #tpu.memory_space<vmem>>, vector<1x8x128xf32>
    %617 = vector.shape_cast %616 : vector<1x8x128xf32> to vector<8x128xf32>
    %cst_575 = arith.constant 0.000000e+00 : f32
    %618 = vector.broadcast %cst_575 : f32 to vector<8x128xf32>
    %619 = arith.maximumf %617, %618 : vector<8x128xf32>
    %620 = arith.truncf %619 : vector<8x128xf32> to vector<8x128xbf16>
    %cst_576 = arith.constant dense<0.000000e+00> : vector<8x128xf32>
    %621 = tpu.matmul %620, %601, %cst_576 {dimension_numbers = #tpu.dot_dimension_numbers<[1], [0], [0], [1], [0, 0, 1, 1], [], []>} : vector<8x128xbf16>, vector<128x128xbf16>, vector<8x128xf32> -> vector<8x128xf32>
    %622 = arith.addf %615, %621 : vector<8x128xf32>
    %623 = vector.broadcast %602 : vector<1x128xf32> to vector<8x128xf32>
    %624 = arith.addf %622, %623 : vector<8x128xf32>
    %cst_577 = arith.constant 0.000000e+00 : f32
    %625 = vector.broadcast %cst_577 : f32 to vector<8x128xf32>
    %626 = arith.maximumf %624, %625 : vector<8x128xf32>
    %627 = arith.truncf %626 : vector<8x128xf32> to vector<8x128xbf16>
    %c1_578 = arith.constant 1 : index
    %c0_579 = arith.constant 0 : index
    %c0_580 = arith.constant 0 : index
    %628 = vector.load %arg5[%c1_578, %c0_579, %c0_580] : memref<4x128x128xbf16, #tpu.memory_space<vmem>>, vector<1x128x128xbf16>
    %629 = vector.shape_cast %628 : vector<1x128x128xbf16> to vector<128x128xbf16>
    %cst_581 = arith.constant dense<0.000000e+00> : vector<8x128xf32>
    %630 = tpu.matmul %627, %629, %cst_581 {dimension_numbers = #tpu.dot_dimension_numbers<[1], [0], [0], [1], [0, 0, 1, 1], [], []>} : vector<8x128xbf16>, vector<128x128xbf16>, vector<8x128xf32> -> vector<8x128xf32>
    %c1_582 = arith.constant 1 : index
    %c0_583 = arith.constant 0 : index
    %631 = vector.load %arg6[%c1_582, %c0_583] : memref<4x128xf32, #tpu.memory_space<vmem>>, vector<1x128xf32>
    %632 = vector.broadcast %631 : vector<1x128xf32> to vector<8x128xf32>
    %633 = arith.addf %630, %632 : vector<8x128xf32>
    %634 = arith.addf %633, %595 : vector<8x128xf32>
    %c1_584 = arith.constant 1 : index
    %c8_585 = arith.constant 8 : index
    %c0_586 = arith.constant 0 : index
    %635 = vector.load %arg10[%c1_584, %c8_585, %c0_586] : memref<2x48x128xf32, #tpu.memory_space<vmem>>, vector<1x8x128xf32>
    %636 = vector.shape_cast %635 : vector<1x8x128xf32> to vector<8x128xf32>
    %637 = vector.shape_cast %634 : vector<8x128xf32> to vector<1x8x128xf32>
    tpu.vector_store %arg10[%c1_584, %c8_585, %c0_586], %637 {strides = array<i32>} : memref<2x48x128xf32, #tpu.memory_space<vmem>>, vector<1x8x128xf32>,
    %c1_587 = arith.constant 1 : index
    %c15_588 = arith.constant 15 : index
    %c0_589 = arith.constant 0 : index
    %638 = vector.load %arg10[%c1_587, %c15_588, %c0_589] : memref<2x48x128xf32, #tpu.memory_space<vmem>>, vector<1x1x128xf32>
    %639 = vector.shape_cast %638 : vector<1x1x128xf32> to vector<1x128xf32>
    %c1_590 = arith.constant 1 : index
    %c22_591 = arith.constant 22 : index
    %c0_592 = arith.constant 0 : index
    %640 = vector.load %arg10[%c1_590, %c22_591, %c0_592] : memref<2x48x128xf32, #tpu.memory_space<vmem>>, vector<1x1x128xf32>
    %641 = vector.shape_cast %640 : vector<1x1x128xf32> to vector<1x128xf32>
    %642 = vector.shape_cast %639 : vector<1x128xf32> to vector<1x1x128xf32>
    tpu.vector_store %arg10[%c1_590, %c22_591, %c0_592], %642 {strides = array<i32>} : memref<2x48x128xf32, #tpu.memory_space<vmem>>, vector<1x1x128xf32>,
    %c1_593 = arith.constant 1 : index
    %c23_594 = arith.constant 23 : index
    %c0_595 = arith.constant 0 : index
    %643 = vector.load %arg10[%c1_593, %c23_594, %c0_595] : memref<2x48x128xf32, #tpu.memory_space<vmem>>, vector<1x1x128xf32>
    %644 = vector.shape_cast %643 : vector<1x1x128xf32> to vector<1x128xf32>
    %645 = vector.shape_cast %639 : vector<1x128xf32> to vector<1x1x128xf32>
    tpu.vector_store %arg10[%c1_593, %c23_594, %c0_595], %645 {strides = array<i32>} : memref<2x48x128xf32, #tpu.memory_space<vmem>>, vector<1x1x128xf32>,
    %c1_596 = arith.constant 1 : index
    %c14_597 = arith.constant 14 : index
    %c0_598 = arith.constant 0 : index
    %646 = vector.load %arg10[%c1_596, %c14_597, %c0_598] : memref<2x48x128xf32, #tpu.memory_space<vmem>>, vector<1x1x128xf32>
    %647 = vector.shape_cast %646 : vector<1x1x128xf32> to vector<1x128xf32>
    %c1_599 = arith.constant 1 : index
    %c20_600 = arith.constant 20 : index
    %c0_601 = arith.constant 0 : index
    %648 = vector.load %arg10[%c1_599, %c20_600, %c0_601] : memref<2x48x128xf32, #tpu.memory_space<vmem>>, vector<1x1x128xf32>
    %649 = vector.shape_cast %648 : vector<1x1x128xf32> to vector<1x128xf32>
    %650 = vector.shape_cast %647 : vector<1x128xf32> to vector<1x1x128xf32>
    tpu.vector_store %arg10[%c1_599, %c20_600, %c0_601], %650 {strides = array<i32>} : memref<2x48x128xf32, #tpu.memory_space<vmem>>, vector<1x1x128xf32>,
    %c1_602 = arith.constant 1 : index
    %c21_603 = arith.constant 21 : index
    %c0_604 = arith.constant 0 : index
    %651 = vector.load %arg10[%c1_602, %c21_603, %c0_604] : memref<2x48x128xf32, #tpu.memory_space<vmem>>, vector<1x1x128xf32>
    %652 = vector.shape_cast %651 : vector<1x1x128xf32> to vector<1x128xf32>
    %653 = vector.shape_cast %647 : vector<1x128xf32> to vector<1x1x128xf32>
    tpu.vector_store %arg10[%c1_602, %c21_603, %c0_604], %653 {strides = array<i32>} : memref<2x48x128xf32, #tpu.memory_space<vmem>>, vector<1x1x128xf32>,
    %c1_605 = arith.constant 1 : index
    %c13_606 = arith.constant 13 : index
    %c0_607 = arith.constant 0 : index
    %654 = vector.load %arg10[%c1_605, %c13_606, %c0_607] : memref<2x48x128xf32, #tpu.memory_space<vmem>>, vector<1x1x128xf32>
    %655 = vector.shape_cast %654 : vector<1x1x128xf32> to vector<1x128xf32>
    %c1_608 = arith.constant 1 : index
    %c18_609 = arith.constant 18 : index
    %c0_610 = arith.constant 0 : index
    %656 = vector.load %arg10[%c1_608, %c18_609, %c0_610] : memref<2x48x128xf32, #tpu.memory_space<vmem>>, vector<1x1x128xf32>
    %657 = vector.shape_cast %656 : vector<1x1x128xf32> to vector<1x128xf32>
    %658 = vector.shape_cast %655 : vector<1x128xf32> to vector<1x1x128xf32>
    tpu.vector_store %arg10[%c1_608, %c18_609, %c0_610], %658 {strides = array<i32>} : memref<2x48x128xf32, #tpu.memory_space<vmem>>, vector<1x1x128xf32>,
    %c1_611 = arith.constant 1 : index
    %c19_612 = arith.constant 19 : index
    %c0_613 = arith.constant 0 : index
    %659 = vector.load %arg10[%c1_611, %c19_612, %c0_613] : memref<2x48x128xf32, #tpu.memory_space<vmem>>, vector<1x1x128xf32>
    %660 = vector.shape_cast %659 : vector<1x1x128xf32> to vector<1x128xf32>
    %661 = vector.shape_cast %655 : vector<1x128xf32> to vector<1x1x128xf32>
    tpu.vector_store %arg10[%c1_611, %c19_612, %c0_613], %661 {strides = array<i32>} : memref<2x48x128xf32, #tpu.memory_space<vmem>>, vector<1x1x128xf32>,
    %c1_614 = arith.constant 1 : index
    %c12_615 = arith.constant 12 : index
    %c0_616 = arith.constant 0 : index
    %662 = vector.load %arg10[%c1_614, %c12_615, %c0_616] : memref<2x48x128xf32, #tpu.memory_space<vmem>>, vector<1x1x128xf32>
    %663 = vector.shape_cast %662 : vector<1x1x128xf32> to vector<1x128xf32>
    %c1_617 = arith.constant 1 : index
    %c16_618 = arith.constant 16 : index
    %c0_619 = arith.constant 0 : index
    %664 = vector.load %arg10[%c1_617, %c16_618, %c0_619] : memref<2x48x128xf32, #tpu.memory_space<vmem>>, vector<1x1x128xf32>
    %665 = vector.shape_cast %664 : vector<1x1x128xf32> to vector<1x128xf32>
    %666 = vector.shape_cast %663 : vector<1x128xf32> to vector<1x1x128xf32>
    tpu.vector_store %arg10[%c1_617, %c16_618, %c0_619], %666 {strides = array<i32>} : memref<2x48x128xf32, #tpu.memory_space<vmem>>, vector<1x1x128xf32>,
    %c1_620 = arith.constant 1 : index
    %c17_621 = arith.constant 17 : index
    %c0_622 = arith.constant 0 : index
    %667 = vector.load %arg10[%c1_620, %c17_621, %c0_622] : memref<2x48x128xf32, #tpu.memory_space<vmem>>, vector<1x1x128xf32>
    %668 = vector.shape_cast %667 : vector<1x1x128xf32> to vector<1x128xf32>
    %669 = vector.shape_cast %663 : vector<1x128xf32> to vector<1x1x128xf32>
    tpu.vector_store %arg10[%c1_620, %c17_621, %c0_622], %669 {strides = array<i32>} : memref<2x48x128xf32, #tpu.memory_space<vmem>>, vector<1x1x128xf32>,
    %c1_623 = arith.constant 1 : index
    %c11_624 = arith.constant 11 : index
    %c0_625 = arith.constant 0 : index
    %670 = vector.load %arg10[%c1_623, %c11_624, %c0_625] : memref<2x48x128xf32, #tpu.memory_space<vmem>>, vector<1x1x128xf32>
    %671 = vector.shape_cast %670 : vector<1x1x128xf32> to vector<1x128xf32>
    %c1_626 = arith.constant 1 : index
    %c14_627 = arith.constant 14 : index
    %c0_628 = arith.constant 0 : index
    %672 = vector.load %arg10[%c1_626, %c14_627, %c0_628] : memref<2x48x128xf32, #tpu.memory_space<vmem>>, vector<1x1x128xf32>
    %673 = vector.shape_cast %672 : vector<1x1x128xf32> to vector<1x128xf32>
    %674 = vector.shape_cast %671 : vector<1x128xf32> to vector<1x1x128xf32>
    tpu.vector_store %arg10[%c1_626, %c14_627, %c0_628], %674 {strides = array<i32>} : memref<2x48x128xf32, #tpu.memory_space<vmem>>, vector<1x1x128xf32>,
    %c1_629 = arith.constant 1 : index
    %c15_630 = arith.constant 15 : index
    %c0_631 = arith.constant 0 : index
    %675 = vector.load %arg10[%c1_629, %c15_630, %c0_631] : memref<2x48x128xf32, #tpu.memory_space<vmem>>, vector<1x1x128xf32>
    %676 = vector.shape_cast %675 : vector<1x1x128xf32> to vector<1x128xf32>
    %677 = vector.shape_cast %671 : vector<1x128xf32> to vector<1x1x128xf32>
    tpu.vector_store %arg10[%c1_629, %c15_630, %c0_631], %677 {strides = array<i32>} : memref<2x48x128xf32, #tpu.memory_space<vmem>>, vector<1x1x128xf32>,
    %c1_632 = arith.constant 1 : index
    %c10_633 = arith.constant 10 : index
    %c0_634 = arith.constant 0 : index
    %678 = vector.load %arg10[%c1_632, %c10_633, %c0_634] : memref<2x48x128xf32, #tpu.memory_space<vmem>>, vector<1x1x128xf32>
    %679 = vector.shape_cast %678 : vector<1x1x128xf32> to vector<1x128xf32>
    %c1_635 = arith.constant 1 : index
    %c12_636 = arith.constant 12 : index
    %c0_637 = arith.constant 0 : index
    %680 = vector.load %arg10[%c1_635, %c12_636, %c0_637] : memref<2x48x128xf32, #tpu.memory_space<vmem>>, vector<1x1x128xf32>
    %681 = vector.shape_cast %680 : vector<1x1x128xf32> to vector<1x128xf32>
    %682 = vector.shape_cast %679 : vector<1x128xf32> to vector<1x1x128xf32>
    tpu.vector_store %arg10[%c1_635, %c12_636, %c0_637], %682 {strides = array<i32>} : memref<2x48x128xf32, #tpu.memory_space<vmem>>, vector<1x1x128xf32>,
    %c1_638 = arith.constant 1 : index
    %c13_639 = arith.constant 13 : index
    %c0_640 = arith.constant 0 : index
    %683 = vector.load %arg10[%c1_638, %c13_639, %c0_640] : memref<2x48x128xf32, #tpu.memory_space<vmem>>, vector<1x1x128xf32>
    %684 = vector.shape_cast %683 : vector<1x1x128xf32> to vector<1x128xf32>
    %685 = vector.shape_cast %679 : vector<1x128xf32> to vector<1x1x128xf32>
    tpu.vector_store %arg10[%c1_638, %c13_639, %c0_640], %685 {strides = array<i32>} : memref<2x48x128xf32, #tpu.memory_space<vmem>>, vector<1x1x128xf32>,
    %c1_641 = arith.constant 1 : index
    %c9_642 = arith.constant 9 : index
    %c0_643 = arith.constant 0 : index
    %686 = vector.load %arg10[%c1_641, %c9_642, %c0_643] : memref<2x48x128xf32, #tpu.memory_space<vmem>>, vector<1x1x128xf32>
    %687 = vector.shape_cast %686 : vector<1x1x128xf32> to vector<1x128xf32>
    %c1_644 = arith.constant 1 : index
    %c10_645 = arith.constant 10 : index
    %c0_646 = arith.constant 0 : index
    %688 = vector.load %arg10[%c1_644, %c10_645, %c0_646] : memref<2x48x128xf32, #tpu.memory_space<vmem>>, vector<1x1x128xf32>
    %689 = vector.shape_cast %688 : vector<1x1x128xf32> to vector<1x128xf32>
    %690 = vector.shape_cast %687 : vector<1x128xf32> to vector<1x1x128xf32>
    tpu.vector_store %arg10[%c1_644, %c10_645, %c0_646], %690 {strides = array<i32>} : memref<2x48x128xf32, #tpu.memory_space<vmem>>, vector<1x1x128xf32>,
    %c1_647 = arith.constant 1 : index
    %c11_648 = arith.constant 11 : index
    %c0_649 = arith.constant 0 : index
    %691 = vector.load %arg10[%c1_647, %c11_648, %c0_649] : memref<2x48x128xf32, #tpu.memory_space<vmem>>, vector<1x1x128xf32>
    %692 = vector.shape_cast %691 : vector<1x1x128xf32> to vector<1x128xf32>
    %693 = vector.shape_cast %687 : vector<1x128xf32> to vector<1x1x128xf32>
    tpu.vector_store %arg10[%c1_647, %c11_648, %c0_649], %693 {strides = array<i32>} : memref<2x48x128xf32, #tpu.memory_space<vmem>>, vector<1x1x128xf32>,
    %c1_650 = arith.constant 1 : index
    %c8_651 = arith.constant 8 : index
    %c0_652 = arith.constant 0 : index
    %694 = vector.load %arg10[%c1_650, %c8_651, %c0_652] : memref<2x48x128xf32, #tpu.memory_space<vmem>>, vector<1x1x128xf32>
    %695 = vector.shape_cast %694 : vector<1x1x128xf32> to vector<1x128xf32>
    %c1_653 = arith.constant 1 : index
    %c8_654 = arith.constant 8 : index
    %c0_655 = arith.constant 0 : index
    %696 = vector.load %arg10[%c1_653, %c8_654, %c0_655] : memref<2x48x128xf32, #tpu.memory_space<vmem>>, vector<1x1x128xf32>
    %697 = vector.shape_cast %696 : vector<1x1x128xf32> to vector<1x128xf32>
    %698 = vector.shape_cast %695 : vector<1x128xf32> to vector<1x1x128xf32>
    tpu.vector_store %arg10[%c1_653, %c8_654, %c0_655], %698 {strides = array<i32>} : memref<2x48x128xf32, #tpu.memory_space<vmem>>, vector<1x1x128xf32>,
    %c1_656 = arith.constant 1 : index
    %c9_657 = arith.constant 9 : index
    %c0_658 = arith.constant 0 : index
    %699 = vector.load %arg10[%c1_656, %c9_657, %c0_658] : memref<2x48x128xf32, #tpu.memory_space<vmem>>, vector<1x1x128xf32>
    %700 = vector.shape_cast %699 : vector<1x1x128xf32> to vector<1x128xf32>
    %701 = vector.shape_cast %695 : vector<1x128xf32> to vector<1x1x128xf32>
    tpu.vector_store %arg10[%c1_656, %c9_657, %c0_658], %701 {strides = array<i32>} : memref<2x48x128xf32, #tpu.memory_space<vmem>>, vector<1x1x128xf32>,
    %c6_659 = arith.constant 6 : index
    %c0_660 = arith.constant 0 : index
    %c0_661 = arith.constant 0 : index
    %702 = vector.load %arg3[%c6_659, %c0_660, %c0_661] : memref<21x128x128xbf16, #tpu.memory_space<vmem>>, vector<1x128x128xbf16>
    %703 = vector.shape_cast %702 : vector<1x128x128xbf16> to vector<128x128xbf16>
    %c7_662 = arith.constant 7 : index
    %c0_663 = arith.constant 0 : index
    %c0_664 = arith.constant 0 : index
    %704 = vector.load %arg3[%c7_662, %c0_663, %c0_664] : memref<21x128x128xbf16, #tpu.memory_space<vmem>>, vector<1x128x128xbf16>
    %705 = vector.shape_cast %704 : vector<1x128x128xbf16> to vector<128x128xbf16>
    %c8_665 = arith.constant 8 : index
    %c0_666 = arith.constant 0 : index
    %c0_667 = arith.constant 0 : index
    %706 = vector.load %arg3[%c8_665, %c0_666, %c0_667] : memref<21x128x128xbf16, #tpu.memory_space<vmem>>, vector<1x128x128xbf16>
    %707 = vector.shape_cast %706 : vector<1x128x128xbf16> to vector<128x128xbf16>
    %c2_668 = arith.constant 2 : index
    %c0_669 = arith.constant 0 : index
    %708 = vector.load %arg4[%c2_668, %c0_669] : memref<7x128xf32, #tpu.memory_space<vmem>>, vector<1x128xf32>
    %c1_670 = arith.constant 1 : index
    %c7_671 = arith.constant 7 : index
    %c0_672 = arith.constant 0 : index
    %709 = vector.load %arg10[%c1_670, %c7_671, %c0_672] : memref<2x48x128xf32, #tpu.memory_space<vmem>>, vector<1x16x128xf32>
    %710 = vector.shape_cast %709 : vector<1x16x128xf32> to vector<16x128xf32>
    %711 = arith.truncf %710 : vector<16x128xf32> to vector<16x128xbf16>
    %cst_673 = arith.constant dense<0.000000e+00> : vector<16x128xf32>
    %712 = tpu.matmul %711, %703, %cst_673 {dimension_numbers = #tpu.dot_dimension_numbers<[1], [0], [0], [1], [0, 0, 1, 1], [], []>} : vector<16x128xbf16>, vector<128x128xbf16>, vector<16x128xf32> -> vector<16x128xf32>
    %c1_674 = arith.constant 1 : index
    %c8_675 = arith.constant 8 : index
    %c0_676 = arith.constant 0 : index
    %713 = vector.load %arg10[%c1_674, %c8_675, %c0_676] : memref<2x48x128xf32, #tpu.memory_space<vmem>>, vector<1x16x128xf32>
    %714 = vector.shape_cast %713 : vector<1x16x128xf32> to vector<16x128xf32>
    %715 = arith.truncf %714 : vector<16x128xf32> to vector<16x128xbf16>
    %cst_677 = arith.constant dense<0.000000e+00> : vector<16x128xf32>
    %716 = tpu.matmul %715, %705, %cst_677 {dimension_numbers = #tpu.dot_dimension_numbers<[1], [0], [0], [1], [0, 0, 1, 1], [], []>} : vector<16x128xbf16>, vector<128x128xbf16>, vector<16x128xf32> -> vector<16x128xf32>
    %717 = arith.addf %712, %716 : vector<16x128xf32>
    %c1_678 = arith.constant 1 : index
    %c9_679 = arith.constant 9 : index
    %c0_680 = arith.constant 0 : index
    %718 = vector.load %arg10[%c1_678, %c9_679, %c0_680] : memref<2x48x128xf32, #tpu.memory_space<vmem>>, vector<1x16x128xf32>
    %719 = vector.shape_cast %718 : vector<1x16x128xf32> to vector<16x128xf32>
    %720 = arith.truncf %719 : vector<16x128xf32> to vector<16x128xbf16>
    %cst_681 = arith.constant dense<0.000000e+00> : vector<16x128xf32>
    %721 = tpu.matmul %720, %707, %cst_681 {dimension_numbers = #tpu.dot_dimension_numbers<[1], [0], [0], [1], [0, 0, 1, 1], [], []>} : vector<16x128xbf16>, vector<128x128xbf16>, vector<16x128xf32> -> vector<16x128xf32>
    %722 = arith.addf %717, %721 : vector<16x128xf32>
    %723 = vector.broadcast %708 : vector<1x128xf32> to vector<16x128xf32>
    %724 = arith.addf %722, %723 : vector<16x128xf32>
    %c1_682 = arith.constant 1 : index
    %c8_683 = arith.constant 8 : index
    %c0_684 = arith.constant 0 : index
    %725 = vector.load %arg10[%c1_682, %c8_683, %c0_684] : memref<2x48x128xf32, #tpu.memory_space<vmem>>, vector<1x16x128xf32>
    %726 = vector.shape_cast %725 : vector<1x16x128xf32> to vector<16x128xf32>
    %727 = vector.shape_cast %724 : vector<16x128xf32> to vector<1x16x128xf32>
    tpu.vector_store %arg10[%c1_682, %c8_683, %c0_684], %727 {strides = array<i32>} : memref<2x48x128xf32, #tpu.memory_space<vmem>>, vector<1x16x128xf32>,
    %c1_685 = arith.constant 1 : index
    %c8_686 = arith.constant 8 : index
    %c0_687 = arith.constant 0 : index
    %728 = vector.load %arg10[%c1_685, %c8_686, %c0_687] : memref<2x48x128xf32, #tpu.memory_space<vmem>>, vector<1x16x128xf32>
    %729 = vector.shape_cast %728 : vector<1x16x128xf32> to vector<16x128xf32>
    %c9_688 = arith.constant 9 : index
    %c0_689 = arith.constant 0 : index
    %c0_690 = arith.constant 0 : index
    %730 = vector.load %arg3[%c9_688, %c0_689, %c0_690] : memref<21x128x128xbf16, #tpu.memory_space<vmem>>, vector<1x128x128xbf16>
    %731 = vector.shape_cast %730 : vector<1x128x128xbf16> to vector<128x128xbf16>
    %c10_691 = arith.constant 10 : index
    %c0_692 = arith.constant 0 : index
    %c0_693 = arith.constant 0 : index
    %732 = vector.load %arg3[%c10_691, %c0_692, %c0_693] : memref<21x128x128xbf16, #tpu.memory_space<vmem>>, vector<1x128x128xbf16>
    %733 = vector.shape_cast %732 : vector<1x128x128xbf16> to vector<128x128xbf16>
    %c11_694 = arith.constant 11 : index
    %c0_695 = arith.constant 0 : index
    %c0_696 = arith.constant 0 : index
    %734 = vector.load %arg3[%c11_694, %c0_695, %c0_696] : memref<21x128x128xbf16, #tpu.memory_space<vmem>>, vector<1x128x128xbf16>
    %735 = vector.shape_cast %734 : vector<1x128x128xbf16> to vector<128x128xbf16>
    %c3_697 = arith.constant 3 : index
    %c0_698 = arith.constant 0 : index
    %736 = vector.load %arg4[%c3_697, %c0_698] : memref<7x128xf32, #tpu.memory_space<vmem>>, vector<1x128xf32>
    %c1_699 = arith.constant 1 : index
    %c5_700 = arith.constant 5 : index
    %c0_701 = arith.constant 0 : index
    %737 = vector.load %arg10[%c1_699, %c5_700, %c0_701] : memref<2x48x128xf32, #tpu.memory_space<vmem>>, vector<1x16x128xf32>
    %738 = vector.shape_cast %737 : vector<1x16x128xf32> to vector<16x128xf32>
    %cst_702 = arith.constant 0.000000e+00 : f32
    %739 = vector.broadcast %cst_702 : f32 to vector<16x128xf32>
    %740 = arith.maximumf %738, %739 : vector<16x128xf32>
    %741 = arith.truncf %740 : vector<16x128xf32> to vector<16x128xbf16>
    %cst_703 = arith.constant dense<0.000000e+00> : vector<16x128xf32>
    %742 = tpu.matmul %741, %731, %cst_703 {dimension_numbers = #tpu.dot_dimension_numbers<[1], [0], [0], [1], [0, 0, 1, 1], [], []>} : vector<16x128xbf16>, vector<128x128xbf16>, vector<16x128xf32> -> vector<16x128xf32>
    %c1_704 = arith.constant 1 : index
    %c8_705 = arith.constant 8 : index
    %c0_706 = arith.constant 0 : index
    %743 = vector.load %arg10[%c1_704, %c8_705, %c0_706] : memref<2x48x128xf32, #tpu.memory_space<vmem>>, vector<1x16x128xf32>
    %744 = vector.shape_cast %743 : vector<1x16x128xf32> to vector<16x128xf32>
    %cst_707 = arith.constant 0.000000e+00 : f32
    %745 = vector.broadcast %cst_707 : f32 to vector<16x128xf32>
    %746 = arith.maximumf %744, %745 : vector<16x128xf32>
    %747 = arith.truncf %746 : vector<16x128xf32> to vector<16x128xbf16>
    %cst_708 = arith.constant dense<0.000000e+00> : vector<16x128xf32>
    %748 = tpu.matmul %747, %733, %cst_708 {dimension_numbers = #tpu.dot_dimension_numbers<[1], [0], [0], [1], [0, 0, 1, 1], [], []>} : vector<16x128xbf16>, vector<128x128xbf16>, vector<16x128xf32> -> vector<16x128xf32>
    %749 = arith.addf %742, %748 : vector<16x128xf32>
    %c1_709 = arith.constant 1 : index
    %c11_710 = arith.constant 11 : index
    %c0_711 = arith.constant 0 : index
    %750 = vector.load %arg10[%c1_709, %c11_710, %c0_711] : memref<2x48x128xf32, #tpu.memory_space<vmem>>, vector<1x16x128xf32>
    %751 = vector.shape_cast %750 : vector<1x16x128xf32> to vector<16x128xf32>
    %cst_712 = arith.constant 0.000000e+00 : f32
    %752 = vector.broadcast %cst_712 : f32 to vector<16x128xf32>
    %753 = arith.maximumf %751, %752 : vector<16x128xf32>
    %754 = arith.truncf %753 : vector<16x128xf32> to vector<16x128xbf16>
    %cst_713 = arith.constant dense<0.000000e+00> : vector<16x128xf32>
    %755 = tpu.matmul %754, %735, %cst_713 {dimension_numbers = #tpu.dot_dimension_numbers<[1], [0], [0], [1], [0, 0, 1, 1], [], []>} : vector<16x128xbf16>, vector<128x128xbf16>, vector<16x128xf32> -> vector<16x128xf32>
    %756 = arith.addf %749, %755 : vector<16x128xf32>
    %757 = vector.broadcast %736 : vector<1x128xf32> to vector<16x128xf32>
    %758 = arith.addf %756, %757 : vector<16x128xf32>
    %cst_714 = arith.constant 0.000000e+00 : f32
    %759 = vector.broadcast %cst_714 : f32 to vector<16x128xf32>
    %760 = arith.maximumf %758, %759 : vector<16x128xf32>
    %761 = arith.truncf %760 : vector<16x128xf32> to vector<16x128xbf16>
    %c2_715 = arith.constant 2 : index
    %c0_716 = arith.constant 0 : index
    %c0_717 = arith.constant 0 : index
    %762 = vector.load %arg5[%c2_715, %c0_716, %c0_717] : memref<4x128x128xbf16, #tpu.memory_space<vmem>>, vector<1x128x128xbf16>
    %763 = vector.shape_cast %762 : vector<1x128x128xbf16> to vector<128x128xbf16>
    %cst_718 = arith.constant dense<0.000000e+00> : vector<16x128xf32>
    %764 = tpu.matmul %761, %763, %cst_718 {dimension_numbers = #tpu.dot_dimension_numbers<[1], [0], [0], [1], [0, 0, 1, 1], [], []>} : vector<16x128xbf16>, vector<128x128xbf16>, vector<16x128xf32> -> vector<16x128xf32>
    %c2_719 = arith.constant 2 : index
    %c0_720 = arith.constant 0 : index
    %765 = vector.load %arg6[%c2_719, %c0_720] : memref<4x128xf32, #tpu.memory_space<vmem>>, vector<1x128xf32>
    %766 = vector.broadcast %765 : vector<1x128xf32> to vector<16x128xf32>
    %767 = arith.addf %764, %766 : vector<16x128xf32>
    %768 = arith.addf %767, %729 : vector<16x128xf32>
    %c1_721 = arith.constant 1 : index
    %c8_722 = arith.constant 8 : index
    %c0_723 = arith.constant 0 : index
    %769 = vector.load %arg10[%c1_721, %c8_722, %c0_723] : memref<2x48x128xf32, #tpu.memory_space<vmem>>, vector<1x16x128xf32>
    %770 = vector.shape_cast %769 : vector<1x16x128xf32> to vector<16x128xf32>
    %771 = vector.shape_cast %768 : vector<16x128xf32> to vector<1x16x128xf32>
    tpu.vector_store %arg10[%c1_721, %c8_722, %c0_723], %771 {strides = array<i32>} : memref<2x48x128xf32, #tpu.memory_space<vmem>>, vector<1x16x128xf32>,
    %c1_724 = arith.constant 1 : index
    %c8_725 = arith.constant 8 : index
    %c0_726 = arith.constant 0 : index
    %772 = vector.load %arg10[%c1_724, %c8_725, %c0_726] : memref<2x48x128xf32, #tpu.memory_space<vmem>>, vector<1x16x128xf32>
    %773 = vector.shape_cast %772 : vector<1x16x128xf32> to vector<16x128xf32>
    %c12_727 = arith.constant 12 : index
    %c0_728 = arith.constant 0 : index
    %c0_729 = arith.constant 0 : index
    %774 = vector.load %arg3[%c12_727, %c0_728, %c0_729] : memref<21x128x128xbf16, #tpu.memory_space<vmem>>, vector<1x128x128xbf16>
    %775 = vector.shape_cast %774 : vector<1x128x128xbf16> to vector<128x128xbf16>
    %c13_730 = arith.constant 13 : index
    %c0_731 = arith.constant 0 : index
    %c0_732 = arith.constant 0 : index
    %776 = vector.load %arg3[%c13_730, %c0_731, %c0_732] : memref<21x128x128xbf16, #tpu.memory_space<vmem>>, vector<1x128x128xbf16>
    %777 = vector.shape_cast %776 : vector<1x128x128xbf16> to vector<128x128xbf16>
    %c14_733 = arith.constant 14 : index
    %c0_734 = arith.constant 0 : index
    %c0_735 = arith.constant 0 : index
    %778 = vector.load %arg3[%c14_733, %c0_734, %c0_735] : memref<21x128x128xbf16, #tpu.memory_space<vmem>>, vector<1x128x128xbf16>
    %779 = vector.shape_cast %778 : vector<1x128x128xbf16> to vector<128x128xbf16>
    %c4_736 = arith.constant 4 : index
    %c0_737 = arith.constant 0 : index
    %780 = vector.load %arg4[%c4_736, %c0_737] : memref<7x128xf32, #tpu.memory_space<vmem>>, vector<1x128xf32>
    %c1_738 = arith.constant 1 : index
    %c7_739 = arith.constant 7 : index
    %c0_740 = arith.constant 0 : index
    %781 = vector.load %arg10[%c1_738, %c7_739, %c0_740] : memref<2x48x128xf32, #tpu.memory_space<vmem>>, vector<1x16x128xf32>
    %782 = vector.shape_cast %781 : vector<1x16x128xf32> to vector<16x128xf32>
    %cst_741 = arith.constant 0.000000e+00 : f32
    %783 = vector.broadcast %cst_741 : f32 to vector<16x128xf32>
    %784 = arith.maximumf %782, %783 : vector<16x128xf32>
    %785 = arith.truncf %784 : vector<16x128xf32> to vector<16x128xbf16>
    %cst_742 = arith.constant dense<0.000000e+00> : vector<16x128xf32>
    %786 = tpu.matmul %785, %775, %cst_742 {dimension_numbers = #tpu.dot_dimension_numbers<[1], [0], [0], [1], [0, 0, 1, 1], [], []>} : vector<16x128xbf16>, vector<128x128xbf16>, vector<16x128xf32> -> vector<16x128xf32>
    %c1_743 = arith.constant 1 : index
    %c8_744 = arith.constant 8 : index
    %c0_745 = arith.constant 0 : index
    %787 = vector.load %arg10[%c1_743, %c8_744, %c0_745] : memref<2x48x128xf32, #tpu.memory_space<vmem>>, vector<1x16x128xf32>
    %788 = vector.shape_cast %787 : vector<1x16x128xf32> to vector<16x128xf32>
    %cst_746 = arith.constant 0.000000e+00 : f32
    %789 = vector.broadcast %cst_746 : f32 to vector<16x128xf32>
    %790 = arith.maximumf %788, %789 : vector<16x128xf32>
    %791 = arith.truncf %790 : vector<16x128xf32> to vector<16x128xbf16>
    %cst_747 = arith.constant dense<0.000000e+00> : vector<16x128xf32>
    %792 = tpu.matmul %791, %777, %cst_747 {dimension_numbers = #tpu.dot_dimension_numbers<[1], [0], [0], [1], [0, 0, 1, 1], [], []>} : vector<16x128xbf16>, vector<128x128xbf16>, vector<16x128xf32> -> vector<16x128xf32>
    %793 = arith.addf %786, %792 : vector<16x128xf32>
    %c1_748 = arith.constant 1 : index
    %c9_749 = arith.constant 9 : index
    %c0_750 = arith.constant 0 : index
    %794 = vector.load %arg10[%c1_748, %c9_749, %c0_750] : memref<2x48x128xf32, #tpu.memory_space<vmem>>, vector<1x16x128xf32>
    %795 = vector.shape_cast %794 : vector<1x16x128xf32> to vector<16x128xf32>
    %cst_751 = arith.constant 0.000000e+00 : f32
    %796 = vector.broadcast %cst_751 : f32 to vector<16x128xf32>
    %797 = arith.maximumf %795, %796 : vector<16x128xf32>
    %798 = arith.truncf %797 : vector<16x128xf32> to vector<16x128xbf16>
    %cst_752 = arith.constant dense<0.000000e+00> : vector<16x128xf32>
    %799 = tpu.matmul %798, %779, %cst_752 {dimension_numbers = #tpu.dot_dimension_numbers<[1], [0], [0], [1], [0, 0, 1, 1], [], []>} : vector<16x128xbf16>, vector<128x128xbf16>, vector<16x128xf32> -> vector<16x128xf32>
    %800 = arith.addf %793, %799 : vector<16x128xf32>
    %801 = vector.broadcast %780 : vector<1x128xf32> to vector<16x128xf32>
    %802 = arith.addf %800, %801 : vector<16x128xf32>
    %cst_753 = arith.constant 0.000000e+00 : f32
    %803 = vector.broadcast %cst_753 : f32 to vector<16x128xf32>
    %804 = arith.maximumf %802, %803 : vector<16x128xf32>
    %805 = arith.truncf %804 : vector<16x128xf32> to vector<16x128xbf16>
    %c3_754 = arith.constant 3 : index
    %c0_755 = arith.constant 0 : index
    %c0_756 = arith.constant 0 : index
    %806 = vector.load %arg5[%c3_754, %c0_755, %c0_756] : memref<4x128x128xbf16, #tpu.memory_space<vmem>>, vector<1x128x128xbf16>
    %807 = vector.shape_cast %806 : vector<1x128x128xbf16> to vector<128x128xbf16>
    %cst_757 = arith.constant dense<0.000000e+00> : vector<16x128xf32>
    %808 = tpu.matmul %805, %807, %cst_757 {dimension_numbers = #tpu.dot_dimension_numbers<[1], [0], [0], [1], [0, 0, 1, 1], [], []>} : vector<16x128xbf16>, vector<128x128xbf16>, vector<16x128xf32> -> vector<16x128xf32>
    %c3_758 = arith.constant 3 : index
    %c0_759 = arith.constant 0 : index
    %809 = vector.load %arg6[%c3_758, %c0_759] : memref<4x128xf32, #tpu.memory_space<vmem>>, vector<1x128xf32>
    %810 = vector.broadcast %809 : vector<1x128xf32> to vector<16x128xf32>
    %811 = arith.addf %808, %810 : vector<16x128xf32>
    %812 = arith.addf %811, %773 : vector<16x128xf32>
    %c1_760 = arith.constant 1 : index
    %c8_761 = arith.constant 8 : index
    %c0_762 = arith.constant 0 : index
    %813 = vector.load %arg10[%c1_760, %c8_761, %c0_762] : memref<2x48x128xf32, #tpu.memory_space<vmem>>, vector<1x16x128xf32>
    %814 = vector.shape_cast %813 : vector<1x16x128xf32> to vector<16x128xf32>
    %815 = vector.shape_cast %812 : vector<16x128xf32> to vector<1x16x128xf32>
    tpu.vector_store %arg10[%c1_760, %c8_761, %c0_762], %815 {strides = array<i32>} : memref<2x48x128xf32, #tpu.memory_space<vmem>>, vector<1x16x128xf32>,
    %c1_763 = arith.constant 1 : index
    %c23_764 = arith.constant 23 : index
    %c0_765 = arith.constant 0 : index
    %816 = vector.load %arg10[%c1_763, %c23_764, %c0_765] : memref<2x48x128xf32, #tpu.memory_space<vmem>>, vector<1x1x128xf32>
    %817 = vector.shape_cast %816 : vector<1x1x128xf32> to vector<1x128xf32>
    %c1_766 = arith.constant 1 : index
    %c38_767 = arith.constant 38 : index
    %c0_768 = arith.constant 0 : index
    %818 = vector.load %arg10[%c1_766, %c38_767, %c0_768] : memref<2x48x128xf32, #tpu.memory_space<vmem>>, vector<1x1x128xf32>
    %819 = vector.shape_cast %818 : vector<1x1x128xf32> to vector<1x128xf32>
    %820 = vector.shape_cast %817 : vector<1x128xf32> to vector<1x1x128xf32>
    tpu.vector_store %arg10[%c1_766, %c38_767, %c0_768], %820 {strides = array<i32>} : memref<2x48x128xf32, #tpu.memory_space<vmem>>, vector<1x1x128xf32>,
    %c1_769 = arith.constant 1 : index
    %c39_770 = arith.constant 39 : index
    %c0_771 = arith.constant 0 : index
    %821 = vector.load %arg10[%c1_769, %c39_770, %c0_771] : memref<2x48x128xf32, #tpu.memory_space<vmem>>, vector<1x1x128xf32>
    %822 = vector.shape_cast %821 : vector<1x1x128xf32> to vector<1x128xf32>
    %823 = vector.shape_cast %817 : vector<1x128xf32> to vector<1x1x128xf32>
    tpu.vector_store %arg10[%c1_769, %c39_770, %c0_771], %823 {strides = array<i32>} : memref<2x48x128xf32, #tpu.memory_space<vmem>>, vector<1x1x128xf32>,
    %c1_772 = arith.constant 1 : index
    %c22_773 = arith.constant 22 : index
    %c0_774 = arith.constant 0 : index
    %824 = vector.load %arg10[%c1_772, %c22_773, %c0_774] : memref<2x48x128xf32, #tpu.memory_space<vmem>>, vector<1x1x128xf32>
    %825 = vector.shape_cast %824 : vector<1x1x128xf32> to vector<1x128xf32>
    %c1_775 = arith.constant 1 : index
    %c36_776 = arith.constant 36 : index
    %c0_777 = arith.constant 0 : index
    %826 = vector.load %arg10[%c1_775, %c36_776, %c0_777] : memref<2x48x128xf32, #tpu.memory_space<vmem>>, vector<1x1x128xf32>
    %827 = vector.shape_cast %826 : vector<1x1x128xf32> to vector<1x128xf32>
    %828 = vector.shape_cast %825 : vector<1x128xf32> to vector<1x1x128xf32>
    tpu.vector_store %arg10[%c1_775, %c36_776, %c0_777], %828 {strides = array<i32>} : memref<2x48x128xf32, #tpu.memory_space<vmem>>, vector<1x1x128xf32>,
    %c1_778 = arith.constant 1 : index
    %c37_779 = arith.constant 37 : index
    %c0_780 = arith.constant 0 : index
    %829 = vector.load %arg10[%c1_778, %c37_779, %c0_780] : memref<2x48x128xf32, #tpu.memory_space<vmem>>, vector<1x1x128xf32>
    %830 = vector.shape_cast %829 : vector<1x1x128xf32> to vector<1x128xf32>
    %831 = vector.shape_cast %825 : vector<1x128xf32> to vector<1x1x128xf32>
    tpu.vector_store %arg10[%c1_778, %c37_779, %c0_780], %831 {strides = array<i32>} : memref<2x48x128xf32, #tpu.memory_space<vmem>>, vector<1x1x128xf32>,
    %c1_781 = arith.constant 1 : index
    %c21_782 = arith.constant 21 : index
    %c0_783 = arith.constant 0 : index
    %832 = vector.load %arg10[%c1_781, %c21_782, %c0_783] : memref<2x48x128xf32, #tpu.memory_space<vmem>>, vector<1x1x128xf32>
    %833 = vector.shape_cast %832 : vector<1x1x128xf32> to vector<1x128xf32>
    %c1_784 = arith.constant 1 : index
    %c34_785 = arith.constant 34 : index
    %c0_786 = arith.constant 0 : index
    %834 = vector.load %arg10[%c1_784, %c34_785, %c0_786] : memref<2x48x128xf32, #tpu.memory_space<vmem>>, vector<1x1x128xf32>
    %835 = vector.shape_cast %834 : vector<1x1x128xf32> to vector<1x128xf32>
    %836 = vector.shape_cast %833 : vector<1x128xf32> to vector<1x1x128xf32>
    tpu.vector_store %arg10[%c1_784, %c34_785, %c0_786], %836 {strides = array<i32>} : memref<2x48x128xf32, #tpu.memory_space<vmem>>, vector<1x1x128xf32>,
    %c1_787 = arith.constant 1 : index
    %c35_788 = arith.constant 35 : index
    %c0_789 = arith.constant 0 : index
    %837 = vector.load %arg10[%c1_787, %c35_788, %c0_789] : memref<2x48x128xf32, #tpu.memory_space<vmem>>, vector<1x1x128xf32>
    %838 = vector.shape_cast %837 : vector<1x1x128xf32> to vector<1x128xf32>
    %839 = vector.shape_cast %833 : vector<1x128xf32> to vector<1x1x128xf32>
    tpu.vector_store %arg10[%c1_787, %c35_788, %c0_789], %839 {strides = array<i32>} : memref<2x48x128xf32, #tpu.memory_space<vmem>>, vector<1x1x128xf32>,
    %c1_790 = arith.constant 1 : index
    %c20_791 = arith.constant 20 : index
    %c0_792 = arith.constant 0 : index
    %840 = vector.load %arg10[%c1_790, %c20_791, %c0_792] : memref<2x48x128xf32, #tpu.memory_space<vmem>>, vector<1x1x128xf32>
    %841 = vector.shape_cast %840 : vector<1x1x128xf32> to vector<1x128xf32>
    %c1_793 = arith.constant 1 : index
    %c32_794 = arith.constant 32 : index
    %c0_795 = arith.constant 0 : index
    %842 = vector.load %arg10[%c1_793, %c32_794, %c0_795] : memref<2x48x128xf32, #tpu.memory_space<vmem>>, vector<1x1x128xf32>
    %843 = vector.shape_cast %842 : vector<1x1x128xf32> to vector<1x128xf32>
    %844 = vector.shape_cast %841 : vector<1x128xf32> to vector<1x1x128xf32>
    tpu.vector_store %arg10[%c1_793, %c32_794, %c0_795], %844 {strides = array<i32>} : memref<2x48x128xf32, #tpu.memory_space<vmem>>, vector<1x1x128xf32>,
    %c1_796 = arith.constant 1 : index
    %c33_797 = arith.constant 33 : index
    %c0_798 = arith.constant 0 : index
    %845 = vector.load %arg10[%c1_796, %c33_797, %c0_798] : memref<2x48x128xf32, #tpu.memory_space<vmem>>, vector<1x1x128xf32>
    %846 = vector.shape_cast %845 : vector<1x1x128xf32> to vector<1x128xf32>
    %847 = vector.shape_cast %841 : vector<1x128xf32> to vector<1x1x128xf32>
    tpu.vector_store %arg10[%c1_796, %c33_797, %c0_798], %847 {strides = array<i32>} : memref<2x48x128xf32, #tpu.memory_space<vmem>>, vector<1x1x128xf32>,
    %c1_799 = arith.constant 1 : index
    %c19_800 = arith.constant 19 : index
    %c0_801 = arith.constant 0 : index
    %848 = vector.load %arg10[%c1_799, %c19_800, %c0_801] : memref<2x48x128xf32, #tpu.memory_space<vmem>>, vector<1x1x128xf32>
    %849 = vector.shape_cast %848 : vector<1x1x128xf32> to vector<1x128xf32>
    %c1_802 = arith.constant 1 : index
    %c30_803 = arith.constant 30 : index
    %c0_804 = arith.constant 0 : index
    %850 = vector.load %arg10[%c1_802, %c30_803, %c0_804] : memref<2x48x128xf32, #tpu.memory_space<vmem>>, vector<1x1x128xf32>
    %851 = vector.shape_cast %850 : vector<1x1x128xf32> to vector<1x128xf32>
    %852 = vector.shape_cast %849 : vector<1x128xf32> to vector<1x1x128xf32>
    tpu.vector_store %arg10[%c1_802, %c30_803, %c0_804], %852 {strides = array<i32>} : memref<2x48x128xf32, #tpu.memory_space<vmem>>, vector<1x1x128xf32>,
    %c1_805 = arith.constant 1 : index
    %c31_806 = arith.constant 31 : index
    %c0_807 = arith.constant 0 : index
    %853 = vector.load %arg10[%c1_805, %c31_806, %c0_807] : memref<2x48x128xf32, #tpu.memory_space<vmem>>, vector<1x1x128xf32>
    %854 = vector.shape_cast %853 : vector<1x1x128xf32> to vector<1x128xf32>
    %855 = vector.shape_cast %849 : vector<1x128xf32> to vector<1x1x128xf32>
    tpu.vector_store %arg10[%c1_805, %c31_806, %c0_807], %855 {strides = array<i32>} : memref<2x48x128xf32, #tpu.memory_space<vmem>>, vector<1x1x128xf32>,
    %c1_808 = arith.constant 1 : index
    %c18_809 = arith.constant 18 : index
    %c0_810 = arith.constant 0 : index
    %856 = vector.load %arg10[%c1_808, %c18_809, %c0_810] : memref<2x48x128xf32, #tpu.memory_space<vmem>>, vector<1x1x128xf32>
    %857 = vector.shape_cast %856 : vector<1x1x128xf32> to vector<1x128xf32>
    %c1_811 = arith.constant 1 : index
    %c28_812 = arith.constant 28 : index
    %c0_813 = arith.constant 0 : index
    %858 = vector.load %arg10[%c1_811, %c28_812, %c0_813] : memref<2x48x128xf32, #tpu.memory_space<vmem>>, vector<1x1x128xf32>
    %859 = vector.shape_cast %858 : vector<1x1x128xf32> to vector<1x128xf32>
    %860 = vector.shape_cast %857 : vector<1x128xf32> to vector<1x1x128xf32>
    tpu.vector_store %arg10[%c1_811, %c28_812, %c0_813], %860 {strides = array<i32>} : memref<2x48x128xf32, #tpu.memory_space<vmem>>, vector<1x1x128xf32>,
    %c1_814 = arith.constant 1 : index
    %c29_815 = arith.constant 29 : index
    %c0_816 = arith.constant 0 : index
    %861 = vector.load %arg10[%c1_814, %c29_815, %c0_816] : memref<2x48x128xf32, #tpu.memory_space<vmem>>, vector<1x1x128xf32>
    %862 = vector.shape_cast %861 : vector<1x1x128xf32> to vector<1x128xf32>
    %863 = vector.shape_cast %857 : vector<1x128xf32> to vector<1x1x128xf32>
    tpu.vector_store %arg10[%c1_814, %c29_815, %c0_816], %863 {strides = array<i32>} : memref<2x48x128xf32, #tpu.memory_space<vmem>>, vector<1x1x128xf32>,
    %c1_817 = arith.constant 1 : index
    %c17_818 = arith.constant 17 : index
    %c0_819 = arith.constant 0 : index
    %864 = vector.load %arg10[%c1_817, %c17_818, %c0_819] : memref<2x48x128xf32, #tpu.memory_space<vmem>>, vector<1x1x128xf32>
    %865 = vector.shape_cast %864 : vector<1x1x128xf32> to vector<1x128xf32>
    %c1_820 = arith.constant 1 : index
    %c26_821 = arith.constant 26 : index
    %c0_822 = arith.constant 0 : index
    %866 = vector.load %arg10[%c1_820, %c26_821, %c0_822] : memref<2x48x128xf32, #tpu.memory_space<vmem>>, vector<1x1x128xf32>
    %867 = vector.shape_cast %866 : vector<1x1x128xf32> to vector<1x128xf32>
    %868 = vector.shape_cast %865 : vector<1x128xf32> to vector<1x1x128xf32>
    tpu.vector_store %arg10[%c1_820, %c26_821, %c0_822], %868 {strides = array<i32>} : memref<2x48x128xf32, #tpu.memory_space<vmem>>, vector<1x1x128xf32>,
    %c1_823 = arith.constant 1 : index
    %c27_824 = arith.constant 27 : index
    %c0_825 = arith.constant 0 : index
    %869 = vector.load %arg10[%c1_823, %c27_824, %c0_825] : memref<2x48x128xf32, #tpu.memory_space<vmem>>, vector<1x1x128xf32>
    %870 = vector.shape_cast %869 : vector<1x1x128xf32> to vector<1x128xf32>
    %871 = vector.shape_cast %865 : vector<1x128xf32> to vector<1x1x128xf32>
    tpu.vector_store %arg10[%c1_823, %c27_824, %c0_825], %871 {strides = array<i32>} : memref<2x48x128xf32, #tpu.memory_space<vmem>>, vector<1x1x128xf32>,
    %c1_826 = arith.constant 1 : index
    %c16_827 = arith.constant 16 : index
    %c0_828 = arith.constant 0 : index
    %872 = vector.load %arg10[%c1_826, %c16_827, %c0_828] : memref<2x48x128xf32, #tpu.memory_space<vmem>>, vector<1x1x128xf32>
    %873 = vector.shape_cast %872 : vector<1x1x128xf32> to vector<1x128xf32>
    %c1_829 = arith.constant 1 : index
    %c24_830 = arith.constant 24 : index
    %c0_831 = arith.constant 0 : index
    %874 = vector.load %arg10[%c1_829, %c24_830, %c0_831] : memref<2x48x128xf32, #tpu.memory_space<vmem>>, vector<1x1x128xf32>
    %875 = vector.shape_cast %874 : vector<1x1x128xf32> to vector<1x128xf32>
    %876 = vector.shape_cast %873 : vector<1x128xf32> to vector<1x1x128xf32>
    tpu.vector_store %arg10[%c1_829, %c24_830, %c0_831], %876 {strides = array<i32>} : memref<2x48x128xf32, #tpu.memory_space<vmem>>, vector<1x1x128xf32>,
    %c1_832 = arith.constant 1 : index
    %c25_833 = arith.constant 25 : index
    %c0_834 = arith.constant 0 : index
    %877 = vector.load %arg10[%c1_832, %c25_833, %c0_834] : memref<2x48x128xf32, #tpu.memory_space<vmem>>, vector<1x1x128xf32>
    %878 = vector.shape_cast %877 : vector<1x1x128xf32> to vector<1x128xf32>
    %879 = vector.shape_cast %873 : vector<1x128xf32> to vector<1x1x128xf32>
    tpu.vector_store %arg10[%c1_832, %c25_833, %c0_834], %879 {strides = array<i32>} : memref<2x48x128xf32, #tpu.memory_space<vmem>>, vector<1x1x128xf32>,
    %c1_835 = arith.constant 1 : index
    %c15_836 = arith.constant 15 : index
    %c0_837 = arith.constant 0 : index
    %880 = vector.load %arg10[%c1_835, %c15_836, %c0_837] : memref<2x48x128xf32, #tpu.memory_space<vmem>>, vector<1x1x128xf32>
    %881 = vector.shape_cast %880 : vector<1x1x128xf32> to vector<1x128xf32>
    %c1_838 = arith.constant 1 : index
    %c22_839 = arith.constant 22 : index
    %c0_840 = arith.constant 0 : index
    %882 = vector.load %arg10[%c1_838, %c22_839, %c0_840] : memref<2x48x128xf32, #tpu.memory_space<vmem>>, vector<1x1x128xf32>
    %883 = vector.shape_cast %882 : vector<1x1x128xf32> to vector<1x128xf32>
    %884 = vector.shape_cast %881 : vector<1x128xf32> to vector<1x1x128xf32>
    tpu.vector_store %arg10[%c1_838, %c22_839, %c0_840], %884 {strides = array<i32>} : memref<2x48x128xf32, #tpu.memory_space<vmem>>, vector<1x1x128xf32>,
    %c1_841 = arith.constant 1 : index
    %c23_842 = arith.constant 23 : index
    %c0_843 = arith.constant 0 : index
    %885 = vector.load %arg10[%c1_841, %c23_842, %c0_843] : memref<2x48x128xf32, #tpu.memory_space<vmem>>, vector<1x1x128xf32>
    %886 = vector.shape_cast %885 : vector<1x1x128xf32> to vector<1x128xf32>
    %887 = vector.shape_cast %881 : vector<1x128xf32> to vector<1x1x128xf32>
    tpu.vector_store %arg10[%c1_841, %c23_842, %c0_843], %887 {strides = array<i32>} : memref<2x48x128xf32, #tpu.memory_space<vmem>>, vector<1x1x128xf32>,
    %c1_844 = arith.constant 1 : index
    %c14_845 = arith.constant 14 : index
    %c0_846 = arith.constant 0 : index
    %888 = vector.load %arg10[%c1_844, %c14_845, %c0_846] : memref<2x48x128xf32, #tpu.memory_space<vmem>>, vector<1x1x128xf32>
    %889 = vector.shape_cast %888 : vector<1x1x128xf32> to vector<1x128xf32>
    %c1_847 = arith.constant 1 : index
    %c20_848 = arith.constant 20 : index
    %c0_849 = arith.constant 0 : index
    %890 = vector.load %arg10[%c1_847, %c20_848, %c0_849] : memref<2x48x128xf32, #tpu.memory_space<vmem>>, vector<1x1x128xf32>
    %891 = vector.shape_cast %890 : vector<1x1x128xf32> to vector<1x128xf32>
    %892 = vector.shape_cast %889 : vector<1x128xf32> to vector<1x1x128xf32>
    tpu.vector_store %arg10[%c1_847, %c20_848, %c0_849], %892 {strides = array<i32>} : memref<2x48x128xf32, #tpu.memory_space<vmem>>, vector<1x1x128xf32>,
    %c1_850 = arith.constant 1 : index
    %c21_851 = arith.constant 21 : index
    %c0_852 = arith.constant 0 : index
    %893 = vector.load %arg10[%c1_850, %c21_851, %c0_852] : memref<2x48x128xf32, #tpu.memory_space<vmem>>, vector<1x1x128xf32>
    %894 = vector.shape_cast %893 : vector<1x1x128xf32> to vector<1x128xf32>
    %895 = vector.shape_cast %889 : vector<1x128xf32> to vector<1x1x128xf32>
    tpu.vector_store %arg10[%c1_850, %c21_851, %c0_852], %895 {strides = array<i32>} : memref<2x48x128xf32, #tpu.memory_space<vmem>>, vector<1x1x128xf32>,
    %c1_853 = arith.constant 1 : index
    %c13_854 = arith.constant 13 : index
    %c0_855 = arith.constant 0 : index
    %896 = vector.load %arg10[%c1_853, %c13_854, %c0_855] : memref<2x48x128xf32, #tpu.memory_space<vmem>>, vector<1x1x128xf32>
    %897 = vector.shape_cast %896 : vector<1x1x128xf32> to vector<1x128xf32>
    %c1_856 = arith.constant 1 : index
    %c18_857 = arith.constant 18 : index
    %c0_858 = arith.constant 0 : index
    %898 = vector.load %arg10[%c1_856, %c18_857, %c0_858] : memref<2x48x128xf32, #tpu.memory_space<vmem>>, vector<1x1x128xf32>
    %899 = vector.shape_cast %898 : vector<1x1x128xf32> to vector<1x128xf32>
    %900 = vector.shape_cast %897 : vector<1x128xf32> to vector<1x1x128xf32>
    tpu.vector_store %arg10[%c1_856, %c18_857, %c0_858], %900 {strides = array<i32>} : memref<2x48x128xf32, #tpu.memory_space<vmem>>, vector<1x1x128xf32>,
    %c1_859 = arith.constant 1 : index
    %c19_860 = arith.constant 19 : index
    %c0_861 = arith.constant 0 : index
    %901 = vector.load %arg10[%c1_859, %c19_860, %c0_861] : memref<2x48x128xf32, #tpu.memory_space<vmem>>, vector<1x1x128xf32>
    %902 = vector.shape_cast %901 : vector<1x1x128xf32> to vector<1x128xf32>
    %903 = vector.shape_cast %897 : vector<1x128xf32> to vector<1x1x128xf32>
    tpu.vector_store %arg10[%c1_859, %c19_860, %c0_861], %903 {strides = array<i32>} : memref<2x48x128xf32, #tpu.memory_space<vmem>>, vector<1x1x128xf32>,
    %c1_862 = arith.constant 1 : index
    %c12_863 = arith.constant 12 : index
    %c0_864 = arith.constant 0 : index
    %904 = vector.load %arg10[%c1_862, %c12_863, %c0_864] : memref<2x48x128xf32, #tpu.memory_space<vmem>>, vector<1x1x128xf32>
    %905 = vector.shape_cast %904 : vector<1x1x128xf32> to vector<1x128xf32>
    %c1_865 = arith.constant 1 : index
    %c16_866 = arith.constant 16 : index
    %c0_867 = arith.constant 0 : index
    %906 = vector.load %arg10[%c1_865, %c16_866, %c0_867] : memref<2x48x128xf32, #tpu.memory_space<vmem>>, vector<1x1x128xf32>
    %907 = vector.shape_cast %906 : vector<1x1x128xf32> to vector<1x128xf32>
    %908 = vector.shape_cast %905 : vector<1x128xf32> to vector<1x1x128xf32>
    tpu.vector_store %arg10[%c1_865, %c16_866, %c0_867], %908 {strides = array<i32>} : memref<2x48x128xf32, #tpu.memory_space<vmem>>, vector<1x1x128xf32>,
    %c1_868 = arith.constant 1 : index
    %c17_869 = arith.constant 17 : index
    %c0_870 = arith.constant 0 : index
    %909 = vector.load %arg10[%c1_868, %c17_869, %c0_870] : memref<2x48x128xf32, #tpu.memory_space<vmem>>, vector<1x1x128xf32>
    %910 = vector.shape_cast %909 : vector<1x1x128xf32> to vector<1x128xf32>
    %911 = vector.shape_cast %905 : vector<1x128xf32> to vector<1x1x128xf32>
    tpu.vector_store %arg10[%c1_868, %c17_869, %c0_870], %911 {strides = array<i32>} : memref<2x48x128xf32, #tpu.memory_space<vmem>>, vector<1x1x128xf32>,
    %c1_871 = arith.constant 1 : index
    %c11_872 = arith.constant 11 : index
    %c0_873 = arith.constant 0 : index
    %912 = vector.load %arg10[%c1_871, %c11_872, %c0_873] : memref<2x48x128xf32, #tpu.memory_space<vmem>>, vector<1x1x128xf32>
    %913 = vector.shape_cast %912 : vector<1x1x128xf32> to vector<1x128xf32>
    %c1_874 = arith.constant 1 : index
    %c14_875 = arith.constant 14 : index
    %c0_876 = arith.constant 0 : index
    %914 = vector.load %arg10[%c1_874, %c14_875, %c0_876] : memref<2x48x128xf32, #tpu.memory_space<vmem>>, vector<1x1x128xf32>
    %915 = vector.shape_cast %914 : vector<1x1x128xf32> to vector<1x128xf32>
    %916 = vector.shape_cast %913 : vector<1x128xf32> to vector<1x1x128xf32>
    tpu.vector_store %arg10[%c1_874, %c14_875, %c0_876], %916 {strides = array<i32>} : memref<2x48x128xf32, #tpu.memory_space<vmem>>, vector<1x1x128xf32>,
    %c1_877 = arith.constant 1 : index
    %c15_878 = arith.constant 15 : index
    %c0_879 = arith.constant 0 : index
    %917 = vector.load %arg10[%c1_877, %c15_878, %c0_879] : memref<2x48x128xf32, #tpu.memory_space<vmem>>, vector<1x1x128xf32>
    %918 = vector.shape_cast %917 : vector<1x1x128xf32> to vector<1x128xf32>
    %919 = vector.shape_cast %913 : vector<1x128xf32> to vector<1x1x128xf32>
    tpu.vector_store %arg10[%c1_877, %c15_878, %c0_879], %919 {strides = array<i32>} : memref<2x48x128xf32, #tpu.memory_space<vmem>>, vector<1x1x128xf32>,
    %c1_880 = arith.constant 1 : index
    %c10_881 = arith.constant 10 : index
    %c0_882 = arith.constant 0 : index
    %920 = vector.load %arg10[%c1_880, %c10_881, %c0_882] : memref<2x48x128xf32, #tpu.memory_space<vmem>>, vector<1x1x128xf32>
    %921 = vector.shape_cast %920 : vector<1x1x128xf32> to vector<1x128xf32>
    %c1_883 = arith.constant 1 : index
    %c12_884 = arith.constant 12 : index
    %c0_885 = arith.constant 0 : index
    %922 = vector.load %arg10[%c1_883, %c12_884, %c0_885] : memref<2x48x128xf32, #tpu.memory_space<vmem>>, vector<1x1x128xf32>
    %923 = vector.shape_cast %922 : vector<1x1x128xf32> to vector<1x128xf32>
    %924 = vector.shape_cast %921 : vector<1x128xf32> to vector<1x1x128xf32>
    tpu.vector_store %arg10[%c1_883, %c12_884, %c0_885], %924 {strides = array<i32>} : memref<2x48x128xf32, #tpu.memory_space<vmem>>, vector<1x1x128xf32>,
    %c1_886 = arith.constant 1 : index
    %c13_887 = arith.constant 13 : index
    %c0_888 = arith.constant 0 : index
    %925 = vector.load %arg10[%c1_886, %c13_887, %c0_888] : memref<2x48x128xf32, #tpu.memory_space<vmem>>, vector<1x1x128xf32>
    %926 = vector.shape_cast %925 : vector<1x1x128xf32> to vector<1x128xf32>
    %927 = vector.shape_cast %921 : vector<1x128xf32> to vector<1x1x128xf32>
    tpu.vector_store %arg10[%c1_886, %c13_887, %c0_888], %927 {strides = array<i32>} : memref<2x48x128xf32, #tpu.memory_space<vmem>>, vector<1x1x128xf32>,
    %c1_889 = arith.constant 1 : index
    %c9_890 = arith.constant 9 : index
    %c0_891 = arith.constant 0 : index
    %928 = vector.load %arg10[%c1_889, %c9_890, %c0_891] : memref<2x48x128xf32, #tpu.memory_space<vmem>>, vector<1x1x128xf32>
    %929 = vector.shape_cast %928 : vector<1x1x128xf32> to vector<1x128xf32>
    %c1_892 = arith.constant 1 : index
    %c10_893 = arith.constant 10 : index
    %c0_894 = arith.constant 0 : index
    %930 = vector.load %arg10[%c1_892, %c10_893, %c0_894] : memref<2x48x128xf32, #tpu.memory_space<vmem>>, vector<1x1x128xf32>
    %931 = vector.shape_cast %930 : vector<1x1x128xf32> to vector<1x128xf32>
    %932 = vector.shape_cast %929 : vector<1x128xf32> to vector<1x1x128xf32>
    tpu.vector_store %arg10[%c1_892, %c10_893, %c0_894], %932 {strides = array<i32>} : memref<2x48x128xf32, #tpu.memory_space<vmem>>, vector<1x1x128xf32>,
    %c1_895 = arith.constant 1 : index
    %c11_896 = arith.constant 11 : index
    %c0_897 = arith.constant 0 : index
    %933 = vector.load %arg10[%c1_895, %c11_896, %c0_897] : memref<2x48x128xf32, #tpu.memory_space<vmem>>, vector<1x1x128xf32>
    %934 = vector.shape_cast %933 : vector<1x1x128xf32> to vector<1x128xf32>
    %935 = vector.shape_cast %929 : vector<1x128xf32> to vector<1x1x128xf32>
    tpu.vector_store %arg10[%c1_895, %c11_896, %c0_897], %935 {strides = array<i32>} : memref<2x48x128xf32, #tpu.memory_space<vmem>>, vector<1x1x128xf32>,
    %c1_898 = arith.constant 1 : index
    %c8_899 = arith.constant 8 : index
    %c0_900 = arith.constant 0 : index
    %936 = vector.load %arg10[%c1_898, %c8_899, %c0_900] : memref<2x48x128xf32, #tpu.memory_space<vmem>>, vector<1x1x128xf32>
    %937 = vector.shape_cast %936 : vector<1x1x128xf32> to vector<1x128xf32>
    %c1_901 = arith.constant 1 : index
    %c8_902 = arith.constant 8 : index
    %c0_903 = arith.constant 0 : index
    %938 = vector.load %arg10[%c1_901, %c8_902, %c0_903] : memref<2x48x128xf32, #tpu.memory_space<vmem>>, vector<1x1x128xf32>
    %939 = vector.shape_cast %938 : vector<1x1x128xf32> to vector<1x128xf32>
    %940 = vector.shape_cast %937 : vector<1x128xf32> to vector<1x1x128xf32>
    tpu.vector_store %arg10[%c1_901, %c8_902, %c0_903], %940 {strides = array<i32>} : memref<2x48x128xf32, #tpu.memory_space<vmem>>, vector<1x1x128xf32>,
    %c1_904 = arith.constant 1 : index
    %c9_905 = arith.constant 9 : index
    %c0_906 = arith.constant 0 : index
    %941 = vector.load %arg10[%c1_904, %c9_905, %c0_906] : memref<2x48x128xf32, #tpu.memory_space<vmem>>, vector<1x1x128xf32>
    %942 = vector.shape_cast %941 : vector<1x1x128xf32> to vector<1x128xf32>
    %943 = vector.shape_cast %937 : vector<1x128xf32> to vector<1x1x128xf32>
    tpu.vector_store %arg10[%c1_904, %c9_905, %c0_906], %943 {strides = array<i32>} : memref<2x48x128xf32, #tpu.memory_space<vmem>>, vector<1x1x128xf32>,
    %c15_907 = arith.constant 15 : index
    %c0_908 = arith.constant 0 : index
    %c0_909 = arith.constant 0 : index
    %944 = vector.load %arg3[%c15_907, %c0_908, %c0_909] : memref<21x128x128xbf16, #tpu.memory_space<vmem>>, vector<1x128x128xbf16>
    %945 = vector.shape_cast %944 : vector<1x128x128xbf16> to vector<128x128xbf16>
    %c16_910 = arith.constant 16 : index
    %c0_911 = arith.constant 0 : index
    %c0_912 = arith.constant 0 : index
    %946 = vector.load %arg3[%c16_910, %c0_911, %c0_912] : memref<21x128x128xbf16, #tpu.memory_space<vmem>>, vector<1x128x128xbf16>
    %947 = vector.shape_cast %946 : vector<1x128x128xbf16> to vector<128x128xbf16>
    %c17_913 = arith.constant 17 : index
    %c0_914 = arith.constant 0 : index
    %c0_915 = arith.constant 0 : index
    %948 = vector.load %arg3[%c17_913, %c0_914, %c0_915] : memref<21x128x128xbf16, #tpu.memory_space<vmem>>, vector<1x128x128xbf16>
    %949 = vector.shape_cast %948 : vector<1x128x128xbf16> to vector<128x128xbf16>
    %c5_916 = arith.constant 5 : index
    %c0_917 = arith.constant 0 : index
    %950 = vector.load %arg4[%c5_916, %c0_917] : memref<7x128xf32, #tpu.memory_space<vmem>>, vector<1x128xf32>
    %c1_918 = arith.constant 1 : index
    %c7_919 = arith.constant 7 : index
    %c0_920 = arith.constant 0 : index
    %951 = vector.load %arg10[%c1_918, %c7_919, %c0_920] : memref<2x48x128xf32, #tpu.memory_space<vmem>>, vector<1x32x128xf32>
    %952 = vector.shape_cast %951 : vector<1x32x128xf32> to vector<32x128xf32>
    %953 = arith.truncf %952 : vector<32x128xf32> to vector<32x128xbf16>
    %cst_921 = arith.constant dense<0.000000e+00> : vector<32x128xf32>
    %954 = tpu.matmul %953, %945, %cst_921 {dimension_numbers = #tpu.dot_dimension_numbers<[1], [0], [0], [1], [0, 0, 1, 1], [], []>} : vector<32x128xbf16>, vector<128x128xbf16>, vector<32x128xf32> -> vector<32x128xf32>
    %c1_922 = arith.constant 1 : index
    %c8_923 = arith.constant 8 : index
    %c0_924 = arith.constant 0 : index
    %955 = vector.load %arg10[%c1_922, %c8_923, %c0_924] : memref<2x48x128xf32, #tpu.memory_space<vmem>>, vector<1x32x128xf32>
    %956 = vector.shape_cast %955 : vector<1x32x128xf32> to vector<32x128xf32>
    %957 = arith.truncf %956 : vector<32x128xf32> to vector<32x128xbf16>
    %cst_925 = arith.constant dense<0.000000e+00> : vector<32x128xf32>
    %958 = tpu.matmul %957, %947, %cst_925 {dimension_numbers = #tpu.dot_dimension_numbers<[1], [0], [0], [1], [0, 0, 1, 1], [], []>} : vector<32x128xbf16>, vector<128x128xbf16>, vector<32x128xf32> -> vector<32x128xf32>
    %959 = arith.addf %954, %958 : vector<32x128xf32>
    %c1_926 = arith.constant 1 : index
    %c9_927 = arith.constant 9 : index
    %c0_928 = arith.constant 0 : index
    %960 = vector.load %arg10[%c1_926, %c9_927, %c0_928] : memref<2x48x128xf32, #tpu.memory_space<vmem>>, vector<1x32x128xf32>
    %961 = vector.shape_cast %960 : vector<1x32x128xf32> to vector<32x128xf32>
    %962 = arith.truncf %961 : vector<32x128xf32> to vector<32x128xbf16>
    %cst_929 = arith.constant dense<0.000000e+00> : vector<32x128xf32>
    %963 = tpu.matmul %962, %949, %cst_929 {dimension_numbers = #tpu.dot_dimension_numbers<[1], [0], [0], [1], [0, 0, 1, 1], [], []>} : vector<32x128xbf16>, vector<128x128xbf16>, vector<32x128xf32> -> vector<32x128xf32>
    %964 = arith.addf %959, %963 : vector<32x128xf32>
    %965 = vector.broadcast %950 : vector<1x128xf32> to vector<32x128xf32>
    %966 = arith.addf %964, %965 : vector<32x128xf32>
    %c1_930 = arith.constant 1 : index
    %c8_931 = arith.constant 8 : index
    %c0_932 = arith.constant 0 : index
    %967 = vector.load %arg10[%c1_930, %c8_931, %c0_932] : memref<2x48x128xf32, #tpu.memory_space<vmem>>, vector<1x32x128xf32>
    %968 = vector.shape_cast %967 : vector<1x32x128xf32> to vector<32x128xf32>
    %969 = vector.shape_cast %966 : vector<32x128xf32> to vector<1x32x128xf32>
    tpu.vector_store %arg10[%c1_930, %c8_931, %c0_932], %969 {strides = array<i32>} : memref<2x48x128xf32, #tpu.memory_space<vmem>>, vector<1x32x128xf32>,
    %c18_933 = arith.constant 18 : index
    %c0_934 = arith.constant 0 : index
    %c0_935 = arith.constant 0 : index
    %970 = vector.load %arg3[%c18_933, %c0_934, %c0_935] : memref<21x128x128xbf16, #tpu.memory_space<vmem>>, vector<1x128x128xbf16>
    %971 = vector.shape_cast %970 : vector<1x128x128xbf16> to vector<128x128xbf16>
    %c19_936 = arith.constant 19 : index
    %c0_937 = arith.constant 0 : index
    %c0_938 = arith.constant 0 : index
    %972 = vector.load %arg3[%c19_936, %c0_937, %c0_938] : memref<21x128x128xbf16, #tpu.memory_space<vmem>>, vector<1x128x128xbf16>
    %973 = vector.shape_cast %972 : vector<1x128x128xbf16> to vector<128x128xbf16>
    %c20_939 = arith.constant 20 : index
    %c0_940 = arith.constant 0 : index
    %c0_941 = arith.constant 0 : index
    %974 = vector.load %arg3[%c20_939, %c0_940, %c0_941] : memref<21x128x128xbf16, #tpu.memory_space<vmem>>, vector<1x128x128xbf16>
    %975 = vector.shape_cast %974 : vector<1x128x128xbf16> to vector<128x128xbf16>
    %c6_942 = arith.constant 6 : index
    %c0_943 = arith.constant 0 : index
    %976 = vector.load %arg4[%c6_942, %c0_943] : memref<7x128xf32, #tpu.memory_space<vmem>>, vector<1x128xf32>
    %c1_944 = arith.constant 1 : index
    %c7_945 = arith.constant 7 : index
    %c0_946 = arith.constant 0 : index
    %977 = vector.load %arg10[%c1_944, %c7_945, %c0_946] : memref<2x48x128xf32, #tpu.memory_space<vmem>>, vector<1x32x128xf32>
    %978 = vector.shape_cast %977 : vector<1x32x128xf32> to vector<32x128xf32>
    %979 = arith.truncf %978 : vector<32x128xf32> to vector<32x128xbf16>
    %cst_947 = arith.constant dense<0.000000e+00> : vector<32x128xf32>
    %980 = tpu.matmul %979, %971, %cst_947 {dimension_numbers = #tpu.dot_dimension_numbers<[1], [0], [0], [1], [0, 0, 1, 1], [], []>} : vector<32x128xbf16>, vector<128x128xbf16>, vector<32x128xf32> -> vector<32x128xf32>
    %c1_948 = arith.constant 1 : index
    %c8_949 = arith.constant 8 : index
    %c0_950 = arith.constant 0 : index
    %981 = vector.load %arg10[%c1_948, %c8_949, %c0_950] : memref<2x48x128xf32, #tpu.memory_space<vmem>>, vector<1x32x128xf32>
    %982 = vector.shape_cast %981 : vector<1x32x128xf32> to vector<32x128xf32>
    %983 = arith.truncf %982 : vector<32x128xf32> to vector<32x128xbf16>
    %cst_951 = arith.constant dense<0.000000e+00> : vector<32x128xf32>
    %984 = tpu.matmul %983, %973, %cst_951 {dimension_numbers = #tpu.dot_dimension_numbers<[1], [0], [0], [1], [0, 0, 1, 1], [], []>} : vector<32x128xbf16>, vector<128x128xbf16>, vector<32x128xf32> -> vector<32x128xf32>
    %985 = arith.addf %980, %984 : vector<32x128xf32>
    %c1_952 = arith.constant 1 : index
    %c9_953 = arith.constant 9 : index
    %c0_954 = arith.constant 0 : index
    %986 = vector.load %arg10[%c1_952, %c9_953, %c0_954] : memref<2x48x128xf32, #tpu.memory_space<vmem>>, vector<1x32x128xf32>
    %987 = vector.shape_cast %986 : vector<1x32x128xf32> to vector<32x128xf32>
    %988 = arith.truncf %987 : vector<32x128xf32> to vector<32x128xbf16>
    %cst_955 = arith.constant dense<0.000000e+00> : vector<32x128xf32>
    %989 = tpu.matmul %988, %975, %cst_955 {dimension_numbers = #tpu.dot_dimension_numbers<[1], [0], [0], [1], [0, 0, 1, 1], [], []>} : vector<32x128xbf16>, vector<128x128xbf16>, vector<32x128xf32> -> vector<32x128xf32>
    %990 = arith.addf %985, %989 : vector<32x128xf32>
    %991 = vector.broadcast %976 : vector<1x128xf32> to vector<32x128xf32>
    %992 = arith.addf %990, %991 : vector<32x128xf32>
    %cst_956 = arith.constant 0.000000e+00 : f32
    %993 = vector.broadcast %cst_956 : f32 to vector<32x128xf32>
    %994 = arith.maximumf %992, %993 : vector<32x128xf32>
    %c1_957 = arith.constant 1 : index
    %c8_958 = arith.constant 8 : index
    %c0_959 = arith.constant 0 : index
    %995 = vector.load %arg10[%c1_957, %c8_958, %c0_959] : memref<2x48x128xf32, #tpu.memory_space<vmem>>, vector<1x32x128xf32>
    %996 = vector.shape_cast %995 : vector<1x32x128xf32> to vector<32x128xf32>
    %997 = vector.shape_cast %994 : vector<32x128xf32> to vector<1x32x128xf32>
    tpu.vector_store %arg10[%c1_957, %c8_958, %c0_959], %997 {strides = array<i32>} : memref<2x48x128xf32, #tpu.memory_space<vmem>>, vector<1x32x128xf32>,
    %c0_960 = arith.constant 0 : index
    %c0_961 = arith.constant 0 : index
    %998 = vector.load %arg8[%c0_960, %c0_961] : memref<1x128xf32, #tpu.memory_space<vmem>>, vector<1x128xf32>
    %c1_962 = arith.constant 1 : index
    %c7_963 = arith.constant 7 : index
    %c0_964 = arith.constant 0 : index
    %999 = vector.load %arg10[%c1_962, %c7_963, %c0_964] : memref<2x48x128xf32, #tpu.memory_space<vmem>>, vector<1x32x128xf32>
    %1000 = vector.shape_cast %999 : vector<1x32x128xf32> to vector<32x128xf32>
    %1001 = arith.truncf %1000 : vector<32x128xf32> to vector<32x128xbf16>
    %cst_965 = arith.constant dense<0.000000e+00> : vector<32x128xf32>
    %1002 = tpu.matmul %1001, %7, %cst_965 {dimension_numbers = #tpu.dot_dimension_numbers<[1], [0], [0], [1], [0, 0, 1, 1], [], []>} : vector<32x128xbf16>, vector<128x128xbf16>, vector<32x128xf32> -> vector<32x128xf32>
    %c1_966 = arith.constant 1 : index
    %c8_967 = arith.constant 8 : index
    %c0_968 = arith.constant 0 : index
    %1003 = vector.load %arg10[%c1_966, %c8_967, %c0_968] : memref<2x48x128xf32, #tpu.memory_space<vmem>>, vector<1x32x128xf32>
    %1004 = vector.shape_cast %1003 : vector<1x32x128xf32> to vector<32x128xf32>
    %1005 = arith.truncf %1004 : vector<32x128xf32> to vector<32x128xbf16>
    %cst_969 = arith.constant dense<0.000000e+00> : vector<32x128xf32>
    %1006 = tpu.matmul %1005, %9, %cst_969 {dimension_numbers = #tpu.dot_dimension_numbers<[1], [0], [0], [1], [0, 0, 1, 1], [], []>} : vector<32x128xbf16>, vector<128x128xbf16>, vector<32x128xf32> -> vector<32x128xf32>
    %1007 = arith.addf %1002, %1006 : vector<32x128xf32>
    %c1_970 = arith.constant 1 : index
    %c9_971 = arith.constant 9 : index
    %c0_972 = arith.constant 0 : index
    %1008 = vector.load %arg10[%c1_970, %c9_971, %c0_972] : memref<2x48x128xf32, #tpu.memory_space<vmem>>, vector<1x32x128xf32>
    %1009 = vector.shape_cast %1008 : vector<1x32x128xf32> to vector<32x128xf32>
    %1010 = arith.truncf %1009 : vector<32x128xf32> to vector<32x128xbf16>
    %cst_973 = arith.constant dense<0.000000e+00> : vector<32x128xf32>
    %1011 = tpu.matmul %1010, %11, %cst_973 {dimension_numbers = #tpu.dot_dimension_numbers<[1], [0], [0], [1], [0, 0, 1, 1], [], []>} : vector<32x128xbf16>, vector<128x128xbf16>, vector<32x128xf32> -> vector<32x128xf32>
    %1012 = arith.addf %1007, %1011 : vector<32x128xf32>
    %1013 = vector.broadcast %998 : vector<1x128xf32> to vector<32x128xf32>
    %1014 = arith.addf %1012, %1013 : vector<32x128xf32>
    %c1_974 = arith.constant 1 : index
    %c0_975 = arith.constant 0 : index
    %c0_976 = arith.constant 0 : index
    %1015 = vector.load %arg9[%c1_974, %c0_975, %c0_976] : memref<2x32x128xf32, #tpu.memory_space<vmem>>, vector<1x32x128xf32>
    %1016 = vector.shape_cast %1015 : vector<1x32x128xf32> to vector<32x128xf32>
    %1017 = vector.shape_cast %1014 : vector<32x128xf32> to vector<1x32x128xf32>
    tpu.vector_store %arg9[%c1_974, %c0_975, %c0_976], %1017 {strides = array<i32>} : memref<2x32x128xf32, #tpu.memory_space<vmem>>, vector<1x32x128xf32>,
    return
  }
}

</mosaic_0001>

<llo_original>
// kernel: tpu_custom_call.1
$region0: #{tpu_custom_call.1}
  #allocation0 [shape = 'u32[]', space=smem, size = 0x4, offset = 0x4, fixed_abs, tag = 'smem constant byte address 0x4 - core index']
  #allocation1 [shape = 'u32[144,128]{1,0:T(1,128)}', space=vmem, size = 0x12000, scoped, tag = 'internal scratch']
  #allocation2 [shape = 'f32[2,48,128]{2,1,0:T(8,128)}', space=vmem, size = 0xc000, scoped, tag = 'scratch operand']
  %s0 = inlined_call_operand.hbm [shape: f32[2,8,128], index: 0, kind: input, shape index: {}]
  %s1 = inlined_call_operand.hbm [shape: bf16[3,128,128], index: 1, kind: input, shape index: {}]
  %s2 = inlined_call_operand.vmem [shape: f32[1,128], index: 2, kind: input, shape index: {}]
  %s3 = inlined_call_operand.hbm [shape: bf16[21,128,128], index: 3, kind: input, shape index: {}]
  %s4 = inlined_call_operand.vmem [shape: f32[7,128], index: 4, kind: input, shape index: {}]
  %s5 = inlined_call_operand.hbm [shape: bf16[4,128,128], index: 5, kind: input, shape index: {}]
  %s6 = inlined_call_operand.vmem [shape: f32[4,128], index: 6, kind: input, shape index: {}]
  %s7 = inlined_call_operand.hbm [shape: bf16[3,128,128], index: 7, kind: input, shape index: {}]
  %s8 = inlined_call_operand.vmem [shape: f32[1,128], index: 8, kind: input, shape index: {}]
  %s9 = inlined_call_operand.hbm [shape: f32[2,32,128], index: 9, kind: output, shape index: {}]
  %s10 = sld [smem:[#allocation0]]
  $region66: #{tpu_custom_call.1} parent=0
    _
  %s12 = ssub.s32 1, %s10
  %s13 = scalar_select 0, %s12, %s10
  $region1: #{tpu_custom_call.1} parent=0
    #allocation3 [shape = 'u8[8192]{0}', space=vmem, size = 0x2000, scoped, tag = 'input window, operand 0, single buffered']
    #allocation4 [shape = 's32[1]{0}', space=sflag, size = 0x4, scoped, tag = 'scoped memory for tpu_custom_call.1']
    #allocation5 [shape = 's32[1]{0}', space=sflag, size = 0x4, scoped, tag = 'scoped memory for tpu_custom_call.1']
    #allocation6 [shape = 'u8[98304]{0}', space=vmem, size = 0x18000, scoped, tag = 'input window, operand 1, single buffered']
    #allocation7 [shape = 's32[1]{0}', space=sflag, size = 0x4, scoped, tag = 'scoped memory for tpu_custom_call.1']
    #allocation8 [shape = 'u8[688128]{0}', space=vmem, size = 0xa8000, scoped, tag = 'input window, operand 3, single buffered']
    #allocation9 [shape = 'u8[131072]{0}', space=vmem, size = 0x20000, scoped, tag = 'input window, operand 5, single buffered']
    #allocation10 [shape = 's32[1]{0}', space=sflag, size = 0x4, scoped, tag = 'scoped memory for tpu_custom_call.1']
    #allocation11 [shape = 'u8[98304]{0}', space=vmem, size = 0x18000, scoped, tag = 'input window, operand 7, single buffered']
    #allocation12 [shape = 'u8[32768]{0}', space=vmem, size = 0x8000, scoped, tag = 'output window, operand 0, single buffered']
    %14 = vsyncpa [#allocation4], 0
    %15 = vsyncpa [#allocation7], 0
    %16 = vsyncpa [#allocation10], 0
    %17 = vsyncpa [#allocation5], 0
    // Predicated region
    $region2: #{tpu_custom_call.1} parent=1 // pred_check
      _
    $region3: #{tpu_custom_call.1} parent=1 // pred_check_branch
      %19 = sbr.rel (0) target = $region5
    $region4: #{tpu_custom_call.1} parent=1 // pred_region
      %s21 = ssub.s32 256, 256
      %22 = vsyncadd [#allocation4], %s21
      %s23 = sshll.u32 [#allocation3], 4
      %s24 = int_to_ptr.vmem [resolvable:$true] %s23
      %29 = dma.hbm_to_vmem [thread:$0]  %s0, 256, %s24, [#allocation4], 128, 128, 8
    $region5: #{tpu_custom_call.1} parent=1 // pred_fallthru
      _
    // Predicated region
    $region6: #{tpu_custom_call.1} parent=1 // pred_check
      _
    $region7: #{tpu_custom_call.1} parent=1 // pred_check_branch
      %31 = sbr.rel (0) target = $region9
    $region8: #{tpu_custom_call.1} parent=1 // pred_region
      %s33 = ssub.s32 3072, 3072
      %34 = vsyncadd [#allocation7], %s33
      %s35 = sshll.u32 [#allocation6], 4
      %s36 = int_to_ptr.vmem [resolvable:$true] %s35
      %41 = dma.hbm_to_vmem [thread:$0]  %s1, 3072, %s36, [#allocation7], 64, 64, 4
    $region9: #{tpu_custom_call.1} parent=1 // pred_fallthru
      _
    // Predicated region
    $region10: #{tpu_custom_call.1} parent=1 // pred_check
      _
    $region11: #{tpu_custom_call.1} parent=1 // pred_check_branch
      %43 = sbr.rel (0) target = $region13
    $region12: #{tpu_custom_call.1} parent=1 // pred_region
      _
    $region13: #{tpu_custom_call.1} parent=1 // pred_fallthru
      _
    // Predicated region
    $region14: #{tpu_custom_call.1} parent=1 // pred_check
      _
    $region15: #{tpu_custom_call.1} parent=1 // pred_check_branch
      %45 = sbr.rel (0) target = $region17
    $region16: #{tpu_custom_call.1} parent=1 // pred_region
      %s47 = ssub.s32 21504, 21504
      %48 = vsyncadd [#allocation7], %s47
      %s49 = sshll.u32 [#allocation8], 4
      %s50 = int_to_ptr.vmem [resolvable:$true] %s49
      %55 = dma.hbm_to_vmem [thread:$0]  %s3, 21504, %s50, [#allocation7], 64, 64, 4
    $region17: #{tpu_custom_call.1} parent=1 // pred_fallthru
      _
    // Predicated region
    $region18: #{tpu_custom_call.1} parent=1 // pred_check
      _
    $region19: #{tpu_custom_call.1} parent=1 // pred_check_branch
      %57 = sbr.rel (0) target = $region21
    $region20: #{tpu_custom_call.1} parent=1 // pred_region
      _
    $region21: #{tpu_custom_call.1} parent=1 // pred_fallthru
      _
    // Predicated region
    $region22: #{tpu_custom_call.1} parent=1 // pred_check
      _
    $region23: #{tpu_custom_call.1} parent=1 // pred_check_branch
      %59 = sbr.rel (0) target = $region25
    $region24: #{tpu_custom_call.1} parent=1 // pred_region
      %s61 = ssub.s32 4096, 4096
      %62 = vsyncadd [#allocation10], %s61
      %s63 = sshll.u32 [#allocation9], 4
      %s64 = int_to_ptr.vmem [resolvable:$true] %s63
      %69 = dma.hbm_to_vmem [thread:$0]  %s5, 4096, %s64, [#allocation10], 64, 64, 4
    $region25: #{tpu_custom_call.1} parent=1 // pred_fallthru
      _
    // Predicated region
    $region26: #{tpu_custom_call.1} parent=1 // pred_check
      _
    $region27: #{tpu_custom_call.1} parent=1 // pred_check_branch
      %71 = sbr.rel (0) target = $region29
    $region28: #{tpu_custom_call.1} parent=1 // pred_region
      _
    $region29: #{tpu_custom_call.1} parent=1 // pred_fallthru
      _
    // Predicated region
    $region30: #{tpu_custom_call.1} parent=1 // pred_check
      _
    $region31: #{tpu_custom_call.1} parent=1 // pred_check_branch
      %73 = sbr.rel (0) target = $region33
    $region32: #{tpu_custom_call.1} parent=1 // pred_region
      %s75 = ssub.s32 3072, 3072
      %76 = vsyncadd [#allocation10], %s75
      %s77 = sshll.u32 [#allocation11], 4
      %s78 = int_to_ptr.vmem [resolvable:$true] %s77
      %83 = dma.hbm_to_vmem [thread:$0]  %s7, 3072, %s78, [#allocation10], 64, 64, 4
    $region33: #{tpu_custom_call.1} parent=1 // pred_fallthru
      _
    // Predicated region
    $region34: #{tpu_custom_call.1} parent=1 // pred_check
      _
    $region35: #{tpu_custom_call.1} parent=1 // pred_check_branch
      %85 = sbr.rel (0) target = $region37
    $region36: #{tpu_custom_call.1} parent=1 // pred_region
      _
    $region37: #{tpu_custom_call.1} parent=1 // pred_fallthru
      _
    // Predicated region
    $region38: #{tpu_custom_call.1} parent=1 // pred_check
      _
    $region39: #{tpu_custom_call.1} parent=1 // pred_check_branch
      %87 = sbr.rel (0) target = $region41
    $region40: #{tpu_custom_call.1} parent=1 // pred_region
      %88 = dma.done [#allocation4], 256
    $region41: #{tpu_custom_call.1} parent=1 // pred_fallthru
      _
    // Predicated region
    $region42: #{tpu_custom_call.1} parent=1 // pred_check
      _
    $region43: #{tpu_custom_call.1} parent=1 // pred_check_branch
      %90 = sbr.rel (0) target = $region45
    $region44: #{tpu_custom_call.1} parent=1 // pred_region
      %91 = dma.done [#allocation7], 3072
    $region45: #{tpu_custom_call.1} parent=1 // pred_fallthru
      _
    // Predicated region
    $region46: #{tpu_custom_call.1} parent=1 // pred_check
      _
    $region47: #{tpu_custom_call.1} parent=1 // pred_check_branch
      %93 = sbr.rel (0) target = $region49
    $region48: #{tpu_custom_call.1} parent=1 // pred_region
      %94 = dma.done [#allocation7], 21504
    $region49: #{tpu_custom_call.1} parent=1 // pred_fallthru
      _
    // Predicated region
    $region50: #{tpu_custom_call.1} parent=1 // pred_check
      _
    $region51: #{tpu_custom_call.1} parent=1 // pred_check_branch
      %96 = sbr.rel (0) target = $region53
    $region52: #{tpu_custom_call.1} parent=1 // pred_region
      %97 = dma.done [#allocation10], 4096
    $region53: #{tpu_custom_call.1} parent=1 // pred_fallthru
      _
    // Predicated region
    $region54: #{tpu_custom_call.1} parent=1 // pred_check
      _
    $region55: #{tpu_custom_call.1} parent=1 // pred_check_branch
      %99 = sbr.rel (0) target = $region57
    $region56: #{tpu_custom_call.1} parent=1 // pred_region
      %100 = dma.done [#allocation10], 3072
    $region57: #{tpu_custom_call.1} parent=1 // pred_fallthru
      _
    %v102 = vld [vmem:[#allocation6] sm:$0xf]
    %v103 = vld [vmem:[#allocation6 + $0x4] sm:$0xf]
    %v104 = vld [vmem:[#allocation6 + $0x8] sm:$0xf]
    %v105 = vld [vmem:[#allocation6 + $0xc] sm:$0xf]
    %v106 = vld [vmem:[#allocation6 + $0x10] sm:$0xf]
    %v107 = vld [vmem:[#allocation6 + $0x14] sm:$0xf]
    %v108 = vld [vmem:[#allocation6 + $0x18] sm:$0xf]
    %v109 = vld [vmem:[#allocation6 + $0x1c] sm:$0xf]
    %v110 = vld [vmem:[#allocation6 + $0x20] sm:$0xf]
    %v111 = vld [vmem:[#allocation6 + $0x24] sm:$0xf]
    %v112 = vld [vmem:[#allocation6 + $0x28] sm:$0xf]
    %v113 = vld [vmem:[#allocation6 + $0x2c] sm:$0xf]
    %v114 = vld [vmem:[#allocation6 + $0x30] sm:$0xf]
    %v115 = vld [vmem:[#allocation6 + $0x34] sm:$0xf]
    %v116 = vld [vmem:[#allocation6 + $0x38] sm:$0xf]
    %v117 = vld [vmem:[#allocation6 + $0x3c] sm:$0xf]
    %s118 = scalar_lea.vmem [#allocation6], 64
    %v119 = vld [vmem:[%s118] sm:$0xf]
    %v120 = vld [vmem:[%s118 + $0x4] sm:$0xf]
    %v121 = vld [vmem:[%s118 + $0x8] sm:$0xf]
    %v122 = vld [vmem:[%s118 + $0xc] sm:$0xf]
    %v123 = vld [vmem:[%s118 + $0x10] sm:$0xf]
    %v124 = vld [vmem:[%s118 + $0x14] sm:$0xf]
    %v125 = vld [vmem:[%s118 + $0x18] sm:$0xf]
    %v126 = vld [vmem:[%s118 + $0x1c] sm:$0xf]
    %v127 = vld [vmem:[%s118 + $0x20] sm:$0xf]
    %v128 = vld [vmem:[%s118 + $0x24] sm:$0xf]
    %v129 = vld [vmem:[%s118 + $0x28] sm:$0xf]
    %v130 = vld [vmem:[%s118 + $0x2c] sm:$0xf]
    %v131 = vld [vmem:[%s118 + $0x30] sm:$0xf]
    %v132 = vld [vmem:[%s118 + $0x34] sm:$0xf]
    %v133 = vld [vmem:[%s118 + $0x38] sm:$0xf]
    %v134 = vld [vmem:[%s118 + $0x3c] sm:$0xf]
    %s135 = scalar_lea.vmem [#allocation6], 128
    %v136 = vld [vmem:[%s135] sm:$0xf]
    %v137 = vld [vmem:[%s135 + $0x4] sm:$0xf]
    %v138 = vld [vmem:[%s135 + $0x8] sm:$0xf]
    %v139 = vld [vmem:[%s135 + $0xc] sm:$0xf]
    %v140 = vld [vmem:[%s135 + $0x10] sm:$0xf]
    %v141 = vld [vmem:[%s135 + $0x14] sm:$0xf]
    %v142 = vld [vmem:[%s135 + $0x18] sm:$0xf]
    %v143 = vld [vmem:[%s135 + $0x1c] sm:$0xf]
    %v144 = vld [vmem:[%s135 + $0x20] sm:$0xf]
    %v145 = vld [vmem:[%s135 + $0x24] sm:$0xf]
    %v146 = vld [vmem:[%s135 + $0x28] sm:$0xf]
    %v147 = vld [vmem:[%s135 + $0x2c] sm:$0xf]
    %v148 = vld [vmem:[%s135 + $0x30] sm:$0xf]
    %v149 = vld [vmem:[%s135 + $0x34] sm:$0xf]
    %v150 = vld [vmem:[%s135 + $0x38] sm:$0xf]
    %v151 = vld [vmem:[%s135 + $0x3c] sm:$0xf]
    %v152 = vld [vmem:[#allocation11] sm:$0xf]
    %v153 = vld [vmem:[#allocation11 + $0x4] sm:$0xf]
    %v154 = vld [vmem:[#allocation11 + $0x8] sm:$0xf]
    %v155 = vld [vmem:[#allocation11 + $0xc] sm:$0xf]
    %v156 = vld [vmem:[#allocation11 + $0x10] sm:$0xf]
    %v157 = vld [vmem:[#allocation11 + $0x14] sm:$0xf]
    %v158 = vld [vmem:[#allocation11 + $0x18] sm:$0xf]
    %v159 = vld [vmem:[#allocation11 + $0x1c] sm:$0xf]
    %v160 = vld [vmem:[#allocation11 + $0x20] sm:$0xf]
    %v161 = vld [vmem:[#allocation11 + $0x24] sm:$0xf]
    %v162 = vld [vmem:[#allocation11 + $0x28] sm:$0xf]
    %v163 = vld [vmem:[#allocation11 + $0x2c] sm:$0xf]
    %v164 = vld [vmem:[#allocation11 + $0x30] sm:$0xf]
    %v165 = vld [vmem:[#allocation11 + $0x34] sm:$0xf]
    %v166 = vld [vmem:[#allocation11 + $0x38] sm:$0xf]
    %v167 = vld [vmem:[#allocation11 + $0x3c] sm:$0xf]
    %s168 = scalar_lea.vmem [#allocation11], 64
    %v169 = vld [vmem:[%s168] sm:$0xf]
    %v170 = vld [vmem:[%s168 + $0x4] sm:$0xf]
    %v171 = vld [vmem:[%s168 + $0x8] sm:$0xf]
    %v172 = vld [vmem:[%s168 + $0xc] sm:$0xf]
    %v173 = vld [vmem:[%s168 + $0x10] sm:$0xf]
    %v174 = vld [vmem:[%s168 + $0x14] sm:$0xf]
    %v175 = vld [vmem:[%s168 + $0x18] sm:$0xf]
    %v176 = vld [vmem:[%s168 + $0x1c] sm:$0xf]
    %v177 = vld [vmem:[%s168 + $0x20] sm:$0xf]
    %v178 = vld [vmem:[%s168 + $0x24] sm:$0xf]
    %v179 = vld [vmem:[%s168 + $0x28] sm:$0xf]
    %v180 = vld [vmem:[%s168 + $0x2c] sm:$0xf]
    %v181 = vld [vmem:[%s168 + $0x30] sm:$0xf]
    %v182 = vld [vmem:[%s168 + $0x34] sm:$0xf]
    %v183 = vld [vmem:[%s168 + $0x38] sm:$0xf]
    %v184 = vld [vmem:[%s168 + $0x3c] sm:$0xf]
    %s185 = scalar_lea.vmem [#allocation11], 128
    %v186 = vld [vmem:[%s185] sm:$0xf]
    %v187 = vld [vmem:[%s185 + $0x4] sm:$0xf]
    %v188 = vld [vmem:[%s185 + $0x8] sm:$0xf]
    %v189 = vld [vmem:[%s185 + $0xc] sm:$0xf]
    %v190 = vld [vmem:[%s185 + $0x10] sm:$0xf]
    %v191 = vld [vmem:[%s185 + $0x14] sm:$0xf]
    %v192 = vld [vmem:[%s185 + $0x18] sm:$0xf]
    %v193 = vld [vmem:[%s185 + $0x1c] sm:$0xf]
    %v194 = vld [vmem:[%s185 + $0x20] sm:$0xf]
    %v195 = vld [vmem:[%s185 + $0x24] sm:$0xf]
    %v196 = vld [vmem:[%s185 + $0x28] sm:$0xf]
    %v197 = vld [vmem:[%s185 + $0x2c] sm:$0xf]
    %v198 = vld [vmem:[%s185 + $0x30] sm:$0xf]
    %v199 = vld [vmem:[%s185 + $0x34] sm:$0xf]
    %v200 = vld [vmem:[%s185 + $0x38] sm:$0xf]
    %v201 = vld [vmem:[%s185 + $0x3c] sm:$0xf]
    %202 = vst [vmem:[#allocation2] sm:$0xff] 0.0
    %203 = vst [vmem:[#allocation2 + $0x10] sm:$0xff] 0.0
    %204 = vst [vmem:[#allocation2 + $0x18] sm:$0xff] 0.0
    %205 = vst [vmem:[#allocation2 + $0x20] sm:$0xff] 0.0
    %206 = vst [vmem:[#allocation2 + $0x28] sm:$0xff] 0.0
    %v207 = vld [vmem:[#allocation3] sm:$0xff]
    %208 = vst [vmem:[#allocation2 + $0x8] sm:$0xff] %v207
    %v209 = vld [vmem:[%s2] sm:$0x1]
    %v210 = vld [vmem:[#allocation2 + $0x7] sm:$0xff]
    %v211 = vpack.c.bf16 %v210, %v210
    %v212 = vld [vmem:[#allocation2 + $0x8] sm:$0xff]
    %v213 = vpack.c.bf16 %v212, %v212
    %v230 = vunpack.c.l.b16 %v119
    %v231 = vunpack.c.l.b16 %v120
    %v232 = vunpack.c.l.b16 %v121
    %v233 = vunpack.c.l.b16 %v122
    %v234 = vunpack.c.l.b16 %v123
    %v235 = vunpack.c.l.b16 %v124
    %v236 = vunpack.c.l.b16 %v125
    %v237 = vunpack.c.l.b16 %v126
    %v238 = vunpack.c.l.b16 %v127
    %v239 = vunpack.c.l.b16 %v128
    %v240 = vunpack.c.l.b16 %v129
    %v241 = vunpack.c.l.b16 %v130
    %v242 = vunpack.c.l.b16 %v131
    %v243 = vunpack.c.l.b16 %v132
    %v244 = vunpack.c.l.b16 %v133
    %v245 = vunpack.c.l.b16 %v134
    %v246 = vpack.c.b16 %v231, %v230
    %v247 = vpack.c.b16 %v233, %v232
    %v248 = vpack.c.b16 %v235, %v234
    %v249 = vpack.c.b16 %v237, %v236
    %v250 = vpack.c.b16 %v239, %v238
    %v251 = vpack.c.b16 %v241, %v240
    %v252 = vpack.c.b16 %v243, %v242
    %v253 = vpack.c.b16 %v245, %v244
    %262 = vmatprep.subr.bf16.mxu0 0
    %263 = vmatpush1.bf16.msra.mxu0 %v246
    %264 = vmatprep.subr.bf16.mxu0 0
    %265 = vmatpush1.bf16.msra.mxu0 %v247
    %266 = vmatprep.subr.bf16.mxu0 0
    %267 = vmatpush1.bf16.msra.mxu0 %v248
    %268 = vmatprep.subr.bf16.mxu0 0
    %269 = vmatpush1.bf16.msra.mxu0 %v249
    %270 = vmatprep.subr.bf16.mxu0 0
    %271 = vmatpush1.bf16.msra.mxu0 %v250
    %272 = vmatprep.subr.bf16.mxu0 0
    %273 = vmatpush1.bf16.msra.mxu0 %v251
    %274 = vmatprep.subr.bf16.mxu0 0
    %275 = vmatpush1.bf16.msra.mxu0 %v252
    %276 = vmatprep.subr.bf16.mxu0 0
    %277 = vmatpush1.bf16.msra.mxu0 %v253
    %278 = vmatprep.subr.bf16.mxu0 0
    %279 = vmatpush1.bf16.msra.mxu0 0
    %280 = vmatprep.subr.bf16.mxu0 0
    %281 = vmatpush1.bf16.msra.mxu0 0
    %282 = vmatprep.subr.bf16.mxu0 0
    %283 = vmatpush1.bf16.msra.mxu0 0
    %284 = vmatprep.subr.bf16.mxu0 0
    %285 = vmatpush1.bf16.msra.mxu0 0
    %286 = vmatprep.subr.bf16.mxu0 0
    %287 = vmatpush1.bf16.msra.mxu0 0
    %288 = vmatprep.subr.bf16.mxu0 0
    %289 = vmatpush1.bf16.msra.mxu0 0
    %290 = vmatprep.subr.bf16.mxu0 0
    %291 = vmatpush1.bf16.msra.mxu0 0
    %292 = vmatprep.subr.bf16.mxu0 0
    %293 = vmatpush1.bf16.msra.mxu0 0
    %294 = vmatprep.mubr.bf16.mxu0 0
    %295 = vmatmul.mubr.bf16.gmra.mrb[0].mxu0 %v213
    %v296 = vpop.f32.mrb[0].mxu0
    %v297 = vadd.f32 0.0, %v296
    %v298 = vpop.f32.mrb[0].mxu0
    %v299 = vpop.f32.mrb[0].mxu0
    %v300 = vpop.f32.mrb[0].mxu0
    %301 = vdwg.mxu0
    %v318 = vunpack.c.l.b16 %v102
    %v319 = vunpack.c.l.b16 %v103
    %v320 = vunpack.c.l.b16 %v104
    %v321 = vunpack.c.l.b16 %v105
    %v322 = vunpack.c.l.b16 %v106
    %v323 = vunpack.c.l.b16 %v107
    %v324 = vunpack.c.l.b16 %v108
    %v325 = vunpack.c.l.b16 %v109
    %v326 = vunpack.c.l.b16 %v110
    %v327 = vunpack.c.l.b16 %v111
    %v328 = vunpack.c.l.b16 %v112
    %v329 = vunpack.c.l.b16 %v113
    %v330 = vunpack.c.l.b16 %v114
    %v331 = vunpack.c.l.b16 %v115
    %v332 = vunpack.c.l.b16 %v116
    %v333 = vunpack.c.l.b16 %v117
    %v334 = vpack.c.b16 %v319, %v318
    %v335 = vpack.c.b16 %v321, %v320
    %v336 = vpack.c.b16 %v323, %v322
    %v337 = vpack.c.b16 %v325, %v324
    %v338 = vpack.c.b16 %v327, %v326
    %v339 = vpack.c.b16 %v329, %v328
    %v340 = vpack.c.b16 %v331, %v330
    %v341 = vpack.c.b16 %v333, %v332
    %350 = vmatprep.subr.bf16.mxu0 0
    %351 = vmatpush1.bf16.msra.mxu0 %v334
    %352 = vmatprep.subr.bf16.mxu0 0
    %353 = vmatpush1.bf16.msra.mxu0 %v335
    %354 = vmatprep.subr.bf16.mxu0 0
    %355 = vmatpush1.bf16.msra.mxu0 %v336
    %356 = vmatprep.subr.bf16.mxu0 0
    %357 = vmatpush1.bf16.msra.mxu0 %v337
    %358 = vmatprep.subr.bf16.mxu0 0
    %359 = vmatpush1.bf16.msra.mxu0 %v338
    %360 = vmatprep.subr.bf16.mxu0 0
    %361 = vmatpush1.bf16.msra.mxu0 %v339
    %362 = vmatprep.subr.bf16.mxu0 0
    %363 = vmatpush1.bf16.msra.mxu0 %v340
    %364 = vmatprep.subr.bf16.mxu0 0
    %365 = vmatpush1.bf16.msra.mxu0 %v341
    %366 = vmatprep.subr.bf16.mxu0 0
    %367 = vmatpush1.bf16.msra.mxu0 0
    %368 = vmatprep.subr.bf16.mxu0 0
    %369 = vmatpush1.bf16.msra.mxu0 0
    %370 = vmatprep.subr.bf16.mxu0 0
    %371 = vmatpush1.bf16.msra.mxu0 0
    %372 = vmatprep.subr.bf16.mxu0 0
    %373 = vmatpush1.bf16.msra.mxu0 0
    %374 = vmatprep.subr.bf16.mxu0 0
    %375 = vmatpush1.bf16.msra.mxu0 0
    %376 = vmatprep.subr.bf16.mxu0 0
    %377 = vmatpush1.bf16.msra.mxu0 0
    %378 = vmatprep.subr.bf16.mxu0 0
    %379 = vmatpush1.bf16.msra.mxu0 0
    %380 = vmatprep.subr.bf16.mxu0 0
    %381 = vmatpush1.bf16.msra.mxu0 0
    %382 = vmatprep.mubr.bf16.mxu0 0
    %383 = vmatmul.mubr.bf16.gmra.mrb[0].mxu0 %v211
    %v384 = vpop.f32.mrb[0].mxu0
    %v385 = vadd.f32 %v297, %v384
    %v386 = vpop.f32.mrb[0].mxu0
    %v387 = vpop.f32.mrb[0].mxu0
    %v388 = vpop.f32.mrb[0].mxu0
    %389 = vdwg.mxu0
    %v390 = vld [vmem:[#allocation2 + $0x9] sm:$0xff]
    %v391 = vpack.c.bf16 %v390, %v390
    %v408 = vunpack.c.l.b16 %v136
    %v409 = vunpack.c.l.b16 %v137
    %v410 = vunpack.c.l.b16 %v138
    %v411 = vunpack.c.l.b16 %v139
    %v412 = vunpack.c.l.b16 %v140
    %v413 = vunpack.c.l.b16 %v141
    %v414 = vunpack.c.l.b16 %v142
    %v415 = vunpack.c.l.b16 %v143
    %v416 = vunpack.c.l.b16 %v144
    %v417 = vunpack.c.l.b16 %v145
    %v418 = vunpack.c.l.b16 %v146
    %v419 = vunpack.c.l.b16 %v147
    %v420 = vunpack.c.l.b16 %v148
    %v421 = vunpack.c.l.b16 %v149
    %v422 = vunpack.c.l.b16 %v150
    %v423 = vunpack.c.l.b16 %v151
    %v424 = vpack.c.b16 %v409, %v408
    %v425 = vpack.c.b16 %v411, %v410
    %v426 = vpack.c.b16 %v413, %v412
    %v427 = vpack.c.b16 %v415, %v414
    %v428 = vpack.c.b16 %v417, %v416
    %v429 = vpack.c.b16 %v419, %v418
    %v430 = vpack.c.b16 %v421, %v420
    %v431 = vpack.c.b16 %v423, %v422
    %440 = vmatprep.subr.bf16.mxu0 0
    %441 = vmatpush1.bf16.msra.mxu0 %v424
    %442 = vmatprep.subr.bf16.mxu0 0
    %443 = vmatpush1.bf16.msra.mxu0 %v425
    %444 = vmatprep.subr.bf16.mxu0 0
    %445 = vmatpush1.bf16.msra.mxu0 %v426
    %446 = vmatprep.subr.bf16.mxu0 0
    %447 = vmatpush1.bf16.msra.mxu0 %v427
    %448 = vmatprep.subr.bf16.mxu0 0
    %449 = vmatpush1.bf16.msra.mxu0 %v428
    %450 = vmatprep.subr.bf16.mxu0 0
    %451 = vmatpush1.bf16.msra.mxu0 %v429
    %452 = vmatprep.subr.bf16.mxu0 0
    %453 = vmatpush1.bf16.msra.mxu0 %v430
    %454 = vmatprep.subr.bf16.mxu0 0
    %455 = vmatpush1.bf16.msra.mxu0 %v431
    %456 = vmatprep.subr.bf16.mxu0 0
    %457 = vmatpush1.bf16.msra.mxu0 0
    %458 = vmatprep.subr.bf16.mxu0 0
    %459 = vmatpush1.bf16.msra.mxu0 0
    %460 = vmatprep.subr.bf16.mxu0 0
    %461 = vmatpush1.bf16.msra.mxu0 0
    %462 = vmatprep.subr.bf16.mxu0 0
    %463 = vmatpush1.bf16.msra.mxu0 0
    %464 = vmatprep.subr.bf16.mxu0 0
    %465 = vmatpush1.bf16.msra.mxu0 0
    %466 = vmatprep.subr.bf16.mxu0 0
    %467 = vmatpush1.bf16.msra.mxu0 0
    %468 = vmatprep.subr.bf16.mxu0 0
    %469 = vmatpush1.bf16.msra.mxu0 0
    %470 = vmatprep.subr.bf16.mxu0 0
    %471 = vmatpush1.bf16.msra.mxu0 0
    %472 = vmatprep.mubr.bf16.mxu0 0
    %473 = vmatmul.mubr.bf16.gmra.mrb[0].mxu0 %v391
    %v474 = vpop.f32.mrb[0].mxu0
    %v475 = vadd.f32 0.0, %v474
    %v476 = vpop.f32.mrb[0].mxu0
    %v477 = vpop.f32.mrb[0].mxu0
    %v478 = vpop.f32.mrb[0].mxu0
    %479 = vdwg.mxu0
    %v480 = vadd.f32 %v385, %v475
    %v482 = vlaneseq
    %v483 = vshrl.u32 %v482, 7
    %v484 = vsub.s32 0, %v483
    %v485 = vrot.slane %v209, %v484
    %v487 = vadd.f32 %v480, %v485
    %v488 = vmax.f32 %v487, 0.0
    %489 = vst [vmem:[#allocation2 + $0x8] sm:$0xff] %v488
    %v490 = vld [vmem:[#allocation2 + $0x8] sm:$0xff]
    %v491 = vld [vmem:[#allocation8] sm:$0xf]
    %v492 = vld [vmem:[#allocation8 + $0x4] sm:$0xf]
    %v493 = vld [vmem:[#allocation8 + $0x8] sm:$0xf]
    %v494 = vld [vmem:[#allocation8 + $0xc] sm:$0xf]
    %v495 = vld [vmem:[#allocation8 + $0x10] sm:$0xf]
    %v496 = vld [vmem:[#allocation8 + $0x14] sm:$0xf]
    %v497 = vld [vmem:[#allocation8 + $0x18] sm:$0xf]
    %v498 = vld [vmem:[#allocation8 + $0x1c] sm:$0xf]
    %v499 = vld [vmem:[#allocation8 + $0x20] sm:$0xf]
    %v500 = vld [vmem:[#allocation8 + $0x24] sm:$0xf]
    %v501 = vld [vmem:[#allocation8 + $0x28] sm:$0xf]
    %v502 = vld [vmem:[#allocation8 + $0x2c] sm:$0xf]
    %v503 = vld [vmem:[#allocation8 + $0x30] sm:$0xf]
    %v504 = vld [vmem:[#allocation8 + $0x34] sm:$0xf]
    %v505 = vld [vmem:[#allocation8 + $0x38] sm:$0xf]
    %v506 = vld [vmem:[#allocation8 + $0x3c] sm:$0xf]
    %s507 = scalar_lea.vmem [#allocation8], 64
    %v508 = vld [vmem:[%s507] sm:$0xf]
    %v509 = vld [vmem:[%s507 + $0x4] sm:$0xf]
    %v510 = vld [vmem:[%s507 + $0x8] sm:$0xf]
    %v511 = vld [vmem:[%s507 + $0xc] sm:$0xf]
    %v512 = vld [vmem:[%s507 + $0x10] sm:$0xf]
    %v513 = vld [vmem:[%s507 + $0x14] sm:$0xf]
    %v514 = vld [vmem:[%s507 + $0x18] sm:$0xf]
    %v515 = vld [vmem:[%s507 + $0x1c] sm:$0xf]
    %v516 = vld [vmem:[%s507 + $0x20] sm:$0xf]
    %v517 = vld [vmem:[%s507 + $0x24] sm:$0xf]
    %v518 = vld [vmem:[%s507 + $0x28] sm:$0xf]
    %v519 = vld [vmem:[%s507 + $0x2c] sm:$0xf]
    %v520 = vld [vmem:[%s507 + $0x30] sm:$0xf]
    %v521 = vld [vmem:[%s507 + $0x34] sm:$0xf]
    %v522 = vld [vmem:[%s507 + $0x38] sm:$0xf]
    %v523 = vld [vmem:[%s507 + $0x3c] sm:$0xf]
    %s524 = scalar_lea.vmem [#allocation8], 128
    %v525 = vld [vmem:[%s524] sm:$0xf]
    %v526 = vld [vmem:[%s524 + $0x4] sm:$0xf]
    %v527 = vld [vmem:[%s524 + $0x8] sm:$0xf]
    %v528 = vld [vmem:[%s524 + $0xc] sm:$0xf]
    %v529 = vld [vmem:[%s524 + $0x10] sm:$0xf]
    %v530 = vld [vmem:[%s524 + $0x14] sm:$0xf]
    %v531 = vld [vmem:[%s524 + $0x18] sm:$0xf]
    %v532 = vld [vmem:[%s524 + $0x1c] sm:$0xf]
    %v533 = vld [vmem:[%s524 + $0x20] sm:$0xf]
    %v534 = vld [vmem:[%s524 + $0x24] sm:$0xf]
    %v535 = vld [vmem:[%s524 + $0x28] sm:$0xf]
    %v536 = vld [vmem:[%s524 + $0x2c] sm:$0xf]
    %v537 = vld [vmem:[%s524 + $0x30] sm:$0xf]
    %v538 = vld [vmem:[%s524 + $0x34] sm:$0xf]
    %v539 = vld [vmem:[%s524 + $0x38] sm:$0xf]
    %v540 = vld [vmem:[%s524 + $0x3c] sm:$0xf]
    %v541 = vld [vmem:[%s4] sm:$0x1]
    %v542 = vld [vmem:[#allocation2 + $0x5] sm:$0xff]
    %v543 = vmax.f32 %v542, 0.0
    %v544 = vpack.c.bf16 %v543, %v543
    %v545 = vmax.f32 %v490, 0.0
    %v546 = vpack.c.bf16 %v545, %v545
    %v563 = vunpack.c.l.b16 %v508
    %v564 = vunpack.c.l.b16 %v509
    %v565 = vunpack.c.l.b16 %v510
    %v566 = vunpack.c.l.b16 %v511
    %v567 = vunpack.c.l.b16 %v512
    %v568 = vunpack.c.l.b16 %v513
    %v569 = vunpack.c.l.b16 %v514
    %v570 = vunpack.c.l.b16 %v515
    %v571 = vunpack.c.l.b16 %v516
    %v572 = vunpack.c.l.b16 %v517
    %v573 = vunpack.c.l.b16 %v518
    %v574 = vunpack.c.l.b16 %v519
    %v575 = vunpack.c.l.b16 %v520
    %v576 = vunpack.c.l.b16 %v521
    %v577 = vunpack.c.l.b16 %v522
    %v578 = vunpack.c.l.b16 %v523
    %v579 = vpack.c.b16 %v564, %v563
    %v580 = vpack.c.b16 %v566, %v565
    %v581 = vpack.c.b16 %v568, %v567
    %v582 = vpack.c.b16 %v570, %v569
    %v583 = vpack.c.b16 %v572, %v571
    %v584 = vpack.c.b16 %v574, %v573
    %v585 = vpack.c.b16 %v576, %v575
    %v586 = vpack.c.b16 %v578, %v577
    %595 = vmatprep.subr.bf16.mxu0 0
    %596 = vmatpush1.bf16.msra.mxu0 %v579
    %597 = vmatprep.subr.bf16.mxu0 0
    %598 = vmatpush1.bf16.msra.mxu0 %v580
    %599 = vmatprep.subr.bf16.mxu0 0
    %600 = vmatpush1.bf16.msra.mxu0 %v581
    %601 = vmatprep.subr.bf16.mxu0 0
    %602 = vmatpush1.bf16.msra.mxu0 %v582
    %603 = vmatprep.subr.bf16.mxu0 0
    %604 = vmatpush1.bf16.msra.mxu0 %v583
    %605 = vmatprep.subr.bf16.mxu0 0
    %606 = vmatpush1.bf16.msra.mxu0 %v584
    %607 = vmatprep.subr.bf16.mxu0 0
    %608 = vmatpush1.bf16.msra.mxu0 %v585
    %609 = vmatprep.subr.bf16.mxu0 0
    %610 = vmatpush1.bf16.msra.mxu0 %v586
    %611 = vmatprep.subr.bf16.mxu0 0
    %612 = vmatpush1.bf16.msra.mxu0 0
    %613 = vmatprep.subr.bf16.mxu0 0
    %614 = vmatpush1.bf16.msra.mxu0 0
    %615 = vmatprep.subr.bf16.mxu0 0
    %616 = vmatpush1.bf16.msra.mxu0 0
    %617 = vmatprep.subr.bf16.mxu0 0
    %618 = vmatpush1.bf16.msra.mxu0 0
    %619 = vmatprep.subr.bf16.mxu0 0
    %620 = vmatpush1.bf16.msra.mxu0 0
    %621 = vmatprep.subr.bf16.mxu0 0
    %622 = vmatpush1.bf16.msra.mxu0 0
    %623 = vmatprep.subr.bf16.mxu0 0
    %624 = vmatpush1.bf16.msra.mxu0 0
    %625 = vmatprep.subr.bf16.mxu0 0
    %626 = vmatpush1.bf16.msra.mxu0 0
    %627 = vmatprep.mubr.bf16.mxu0 0
    %628 = vmatmul.mubr.bf16.gmra.mrb[0].mxu0 %v546
    %v629 = vpop.f32.mrb[0].mxu0
    %v630 = vadd.f32 0.0, %v629
    %v631 = vpop.f32.mrb[0].mxu0
    %v632 = vpop.f32.mrb[0].mxu0
    %v633 = vpop.f32.mrb[0].mxu0
    %634 = vdwg.mxu0
    %v651 = vunpack.c.l.b16 %v491
    %v652 = vunpack.c.l.b16 %v492
    %v653 = vunpack.c.l.b16 %v493
    %v654 = vunpack.c.l.b16 %v494
    %v655 = vunpack.c.l.b16 %v495
    %v656 = vunpack.c.l.b16 %v496
    %v657 = vunpack.c.l.b16 %v497
    %v658 = vunpack.c.l.b16 %v498
    %v659 = vunpack.c.l.b16 %v499
    %v660 = vunpack.c.l.b16 %v500
    %v661 = vunpack.c.l.b16 %v501
    %v662 = vunpack.c.l.b16 %v502
    %v663 = vunpack.c.l.b16 %v503
    %v664 = vunpack.c.l.b16 %v504
    %v665 = vunpack.c.l.b16 %v505
    %v666 = vunpack.c.l.b16 %v506
    %v667 = vpack.c.b16 %v652, %v651
    %v668 = vpack.c.b16 %v654, %v653
    %v669 = vpack.c.b16 %v656, %v655
    %v670 = vpack.c.b16 %v658, %v657
    %v671 = vpack.c.b16 %v660, %v659
    %v672 = vpack.c.b16 %v662, %v661
    %v673 = vpack.c.b16 %v664, %v663
    %v674 = vpack.c.b16 %v666, %v665
    %683 = vmatprep.subr.bf16.mxu0 0
    %684 = vmatpush1.bf16.msra.mxu0 %v667
    %685 = vmatprep.subr.bf16.mxu0 0
    %686 = vmatpush1.bf16.msra.mxu0 %v668
    %687 = vmatprep.subr.bf16.mxu0 0
    %688 = vmatpush1.bf16.msra.mxu0 %v669
    %689 = vmatprep.subr.bf16.mxu0 0
    %690 = vmatpush1.bf16.msra.mxu0 %v670
    %691 = vmatprep.subr.bf16.mxu0 0
    %692 = vmatpush1.bf16.msra.mxu0 %v671
    %693 = vmatprep.subr.bf16.mxu0 0
    %694 = vmatpush1.bf16.msra.mxu0 %v672
    %695 = vmatprep.subr.bf16.mxu0 0
    %696 = vmatpush1.bf16.msra.mxu0 %v673
    %697 = vmatprep.subr.bf16.mxu0 0
    %698 = vmatpush1.bf16.msra.mxu0 %v674
    %699 = vmatprep.subr.bf16.mxu0 0
    %700 = vmatpush1.bf16.msra.mxu0 0
    %701 = vmatprep.subr.bf16.mxu0 0
    %702 = vmatpush1.bf16.msra.mxu0 0
    %703 = vmatprep.subr.bf16.mxu0 0
    %704 = vmatpush1.bf16.msra.mxu0 0
    %705 = vmatprep.subr.bf16.mxu0 0
    %706 = vmatpush1.bf16.msra.mxu0 0
    %707 = vmatprep.subr.bf16.mxu0 0
    %708 = vmatpush1.bf16.msra.mxu0 0
    %709 = vmatprep.subr.bf16.mxu0 0
    %710 = vmatpush1.bf16.msra.mxu0 0
    %711 = vmatprep.subr.bf16.mxu0 0
    %712 = vmatpush1.bf16.msra.mxu0 0
    %713 = vmatprep.subr.bf16.mxu0 0
    %714 = vmatpush1.bf16.msra.mxu0 0
    %715 = vmatprep.mubr.bf16.mxu0 0
    %716 = vmatmul.mubr.bf16.gmra.mrb[0].mxu0 %v544
    %v717 = vpop.f32.mrb[0].mxu0
    %v718 = vadd.f32 %v630, %v717
    %v719 = vpop.f32.mrb[0].mxu0
    %v720 = vpop.f32.mrb[0].mxu0
    %v721 = vpop.f32.mrb[0].mxu0
    %722 = vdwg.mxu0
    %v723 = vld [vmem:[#allocation2 + $0xb] sm:$0xff]
    %v724 = vmax.f32 %v723, 0.0
    %v725 = vpack.c.bf16 %v724, %v724
    %v742 = vunpack.c.l.b16 %v525
    %v743 = vunpack.c.l.b16 %v526
    %v744 = vunpack.c.l.b16 %v527
    %v745 = vunpack.c.l.b16 %v528
    %v746 = vunpack.c.l.b16 %v529
    %v747 = vunpack.c.l.b16 %v530
    %v748 = vunpack.c.l.b16 %v531
    %v749 = vunpack.c.l.b16 %v532
    %v750 = vunpack.c.l.b16 %v533
    %v751 = vunpack.c.l.b16 %v534
    %v752 = vunpack.c.l.b16 %v535
    %v753 = vunpack.c.l.b16 %v536
    %v754 = vunpack.c.l.b16 %v537
    %v755 = vunpack.c.l.b16 %v538
    %v756 = vunpack.c.l.b16 %v539
    %v757 = vunpack.c.l.b16 %v540
    %v758 = vpack.c.b16 %v743, %v742
    %v759 = vpack.c.b16 %v745, %v744
    %v760 = vpack.c.b16 %v747, %v746
    %v761 = vpack.c.b16 %v749, %v748
    %v762 = vpack.c.b16 %v751, %v750
    %v763 = vpack.c.b16 %v753, %v752
    %v764 = vpack.c.b16 %v755, %v754
    %v765 = vpack.c.b16 %v757, %v756
    %774 = vmatprep.subr.bf16.mxu0 0
    %775 = vmatpush1.bf16.msra.mxu0 %v758
    %776 = vmatprep.subr.bf16.mxu0 0
    %777 = vmatpush1.bf16.msra.mxu0 %v759
    %778 = vmatprep.subr.bf16.mxu0 0
    %779 = vmatpush1.bf16.msra.mxu0 %v760
    %780 = vmatprep.subr.bf16.mxu0 0
    %781 = vmatpush1.bf16.msra.mxu0 %v761
    %782 = vmatprep.subr.bf16.mxu0 0
    %783 = vmatpush1.bf16.msra.mxu0 %v762
    %784 = vmatprep.subr.bf16.mxu0 0
    %785 = vmatpush1.bf16.msra.mxu0 %v763
    %786 = vmatprep.subr.bf16.mxu0 0
    %787 = vmatpush1.bf16.msra.mxu0 %v764
    %788 = vmatprep.subr.bf16.mxu0 0
    %789 = vmatpush1.bf16.msra.mxu0 %v765
    %790 = vmatprep.subr.bf16.mxu0 0
    %791 = vmatpush1.bf16.msra.mxu0 0
    %792 = vmatprep.subr.bf16.mxu0 0
    %793 = vmatpush1.bf16.msra.mxu0 0
    %794 = vmatprep.subr.bf16.mxu0 0
    %795 = vmatpush1.bf16.msra.mxu0 0
    %796 = vmatprep.subr.bf16.mxu0 0
    %797 = vmatpush1.bf16.msra.mxu0 0
    %798 = vmatprep.subr.bf16.mxu0 0
    %799 = vmatpush1.bf16.msra.mxu0 0
    %800 = vmatprep.subr.bf16.mxu0 0
    %801 = vmatpush1.bf16.msra.mxu0 0
    %802 = vmatprep.subr.bf16.mxu0 0
    %803 = vmatpush1.bf16.msra.mxu0 0
    %804 = vmatprep.subr.bf16.mxu0 0
    %805 = vmatpush1.bf16.msra.mxu0 0
    %806 = vmatprep.mubr.bf16.mxu0 0
    %807 = vmatmul.mubr.bf16.gmra.mrb[0].mxu0 %v725
    %v808 = vpop.f32.mrb[0].mxu0
    %v809 = vadd.f32 0.0, %v808
    %v810 = vpop.f32.mrb[0].mxu0
    %v811 = vpop.f32.mrb[0].mxu0
    %v812 = vpop.f32.mrb[0].mxu0
    %813 = vdwg.mxu0
    %v814 = vadd.f32 %v718, %v809
    %v815 = vlaneseq
    %v816 = vshrl.u32 %v815, 7
    %v817 = vsub.s32 0, %v816
    %v818 = vrot.slane %v541, %v817
    %v819 = vadd.f32 %v814, %v818
    %v820 = vmax.f32 %v819, 0.0
    %v821 = vpack.c.bf16 %v820, %v820
    %v822 = vld [vmem:[#allocation9] sm:$0xf]
    %v823 = vld [vmem:[#allocation9 + $0x4] sm:$0xf]
    %v824 = vld [vmem:[#allocation9 + $0x8] sm:$0xf]
    %v825 = vld [vmem:[#allocation9 + $0xc] sm:$0xf]
    %v826 = vld [vmem:[#allocation9 + $0x10] sm:$0xf]
    %v827 = vld [vmem:[#allocation9 + $0x14] sm:$0xf]
    %v828 = vld [vmem:[#allocation9 + $0x18] sm:$0xf]
    %v829 = vld [vmem:[#allocation9 + $0x1c] sm:$0xf]
    %v830 = vld [vmem:[#allocation9 + $0x20] sm:$0xf]
    %v831 = vld [vmem:[#allocation9 + $0x24] sm:$0xf]
    %v832 = vld [vmem:[#allocation9 + $0x28] sm:$0xf]
    %v833 = vld [vmem:[#allocation9 + $0x2c] sm:$0xf]
    %v834 = vld [vmem:[#allocation9 + $0x30] sm:$0xf]
    %v835 = vld [vmem:[#allocation9 + $0x34] sm:$0xf]
    %v836 = vld [vmem:[#allocation9 + $0x38] sm:$0xf]
    %v837 = vld [vmem:[#allocation9 + $0x3c] sm:$0xf]
    %v838 = vld [vmem:[%s6] sm:$0x1]
    %v839 = vlaneseq
    %v840 = vshrl.u32 %v839, 7
    %v841 = vsub.s32 0, %v840
    %v842 = vrot.slane %v838, %v841
    %v859 = vunpack.c.l.b16 %v822
    %v860 = vunpack.c.l.b16 %v823
    %v861 = vunpack.c.l.b16 %v824
    %v862 = vunpack.c.l.b16 %v825
    %v863 = vunpack.c.l.b16 %v826
    %v864 = vunpack.c.l.b16 %v827
    %v865 = vunpack.c.l.b16 %v828
    %v866 = vunpack.c.l.b16 %v829
    %v867 = vunpack.c.l.b16 %v830
    %v868 = vunpack.c.l.b16 %v831
    %v869 = vunpack.c.l.b16 %v832
    %v870 = vunpack.c.l.b16 %v833
    %v871 = vunpack.c.l.b16 %v834
    %v872 = vunpack.c.l.b16 %v835
    %v873 = vunpack.c.l.b16 %v836
    %v874 = vunpack.c.l.b16 %v837
    %v875 = vpack.c.b16 %v860, %v859
    %v876 = vpack.c.b16 %v862, %v861
    %v877 = vpack.c.b16 %v864, %v863
    %v878 = vpack.c.b16 %v866, %v865
    %v879 = vpack.c.b16 %v868, %v867
    %v880 = vpack.c.b16 %v870, %v869
    %v881 = vpack.c.b16 %v872, %v871
    %v882 = vpack.c.b16 %v874, %v873
    %891 = vmatprep.subr.bf16.mxu0 0
    %892 = vmatpush1.bf16.msra.mxu0 %v875
    %893 = vmatprep.subr.bf16.mxu0 0
    %894 = vmatpush1.bf16.msra.mxu0 %v876
    %895 = vmatprep.subr.bf16.mxu0 0
    %896 = vmatpush1.bf16.msra.mxu0 %v877
    %897 = vmatprep.subr.bf16.mxu0 0
    %898 = vmatpush1.bf16.msra.mxu0 %v878
    %899 = vmatprep.subr.bf16.mxu0 0
    %900 = vmatpush1.bf16.msra.mxu0 %v879
    %901 = vmatprep.subr.bf16.mxu0 0
    %902 = vmatpush1.bf16.msra.mxu0 %v880
    %903 = vmatprep.subr.bf16.mxu0 0
    %904 = vmatpush1.bf16.msra.mxu0 %v881
    %905 = vmatprep.subr.bf16.mxu0 0
    %906 = vmatpush1.bf16.msra.mxu0 %v882
    %907 = vmatprep.subr.bf16.mxu0 0
    %908 = vmatpush1.bf16.msra.mxu0 0
    %909 = vmatprep.subr.bf16.mxu0 0
    %910 = vmatpush1.bf16.msra.mxu0 0
    %911 = vmatprep.subr.bf16.mxu0 0
    %912 = vmatpush1.bf16.msra.mxu0 0
    %913 = vmatprep.subr.bf16.mxu0 0
    %914 = vmatpush1.bf16.msra.mxu0 0
    %915 = vmatprep.subr.bf16.mxu0 0
    %916 = vmatpush1.bf16.msra.mxu0 0
    %917 = vmatprep.subr.bf16.mxu0 0
    %918 = vmatpush1.bf16.msra.mxu0 0
    %919 = vmatprep.subr.bf16.mxu0 0
    %920 = vmatpush1.bf16.msra.mxu0 0
    %921 = vmatprep.subr.bf16.mxu0 0
    %922 = vmatpush1.bf16.msra.mxu0 0
    %923 = vmatprep.mubr.bf16.mxu0 0
    %924 = vmatmul.mubr.bf16.gmra.mrb[0].mxu0 %v821
    %v925 = vpop.f32.mrb[0].mxu0
    %v926 = vadd.f32 %v842, %v925
    %v927 = vpop.f32.mrb[0].mxu0
    %v928 = vpop.f32.mrb[0].mxu0
    %v929 = vpop.f32.mrb[0].mxu0
    %930 = vdwg.mxu0
    %v931 = vadd.f32 %v926, %v490
    %932 = vst [vmem:[#allocation2 + $0x8] sm:$0xff] %v931
    %v933 = vld [vmem:[#allocation2 + $0x8] sm:$0xff]
    %s934 = scalar_lea.vmem [#allocation8], 192
    %v935 = vld [vmem:[%s934] sm:$0xf]
    %v936 = vld [vmem:[%s934 + $0x4] sm:$0xf]
    %v937 = vld [vmem:[%s934 + $0x8] sm:$0xf]
    %v938 = vld [vmem:[%s934 + $0xc] sm:$0xf]
    %v939 = vld [vmem:[%s934 + $0x10] sm:$0xf]
    %v940 = vld [vmem:[%s934 + $0x14] sm:$0xf]
    %v941 = vld [vmem:[%s934 + $0x18] sm:$0xf]
    %v942 = vld [vmem:[%s934 + $0x1c] sm:$0xf]
    %v943 = vld [vmem:[%s934 + $0x20] sm:$0xf]
    %v944 = vld [vmem:[%s934 + $0x24] sm:$0xf]
    %v945 = vld [vmem:[%s934 + $0x28] sm:$0xf]
    %v946 = vld [vmem:[%s934 + $0x2c] sm:$0xf]
    %v947 = vld [vmem:[%s934 + $0x30] sm:$0xf]
    %v948 = vld [vmem:[%s934 + $0x34] sm:$0xf]
    %v949 = vld [vmem:[%s934 + $0x38] sm:$0xf]
    %v950 = vld [vmem:[%s934 + $0x3c] sm:$0xf]
    %s951 = scalar_lea.vmem [#allocation8], 256
    %v952 = vld [vmem:[%s951] sm:$0xf]
    %v953 = vld [vmem:[%s951 + $0x4] sm:$0xf]
    %v954 = vld [vmem:[%s951 + $0x8] sm:$0xf]
    %v955 = vld [vmem:[%s951 + $0xc] sm:$0xf]
    %v956 = vld [vmem:[%s951 + $0x10] sm:$0xf]
    %v957 = vld [vmem:[%s951 + $0x14] sm:$0xf]
    %v958 = vld [vmem:[%s951 + $0x18] sm:$0xf]
    %v959 = vld [vmem:[%s951 + $0x1c] sm:$0xf]
    %v960 = vld [vmem:[%s951 + $0x20] sm:$0xf]
    %v961 = vld [vmem:[%s951 + $0x24] sm:$0xf]
    %v962 = vld [vmem:[%s951 + $0x28] sm:$0xf]
    %v963 = vld [vmem:[%s951 + $0x2c] sm:$0xf]
    %v964 = vld [vmem:[%s951 + $0x30] sm:$0xf]
    %v965 = vld [vmem:[%s951 + $0x34] sm:$0xf]
    %v966 = vld [vmem:[%s951 + $0x38] sm:$0xf]
    %v967 = vld [vmem:[%s951 + $0x3c] sm:$0xf]
    %s968 = scalar_lea.vmem [#allocation8], 320
    %v969 = vld [vmem:[%s968] sm:$0xf]
    %v970 = vld [vmem:[%s968 + $0x4] sm:$0xf]
    %v971 = vld [vmem:[%s968 + $0x8] sm:$0xf]
    %v972 = vld [vmem:[%s968 + $0xc] sm:$0xf]
    %v973 = vld [vmem:[%s968 + $0x10] sm:$0xf]
    %v974 = vld [vmem:[%s968 + $0x14] sm:$0xf]
    %v975 = vld [vmem:[%s968 + $0x18] sm:$0xf]
    %v976 = vld [vmem:[%s968 + $0x1c] sm:$0xf]
    %v977 = vld [vmem:[%s968 + $0x20] sm:$0xf]
    %v978 = vld [vmem:[%s968 + $0x24] sm:$0xf]
    %v979 = vld [vmem:[%s968 + $0x28] sm:$0xf]
    %v980 = vld [vmem:[%s968 + $0x2c] sm:$0xf]
    %v981 = vld [vmem:[%s968 + $0x30] sm:$0xf]
    %v982 = vld [vmem:[%s968 + $0x34] sm:$0xf]
    %v983 = vld [vmem:[%s968 + $0x38] sm:$0xf]
    %v984 = vld [vmem:[%s968 + $0x3c] sm:$0xf]
    %v985 = vld [vmem:[%s4 + $0x1] sm:$0x1]
    %v986 = vld [vmem:[#allocation2 + $0x7] sm:$0xff]
    %v987 = vmax.f32 %v986, 0.0
    %v988 = vpack.c.bf16 %v987, %v987
    %v989 = vmax.f32 %v933, 0.0
    %v990 = vpack.c.bf16 %v989, %v989
    %v1007 = vunpack.c.l.b16 %v952
    %v1008 = vunpack.c.l.b16 %v953
    %v1009 = vunpack.c.l.b16 %v954
    %v1010 = vunpack.c.l.b16 %v955
    %v1011 = vunpack.c.l.b16 %v956
    %v1012 = vunpack.c.l.b16 %v957
    %v1013 = vunpack.c.l.b16 %v958
    %v1014 = vunpack.c.l.b16 %v959
    %v1015 = vunpack.c.l.b16 %v960
    %v1016 = vunpack.c.l.b16 %v961
    %v1017 = vunpack.c.l.b16 %v962
    %v1018 = vunpack.c.l.b16 %v963
    %v1019 = vunpack.c.l.b16 %v964
    %v1020 = vunpack.c.l.b16 %v965
    %v1021 = vunpack.c.l.b16 %v966
    %v1022 = vunpack.c.l.b16 %v967
    %v1023 = vpack.c.b16 %v1008, %v1007
    %v1024 = vpack.c.b16 %v1010, %v1009
    %v1025 = vpack.c.b16 %v1012, %v1011
    %v1026 = vpack.c.b16 %v1014, %v1013
    %v1027 = vpack.c.b16 %v1016, %v1015
    %v1028 = vpack.c.b16 %v1018, %v1017
    %v1029 = vpack.c.b16 %v1020, %v1019
    %v1030 = vpack.c.b16 %v1022, %v1021
    %1039 = vmatprep.subr.bf16.mxu0 0
    %1040 = vmatpush1.bf16.msra.mxu0 %v1023
    %1041 = vmatprep.subr.bf16.mxu0 0
    %1042 = vmatpush1.bf16.msra.mxu0 %v1024
    %1043 = vmatprep.subr.bf16.mxu0 0
    %1044 = vmatpush1.bf16.msra.mxu0 %v1025
    %1045 = vmatprep.subr.bf16.mxu0 0
    %1046 = vmatpush1.bf16.msra.mxu0 %v1026
    %1047 = vmatprep.subr.bf16.mxu0 0
    %1048 = vmatpush1.bf16.msra.mxu0 %v1027
    %1049 = vmatprep.subr.bf16.mxu0 0
    %1050 = vmatpush1.bf16.msra.mxu0 %v1028
    %1051 = vmatprep.subr.bf16.mxu0 0
    %1052 = vmatpush1.bf16.msra.mxu0 %v1029
    %1053 = vmatprep.subr.bf16.mxu0 0
    %1054 = vmatpush1.bf16.msra.mxu0 %v1030
    %1055 = vmatprep.subr.bf16.mxu0 0
    %1056 = vmatpush1.bf16.msra.mxu0 0
    %1057 = vmatprep.subr.bf16.mxu0 0
    %1058 = vmatpush1.bf16.msra.mxu0 0
    %1059 = vmatprep.subr.bf16.mxu0 0
    %1060 = vmatpush1.bf16.msra.mxu0 0
    %1061 = vmatprep.subr.bf16.mxu0 0
    %1062 = vmatpush1.bf16.msra.mxu0 0
    %1063 = vmatprep.subr.bf16.mxu0 0
    %1064 = vmatpush1.bf16.msra.mxu0 0
    %1065 = vmatprep.subr.bf16.mxu0 0
    %1066 = vmatpush1.bf16.msra.mxu0 0
    %1067 = vmatprep.subr.bf16.mxu0 0
    %1068 = vmatpush1.bf16.msra.mxu0 0
    %1069 = vmatprep.subr.bf16.mxu0 0
    %1070 = vmatpush1.bf16.msra.mxu0 0
    %1071 = vmatprep.mubr.bf16.mxu0 0
    %1072 = vmatmul.mubr.bf16.gmra.mrb[0].mxu0 %v990
    %v1073 = vpop.f32.mrb[0].mxu0
    %v1074 = vadd.f32 0.0, %v1073
    %v1075 = vpop.f32.mrb[0].mxu0
    %v1076 = vpop.f32.mrb[0].mxu0
    %v1077 = vpop.f32.mrb[0].mxu0
    %1078 = vdwg.mxu0
    %v1095 = vunpack.c.l.b16 %v935
    %v1096 = vunpack.c.l.b16 %v936
    %v1097 = vunpack.c.l.b16 %v937
    %v1098 = vunpack.c.l.b16 %v938
    %v1099 = vunpack.c.l.b16 %v939
    %v1100 = vunpack.c.l.b16 %v940
    %v1101 = vunpack.c.l.b16 %v941
    %v1102 = vunpack.c.l.b16 %v942
    %v1103 = vunpack.c.l.b16 %v943
    %v1104 = vunpack.c.l.b16 %v944
    %v1105 = vunpack.c.l.b16 %v945
    %v1106 = vunpack.c.l.b16 %v946
    %v1107 = vunpack.c.l.b16 %v947
    %v1108 = vunpack.c.l.b16 %v948
    %v1109 = vunpack.c.l.b16 %v949
    %v1110 = vunpack.c.l.b16 %v950
    %v1111 = vpack.c.b16 %v1096, %v1095
    %v1112 = vpack.c.b16 %v1098, %v1097
    %v1113 = vpack.c.b16 %v1100, %v1099
    %v1114 = vpack.c.b16 %v1102, %v1101
    %v1115 = vpack.c.b16 %v1104, %v1103
    %v1116 = vpack.c.b16 %v1106, %v1105
    %v1117 = vpack.c.b16 %v1108, %v1107
    %v1118 = vpack.c.b16 %v1110, %v1109
    %1127 = vmatprep.subr.bf16.mxu0 0
    %1128 = vmatpush1.bf16.msra.mxu0 %v1111
    %1129 = vmatprep.subr.bf16.mxu0 0
    %1130 = vmatpush1.bf16.msra.mxu0 %v1112
    %1131 = vmatprep.subr.bf16.mxu0 0
    %1132 = vmatpush1.bf16.msra.mxu0 %v1113
    %1133 = vmatprep.subr.bf16.mxu0 0
    %1134 = vmatpush1.bf16.msra.mxu0 %v1114
    %1135 = vmatprep.subr.bf16.mxu0 0
    %1136 = vmatpush1.bf16.msra.mxu0 %v1115
    %1137 = vmatprep.subr.bf16.mxu0 0
    %1138 = vmatpush1.bf16.msra.mxu0 %v1116
    %1139 = vmatprep.subr.bf16.mxu0 0
    %1140 = vmatpush1.bf16.msra.mxu0 %v1117
    %1141 = vmatprep.subr.bf16.mxu0 0
    %1142 = vmatpush1.bf16.msra.mxu0 %v1118
    %1143 = vmatprep.subr.bf16.mxu0 0
    %1144 = vmatpush1.bf16.msra.mxu0 0
    %1145 = vmatprep.subr.bf16.mxu0 0
    %1146 = vmatpush1.bf16.msra.mxu0 0
    %1147 = vmatprep.subr.bf16.mxu0 0
    %1148 = vmatpush1.bf16.msra.mxu0 0
    %1149 = vmatprep.subr.bf16.mxu0 0
    %1150 = vmatpush1.bf16.msra.mxu0 0
    %1151 = vmatprep.subr.bf16.mxu0 0
    %1152 = vmatpush1.bf16.msra.mxu0 0
    %1153 = vmatprep.subr.bf16.mxu0 0
    %1154 = vmatpush1.bf16.msra.mxu0 0
    %1155 = vmatprep.subr.bf16.mxu0 0
    %1156 = vmatpush1.bf16.msra.mxu0 0
    %1157 = vmatprep.subr.bf16.mxu0 0
    %1158 = vmatpush1.bf16.msra.mxu0 0
    %1159 = vmatprep.mubr.bf16.mxu0 0
    %1160 = vmatmul.mubr.bf16.gmra.mrb[0].mxu0 %v988
    %v1161 = vpop.f32.mrb[0].mxu0
    %v1162 = vadd.f32 %v1074, %v1161
    %v1163 = vpop.f32.mrb[0].mxu0
    %v1164 = vpop.f32.mrb[0].mxu0
    %v1165 = vpop.f32.mrb[0].mxu0
    %1166 = vdwg.mxu0
    %v1167 = vld [vmem:[#allocation2 + $0x9] sm:$0xff]
    %v1168 = vmax.f32 %v1167, 0.0
    %v1169 = vpack.c.bf16 %v1168, %v1168
    %v1186 = vunpack.c.l.b16 %v969
    %v1187 = vunpack.c.l.b16 %v970
    %v1188 = vunpack.c.l.b16 %v971
    %v1189 = vunpack.c.l.b16 %v972
    %v1190 = vunpack.c.l.b16 %v973
    %v1191 = vunpack.c.l.b16 %v974
    %v1192 = vunpack.c.l.b16 %v975
    %v1193 = vunpack.c.l.b16 %v976
    %v1194 = vunpack.c.l.b16 %v977
    %v1195 = vunpack.c.l.b16 %v978
    %v1196 = vunpack.c.l.b16 %v979
    %v1197 = vunpack.c.l.b16 %v980
    %v1198 = vunpack.c.l.b16 %v981
    %v1199 = vunpack.c.l.b16 %v982
    %v1200 = vunpack.c.l.b16 %v983
    %v1201 = vunpack.c.l.b16 %v984
    %v1202 = vpack.c.b16 %v1187, %v1186
    %v1203 = vpack.c.b16 %v1189, %v1188
    %v1204 = vpack.c.b16 %v1191, %v1190
    %v1205 = vpack.c.b16 %v1193, %v1192
    %v1206 = vpack.c.b16 %v1195, %v1194
    %v1207 = vpack.c.b16 %v1197, %v1196
    %v1208 = vpack.c.b16 %v1199, %v1198
    %v1209 = vpack.c.b16 %v1201, %v1200
    %1218 = vmatprep.subr.bf16.mxu0 0
    %1219 = vmatpush1.bf16.msra.mxu0 %v1202
    %1220 = vmatprep.subr.bf16.mxu0 0
    %1221 = vmatpush1.bf16.msra.mxu0 %v1203
    %1222 = vmatprep.subr.bf16.mxu0 0
    %1223 = vmatpush1.bf16.msra.mxu0 %v1204
    %1224 = vmatprep.subr.bf16.mxu0 0
    %1225 = vmatpush1.bf16.msra.mxu0 %v1205
    %1226 = vmatprep.subr.bf16.mxu0 0
    %1227 = vmatpush1.bf16.msra.mxu0 %v1206
    %1228 = vmatprep.subr.bf16.mxu0 0
    %1229 = vmatpush1.bf16.msra.mxu0 %v1207
    %1230 = vmatprep.subr.bf16.mxu0 0
    %1231 = vmatpush1.bf16.msra.mxu0 %v1208
    %1232 = vmatprep.subr.bf16.mxu0 0
    %1233 = vmatpush1.bf16.msra.mxu0 %v1209
    %1234 = vmatprep.subr.bf16.mxu0 0
    %1235 = vmatpush1.bf16.msra.mxu0 0
    %1236 = vmatprep.subr.bf16.mxu0 0
    %1237 = vmatpush1.bf16.msra.mxu0 0
    %1238 = vmatprep.subr.bf16.mxu0 0
    %1239 = vmatpush1.bf16.msra.mxu0 0
    %1240 = vmatprep.subr.bf16.mxu0 0
    %1241 = vmatpush1.bf16.msra.mxu0 0
    %1242 = vmatprep.subr.bf16.mxu0 0
    %1243 = vmatpush1.bf16.msra.mxu0 0
    %1244 = vmatprep.subr.bf16.mxu0 0
    %1245 = vmatpush1.bf16.msra.mxu0 0
    %1246 = vmatprep.subr.bf16.mxu0 0
    %1247 = vmatpush1.bf16.msra.mxu0 0
    %1248 = vmatprep.subr.bf16.mxu0 0
    %1249 = vmatpush1.bf16.msra.mxu0 0
    %1250 = vmatprep.mubr.bf16.mxu0 0
    %1251 = vmatmul.mubr.bf16.gmra.mrb[0].mxu0 %v1169
    %v1252 = vpop.f32.mrb[0].mxu0
    %v1253 = vadd.f32 0.0, %v1252
    %v1254 = vpop.f32.mrb[0].mxu0
    %v1255 = vpop.f32.mrb[0].mxu0
    %v1256 = vpop.f32.mrb[0].mxu0
    %1257 = vdwg.mxu0
    %v1258 = vadd.f32 %v1162, %v1253
    %v1259 = vlaneseq
    %v1260 = vshrl.u32 %v1259, 7
    %v1261 = vsub.s32 0, %v1260
    %v1262 = vrot.slane %v985, %v1261
    %v1263 = vadd.f32 %v1258, %v1262
    %v1264 = vmax.f32 %v1263, 0.0
    %v1265 = vpack.c.bf16 %v1264, %v1264
    %s1266 = scalar_lea.vmem [#allocation9], 64
    %v1267 = vld [vmem:[%s1266] sm:$0xf]
    %v1268 = vld [vmem:[%s1266 + $0x4] sm:$0xf]
    %v1269 = vld [vmem:[%s1266 + $0x8] sm:$0xf]
    %v1270 = vld [vmem:[%s1266 + $0xc] sm:$0xf]
    %v1271 = vld [vmem:[%s1266 + $0x10] sm:$0xf]
    %v1272 = vld [vmem:[%s1266 + $0x14] sm:$0xf]
    %v1273 = vld [vmem:[%s1266 + $0x18] sm:$0xf]
    %v1274 = vld [vmem:[%s1266 + $0x1c] sm:$0xf]
    %v1275 = vld [vmem:[%s1266 + $0x20] sm:$0xf]
    %v1276 = vld [vmem:[%s1266 + $0x24] sm:$0xf]
    %v1277 = vld [vmem:[%s1266 + $0x28] sm:$0xf]
    %v1278 = vld [vmem:[%s1266 + $0x2c] sm:$0xf]
    %v1279 = vld [vmem:[%s1266 + $0x30] sm:$0xf]
    %v1280 = vld [vmem:[%s1266 + $0x34] sm:$0xf]
    %v1281 = vld [vmem:[%s1266 + $0x38] sm:$0xf]
    %v1282 = vld [vmem:[%s1266 + $0x3c] sm:$0xf]
    %v1283 = vld [vmem:[%s6 + $0x1] sm:$0x1]
    %v1284 = vlaneseq
    %v1285 = vshrl.u32 %v1284, 7
    %v1286 = vsub.s32 0, %v1285
    %v1287 = vrot.slane %v1283, %v1286
    %v1304 = vunpack.c.l.b16 %v1267
    %v1305 = vunpack.c.l.b16 %v1268
    %v1306 = vunpack.c.l.b16 %v1269
    %v1307 = vunpack.c.l.b16 %v1270
    %v1308 = vunpack.c.l.b16 %v1271
    %v1309 = vunpack.c.l.b16 %v1272
    %v1310 = vunpack.c.l.b16 %v1273
    %v1311 = vunpack.c.l.b16 %v1274
    %v1312 = vunpack.c.l.b16 %v1275
    %v1313 = vunpack.c.l.b16 %v1276
    %v1314 = vunpack.c.l.b16 %v1277
    %v1315 = vunpack.c.l.b16 %v1278
    %v1316 = vunpack.c.l.b16 %v1279
    %v1317 = vunpack.c.l.b16 %v1280
    %v1318 = vunpack.c.l.b16 %v1281
    %v1319 = vunpack.c.l.b16 %v1282
    %v1320 = vpack.c.b16 %v1305, %v1304
    %v1321 = vpack.c.b16 %v1307, %v1306
    %v1322 = vpack.c.b16 %v1309, %v1308
    %v1323 = vpack.c.b16 %v1311, %v1310
    %v1324 = vpack.c.b16 %v1313, %v1312
    %v1325 = vpack.c.b16 %v1315, %v1314
    %v1326 = vpack.c.b16 %v1317, %v1316
    %v1327 = vpack.c.b16 %v1319, %v1318
    %1336 = vmatprep.subr.bf16.mxu0 0
    %1337 = vmatpush1.bf16.msra.mxu0 %v1320
    %1338 = vmatprep.subr.bf16.mxu0 0
    %1339 = vmatpush1.bf16.msra.mxu0 %v1321
    %1340 = vmatprep.subr.bf16.mxu0 0
    %1341 = vmatpush1.bf16.msra.mxu0 %v1322
    %1342 = vmatprep.subr.bf16.mxu0 0
    %1343 = vmatpush1.bf16.msra.mxu0 %v1323
    %1344 = vmatprep.subr.bf16.mxu0 0
    %1345 = vmatpush1.bf16.msra.mxu0 %v1324
    %1346 = vmatprep.subr.bf16.mxu0 0
    %1347 = vmatpush1.bf16.msra.mxu0 %v1325
    %1348 = vmatprep.subr.bf16.mxu0 0
    %1349 = vmatpush1.bf16.msra.mxu0 %v1326
    %1350 = vmatprep.subr.bf16.mxu0 0
    %1351 = vmatpush1.bf16.msra.mxu0 %v1327
    %1352 = vmatprep.subr.bf16.mxu0 0
    %1353 = vmatpush1.bf16.msra.mxu0 0
    %1354 = vmatprep.subr.bf16.mxu0 0
    %1355 = vmatpush1.bf16.msra.mxu0 0
    %1356 = vmatprep.subr.bf16.mxu0 0
    %1357 = vmatpush1.bf16.msra.mxu0 0
    %1358 = vmatprep.subr.bf16.mxu0 0
    %1359 = vmatpush1.bf16.msra.mxu0 0
    %1360 = vmatprep.subr.bf16.mxu0 0
    %1361 = vmatpush1.bf16.msra.mxu0 0
    %1362 = vmatprep.subr.bf16.mxu0 0
    %1363 = vmatpush1.bf16.msra.mxu0 0
    %1364 = vmatprep.subr.bf16.mxu0 0
    %1365 = vmatpush1.bf16.msra.mxu0 0
    %1366 = vmatprep.subr.bf16.mxu0 0
    %1367 = vmatpush1.bf16.msra.mxu0 0
    %1368 = vmatprep.mubr.bf16.mxu0 0
    %1369 = vmatmul.mubr.bf16.gmra.mrb[0].mxu0 %v1265
    %v1370 = vpop.f32.mrb[0].mxu0
    %v1371 = vadd.f32 %v1287, %v1370
    %v1372 = vpop.f32.mrb[0].mxu0
    %v1373 = vpop.f32.mrb[0].mxu0
    %v1374 = vpop.f32.mrb[0].mxu0
    %1375 = vdwg.mxu0
    %v1376 = vadd.f32 %v1371, %v933
    %1377 = vst [vmem:[#allocation2 + $0x8] sm:$0xff] %v1376
    %v1378 = vld [vmem:[#allocation2 + $0xf] sm:$0x1]
    %1379 = vst [vmem:[#allocation2 + $0x16] sm:$0x1] %v1378
    %1380 = vst [vmem:[#allocation2 + $0x17] sm:$0x1] %v1378
    %v1381 = vld [vmem:[#allocation2 + $0xe] sm:$0x1]
    %1382 = vst [vmem:[#allocation2 + $0x14] sm:$0x1] %v1381
    %1383 = vst [vmem:[#allocation2 + $0x15] sm:$0x1] %v1381
    %v1384 = vld [vmem:[#allocation2 + $0xd] sm:$0x1]
    %1385 = vst [vmem:[#allocation2 + $0x12] sm:$0x1] %v1384
    %1386 = vst [vmem:[#allocation2 + $0x13] sm:$0x1] %v1384
    %v1387 = vld [vmem:[#allocation2 + $0xc] sm:$0x1]
    %1388 = vst [vmem:[#allocation2 + $0x10] sm:$0x1] %v1387
    %1389 = vst [vmem:[#allocation2 + $0x11] sm:$0x1] %v1387
    %v1390 = vld [vmem:[#allocation2 + $0xb] sm:$0x1]
    %1391 = vst [vmem:[#allocation2 + $0xe] sm:$0x1] %v1390
    %1392 = vst [vmem:[#allocation2 + $0xf] sm:$0x1] %v1390
    %v1393 = vld [vmem:[#allocation2 + $0xa] sm:$0x1]
    %1394 = vst [vmem:[#allocation2 + $0xc] sm:$0x1] %v1393
    %1395 = vst [vmem:[#allocation2 + $0xd] sm:$0x1] %v1393
    %v1396 = vld [vmem:[#allocation2 + $0x9] sm:$0x1]
    %1397 = vst [vmem:[#allocation2 + $0xa] sm:$0x1] %v1396
    %1398 = vst [vmem:[#allocation2 + $0xb] sm:$0x1] %v1396
    %v1399 = vld [vmem:[#allocation2 + $0x8] sm:$0x1]
    %1400 = vst [vmem:[#allocation2 + $0x8] sm:$0x1] %v1399
    %1401 = vst [vmem:[#allocation2 + $0x9] sm:$0x1] %v1399
    %s1402 = scalar_lea.vmem [#allocation8], 384
    %v1403 = vld [vmem:[%s1402] sm:$0xf]
    %v1404 = vld [vmem:[%s1402 + $0x4] sm:$0xf]
    %v1405 = vld [vmem:[%s1402 + $0x8] sm:$0xf]
    %v1406 = vld [vmem:[%s1402 + $0xc] sm:$0xf]
    %v1407 = vld [vmem:[%s1402 + $0x10] sm:$0xf]
    %v1408 = vld [vmem:[%s1402 + $0x14] sm:$0xf]
    %v1409 = vld [vmem:[%s1402 + $0x18] sm:$0xf]
    %v1410 = vld [vmem:[%s1402 + $0x1c] sm:$0xf]
    %v1411 = vld [vmem:[%s1402 + $0x20] sm:$0xf]
    %v1412 = vld [vmem:[%s1402 + $0x24] sm:$0xf]
    %v1413 = vld [vmem:[%s1402 + $0x28] sm:$0xf]
    %v1414 = vld [vmem:[%s1402 + $0x2c] sm:$0xf]
    %v1415 = vld [vmem:[%s1402 + $0x30] sm:$0xf]
    %v1416 = vld [vmem:[%s1402 + $0x34] sm:$0xf]
    %v1417 = vld [vmem:[%s1402 + $0x38] sm:$0xf]
    %v1418 = vld [vmem:[%s1402 + $0x3c] sm:$0xf]
    %s1419 = scalar_lea.vmem [#allocation8], 448
    %v1420 = vld [vmem:[%s1419] sm:$0xf]
    %v1421 = vld [vmem:[%s1419 + $0x4] sm:$0xf]
    %v1422 = vld [vmem:[%s1419 + $0x8] sm:$0xf]
    %v1423 = vld [vmem:[%s1419 + $0xc] sm:$0xf]
    %v1424 = vld [vmem:[%s1419 + $0x10] sm:$0xf]
    %v1425 = vld [vmem:[%s1419 + $0x14] sm:$0xf]
    %v1426 = vld [vmem:[%s1419 + $0x18] sm:$0xf]
    %v1427 = vld [vmem:[%s1419 + $0x1c] sm:$0xf]
    %v1428 = vld [vmem:[%s1419 + $0x20] sm:$0xf]
    %v1429 = vld [vmem:[%s1419 + $0x24] sm:$0xf]
    %v1430 = vld [vmem:[%s1419 + $0x28] sm:$0xf]
    %v1431 = vld [vmem:[%s1419 + $0x2c] sm:$0xf]
    %v1432 = vld [vmem:[%s1419 + $0x30] sm:$0xf]
    %v1433 = vld [vmem:[%s1419 + $0x34] sm:$0xf]
    %v1434 = vld [vmem:[%s1419 + $0x38] sm:$0xf]
    %v1435 = vld [vmem:[%s1419 + $0x3c] sm:$0xf]
    %s1436 = scalar_lea.vmem [#allocation8], 512
    %v1437 = vld [vmem:[%s1436] sm:$0xf]
    %v1438 = vld [vmem:[%s1436 + $0x4] sm:$0xf]
    %v1439 = vld [vmem:[%s1436 + $0x8] sm:$0xf]
    %v1440 = vld [vmem:[%s1436 + $0xc] sm:$0xf]
    %v1441 = vld [vmem:[%s1436 + $0x10] sm:$0xf]
    %v1442 = vld [vmem:[%s1436 + $0x14] sm:$0xf]
    %v1443 = vld [vmem:[%s1436 + $0x18] sm:$0xf]
    %v1444 = vld [vmem:[%s1436 + $0x1c] sm:$0xf]
    %v1445 = vld [vmem:[%s1436 + $0x20] sm:$0xf]
    %v1446 = vld [vmem:[%s1436 + $0x24] sm:$0xf]
    %v1447 = vld [vmem:[%s1436 + $0x28] sm:$0xf]
    %v1448 = vld [vmem:[%s1436 + $0x2c] sm:$0xf]
    %v1449 = vld [vmem:[%s1436 + $0x30] sm:$0xf]
    %v1450 = vld [vmem:[%s1436 + $0x34] sm:$0xf]
    %v1451 = vld [vmem:[%s1436 + $0x38] sm:$0xf]
    %v1452 = vld [vmem:[%s1436 + $0x3c] sm:$0xf]
    %v1453 = vld [vmem:[%s4 + $0x2] sm:$0x1]
    %v1454 = vld [vmem:[#allocation2 + $0x7] sm:$0xff]
    %v1455 = vld [vmem:[#allocation2 + $0xf] sm:$0xff]
    %v1456 = vpack.c.bf16 %v1455, %v1454
    %v1457 = vld [vmem:[#allocation2 + $0x8] sm:$0xff]
    %v1458 = vld [vmem:[#allocation2 + $0x10] sm:$0xff]
    %v1459 = vpack.c.bf16 %v1458, %v1457
    %v1476 = vunpack.c.l.b16 %v1420
    %v1477 = vunpack.c.l.b16 %v1421
    %v1478 = vunpack.c.l.b16 %v1422
    %v1479 = vunpack.c.l.b16 %v1423
    %v1480 = vunpack.c.l.b16 %v1424
    %v1481 = vunpack.c.l.b16 %v1425
    %v1482 = vunpack.c.l.b16 %v1426
    %v1483 = vunpack.c.l.b16 %v1427
    %v1484 = vunpack.c.l.b16 %v1428
    %v1485 = vunpack.c.l.b16 %v1429
    %v1486 = vunpack.c.l.b16 %v1430
    %v1487 = vunpack.c.l.b16 %v1431
    %v1488 = vunpack.c.l.b16 %v1432
    %v1489 = vunpack.c.l.b16 %v1433
    %v1490 = vunpack.c.l.b16 %v1434
    %v1491 = vunpack.c.l.b16 %v1435
    %v1492 = vpack.c.b16 %v1477, %v1476
    %v1493 = vpack.c.b16 %v1479, %v1478
    %v1494 = vpack.c.b16 %v1481, %v1480
    %v1495 = vpack.c.b16 %v1483, %v1482
    %v1496 = vpack.c.b16 %v1485, %v1484
    %v1497 = vpack.c.b16 %v1487, %v1486
    %v1498 = vpack.c.b16 %v1489, %v1488
    %v1499 = vpack.c.b16 %v1491, %v1490
    %1508 = vmatprep.subr.bf16.mxu0 0
    %1509 = vmatpush1.bf16.msra.mxu0 %v1492
    %1510 = vmatprep.subr.bf16.mxu0 0
    %1511 = vmatpush1.bf16.msra.mxu0 %v1493
    %1512 = vmatprep.subr.bf16.mxu0 0
    %1513 = vmatpush1.bf16.msra.mxu0 %v1494
    %1514 = vmatprep.subr.bf16.mxu0 0
    %1515 = vmatpush1.bf16.msra.mxu0 %v1495
    %1516 = vmatprep.subr.bf16.mxu0 0
    %1517 = vmatpush1.bf16.msra.mxu0 %v1496
    %1518 = vmatprep.subr.bf16.mxu0 0
    %1519 = vmatpush1.bf16.msra.mxu0 %v1497
    %1520 = vmatprep.subr.bf16.mxu0 0
    %1521 = vmatpush1.bf16.msra.mxu0 %v1498
    %1522 = vmatprep.subr.bf16.mxu0 0
    %1523 = vmatpush1.bf16.msra.mxu0 %v1499
    %1524 = vmatprep.subr.bf16.mxu0 0
    %1525 = vmatpush1.bf16.msra.mxu0 0
    %1526 = vmatprep.subr.bf16.mxu0 0
    %1527 = vmatpush1.bf16.msra.mxu0 0
    %1528 = vmatprep.subr.bf16.mxu0 0
    %1529 = vmatpush1.bf16.msra.mxu0 0
    %1530 = vmatprep.subr.bf16.mxu0 0
    %1531 = vmatpush1.bf16.msra.mxu0 0
    %1532 = vmatprep.subr.bf16.mxu0 0
    %1533 = vmatpush1.bf16.msra.mxu0 0
    %1534 = vmatprep.subr.bf16.mxu0 0
    %1535 = vmatpush1.bf16.msra.mxu0 0
    %1536 = vmatprep.subr.bf16.mxu0 0
    %1537 = vmatpush1.bf16.msra.mxu0 0
    %1538 = vmatprep.subr.bf16.mxu0 0
    %1539 = vmatpush1.bf16.msra.mxu0 0
    %1540 = vmatprep.mubr.bf16.mxu0 0
    %1541 = vmatmul.mubr.bf16.gmra.mrb[0].mxu0 %v1459
    %v1542 = vpop.f32.mrb[0].mxu0
    %v1543 = vadd.f32 0.0, %v1542
    %v1544 = vpop.f32.mrb[0].mxu0
    %v1545 = vpop.f32.mrb[0].mxu0
    %v1546 = vadd.f32 0.0, %v1545
    %v1547 = vpop.f32.mrb[0].mxu0
    %1548 = vdwg.mxu0
    %v1565 = vunpack.c.l.b16 %v1403
    %v1566 = vunpack.c.l.b16 %v1404
    %v1567 = vunpack.c.l.b16 %v1405
    %v1568 = vunpack.c.l.b16 %v1406
    %v1569 = vunpack.c.l.b16 %v1407
    %v1570 = vunpack.c.l.b16 %v1408
    %v1571 = vunpack.c.l.b16 %v1409
    %v1572 = vunpack.c.l.b16 %v1410
    %v1573 = vunpack.c.l.b16 %v1411
    %v1574 = vunpack.c.l.b16 %v1412
    %v1575 = vunpack.c.l.b16 %v1413
    %v1576 = vunpack.c.l.b16 %v1414
    %v1577 = vunpack.c.l.b16 %v1415
    %v1578 = vunpack.c.l.b16 %v1416
    %v1579 = vunpack.c.l.b16 %v1417
    %v1580 = vunpack.c.l.b16 %v1418
    %v1581 = vpack.c.b16 %v1566, %v1565
    %v1582 = vpack.c.b16 %v1568, %v1567
    %v1583 = vpack.c.b16 %v1570, %v1569
    %v1584 = vpack.c.b16 %v1572, %v1571
    %v1585 = vpack.c.b16 %v1574, %v1573
    %v1586 = vpack.c.b16 %v1576, %v1575
    %v1587 = vpack.c.b16 %v1578, %v1577
    %v1588 = vpack.c.b16 %v1580, %v1579
    %1597 = vmatprep.subr.bf16.mxu0 0
    %1598 = vmatpush1.bf16.msra.mxu0 %v1581
    %1599 = vmatprep.subr.bf16.mxu0 0
    %1600 = vmatpush1.bf16.msra.mxu0 %v1582
    %1601 = vmatprep.subr.bf16.mxu0 0
    %1602 = vmatpush1.bf16.msra.mxu0 %v1583
    %1603 = vmatprep.subr.bf16.mxu0 0
    %1604 = vmatpush1.bf16.msra.mxu0 %v1584
    %1605 = vmatprep.subr.bf16.mxu0 0
    %1606 = vmatpush1.bf16.msra.mxu0 %v1585
    %1607 = vmatprep.subr.bf16.mxu0 0
    %1608 = vmatpush1.bf16.msra.mxu0 %v1586
    %1609 = vmatprep.subr.bf16.mxu0 0
    %1610 = vmatpush1.bf16.msra.mxu0 %v1587
    %1611 = vmatprep.subr.bf16.mxu0 0
    %1612 = vmatpush1.bf16.msra.mxu0 %v1588
    %1613 = vmatprep.subr.bf16.mxu0 0
    %1614 = vmatpush1.bf16.msra.mxu0 0
    %1615 = vmatprep.subr.bf16.mxu0 0
    %1616 = vmatpush1.bf16.msra.mxu0 0
    %1617 = vmatprep.subr.bf16.mxu0 0
    %1618 = vmatpush1.bf16.msra.mxu0 0
    %1619 = vmatprep.subr.bf16.mxu0 0
    %1620 = vmatpush1.bf16.msra.mxu0 0
    %1621 = vmatprep.subr.bf16.mxu0 0
    %1622 = vmatpush1.bf16.msra.mxu0 0
    %1623 = vmatprep.subr.bf16.mxu0 0
    %1624 = vmatpush1.bf16.msra.mxu0 0
    %1625 = vmatprep.subr.bf16.mxu0 0
    %1626 = vmatpush1.bf16.msra.mxu0 0
    %1627 = vmatprep.subr.bf16.mxu0 0
    %1628 = vmatpush1.bf16.msra.mxu0 0
    %1629 = vmatprep.mubr.bf16.mxu0 0
    %1630 = vmatmul.mubr.bf16.gmra.mrb[0].mxu0 %v1456
    %v1631 = vpop.f32.mrb[0].mxu0
    %v1632 = vadd.f32 %v1543, %v1631
    %v1633 = vpop.f32.mrb[0].mxu0
    %v1634 = vpop.f32.mrb[0].mxu0
    %v1635 = vadd.f32 %v1546, %v1634
    %v1636 = vpop.f32.mrb[0].mxu0
    %1637 = vdwg.mxu0
    %v1638 = vld [vmem:[#allocation2 + $0x9] sm:$0xff]
    %v1639 = vld [vmem:[#allocation2 + $0x11] sm:$0xff]
    %v1640 = vpack.c.bf16 %v1639, %v1638
    %v1657 = vunpack.c.l.b16 %v1437
    %v1658 = vunpack.c.l.b16 %v1438
    %v1659 = vunpack.c.l.b16 %v1439
    %v1660 = vunpack.c.l.b16 %v1440
    %v1661 = vunpack.c.l.b16 %v1441
    %v1662 = vunpack.c.l.b16 %v1442
    %v1663 = vunpack.c.l.b16 %v1443
    %v1664 = vunpack.c.l.b16 %v1444
    %v1665 = vunpack.c.l.b16 %v1445
    %v1666 = vunpack.c.l.b16 %v1446
    %v1667 = vunpack.c.l.b16 %v1447
    %v1668 = vunpack.c.l.b16 %v1448
    %v1669 = vunpack.c.l.b16 %v1449
    %v1670 = vunpack.c.l.b16 %v1450
    %v1671 = vunpack.c.l.b16 %v1451
    %v1672 = vunpack.c.l.b16 %v1452
    %v1673 = vpack.c.b16 %v1658, %v1657
    %v1674 = vpack.c.b16 %v1660, %v1659
    %v1675 = vpack.c.b16 %v1662, %v1661
    %v1676 = vpack.c.b16 %v1664, %v1663
    %v1677 = vpack.c.b16 %v1666, %v1665
    %v1678 = vpack.c.b16 %v1668, %v1667
    %v1679 = vpack.c.b16 %v1670, %v1669
    %v1680 = vpack.c.b16 %v1672, %v1671
    %1689 = vmatprep.subr.bf16.mxu0 0
    %1690 = vmatpush1.bf16.msra.mxu0 %v1673
    %1691 = vmatprep.subr.bf16.mxu0 0
    %1692 = vmatpush1.bf16.msra.mxu0 %v1674
    %1693 = vmatprep.subr.bf16.mxu0 0
    %1694 = vmatpush1.bf16.msra.mxu0 %v1675
    %1695 = vmatprep.subr.bf16.mxu0 0
    %1696 = vmatpush1.bf16.msra.mxu0 %v1676
    %1697 = vmatprep.subr.bf16.mxu0 0
    %1698 = vmatpush1.bf16.msra.mxu0 %v1677
    %1699 = vmatprep.subr.bf16.mxu0 0
    %1700 = vmatpush1.bf16.msra.mxu0 %v1678
    %1701 = vmatprep.subr.bf16.mxu0 0
    %1702 = vmatpush1.bf16.msra.mxu0 %v1679
    %1703 = vmatprep.subr.bf16.mxu0 0
    %1704 = vmatpush1.bf16.msra.mxu0 %v1680
    %1705 = vmatprep.subr.bf16.mxu0 0
    %1706 = vmatpush1.bf16.msra.mxu0 0
    %1707 = vmatprep.subr.bf16.mxu0 0
    %1708 = vmatpush1.bf16.msra.mxu0 0
    %1709 = vmatprep.subr.bf16.mxu0 0
    %1710 = vmatpush1.bf16.msra.mxu0 0
    %1711 = vmatprep.subr.bf16.mxu0 0
    %1712 = vmatpush1.bf16.msra.mxu0 0
    %1713 = vmatprep.subr.bf16.mxu0 0
    %1714 = vmatpush1.bf16.msra.mxu0 0
    %1715 = vmatprep.subr.bf16.mxu0 0
    %1716 = vmatpush1.bf16.msra.mxu0 0
    %1717 = vmatprep.subr.bf16.mxu0 0
    %1718 = vmatpush1.bf16.msra.mxu0 0
    %1719 = vmatprep.subr.bf16.mxu0 0
    %1720 = vmatpush1.bf16.msra.mxu0 0
    %1721 = vmatprep.mubr.bf16.mxu0 0
    %1722 = vmatmul.mubr.bf16.gmra.mrb[0].mxu0 %v1640
    %v1723 = vpop.f32.mrb[0].mxu0
    %v1724 = vadd.f32 0.0, %v1723
    %v1725 = vpop.f32.mrb[0].mxu0
    %v1726 = vpop.f32.mrb[0].mxu0
    %v1727 = vadd.f32 0.0, %v1726
    %v1728 = vpop.f32.mrb[0].mxu0
    %1729 = vdwg.mxu0
    %v1730 = vadd.f32 %v1632, %v1724
    %v1731 = vadd.f32 %v1635, %v1727
    %v1732 = vlaneseq
    %v1733 = vshrl.u32 %v1732, 7
    %v1734 = vsub.s32 0, %v1733
    %v1735 = vrot.slane %v1453, %v1734
    %v1736 = vadd.f32 %v1730, %v1735
    %v1737 = vadd.f32 %v1731, %v1735
    %1738 = vst [vmem:[#allocation2 + $0x8] sm:$0xff] %v1736
    %1739 = vst [vmem:[#allocation2 + $0x10] sm:$0xff] %v1737
    %v1740 = vld [vmem:[#allocation2 + $0x8] sm:$0xff]
    %v1741 = vld [vmem:[#allocation2 + $0x10] sm:$0xff]
    %s1742 = scalar_lea.vmem [#allocation8], 576
    %v1743 = vld [vmem:[%s1742] sm:$0xf]
    %v1744 = vld [vmem:[%s1742 + $0x4] sm:$0xf]
    %v1745 = vld [vmem:[%s1742 + $0x8] sm:$0xf]
    %v1746 = vld [vmem:[%s1742 + $0xc] sm:$0xf]
    %v1747 = vld [vmem:[%s1742 + $0x10] sm:$0xf]
    %v1748 = vld [vmem:[%s1742 + $0x14] sm:$0xf]
    %v1749 = vld [vmem:[%s1742 + $0x18] sm:$0xf]
    %v1750 = vld [vmem:[%s1742 + $0x1c] sm:$0xf]
    %v1751 = vld [vmem:[%s1742 + $0x20] sm:$0xf]
    %v1752 = vld [vmem:[%s1742 + $0x24] sm:$0xf]
    %v1753 = vld [vmem:[%s1742 + $0x28] sm:$0xf]
    %v1754 = vld [vmem:[%s1742 + $0x2c] sm:$0xf]
    %v1755 = vld [vmem:[%s1742 + $0x30] sm:$0xf]
    %v1756 = vld [vmem:[%s1742 + $0x34] sm:$0xf]
    %v1757 = vld [vmem:[%s1742 + $0x38] sm:$0xf]
    %v1758 = vld [vmem:[%s1742 + $0x3c] sm:$0xf]
    %s1759 = scalar_lea.vmem [#allocation8], 640
    %v1760 = vld [vmem:[%s1759] sm:$0xf]
    %v1761 = vld [vmem:[%s1759 + $0x4] sm:$0xf]
    %v1762 = vld [vmem:[%s1759 + $0x8] sm:$0xf]
    %v1763 = vld [vmem:[%s1759 + $0xc] sm:$0xf]
    %v1764 = vld [vmem:[%s1759 + $0x10] sm:$0xf]
    %v1765 = vld [vmem:[%s1759 + $0x14] sm:$0xf]
    %v1766 = vld [vmem:[%s1759 + $0x18] sm:$0xf]
    %v1767 = vld [vmem:[%s1759 + $0x1c] sm:$0xf]
    %v1768 = vld [vmem:[%s1759 + $0x20] sm:$0xf]
    %v1769 = vld [vmem:[%s1759 + $0x24] sm:$0xf]
    %v1770 = vld [vmem:[%s1759 + $0x28] sm:$0xf]
    %v1771 = vld [vmem:[%s1759 + $0x2c] sm:$0xf]
    %v1772 = vld [vmem:[%s1759 + $0x30] sm:$0xf]
    %v1773 = vld [vmem:[%s1759 + $0x34] sm:$0xf]
    %v1774 = vld [vmem:[%s1759 + $0x38] sm:$0xf]
    %v1775 = vld [vmem:[%s1759 + $0x3c] sm:$0xf]
    %s1776 = scalar_lea.vmem [#allocation8], 704
    %v1777 = vld [vmem:[%s1776] sm:$0xf]
    %v1778 = vld [vmem:[%s1776 + $0x4] sm:$0xf]
    %v1779 = vld [vmem:[%s1776 + $0x8] sm:$0xf]
    %v1780 = vld [vmem:[%s1776 + $0xc] sm:$0xf]
    %v1781 = vld [vmem:[%s1776 + $0x10] sm:$0xf]
    %v1782 = vld [vmem:[%s1776 + $0x14] sm:$0xf]
    %v1783 = vld [vmem:[%s1776 + $0x18] sm:$0xf]
    %v1784 = vld [vmem:[%s1776 + $0x1c] sm:$0xf]
    %v1785 = vld [vmem:[%s1776 + $0x20] sm:$0xf]
    %v1786 = vld [vmem:[%s1776 + $0x24] sm:$0xf]
    %v1787 = vld [vmem:[%s1776 + $0x28] sm:$0xf]
    %v1788 = vld [vmem:[%s1776 + $0x2c] sm:$0xf]
    %v1789 = vld [vmem:[%s1776 + $0x30] sm:$0xf]
    %v1790 = vld [vmem:[%s1776 + $0x34] sm:$0xf]
    %v1791 = vld [vmem:[%s1776 + $0x38] sm:$0xf]
    %v1792 = vld [vmem:[%s1776 + $0x3c] sm:$0xf]
    %v1793 = vld [vmem:[%s4 + $0x3] sm:$0x1]
    %v1794 = vld [vmem:[#allocation2 + $0x5] sm:$0xff]
    %v1795 = vld [vmem:[#allocation2 + $0xd] sm:$0xff]
    %v1796 = vmax.f32 %v1794, 0.0
    %v1797 = vmax.f32 %v1795, 0.0
    %v1798 = vpack.c.bf16 %v1797, %v1796
    %v1799 = vmax.f32 %v1740, 0.0
    %v1800 = vmax.f32 %v1741, 0.0
    %v1801 = vpack.c.bf16 %v1800, %v1799
    %v1818 = vunpack.c.l.b16 %v1760
    %v1819 = vunpack.c.l.b16 %v1761
    %v1820 = vunpack.c.l.b16 %v1762
    %v1821 = vunpack.c.l.b16 %v1763
    %v1822 = vunpack.c.l.b16 %v1764
    %v1823 = vunpack.c.l.b16 %v1765
    %v1824 = vunpack.c.l.b16 %v1766
    %v1825 = vunpack.c.l.b16 %v1767
    %v1826 = vunpack.c.l.b16 %v1768
    %v1827 = vunpack.c.l.b16 %v1769
    %v1828 = vunpack.c.l.b16 %v1770
    %v1829 = vunpack.c.l.b16 %v1771
    %v1830 = vunpack.c.l.b16 %v1772
    %v1831 = vunpack.c.l.b16 %v1773
    %v1832 = vunpack.c.l.b16 %v1774
    %v1833 = vunpack.c.l.b16 %v1775
    %v1834 = vpack.c.b16 %v1819, %v1818
    %v1835 = vpack.c.b16 %v1821, %v1820
    %v1836 = vpack.c.b16 %v1823, %v1822
    %v1837 = vpack.c.b16 %v1825, %v1824
    %v1838 = vpack.c.b16 %v1827, %v1826
    %v1839 = vpack.c.b16 %v1829, %v1828
    %v1840 = vpack.c.b16 %v1831, %v1830
    %v1841 = vpack.c.b16 %v1833, %v1832
    %1850 = vmatprep.subr.bf16.mxu0 0
    %1851 = vmatpush1.bf16.msra.mxu0 %v1834
    %1852 = vmatprep.subr.bf16.mxu0 0
    %1853 = vmatpush1.bf16.msra.mxu0 %v1835
    %1854 = vmatprep.subr.bf16.mxu0 0
    %1855 = vmatpush1.bf16.msra.mxu0 %v1836
    %1856 = vmatprep.subr.bf16.mxu0 0
    %1857 = vmatpush1.bf16.msra.mxu0 %v1837
    %1858 = vmatprep.subr.bf16.mxu0 0
    %1859 = vmatpush1.bf16.msra.mxu0 %v1838
    %1860 = vmatprep.subr.bf16.mxu0 0
    %1861 = vmatpush1.bf16.msra.mxu0 %v1839
    %1862 = vmatprep.subr.bf16.mxu0 0
    %1863 = vmatpush1.bf16.msra.mxu0 %v1840
    %1864 = vmatprep.subr.bf16.mxu0 0
    %1865 = vmatpush1.bf16.msra.mxu0 %v1841
    %1866 = vmatprep.subr.bf16.mxu0 0
    %1867 = vmatpush1.bf16.msra.mxu0 0
    %1868 = vmatprep.subr.bf16.mxu0 0
    %1869 = vmatpush1.bf16.msra.mxu0 0
    %1870 = vmatprep.subr.bf16.mxu0 0
    %1871 = vmatpush1.bf16.msra.mxu0 0
    %1872 = vmatprep.subr.bf16.mxu0 0
    %1873 = vmatpush1.bf16.msra.mxu0 0
    %1874 = vmatprep.subr.bf16.mxu0 0
    %1875 = vmatpush1.bf16.msra.mxu0 0
    %1876 = vmatprep.subr.bf16.mxu0 0
    %1877 = vmatpush1.bf16.msra.mxu0 0
    %1878 = vmatprep.subr.bf16.mxu0 0
    %1879 = vmatpush1.bf16.msra.mxu0 0
    %1880 = vmatprep.subr.bf16.mxu0 0
    %1881 = vmatpush1.bf16.msra.mxu0 0
    %1882 = vmatprep.mubr.bf16.mxu0 0
    %1883 = vmatmul.mubr.bf16.gmra.mrb[0].mxu0 %v1801
    %v1884 = vpop.f32.mrb[0].mxu0
    %v1885 = vadd.f32 0.0, %v1884
    %v1886 = vpop.f32.mrb[0].mxu0
    %v1887 = vpop.f32.mrb[0].mxu0
    %v1888 = vadd.f32 0.0, %v1887
    %v1889 = vpop.f32.mrb[0].mxu0
    %1890 = vdwg.mxu0
    %v1907 = vunpack.c.l.b16 %v1743
    %v1908 = vunpack.c.l.b16 %v1744
    %v1909 = vunpack.c.l.b16 %v1745
    %v1910 = vunpack.c.l.b16 %v1746
    %v1911 = vunpack.c.l.b16 %v1747
    %v1912 = vunpack.c.l.b16 %v1748
    %v1913 = vunpack.c.l.b16 %v1749
    %v1914 = vunpack.c.l.b16 %v1750
    %v1915 = vunpack.c.l.b16 %v1751
    %v1916 = vunpack.c.l.b16 %v1752
    %v1917 = vunpack.c.l.b16 %v1753
    %v1918 = vunpack.c.l.b16 %v1754
    %v1919 = vunpack.c.l.b16 %v1755
    %v1920 = vunpack.c.l.b16 %v1756
    %v1921 = vunpack.c.l.b16 %v1757
    %v1922 = vunpack.c.l.b16 %v1758
    %v1923 = vpack.c.b16 %v1908, %v1907
    %v1924 = vpack.c.b16 %v1910, %v1909
    %v1925 = vpack.c.b16 %v1912, %v1911
    %v1926 = vpack.c.b16 %v1914, %v1913
    %v1927 = vpack.c.b16 %v1916, %v1915
    %v1928 = vpack.c.b16 %v1918, %v1917
    %v1929 = vpack.c.b16 %v1920, %v1919
    %v1930 = vpack.c.b16 %v1922, %v1921
    %1939 = vmatprep.subr.bf16.mxu0 0
    %1940 = vmatpush1.bf16.msra.mxu0 %v1923
    %1941 = vmatprep.subr.bf16.mxu0 0
    %1942 = vmatpush1.bf16.msra.mxu0 %v1924
    %1943 = vmatprep.subr.bf16.mxu0 0
    %1944 = vmatpush1.bf16.msra.mxu0 %v1925
    %1945 = vmatprep.subr.bf16.mxu0 0
    %1946 = vmatpush1.bf16.msra.mxu0 %v1926
    %1947 = vmatprep.subr.bf16.mxu0 0
    %1948 = vmatpush1.bf16.msra.mxu0 %v1927
    %1949 = vmatprep.subr.bf16.mxu0 0
    %1950 = vmatpush1.bf16.msra.mxu0 %v1928
    %1951 = vmatprep.subr.bf16.mxu0 0
    %1952 = vmatpush1.bf16.msra.mxu0 %v1929
    %1953 = vmatprep.subr.bf16.mxu0 0
    %1954 = vmatpush1.bf16.msra.mxu0 %v1930
    %1955 = vmatprep.subr.bf16.mxu0 0
    %1956 = vmatpush1.bf16.msra.mxu0 0
    %1957 = vmatprep.subr.bf16.mxu0 0
    %1958 = vmatpush1.bf16.msra.mxu0 0
    %1959 = vmatprep.subr.bf16.mxu0 0
    %1960 = vmatpush1.bf16.msra.mxu0 0
    %1961 = vmatprep.subr.bf16.mxu0 0
    %1962 = vmatpush1.bf16.msra.mxu0 0
    %1963 = vmatprep.subr.bf16.mxu0 0
    %1964 = vmatpush1.bf16.msra.mxu0 0
    %1965 = vmatprep.subr.bf16.mxu0 0
    %1966 = vmatpush1.bf16.msra.mxu0 0
    %1967 = vmatprep.subr.bf16.mxu0 0
    %1968 = vmatpush1.bf16.msra.mxu0 0
    %1969 = vmatprep.subr.bf16.mxu0 0
    %1970 = vmatpush1.bf16.msra.mxu0 0
    %1971 = vmatprep.mubr.bf16.mxu0 0
    %1972 = vmatmul.mubr.bf16.gmra.mrb[0].mxu0 %v1798
    %v1973 = vpop.f32.mrb[0].mxu0
    %v1974 = vadd.f32 %v1885, %v1973
    %v1975 = vpop.f32.mrb[0].mxu0
    %v1976 = vpop.f32.mrb[0].mxu0
    %v1977 = vadd.f32 %v1888, %v1976
    %v1978 = vpop.f32.mrb[0].mxu0
    %1979 = vdwg.mxu0
    %v1980 = vld [vmem:[#allocation2 + $0xb] sm:$0xff]
    %v1981 = vld [vmem:[#allocation2 + $0x13] sm:$0xff]
    %v1982 = vmax.f32 %v1980, 0.0
    %v1983 = vmax.f32 %v1981, 0.0
    %v1984 = vpack.c.bf16 %v1983, %v1982
    %v2001 = vunpack.c.l.b16 %v1777
    %v2002 = vunpack.c.l.b16 %v1778
    %v2003 = vunpack.c.l.b16 %v1779
    %v2004 = vunpack.c.l.b16 %v1780
    %v2005 = vunpack.c.l.b16 %v1781
    %v2006 = vunpack.c.l.b16 %v1782
    %v2007 = vunpack.c.l.b16 %v1783
    %v2008 = vunpack.c.l.b16 %v1784
    %v2009 = vunpack.c.l.b16 %v1785
    %v2010 = vunpack.c.l.b16 %v1786
    %v2011 = vunpack.c.l.b16 %v1787
    %v2012 = vunpack.c.l.b16 %v1788
    %v2013 = vunpack.c.l.b16 %v1789
    %v2014 = vunpack.c.l.b16 %v1790
    %v2015 = vunpack.c.l.b16 %v1791
    %v2016 = vunpack.c.l.b16 %v1792
    %v2017 = vpack.c.b16 %v2002, %v2001
    %v2018 = vpack.c.b16 %v2004, %v2003
    %v2019 = vpack.c.b16 %v2006, %v2005
    %v2020 = vpack.c.b16 %v2008, %v2007
    %v2021 = vpack.c.b16 %v2010, %v2009
    %v2022 = vpack.c.b16 %v2012, %v2011
    %v2023 = vpack.c.b16 %v2014, %v2013
    %v2024 = vpack.c.b16 %v2016, %v2015
    %2033 = vmatprep.subr.bf16.mxu0 0
    %2034 = vmatpush1.bf16.msra.mxu0 %v2017
    %2035 = vmatprep.subr.bf16.mxu0 0
    %2036 = vmatpush1.bf16.msra.mxu0 %v2018
    %2037 = vmatprep.subr.bf16.mxu0 0
    %2038 = vmatpush1.bf16.msra.mxu0 %v2019
    %2039 = vmatprep.subr.bf16.mxu0 0
    %2040 = vmatpush1.bf16.msra.mxu0 %v2020
    %2041 = vmatprep.subr.bf16.mxu0 0
    %2042 = vmatpush1.bf16.msra.mxu0 %v2021
    %2043 = vmatprep.subr.bf16.mxu0 0
    %2044 = vmatpush1.bf16.msra.mxu0 %v2022
    %2045 = vmatprep.subr.bf16.mxu0 0
    %2046 = vmatpush1.bf16.msra.mxu0 %v2023
    %2047 = vmatprep.subr.bf16.mxu0 0
    %2048 = vmatpush1.bf16.msra.mxu0 %v2024
    %2049 = vmatprep.subr.bf16.mxu0 0
    %2050 = vmatpush1.bf16.msra.mxu0 0
    %2051 = vmatprep.subr.bf16.mxu0 0
    %2052 = vmatpush1.bf16.msra.mxu0 0
    %2053 = vmatprep.subr.bf16.mxu0 0
    %2054 = vmatpush1.bf16.msra.mxu0 0
    %2055 = vmatprep.subr.bf16.mxu0 0
    %2056 = vmatpush1.bf16.msra.mxu0 0
    %2057 = vmatprep.subr.bf16.mxu0 0
    %2058 = vmatpush1.bf16.msra.mxu0 0
    %2059 = vmatprep.subr.bf16.mxu0 0
    %2060 = vmatpush1.bf16.msra.mxu0 0
    %2061 = vmatprep.subr.bf16.mxu0 0
    %2062 = vmatpush1.bf16.msra.mxu0 0
    %2063 = vmatprep.subr.bf16.mxu0 0
    %2064 = vmatpush1.bf16.msra.mxu0 0
    %2065 = vmatprep.mubr.bf16.mxu0 0
    %2066 = vmatmul.mubr.bf16.gmra.mrb[0].mxu0 %v1984
    %v2067 = vpop.f32.mrb[0].mxu0
    %v2068 = vadd.f32 0.0, %v2067
    %v2069 = vpop.f32.mrb[0].mxu0
    %v2070 = vpop.f32.mrb[0].mxu0
    %v2071 = vadd.f32 0.0, %v2070
    %v2072 = vpop.f32.mrb[0].mxu0
    %2073 = vdwg.mxu0
    %v2074 = vadd.f32 %v1974, %v2068
    %v2075 = vadd.f32 %v1977, %v2071
    %v2076 = vlaneseq
    %v2077 = vshrl.u32 %v2076, 7
    %v2078 = vsub.s32 0, %v2077
    %v2079 = vrot.slane %v1793, %v2078
    %v2080 = vadd.f32 %v2074, %v2079
    %v2081 = vadd.f32 %v2075, %v2079
    %v2082 = vmax.f32 %v2080, 0.0
    %v2083 = vmax.f32 %v2081, 0.0
    %v2084 = vpack.c.bf16 %v2083, %v2082
    %s2085 = scalar_lea.vmem [#allocation9], 128
    %v2086 = vld [vmem:[%s2085] sm:$0xf]
    %v2087 = vld [vmem:[%s2085 + $0x4] sm:$0xf]
    %v2088 = vld [vmem:[%s2085 + $0x8] sm:$0xf]
    %v2089 = vld [vmem:[%s2085 + $0xc] sm:$0xf]
    %v2090 = vld [vmem:[%s2085 + $0x10] sm:$0xf]
    %v2091 = vld [vmem:[%s2085 + $0x14] sm:$0xf]
    %v2092 = vld [vmem:[%s2085 + $0x18] sm:$0xf]
    %v2093 = vld [vmem:[%s2085 + $0x1c] sm:$0xf]
    %v2094 = vld [vmem:[%s2085 + $0x20] sm:$0xf]
    %v2095 = vld [vmem:[%s2085 + $0x24] sm:$0xf]
    %v2096 = vld [vmem:[%s2085 + $0x28] sm:$0xf]
    %v2097 = vld [vmem:[%s2085 + $0x2c] sm:$0xf]
    %v2098 = vld [vmem:[%s2085 + $0x30] sm:$0xf]
    %v2099 = vld [vmem:[%s2085 + $0x34] sm:$0xf]
    %v2100 = vld [vmem:[%s2085 + $0x38] sm:$0xf]
    %v2101 = vld [vmem:[%s2085 + $0x3c] sm:$0xf]
    %v2102 = vld [vmem:[%s6 + $0x2] sm:$0x1]
    %v2103 = vlaneseq
    %v2104 = vshrl.u32 %v2103, 7
    %v2105 = vsub.s32 0, %v2104
    %v2106 = vrot.slane %v2102, %v2105
    %v2123 = vunpack.c.l.b16 %v2086
    %v2124 = vunpack.c.l.b16 %v2087
    %v2125 = vunpack.c.l.b16 %v2088
    %v2126 = vunpack.c.l.b16 %v2089
    %v2127 = vunpack.c.l.b16 %v2090
    %v2128 = vunpack.c.l.b16 %v2091
    %v2129 = vunpack.c.l.b16 %v2092
    %v2130 = vunpack.c.l.b16 %v2093
    %v2131 = vunpack.c.l.b16 %v2094
    %v2132 = vunpack.c.l.b16 %v2095
    %v2133 = vunpack.c.l.b16 %v2096
    %v2134 = vunpack.c.l.b16 %v2097
    %v2135 = vunpack.c.l.b16 %v2098
    %v2136 = vunpack.c.l.b16 %v2099
    %v2137 = vunpack.c.l.b16 %v2100
    %v2138 = vunpack.c.l.b16 %v2101
    %v2139 = vpack.c.b16 %v2124, %v2123
    %v2140 = vpack.c.b16 %v2126, %v2125
    %v2141 = vpack.c.b16 %v2128, %v2127
    %v2142 = vpack.c.b16 %v2130, %v2129
    %v2143 = vpack.c.b16 %v2132, %v2131
    %v2144 = vpack.c.b16 %v2134, %v2133
    %v2145 = vpack.c.b16 %v2136, %v2135
    %v2146 = vpack.c.b16 %v2138, %v2137
    %2155 = vmatprep.subr.bf16.mxu0 0
    %2156 = vmatpush1.bf16.msra.mxu0 %v2139
    %2157 = vmatprep.subr.bf16.mxu0 0
    %2158 = vmatpush1.bf16.msra.mxu0 %v2140
    %2159 = vmatprep.subr.bf16.mxu0 0
    %2160 = vmatpush1.bf16.msra.mxu0 %v2141
    %2161 = vmatprep.subr.bf16.mxu0 0
    %2162 = vmatpush1.bf16.msra.mxu0 %v2142
    %2163 = vmatprep.subr.bf16.mxu0 0
    %2164 = vmatpush1.bf16.msra.mxu0 %v2143
    %2165 = vmatprep.subr.bf16.mxu0 0
    %2166 = vmatpush1.bf16.msra.mxu0 %v2144
    %2167 = vmatprep.subr.bf16.mxu0 0
    %2168 = vmatpush1.bf16.msra.mxu0 %v2145
    %2169 = vmatprep.subr.bf16.mxu0 0
    %2170 = vmatpush1.bf16.msra.mxu0 %v2146
    %2171 = vmatprep.subr.bf16.mxu0 0
    %2172 = vmatpush1.bf16.msra.mxu0 0
    %2173 = vmatprep.subr.bf16.mxu0 0
    %2174 = vmatpush1.bf16.msra.mxu0 0
    %2175 = vmatprep.subr.bf16.mxu0 0
    %2176 = vmatpush1.bf16.msra.mxu0 0
    %2177 = vmatprep.subr.bf16.mxu0 0
    %2178 = vmatpush1.bf16.msra.mxu0 0
    %2179 = vmatprep.subr.bf16.mxu0 0
    %2180 = vmatpush1.bf16.msra.mxu0 0
    %2181 = vmatprep.subr.bf16.mxu0 0
    %2182 = vmatpush1.bf16.msra.mxu0 0
    %2183 = vmatprep.subr.bf16.mxu0 0
    %2184 = vmatpush1.bf16.msra.mxu0 0
    %2185 = vmatprep.subr.bf16.mxu0 0
    %2186 = vmatpush1.bf16.msra.mxu0 0
    %2187 = vmatprep.mubr.bf16.mxu0 0
    %2188 = vmatmul.mubr.bf16.gmra.mrb[0].mxu0 %v2084
    %v2189 = vpop.f32.mrb[0].mxu0
    %v2190 = vadd.f32 %v2106, %v2189
    %v2191 = vpop.f32.mrb[0].mxu0
    %v2192 = vpop.f32.mrb[0].mxu0
    %v2193 = vadd.f32 %v2106, %v2192
    %v2194 = vpop.f32.mrb[0].mxu0
    %2195 = vdwg.mxu0
    %v2196 = vadd.f32 %v2190, %v1740
    %v2197 = vadd.f32 %v2193, %v1741
    %2198 = vst [vmem:[#allocation2 + $0x8] sm:$0xff] %v2196
    %2199 = vst [vmem:[#allocation2 + $0x10] sm:$0xff] %v2197
    %v2200 = vld [vmem:[#allocation2 + $0x8] sm:$0xff]
    %v2201 = vld [vmem:[#allocation2 + $0x10] sm:$0xff]
    %s2202 = scalar_lea.vmem [#allocation8], 768
    %v2203 = vld [vmem:[%s2202] sm:$0xf]
    %v2204 = vld [vmem:[%s2202 + $0x4] sm:$0xf]
    %v2205 = vld [vmem:[%s2202 + $0x8] sm:$0xf]
    %v2206 = vld [vmem:[%s2202 + $0xc] sm:$0xf]
    %v2207 = vld [vmem:[%s2202 + $0x10] sm:$0xf]
    %v2208 = vld [vmem:[%s2202 + $0x14] sm:$0xf]
    %v2209 = vld [vmem:[%s2202 + $0x18] sm:$0xf]
    %v2210 = vld [vmem:[%s2202 + $0x1c] sm:$0xf]
    %v2211 = vld [vmem:[%s2202 + $0x20] sm:$0xf]
    %v2212 = vld [vmem:[%s2202 + $0x24] sm:$0xf]
    %v2213 = vld [vmem:[%s2202 + $0x28] sm:$0xf]
    %v2214 = vld [vmem:[%s2202 + $0x2c] sm:$0xf]
    %v2215 = vld [vmem:[%s2202 + $0x30] sm:$0xf]
    %v2216 = vld [vmem:[%s2202 + $0x34] sm:$0xf]
    %v2217 = vld [vmem:[%s2202 + $0x38] sm:$0xf]
    %v2218 = vld [vmem:[%s2202 + $0x3c] sm:$0xf]
    %s2219 = scalar_lea.vmem [#allocation8], 832
    %v2220 = vld [vmem:[%s2219] sm:$0xf]
    %v2221 = vld [vmem:[%s2219 + $0x4] sm:$0xf]
    %v2222 = vld [vmem:[%s2219 + $0x8] sm:$0xf]
    %v2223 = vld [vmem:[%s2219 + $0xc] sm:$0xf]
    %v2224 = vld [vmem:[%s2219 + $0x10] sm:$0xf]
    %v2225 = vld [vmem:[%s2219 + $0x14] sm:$0xf]
    %v2226 = vld [vmem:[%s2219 + $0x18] sm:$0xf]
    %v2227 = vld [vmem:[%s2219 + $0x1c] sm:$0xf]
    %v2228 = vld [vmem:[%s2219 + $0x20] sm:$0xf]
    %v2229 = vld [vmem:[%s2219 + $0x24] sm:$0xf]
    %v2230 = vld [vmem:[%s2219 + $0x28] sm:$0xf]
    %v2231 = vld [vmem:[%s2219 + $0x2c] sm:$0xf]
    %v2232 = vld [vmem:[%s2219 + $0x30] sm:$0xf]
    %v2233 = vld [vmem:[%s2219 + $0x34] sm:$0xf]
    %v2234 = vld [vmem:[%s2219 + $0x38] sm:$0xf]
    %v2235 = vld [vmem:[%s2219 + $0x3c] sm:$0xf]
    %s2236 = scalar_lea.vmem [#allocation8], 896
    %v2237 = vld [vmem:[%s2236] sm:$0xf]
    %v2238 = vld [vmem:[%s2236 + $0x4] sm:$0xf]
    %v2239 = vld [vmem:[%s2236 + $0x8] sm:$0xf]
    %v2240 = vld [vmem:[%s2236 + $0xc] sm:$0xf]
    %v2241 = vld [vmem:[%s2236 + $0x10] sm:$0xf]
    %v2242 = vld [vmem:[%s2236 + $0x14] sm:$0xf]
    %v2243 = vld [vmem:[%s2236 + $0x18] sm:$0xf]
    %v2244 = vld [vmem:[%s2236 + $0x1c] sm:$0xf]
    %v2245 = vld [vmem:[%s2236 + $0x20] sm:$0xf]
    %v2246 = vld [vmem:[%s2236 + $0x24] sm:$0xf]
    %v2247 = vld [vmem:[%s2236 + $0x28] sm:$0xf]
    %v2248 = vld [vmem:[%s2236 + $0x2c] sm:$0xf]
    %v2249 = vld [vmem:[%s2236 + $0x30] sm:$0xf]
    %v2250 = vld [vmem:[%s2236 + $0x34] sm:$0xf]
    %v2251 = vld [vmem:[%s2236 + $0x38] sm:$0xf]
    %v2252 = vld [vmem:[%s2236 + $0x3c] sm:$0xf]
    %v2253 = vld [vmem:[%s4 + $0x4] sm:$0x1]
    %v2254 = vld [vmem:[#allocation2 + $0x7] sm:$0xff]
    %v2255 = vld [vmem:[#allocation2 + $0xf] sm:$0xff]
    %v2256 = vmax.f32 %v2254, 0.0
    %v2257 = vmax.f32 %v2255, 0.0
    %v2258 = vpack.c.bf16 %v2257, %v2256
    %v2259 = vmax.f32 %v2200, 0.0
    %v2260 = vmax.f32 %v2201, 0.0
    %v2261 = vpack.c.bf16 %v2260, %v2259
    %v2278 = vunpack.c.l.b16 %v2220
    %v2279 = vunpack.c.l.b16 %v2221
    %v2280 = vunpack.c.l.b16 %v2222
    %v2281 = vunpack.c.l.b16 %v2223
    %v2282 = vunpack.c.l.b16 %v2224
    %v2283 = vunpack.c.l.b16 %v2225
    %v2284 = vunpack.c.l.b16 %v2226
    %v2285 = vunpack.c.l.b16 %v2227
    %v2286 = vunpack.c.l.b16 %v2228
    %v2287 = vunpack.c.l.b16 %v2229
    %v2288 = vunpack.c.l.b16 %v2230
    %v2289 = vunpack.c.l.b16 %v2231
    %v2290 = vunpack.c.l.b16 %v2232
    %v2291 = vunpack.c.l.b16 %v2233
    %v2292 = vunpack.c.l.b16 %v2234
    %v2293 = vunpack.c.l.b16 %v2235
    %v2294 = vpack.c.b16 %v2279, %v2278
    %v2295 = vpack.c.b16 %v2281, %v2280
    %v2296 = vpack.c.b16 %v2283, %v2282
    %v2297 = vpack.c.b16 %v2285, %v2284
    %v2298 = vpack.c.b16 %v2287, %v2286
    %v2299 = vpack.c.b16 %v2289, %v2288
    %v2300 = vpack.c.b16 %v2291, %v2290
    %v2301 = vpack.c.b16 %v2293, %v2292
    %2310 = vmatprep.subr.bf16.mxu0 0
    %2311 = vmatpush1.bf16.msra.mxu0 %v2294
    %2312 = vmatprep.subr.bf16.mxu0 0
    %2313 = vmatpush1.bf16.msra.mxu0 %v2295
    %2314 = vmatprep.subr.bf16.mxu0 0
    %2315 = vmatpush1.bf16.msra.mxu0 %v2296
    %2316 = vmatprep.subr.bf16.mxu0 0
    %2317 = vmatpush1.bf16.msra.mxu0 %v2297
    %2318 = vmatprep.subr.bf16.mxu0 0
    %2319 = vmatpush1.bf16.msra.mxu0 %v2298
    %2320 = vmatprep.subr.bf16.mxu0 0
    %2321 = vmatpush1.bf16.msra.mxu0 %v2299
    %2322 = vmatprep.subr.bf16.mxu0 0
    %2323 = vmatpush1.bf16.msra.mxu0 %v2300
    %2324 = vmatprep.subr.bf16.mxu0 0
    %2325 = vmatpush1.bf16.msra.mxu0 %v2301
    %2326 = vmatprep.subr.bf16.mxu0 0
    %2327 = vmatpush1.bf16.msra.mxu0 0
    %2328 = vmatprep.subr.bf16.mxu0 0
    %2329 = vmatpush1.bf16.msra.mxu0 0
    %2330 = vmatprep.subr.bf16.mxu0 0
    %2331 = vmatpush1.bf16.msra.mxu0 0
    %2332 = vmatprep.subr.bf16.mxu0 0
    %2333 = vmatpush1.bf16.msra.mxu0 0
    %2334 = vmatprep.subr.bf16.mxu0 0
    %2335 = vmatpush1.bf16.msra.mxu0 0
    %2336 = vmatprep.subr.bf16.mxu0 0
    %2337 = vmatpush1.bf16.msra.mxu0 0
    %2338 = vmatprep.subr.bf16.mxu0 0
    %2339 = vmatpush1.bf16.msra.mxu0 0
    %2340 = vmatprep.subr.bf16.mxu0 0
    %2341 = vmatpush1.bf16.msra.mxu0 0
    %2342 = vmatprep.mubr.bf16.mxu0 0
    %2343 = vmatmul.mubr.bf16.gmra.mrb[0].mxu0 %v2261
    %v2344 = vpop.f32.mrb[0].mxu0
    %v2345 = vadd.f32 0.0, %v2344
    %v2346 = vpop.f32.mrb[0].mxu0
    %v2347 = vpop.f32.mrb[0].mxu0
    %v2348 = vadd.f32 0.0, %v2347
    %v2349 = vpop.f32.mrb[0].mxu0
    %2350 = vdwg.mxu0
    %v2367 = vunpack.c.l.b16 %v2203
    %v2368 = vunpack.c.l.b16 %v2204
    %v2369 = vunpack.c.l.b16 %v2205
    %v2370 = vunpack.c.l.b16 %v2206
    %v2371 = vunpack.c.l.b16 %v2207
    %v2372 = vunpack.c.l.b16 %v2208
    %v2373 = vunpack.c.l.b16 %v2209
    %v2374 = vunpack.c.l.b16 %v2210
    %v2375 = vunpack.c.l.b16 %v2211
    %v2376 = vunpack.c.l.b16 %v2212
    %v2377 = vunpack.c.l.b16 %v2213
    %v2378 = vunpack.c.l.b16 %v2214
    %v2379 = vunpack.c.l.b16 %v2215
    %v2380 = vunpack.c.l.b16 %v2216
    %v2381 = vunpack.c.l.b16 %v2217
    %v2382 = vunpack.c.l.b16 %v2218
    %v2383 = vpack.c.b16 %v2368, %v2367
    %v2384 = vpack.c.b16 %v2370, %v2369
    %v2385 = vpack.c.b16 %v2372, %v2371
    %v2386 = vpack.c.b16 %v2374, %v2373
    %v2387 = vpack.c.b16 %v2376, %v2375
    %v2388 = vpack.c.b16 %v2378, %v2377
    %v2389 = vpack.c.b16 %v2380, %v2379
    %v2390 = vpack.c.b16 %v2382, %v2381
    %2399 = vmatprep.subr.bf16.mxu0 0
    %2400 = vmatpush1.bf16.msra.mxu0 %v2383
    %2401 = vmatprep.subr.bf16.mxu0 0
    %2402 = vmatpush1.bf16.msra.mxu0 %v2384
    %2403 = vmatprep.subr.bf16.mxu0 0
    %2404 = vmatpush1.bf16.msra.mxu0 %v2385
    %2405 = vmatprep.subr.bf16.mxu0 0
    %2406 = vmatpush1.bf16.msra.mxu0 %v2386
    %2407 = vmatprep.subr.bf16.mxu0 0
    %2408 = vmatpush1.bf16.msra.mxu0 %v2387
    %2409 = vmatprep.subr.bf16.mxu0 0
    %2410 = vmatpush1.bf16.msra.mxu0 %v2388
    %2411 = vmatprep.subr.bf16.mxu0 0
    %2412 = vmatpush1.bf16.msra.mxu0 %v2389
    %2413 = vmatprep.subr.bf16.mxu0 0
    %2414 = vmatpush1.bf16.msra.mxu0 %v2390
    %2415 = vmatprep.subr.bf16.mxu0 0
    %2416 = vmatpush1.bf16.msra.mxu0 0
    %2417 = vmatprep.subr.bf16.mxu0 0
    %2418 = vmatpush1.bf16.msra.mxu0 0
    %2419 = vmatprep.subr.bf16.mxu0 0
    %2420 = vmatpush1.bf16.msra.mxu0 0
    %2421 = vmatprep.subr.bf16.mxu0 0
    %2422 = vmatpush1.bf16.msra.mxu0 0
    %2423 = vmatprep.subr.bf16.mxu0 0
    %2424 = vmatpush1.bf16.msra.mxu0 0
    %2425 = vmatprep.subr.bf16.mxu0 0
    %2426 = vmatpush1.bf16.msra.mxu0 0
    %2427 = vmatprep.subr.bf16.mxu0 0
    %2428 = vmatpush1.bf16.msra.mxu0 0
    %2429 = vmatprep.subr.bf16.mxu0 0
    %2430 = vmatpush1.bf16.msra.mxu0 0
    %2431 = vmatprep.mubr.bf16.mxu0 0
    %2432 = vmatmul.mubr.bf16.gmra.mrb[0].mxu0 %v2258
    %v2433 = vpop.f32.mrb[0].mxu0
    %v2434 = vadd.f32 %v2345, %v2433
    %v2435 = vpop.f32.mrb[0].mxu0
    %v2436 = vpop.f32.mrb[0].mxu0
    %v2437 = vadd.f32 %v2348, %v2436
    %v2438 = vpop.f32.mrb[0].mxu0
    %2439 = vdwg.mxu0
    %v2440 = vld [vmem:[#allocation2 + $0x9] sm:$0xff]
    %v2441 = vld [vmem:[#allocation2 + $0x11] sm:$0xff]
    %v2442 = vmax.f32 %v2440, 0.0
    %v2443 = vmax.f32 %v2441, 0.0
    %v2444 = vpack.c.bf16 %v2443, %v2442
    %v2461 = vunpack.c.l.b16 %v2237
    %v2462 = vunpack.c.l.b16 %v2238
    %v2463 = vunpack.c.l.b16 %v2239
    %v2464 = vunpack.c.l.b16 %v2240
    %v2465 = vunpack.c.l.b16 %v2241
    %v2466 = vunpack.c.l.b16 %v2242
    %v2467 = vunpack.c.l.b16 %v2243
    %v2468 = vunpack.c.l.b16 %v2244
    %v2469 = vunpack.c.l.b16 %v2245
    %v2470 = vunpack.c.l.b16 %v2246
    %v2471 = vunpack.c.l.b16 %v2247
    %v2472 = vunpack.c.l.b16 %v2248
    %v2473 = vunpack.c.l.b16 %v2249
    %v2474 = vunpack.c.l.b16 %v2250
    %v2475 = vunpack.c.l.b16 %v2251
    %v2476 = vunpack.c.l.b16 %v2252
    %v2477 = vpack.c.b16 %v2462, %v2461
    %v2478 = vpack.c.b16 %v2464, %v2463
    %v2479 = vpack.c.b16 %v2466, %v2465
    %v2480 = vpack.c.b16 %v2468, %v2467
    %v2481 = vpack.c.b16 %v2470, %v2469
    %v2482 = vpack.c.b16 %v2472, %v2471
    %v2483 = vpack.c.b16 %v2474, %v2473
    %v2484 = vpack.c.b16 %v2476, %v2475
    %2493 = vmatprep.subr.bf16.mxu0 0
    %2494 = vmatpush1.bf16.msra.mxu0 %v2477
    %2495 = vmatprep.subr.bf16.mxu0 0
    %2496 = vmatpush1.bf16.msra.mxu0 %v2478
    %2497 = vmatprep.subr.bf16.mxu0 0
    %2498 = vmatpush1.bf16.msra.mxu0 %v2479
    %2499 = vmatprep.subr.bf16.mxu0 0
    %2500 = vmatpush1.bf16.msra.mxu0 %v2480
    %2501 = vmatprep.subr.bf16.mxu0 0
    %2502 = vmatpush1.bf16.msra.mxu0 %v2481
    %2503 = vmatprep.subr.bf16.mxu0 0
    %2504 = vmatpush1.bf16.msra.mxu0 %v2482
    %2505 = vmatprep.subr.bf16.mxu0 0
    %2506 = vmatpush1.bf16.msra.mxu0 %v2483
    %2507 = vmatprep.subr.bf16.mxu0 0
    %2508 = vmatpush1.bf16.msra.mxu0 %v2484
    %2509 = vmatprep.subr.bf16.mxu0 0
    %2510 = vmatpush1.bf16.msra.mxu0 0
    %2511 = vmatprep.subr.bf16.mxu0 0
    %2512 = vmatpush1.bf16.msra.mxu0 0
    %2513 = vmatprep.subr.bf16.mxu0 0
    %2514 = vmatpush1.bf16.msra.mxu0 0
    %2515 = vmatprep.subr.bf16.mxu0 0
    %2516 = vmatpush1.bf16.msra.mxu0 0
    %2517 = vmatprep.subr.bf16.mxu0 0
    %2518 = vmatpush1.bf16.msra.mxu0 0
    %2519 = vmatprep.subr.bf16.mxu0 0
    %2520 = vmatpush1.bf16.msra.mxu0 0
    %2521 = vmatprep.subr.bf16.mxu0 0
    %2522 = vmatpush1.bf16.msra.mxu0 0
    %2523 = vmatprep.subr.bf16.mxu0 0
    %2524 = vmatpush1.bf16.msra.mxu0 0
    %2525 = vmatprep.mubr.bf16.mxu0 0
    %2526 = vmatmul.mubr.bf16.gmra.mrb[0].mxu0 %v2444
    %v2527 = vpop.f32.mrb[0].mxu0
    %v2528 = vadd.f32 0.0, %v2527
    %v2529 = vpop.f32.mrb[0].mxu0
    %v2530 = vpop.f32.mrb[0].mxu0
    %v2531 = vadd.f32 0.0, %v2530
    %v2532 = vpop.f32.mrb[0].mxu0
    %2533 = vdwg.mxu0
    %v2534 = vadd.f32 %v2434, %v2528
    %v2535 = vadd.f32 %v2437, %v2531
    %v2536 = vlaneseq
    %v2537 = vshrl.u32 %v2536, 7
    %v2538 = vsub.s32 0, %v2537
    %v2539 = vrot.slane %v2253, %v2538
    %v2540 = vadd.f32 %v2534, %v2539
    %v2541 = vadd.f32 %v2535, %v2539
    %v2542 = vmax.f32 %v2540, 0.0
    %v2543 = vmax.f32 %v2541, 0.0
    %v2544 = vpack.c.bf16 %v2543, %v2542
    %s2545 = scalar_lea.vmem [#allocation9], 192
    %v2546 = vld [vmem:[%s2545] sm:$0xf]
    %v2547 = vld [vmem:[%s2545 + $0x4] sm:$0xf]
    %v2548 = vld [vmem:[%s2545 + $0x8] sm:$0xf]
    %v2549 = vld [vmem:[%s2545 + $0xc] sm:$0xf]
    %v2550 = vld [vmem:[%s2545 + $0x10] sm:$0xf]
    %v2551 = vld [vmem:[%s2545 + $0x14] sm:$0xf]
    %v2552 = vld [vmem:[%s2545 + $0x18] sm:$0xf]
    %v2553 = vld [vmem:[%s2545 + $0x1c] sm:$0xf]
    %v2554 = vld [vmem:[%s2545 + $0x20] sm:$0xf]
    %v2555 = vld [vmem:[%s2545 + $0x24] sm:$0xf]
    %v2556 = vld [vmem:[%s2545 + $0x28] sm:$0xf]
    %v2557 = vld [vmem:[%s2545 + $0x2c] sm:$0xf]
    %v2558 = vld [vmem:[%s2545 + $0x30] sm:$0xf]
    %v2559 = vld [vmem:[%s2545 + $0x34] sm:$0xf]
    %v2560 = vld [vmem:[%s2545 + $0x38] sm:$0xf]
    %v2561 = vld [vmem:[%s2545 + $0x3c] sm:$0xf]
    %v2562 = vld [vmem:[%s6 + $0x3] sm:$0x1]
    %v2563 = vlaneseq
    %v2564 = vshrl.u32 %v2563, 7
    %v2565 = vsub.s32 0, %v2564
    %v2566 = vrot.slane %v2562, %v2565
    %v2583 = vunpack.c.l.b16 %v2546
    %v2584 = vunpack.c.l.b16 %v2547
    %v2585 = vunpack.c.l.b16 %v2548
    %v2586 = vunpack.c.l.b16 %v2549
    %v2587 = vunpack.c.l.b16 %v2550
    %v2588 = vunpack.c.l.b16 %v2551
    %v2589 = vunpack.c.l.b16 %v2552
    %v2590 = vunpack.c.l.b16 %v2553
    %v2591 = vunpack.c.l.b16 %v2554
    %v2592 = vunpack.c.l.b16 %v2555
    %v2593 = vunpack.c.l.b16 %v2556
    %v2594 = vunpack.c.l.b16 %v2557
    %v2595 = vunpack.c.l.b16 %v2558
    %v2596 = vunpack.c.l.b16 %v2559
    %v2597 = vunpack.c.l.b16 %v2560
    %v2598 = vunpack.c.l.b16 %v2561
    %v2599 = vpack.c.b16 %v2584, %v2583
    %v2600 = vpack.c.b16 %v2586, %v2585
    %v2601 = vpack.c.b16 %v2588, %v2587
    %v2602 = vpack.c.b16 %v2590, %v2589
    %v2603 = vpack.c.b16 %v2592, %v2591
    %v2604 = vpack.c.b16 %v2594, %v2593
    %v2605 = vpack.c.b16 %v2596, %v2595
    %v2606 = vpack.c.b16 %v2598, %v2597
    %2615 = vmatprep.subr.bf16.mxu0 0
    %2616 = vmatpush1.bf16.msra.mxu0 %v2599
    %2617 = vmatprep.subr.bf16.mxu0 0
    %2618 = vmatpush1.bf16.msra.mxu0 %v2600
    %2619 = vmatprep.subr.bf16.mxu0 0
    %2620 = vmatpush1.bf16.msra.mxu0 %v2601
    %2621 = vmatprep.subr.bf16.mxu0 0
    %2622 = vmatpush1.bf16.msra.mxu0 %v2602
    %2623 = vmatprep.subr.bf16.mxu0 0
    %2624 = vmatpush1.bf16.msra.mxu0 %v2603
    %2625 = vmatprep.subr.bf16.mxu0 0
    %2626 = vmatpush1.bf16.msra.mxu0 %v2604
    %2627 = vmatprep.subr.bf16.mxu0 0
    %2628 = vmatpush1.bf16.msra.mxu0 %v2605
    %2629 = vmatprep.subr.bf16.mxu0 0
    %2630 = vmatpush1.bf16.msra.mxu0 %v2606
    %2631 = vmatprep.subr.bf16.mxu0 0
    %2632 = vmatpush1.bf16.msra.mxu0 0
    %2633 = vmatprep.subr.bf16.mxu0 0
    %2634 = vmatpush1.bf16.msra.mxu0 0
    %2635 = vmatprep.subr.bf16.mxu0 0
    %2636 = vmatpush1.bf16.msra.mxu0 0
    %2637 = vmatprep.subr.bf16.mxu0 0
    %2638 = vmatpush1.bf16.msra.mxu0 0
    %2639 = vmatprep.subr.bf16.mxu0 0
    %2640 = vmatpush1.bf16.msra.mxu0 0
    %2641 = vmatprep.subr.bf16.mxu0 0
    %2642 = vmatpush1.bf16.msra.mxu0 0
    %2643 = vmatprep.subr.bf16.mxu0 0
    %2644 = vmatpush1.bf16.msra.mxu0 0
    %2645 = vmatprep.subr.bf16.mxu0 0
    %2646 = vmatpush1.bf16.msra.mxu0 0
    %2647 = vmatprep.mubr.bf16.mxu0 0
    %2648 = vmatmul.mubr.bf16.gmra.mrb[0].mxu0 %v2544
    %v2649 = vpop.f32.mrb[0].mxu0
    %v2650 = vadd.f32 %v2566, %v2649
    %v2651 = vpop.f32.mrb[0].mxu0
    %v2652 = vpop.f32.mrb[0].mxu0
    %v2653 = vadd.f32 %v2566, %v2652
    %v2654 = vpop.f32.mrb[0].mxu0
    %2655 = vdwg.mxu0
    %v2656 = vadd.f32 %v2650, %v2200
    %v2657 = vadd.f32 %v2653, %v2201
    %2658 = vst [vmem:[#allocation2 + $0x8] sm:$0xff] %v2656
    %2659 = vst [vmem:[#allocation2 + $0x10] sm:$0xff] %v2657
    %v2660 = vld [vmem:[#allocation2 + $0x17] sm:$0x1]
    %2661 = vst [vmem:[#allocation2 + $0x26] sm:$0x1] %v2660
    %2662 = vst [vmem:[#allocation2 + $0x27] sm:$0x1] %v2660
    %v2663 = vld [vmem:[#allocation2 + $0x16] sm:$0x1]
    %2664 = vst [vmem:[#allocation2 + $0x24] sm:$0x1] %v2663
    %2665 = vst [vmem:[#allocation2 + $0x25] sm:$0x1] %v2663
    %v2666 = vld [vmem:[#allocation2 + $0x15] sm:$0x1]
    %2667 = vst [vmem:[#allocation2 + $0x22] sm:$0x1] %v2666
    %2668 = vst [vmem:[#allocation2 + $0x23] sm:$0x1] %v2666
    %v2669 = vld [vmem:[#allocation2 + $0x14] sm:$0x1]
    %2670 = vst [vmem:[#allocation2 + $0x20] sm:$0x1] %v2669
    %2671 = vst [vmem:[#allocation2 + $0x21] sm:$0x1] %v2669
    %v2672 = vld [vmem:[#allocation2 + $0x13] sm:$0x1]
    %2673 = vst [vmem:[#allocation2 + $0x1e] sm:$0x1] %v2672
    %2674 = vst [vmem:[#allocation2 + $0x1f] sm:$0x1] %v2672
    %v2675 = vld [vmem:[#allocation2 + $0x12] sm:$0x1]
    %2676 = vst [vmem:[#allocation2 + $0x1c] sm:$0x1] %v2675
    %2677 = vst [vmem:[#allocation2 + $0x1d] sm:$0x1] %v2675
    %v2678 = vld [vmem:[#allocation2 + $0x11] sm:$0x1]
    %2679 = vst [vmem:[#allocation2 + $0x1a] sm:$0x1] %v2678
    %2680 = vst [vmem:[#allocation2 + $0x1b] sm:$0x1] %v2678
    %v2681 = vld [vmem:[#allocation2 + $0x10] sm:$0x1]
    %2682 = vst [vmem:[#allocation2 + $0x18] sm:$0x1] %v2681
    %2683 = vst [vmem:[#allocation2 + $0x19] sm:$0x1] %v2681
    %v2684 = vld [vmem:[#allocation2 + $0xf] sm:$0x1]
    %2685 = vst [vmem:[#allocation2 + $0x16] sm:$0x1] %v2684
    %2686 = vst [vmem:[#allocation2 + $0x17] sm:$0x1] %v2684
    %v2687 = vld [vmem:[#allocation2 + $0xe] sm:$0x1]
    %2688 = vst [vmem:[#allocation2 + $0x14] sm:$0x1] %v2687
    %2689 = vst [vmem:[#allocation2 + $0x15] sm:$0x1] %v2687
    %v2690 = vld [vmem:[#allocation2 + $0xd] sm:$0x1]
    %2691 = vst [vmem:[#allocation2 + $0x12] sm:$0x1] %v2690
    %2692 = vst [vmem:[#allocation2 + $0x13] sm:$0x1] %v2690
    %v2693 = vld [vmem:[#allocation2 + $0xc] sm:$0x1]
    %2694 = vst [vmem:[#allocation2 + $0x10] sm:$0x1] %v2693
    %2695 = vst [vmem:[#allocation2 + $0x11] sm:$0x1] %v2693
    %v2696 = vld [vmem:[#allocation2 + $0xb] sm:$0x1]
    %2697 = vst [vmem:[#allocation2 + $0xe] sm:$0x1] %v2696
    %2698 = vst [vmem:[#allocation2 + $0xf] sm:$0x1] %v2696
    %v2699 = vld [vmem:[#allocation2 + $0xa] sm:$0x1]
    %2700 = vst [vmem:[#allocation2 + $0xc] sm:$0x1] %v2699
    %2701 = vst [vmem:[#allocation2 + $0xd] sm:$0x1] %v2699
    %v2702 = vld [vmem:[#allocation2 + $0x9] sm:$0x1]
    %2703 = vst [vmem:[#allocation2 + $0xa] sm:$0x1] %v2702
    %2704 = vst [vmem:[#allocation2 + $0xb] sm:$0x1] %v2702
    %v2705 = vld [vmem:[#allocation2 + $0x8] sm:$0x1]
    %2706 = vst [vmem:[#allocation2 + $0x8] sm:$0x1] %v2705
    %2707 = vst [vmem:[#allocation2 + $0x9] sm:$0x1] %v2705
    %s2708 = scalar_lea.vmem [#allocation8], 960
    %v2709 = vld [vmem:[%s2708] sm:$0xf]
    %v2710 = vld [vmem:[%s2708 + $0x4] sm:$0xf]
    %v2711 = vld [vmem:[%s2708 + $0x8] sm:$0xf]
    %v2712 = vld [vmem:[%s2708 + $0xc] sm:$0xf]
    %v2713 = vld [vmem:[%s2708 + $0x10] sm:$0xf]
    %v2714 = vld [vmem:[%s2708 + $0x14] sm:$0xf]
    %v2715 = vld [vmem:[%s2708 + $0x18] sm:$0xf]
    %v2716 = vld [vmem:[%s2708 + $0x1c] sm:$0xf]
    %v2717 = vld [vmem:[%s2708 + $0x20] sm:$0xf]
    %v2718 = vld [vmem:[%s2708 + $0x24] sm:$0xf]
    %v2719 = vld [vmem:[%s2708 + $0x28] sm:$0xf]
    %v2720 = vld [vmem:[%s2708 + $0x2c] sm:$0xf]
    %v2721 = vld [vmem:[%s2708 + $0x30] sm:$0xf]
    %v2722 = vld [vmem:[%s2708 + $0x34] sm:$0xf]
    %v2723 = vld [vmem:[%s2708 + $0x38] sm:$0xf]
    %v2724 = vld [vmem:[%s2708 + $0x3c] sm:$0xf]
    %s2725 = scalar_lea.vmem [#allocation8], 1024
    %v2726 = vld [vmem:[%s2725] sm:$0xf]
    %v2727 = vld [vmem:[%s2725 + $0x4] sm:$0xf]
    %v2728 = vld [vmem:[%s2725 + $0x8] sm:$0xf]
    %v2729 = vld [vmem:[%s2725 + $0xc] sm:$0xf]
    %v2730 = vld [vmem:[%s2725 + $0x10] sm:$0xf]
    %v2731 = vld [vmem:[%s2725 + $0x14] sm:$0xf]
    %v2732 = vld [vmem:[%s2725 + $0x18] sm:$0xf]
    %v2733 = vld [vmem:[%s2725 + $0x1c] sm:$0xf]
    %v2734 = vld [vmem:[%s2725 + $0x20] sm:$0xf]
    %v2735 = vld [vmem:[%s2725 + $0x24] sm:$0xf]
    %v2736 = vld [vmem:[%s2725 + $0x28] sm:$0xf]
    %v2737 = vld [vmem:[%s2725 + $0x2c] sm:$0xf]
    %v2738 = vld [vmem:[%s2725 + $0x30] sm:$0xf]
    %v2739 = vld [vmem:[%s2725 + $0x34] sm:$0xf]
    %v2740 = vld [vmem:[%s2725 + $0x38] sm:$0xf]
    %v2741 = vld [vmem:[%s2725 + $0x3c] sm:$0xf]
    %s2742 = scalar_lea.vmem [#allocation8], 1088
    %v2743 = vld [vmem:[%s2742] sm:$0xf]
    %v2744 = vld [vmem:[%s2742 + $0x4] sm:$0xf]
    %v2745 = vld [vmem:[%s2742 + $0x8] sm:$0xf]
    %v2746 = vld [vmem:[%s2742 + $0xc] sm:$0xf]
    %v2747 = vld [vmem:[%s2742 + $0x10] sm:$0xf]
    %v2748 = vld [vmem:[%s2742 + $0x14] sm:$0xf]
    %v2749 = vld [vmem:[%s2742 + $0x18] sm:$0xf]
    %v2750 = vld [vmem:[%s2742 + $0x1c] sm:$0xf]
    %v2751 = vld [vmem:[%s2742 + $0x20] sm:$0xf]
    %v2752 = vld [vmem:[%s2742 + $0x24] sm:$0xf]
    %v2753 = vld [vmem:[%s2742 + $0x28] sm:$0xf]
    %v2754 = vld [vmem:[%s2742 + $0x2c] sm:$0xf]
    %v2755 = vld [vmem:[%s2742 + $0x30] sm:$0xf]
    %v2756 = vld [vmem:[%s2742 + $0x34] sm:$0xf]
    %v2757 = vld [vmem:[%s2742 + $0x38] sm:$0xf]
    %v2758 = vld [vmem:[%s2742 + $0x3c] sm:$0xf]
    %v2759 = vld [vmem:[%s4 + $0x5] sm:$0x1]
    %v2760 = vld [vmem:[#allocation2 + $0x7] sm:$0xff]
    %v2761 = vld [vmem:[#allocation2 + $0xf] sm:$0xff]
    %v2762 = vld [vmem:[#allocation2 + $0x17] sm:$0xff]
    %v2763 = vld [vmem:[#allocation2 + $0x1f] sm:$0xff]
    %v2764 = vpack.c.bf16 %v2761, %v2760
    %v2765 = vpack.c.bf16 %v2763, %v2762
    %v2766 = vld [vmem:[#allocation2 + $0x8] sm:$0xff]
    %v2767 = vld [vmem:[#allocation2 + $0x10] sm:$0xff]
    %v2768 = vld [vmem:[#allocation2 + $0x18] sm:$0xff]
    %v2769 = vld [vmem:[#allocation2 + $0x20] sm:$0xff]
    %v2770 = vpack.c.bf16 %v2767, %v2766
    %v2771 = vpack.c.bf16 %v2769, %v2768
    %v2788 = vunpack.c.l.b16 %v2726
    %v2789 = vunpack.c.l.b16 %v2727
    %v2790 = vunpack.c.l.b16 %v2728
    %v2791 = vunpack.c.l.b16 %v2729
    %v2792 = vunpack.c.l.b16 %v2730
    %v2793 = vunpack.c.l.b16 %v2731
    %v2794 = vunpack.c.l.b16 %v2732
    %v2795 = vunpack.c.l.b16 %v2733
    %v2796 = vunpack.c.l.b16 %v2734
    %v2797 = vunpack.c.l.b16 %v2735
    %v2798 = vunpack.c.l.b16 %v2736
    %v2799 = vunpack.c.l.b16 %v2737
    %v2800 = vunpack.c.l.b16 %v2738
    %v2801 = vunpack.c.l.b16 %v2739
    %v2802 = vunpack.c.l.b16 %v2740
    %v2803 = vunpack.c.l.b16 %v2741
    %v2804 = vpack.c.b16 %v2789, %v2788
    %v2805 = vpack.c.b16 %v2791, %v2790
    %v2806 = vpack.c.b16 %v2793, %v2792
    %v2807 = vpack.c.b16 %v2795, %v2794
    %v2808 = vpack.c.b16 %v2797, %v2796
    %v2809 = vpack.c.b16 %v2799, %v2798
    %v2810 = vpack.c.b16 %v2801, %v2800
    %v2811 = vpack.c.b16 %v2803, %v2802
    %2820 = vmatprep.subr.bf16.mxu0 0
    %2821 = vmatpush1.bf16.msra.mxu0 %v2804
    %2822 = vmatprep.subr.bf16.mxu0 0
    %2823 = vmatpush1.bf16.msra.mxu0 %v2805
    %2824 = vmatprep.subr.bf16.mxu0 0
    %2825 = vmatpush1.bf16.msra.mxu0 %v2806
    %2826 = vmatprep.subr.bf16.mxu0 0
    %2827 = vmatpush1.bf16.msra.mxu0 %v2807
    %2828 = vmatprep.subr.bf16.mxu0 0
    %2829 = vmatpush1.bf16.msra.mxu0 %v2808
    %2830 = vmatprep.subr.bf16.mxu0 0
    %2831 = vmatpush1.bf16.msra.mxu0 %v2809
    %2832 = vmatprep.subr.bf16.mxu0 0
    %2833 = vmatpush1.bf16.msra.mxu0 %v2810
    %2834 = vmatprep.subr.bf16.mxu0 0
    %2835 = vmatpush1.bf16.msra.mxu0 %v2811
    %2836 = vmatprep.subr.bf16.mxu0 0
    %2837 = vmatpush1.bf16.msra.mxu0 0
    %2838 = vmatprep.subr.bf16.mxu0 0
    %2839 = vmatpush1.bf16.msra.mxu0 0
    %2840 = vmatprep.subr.bf16.mxu0 0
    %2841 = vmatpush1.bf16.msra.mxu0 0
    %2842 = vmatprep.subr.bf16.mxu0 0
    %2843 = vmatpush1.bf16.msra.mxu0 0
    %2844 = vmatprep.subr.bf16.mxu0 0
    %2845 = vmatpush1.bf16.msra.mxu0 0
    %2846 = vmatprep.subr.bf16.mxu0 0
    %2847 = vmatpush1.bf16.msra.mxu0 0
    %2848 = vmatprep.subr.bf16.mxu0 0
    %2849 = vmatpush1.bf16.msra.mxu0 0
    %2850 = vmatprep.subr.bf16.mxu0 0
    %2851 = vmatpush1.bf16.msra.mxu0 0
    %2852 = vmatprep.mubr.bf16.mxu0 0
    %2853 = vmatmul.mubr.bf16.gmra.mrb[0].mxu0 %v2770
    %v2854 = vpop.f32.mrb[0].mxu0
    %v2855 = vadd.f32 0.0, %v2854
    %v2856 = vpop.f32.mrb[0].mxu0
    %v2857 = vpop.f32.mrb[0].mxu0
    %v2858 = vadd.f32 0.0, %v2857
    %v2859 = vpop.f32.mrb[0].mxu0
    %2860 = vmatprep.mubr.bf16.mxu0 0
    %2861 = vmatmul.mubr.bf16.gmra.mrb[0].mxu0 %v2771
    %v2862 = vpop.f32.mrb[0].mxu0
    %v2863 = vadd.f32 0.0, %v2862
    %v2864 = vpop.f32.mrb[0].mxu0
    %v2865 = vpop.f32.mrb[0].mxu0
    %v2866 = vadd.f32 0.0, %v2865
    %v2867 = vpop.f32.mrb[0].mxu0
    %2868 = vdwg.mxu0
    %v2885 = vunpack.c.l.b16 %v2709
    %v2886 = vunpack.c.l.b16 %v2710
    %v2887 = vunpack.c.l.b16 %v2711
    %v2888 = vunpack.c.l.b16 %v2712
    %v2889 = vunpack.c.l.b16 %v2713
    %v2890 = vunpack.c.l.b16 %v2714
    %v2891 = vunpack.c.l.b16 %v2715
    %v2892 = vunpack.c.l.b16 %v2716
    %v2893 = vunpack.c.l.b16 %v2717
    %v2894 = vunpack.c.l.b16 %v2718
    %v2895 = vunpack.c.l.b16 %v2719
    %v2896 = vunpack.c.l.b16 %v2720
    %v2897 = vunpack.c.l.b16 %v2721
    %v2898 = vunpack.c.l.b16 %v2722
    %v2899 = vunpack.c.l.b16 %v2723
    %v2900 = vunpack.c.l.b16 %v2724
    %v2901 = vpack.c.b16 %v2886, %v2885
    %v2902 = vpack.c.b16 %v2888, %v2887
    %v2903 = vpack.c.b16 %v2890, %v2889
    %v2904 = vpack.c.b16 %v2892, %v2891
    %v2905 = vpack.c.b16 %v2894, %v2893
    %v2906 = vpack.c.b16 %v2896, %v2895
    %v2907 = vpack.c.b16 %v2898, %v2897
    %v2908 = vpack.c.b16 %v2900, %v2899
    %2917 = vmatprep.subr.bf16.mxu0 0
    %2918 = vmatpush1.bf16.msra.mxu0 %v2901
    %2919 = vmatprep.subr.bf16.mxu0 0
    %2920 = vmatpush1.bf16.msra.mxu0 %v2902
    %2921 = vmatprep.subr.bf16.mxu0 0
    %2922 = vmatpush1.bf16.msra.mxu0 %v2903
    %2923 = vmatprep.subr.bf16.mxu0 0
    %2924 = vmatpush1.bf16.msra.mxu0 %v2904
    %2925 = vmatprep.subr.bf16.mxu0 0
    %2926 = vmatpush1.bf16.msra.mxu0 %v2905
    %2927 = vmatprep.subr.bf16.mxu0 0
    %2928 = vmatpush1.bf16.msra.mxu0 %v2906
    %2929 = vmatprep.subr.bf16.mxu0 0
    %2930 = vmatpush1.bf16.msra.mxu0 %v2907
    %2931 = vmatprep.subr.bf16.mxu0 0
    %2932 = vmatpush1.bf16.msra.mxu0 %v2908
    %2933 = vmatprep.subr.bf16.mxu0 0
    %2934 = vmatpush1.bf16.msra.mxu0 0
    %2935 = vmatprep.subr.bf16.mxu0 0
    %2936 = vmatpush1.bf16.msra.mxu0 0
    %2937 = vmatprep.subr.bf16.mxu0 0
    %2938 = vmatpush1.bf16.msra.mxu0 0
    %2939 = vmatprep.subr.bf16.mxu0 0
    %2940 = vmatpush1.bf16.msra.mxu0 0
    %2941 = vmatprep.subr.bf16.mxu0 0
    %2942 = vmatpush1.bf16.msra.mxu0 0
    %2943 = vmatprep.subr.bf16.mxu0 0
    %2944 = vmatpush1.bf16.msra.mxu0 0
    %2945 = vmatprep.subr.bf16.mxu0 0
    %2946 = vmatpush1.bf16.msra.mxu0 0
    %2947 = vmatprep.subr.bf16.mxu0 0
    %2948 = vmatpush1.bf16.msra.mxu0 0
    %2949 = vmatprep.mubr.bf16.mxu0 0
    %2950 = vmatmul.mubr.bf16.gmra.mrb[0].mxu0 %v2764
    %v2951 = vpop.f32.mrb[0].mxu0
    %v2952 = vadd.f32 %v2855, %v2951
    %v2953 = vpop.f32.mrb[0].mxu0
    %v2954 = vpop.f32.mrb[0].mxu0
    %v2955 = vadd.f32 %v2858, %v2954
    %v2956 = vpop.f32.mrb[0].mxu0
    %2957 = vmatprep.mubr.bf16.mxu0 0
    %2958 = vmatmul.mubr.bf16.gmra.mrb[0].mxu0 %v2765
    %v2959 = vpop.f32.mrb[0].mxu0
    %v2960 = vadd.f32 %v2863, %v2959
    %v2961 = vpop.f32.mrb[0].mxu0
    %v2962 = vpop.f32.mrb[0].mxu0
    %v2963 = vadd.f32 %v2866, %v2962
    %v2964 = vpop.f32.mrb[0].mxu0
    %2965 = vdwg.mxu0
    %v2966 = vld [vmem:[#allocation2 + $0x9] sm:$0xff]
    %v2967 = vld [vmem:[#allocation2 + $0x11] sm:$0xff]
    %v2968 = vld [vmem:[#allocation2 + $0x19] sm:$0xff]
    %v2969 = vld [vmem:[#allocation2 + $0x21] sm:$0xff]
    %v2970 = vpack.c.bf16 %v2967, %v2966
    %v2971 = vpack.c.bf16 %v2969, %v2968
    %v2988 = vunpack.c.l.b16 %v2743
    %v2989 = vunpack.c.l.b16 %v2744
    %v2990 = vunpack.c.l.b16 %v2745
    %v2991 = vunpack.c.l.b16 %v2746
    %v2992 = vunpack.c.l.b16 %v2747
    %v2993 = vunpack.c.l.b16 %v2748
    %v2994 = vunpack.c.l.b16 %v2749
    %v2995 = vunpack.c.l.b16 %v2750
    %v2996 = vunpack.c.l.b16 %v2751
    %v2997 = vunpack.c.l.b16 %v2752
    %v2998 = vunpack.c.l.b16 %v2753
    %v2999 = vunpack.c.l.b16 %v2754
    %v3000 = vunpack.c.l.b16 %v2755
    %v3001 = vunpack.c.l.b16 %v2756
    %v3002 = vunpack.c.l.b16 %v2757
    %v3003 = vunpack.c.l.b16 %v2758
    %v3004 = vpack.c.b16 %v2989, %v2988
    %v3005 = vpack.c.b16 %v2991, %v2990
    %v3006 = vpack.c.b16 %v2993, %v2992
    %v3007 = vpack.c.b16 %v2995, %v2994
    %v3008 = vpack.c.b16 %v2997, %v2996
    %v3009 = vpack.c.b16 %v2999, %v2998
    %v3010 = vpack.c.b16 %v3001, %v3000
    %v3011 = vpack.c.b16 %v3003, %v3002
    %3020 = vmatprep.subr.bf16.mxu0 0
    %3021 = vmatpush1.bf16.msra.mxu0 %v3004
    %3022 = vmatprep.subr.bf16.mxu0 0
    %3023 = vmatpush1.bf16.msra.mxu0 %v3005
    %3024 = vmatprep.subr.bf16.mxu0 0
    %3025 = vmatpush1.bf16.msra.mxu0 %v3006
    %3026 = vmatprep.subr.bf16.mxu0 0
    %3027 = vmatpush1.bf16.msra.mxu0 %v3007
    %3028 = vmatprep.subr.bf16.mxu0 0
    %3029 = vmatpush1.bf16.msra.mxu0 %v3008
    %3030 = vmatprep.subr.bf16.mxu0 0
    %3031 = vmatpush1.bf16.msra.mxu0 %v3009
    %3032 = vmatprep.subr.bf16.mxu0 0
    %3033 = vmatpush1.bf16.msra.mxu0 %v3010
    %3034 = vmatprep.subr.bf16.mxu0 0
    %3035 = vmatpush1.bf16.msra.mxu0 %v3011
    %3036 = vmatprep.subr.bf16.mxu0 0
    %3037 = vmatpush1.bf16.msra.mxu0 0
    %3038 = vmatprep.subr.bf16.mxu0 0
    %3039 = vmatpush1.bf16.msra.mxu0 0
    %3040 = vmatprep.subr.bf16.mxu0 0
    %3041 = vmatpush1.bf16.msra.mxu0 0
    %3042 = vmatprep.subr.bf16.mxu0 0
    %3043 = vmatpush1.bf16.msra.mxu0 0
    %3044 = vmatprep.subr.bf16.mxu0 0
    %3045 = vmatpush1.bf16.msra.mxu0 0
    %3046 = vmatprep.subr.bf16.mxu0 0
    %3047 = vmatpush1.bf16.msra.mxu0 0
    %3048 = vmatprep.subr.bf16.mxu0 0
    %3049 = vmatpush1.bf16.msra.mxu0 0
    %3050 = vmatprep.subr.bf16.mxu0 0
    %3051 = vmatpush1.bf16.msra.mxu0 0
    %3052 = vmatprep.mubr.bf16.mxu0 0
    %3053 = vmatmul.mubr.bf16.gmra.mrb[0].mxu0 %v2970
    %v3054 = vpop.f32.mrb[0].mxu0
    %v3055 = vadd.f32 0.0, %v3054
    %v3056 = vpop.f32.mrb[0].mxu0
    %v3057 = vpop.f32.mrb[0].mxu0
    %v3058 = vadd.f32 0.0, %v3057
    %v3059 = vpop.f32.mrb[0].mxu0
    %3060 = vmatprep.mubr.bf16.mxu0 0
    %3061 = vmatmul.mubr.bf16.gmra.mrb[0].mxu0 %v2971
    %v3062 = vpop.f32.mrb[0].mxu0
    %v3063 = vadd.f32 0.0, %v3062
    %v3064 = vpop.f32.mrb[0].mxu0
    %v3065 = vpop.f32.mrb[0].mxu0
    %v3066 = vadd.f32 0.0, %v3065
    %v3067 = vpop.f32.mrb[0].mxu0
    %3068 = vdwg.mxu0
    %v3069 = vadd.f32 %v2952, %v3055
    %v3070 = vadd.f32 %v2955, %v3058
    %v3071 = vadd.f32 %v2960, %v3063
    %v3072 = vadd.f32 %v2963, %v3066
    %v3073 = vlaneseq
    %v3074 = vshrl.u32 %v3073, 7
    %v3075 = vsub.s32 0, %v3074
    %v3076 = vrot.slane %v2759, %v3075
    %v3077 = vadd.f32 %v3069, %v3076
    %v3078 = vadd.f32 %v3070, %v3076
    %v3079 = vadd.f32 %v3071, %v3076
    %v3080 = vadd.f32 %v3072, %v3076
    %3081 = vst [vmem:[#allocation2 + $0x8] sm:$0xff] %v3077
    %3082 = vst [vmem:[#allocation2 + $0x10] sm:$0xff] %v3078
    %3083 = vst [vmem:[#allocation2 + $0x18] sm:$0xff] %v3079
    %3084 = vst [vmem:[#allocation2 + $0x20] sm:$0xff] %v3080
    %s3085 = scalar_lea.vmem [#allocation8], 1152
    %v3086 = vld [vmem:[%s3085] sm:$0xf]
    %v3087 = vld [vmem:[%s3085 + $0x4] sm:$0xf]
    %v3088 = vld [vmem:[%s3085 + $0x8] sm:$0xf]
    %v3089 = vld [vmem:[%s3085 + $0xc] sm:$0xf]
    %v3090 = vld [vmem:[%s3085 + $0x10] sm:$0xf]
    %v3091 = vld [vmem:[%s3085 + $0x14] sm:$0xf]
    %v3092 = vld [vmem:[%s3085 + $0x18] sm:$0xf]
    %v3093 = vld [vmem:[%s3085 + $0x1c] sm:$0xf]
    %v3094 = vld [vmem:[%s3085 + $0x20] sm:$0xf]
    %v3095 = vld [vmem:[%s3085 + $0x24] sm:$0xf]
    %v3096 = vld [vmem:[%s3085 + $0x28] sm:$0xf]
    %v3097 = vld [vmem:[%s3085 + $0x2c] sm:$0xf]
    %v3098 = vld [vmem:[%s3085 + $0x30] sm:$0xf]
    %v3099 = vld [vmem:[%s3085 + $0x34] sm:$0xf]
    %v3100 = vld [vmem:[%s3085 + $0x38] sm:$0xf]
    %v3101 = vld [vmem:[%s3085 + $0x3c] sm:$0xf]
    %s3102 = scalar_lea.vmem [#allocation8], 1216
    %v3103 = vld [vmem:[%s3102] sm:$0xf]
    %v3104 = vld [vmem:[%s3102 + $0x4] sm:$0xf]
    %v3105 = vld [vmem:[%s3102 + $0x8] sm:$0xf]
    %v3106 = vld [vmem:[%s3102 + $0xc] sm:$0xf]
    %v3107 = vld [vmem:[%s3102 + $0x10] sm:$0xf]
    %v3108 = vld [vmem:[%s3102 + $0x14] sm:$0xf]
    %v3109 = vld [vmem:[%s3102 + $0x18] sm:$0xf]
    %v3110 = vld [vmem:[%s3102 + $0x1c] sm:$0xf]
    %v3111 = vld [vmem:[%s3102 + $0x20] sm:$0xf]
    %v3112 = vld [vmem:[%s3102 + $0x24] sm:$0xf]
    %v3113 = vld [vmem:[%s3102 + $0x28] sm:$0xf]
    %v3114 = vld [vmem:[%s3102 + $0x2c] sm:$0xf]
    %v3115 = vld [vmem:[%s3102 + $0x30] sm:$0xf]
    %v3116 = vld [vmem:[%s3102 + $0x34] sm:$0xf]
    %v3117 = vld [vmem:[%s3102 + $0x38] sm:$0xf]
    %v3118 = vld [vmem:[%s3102 + $0x3c] sm:$0xf]
    %s3119 = scalar_lea.vmem [#allocation8], 1280
    %v3120 = vld [vmem:[%s3119] sm:$0xf]
    %v3121 = vld [vmem:[%s3119 + $0x4] sm:$0xf]
    %v3122 = vld [vmem:[%s3119 + $0x8] sm:$0xf]
    %v3123 = vld [vmem:[%s3119 + $0xc] sm:$0xf]
    %v3124 = vld [vmem:[%s3119 + $0x10] sm:$0xf]
    %v3125 = vld [vmem:[%s3119 + $0x14] sm:$0xf]
    %v3126 = vld [vmem:[%s3119 + $0x18] sm:$0xf]
    %v3127 = vld [vmem:[%s3119 + $0x1c] sm:$0xf]
    %v3128 = vld [vmem:[%s3119 + $0x20] sm:$0xf]
    %v3129 = vld [vmem:[%s3119 + $0x24] sm:$0xf]
    %v3130 = vld [vmem:[%s3119 + $0x28] sm:$0xf]
    %v3131 = vld [vmem:[%s3119 + $0x2c] sm:$0xf]
    %v3132 = vld [vmem:[%s3119 + $0x30] sm:$0xf]
    %v3133 = vld [vmem:[%s3119 + $0x34] sm:$0xf]
    %v3134 = vld [vmem:[%s3119 + $0x38] sm:$0xf]
    %v3135 = vld [vmem:[%s3119 + $0x3c] sm:$0xf]
    %v3136 = vld [vmem:[%s4 + $0x6] sm:$0x1]
    %v3137 = vld [vmem:[#allocation2 + $0x7] sm:$0xff]
    %v3138 = vld [vmem:[#allocation2 + $0xf] sm:$0xff]
    %v3139 = vld [vmem:[#allocation2 + $0x17] sm:$0xff]
    %v3140 = vld [vmem:[#allocation2 + $0x1f] sm:$0xff]
    %v3141 = vpack.c.bf16 %v3138, %v3137
    %v3142 = vpack.c.bf16 %v3140, %v3139
    %v3143 = vld [vmem:[#allocation2 + $0x8] sm:$0xff]
    %v3144 = vld [vmem:[#allocation2 + $0x10] sm:$0xff]
    %v3145 = vld [vmem:[#allocation2 + $0x18] sm:$0xff]
    %v3146 = vld [vmem:[#allocation2 + $0x20] sm:$0xff]
    %v3147 = vpack.c.bf16 %v3144, %v3143
    %v3148 = vpack.c.bf16 %v3146, %v3145
    %v3165 = vunpack.c.l.b16 %v3103
    %v3166 = vunpack.c.l.b16 %v3104
    %v3167 = vunpack.c.l.b16 %v3105
    %v3168 = vunpack.c.l.b16 %v3106
    %v3169 = vunpack.c.l.b16 %v3107
    %v3170 = vunpack.c.l.b16 %v3108
    %v3171 = vunpack.c.l.b16 %v3109
    %v3172 = vunpack.c.l.b16 %v3110
    %v3173 = vunpack.c.l.b16 %v3111
    %v3174 = vunpack.c.l.b16 %v3112
    %v3175 = vunpack.c.l.b16 %v3113
    %v3176 = vunpack.c.l.b16 %v3114
    %v3177 = vunpack.c.l.b16 %v3115
    %v3178 = vunpack.c.l.b16 %v3116
    %v3179 = vunpack.c.l.b16 %v3117
    %v3180 = vunpack.c.l.b16 %v3118
    %v3181 = vpack.c.b16 %v3166, %v3165
    %v3182 = vpack.c.b16 %v3168, %v3167
    %v3183 = vpack.c.b16 %v3170, %v3169
    %v3184 = vpack.c.b16 %v3172, %v3171
    %v3185 = vpack.c.b16 %v3174, %v3173
    %v3186 = vpack.c.b16 %v3176, %v3175
    %v3187 = vpack.c.b16 %v3178, %v3177
    %v3188 = vpack.c.b16 %v3180, %v3179
    %3197 = vmatprep.subr.bf16.mxu0 0
    %3198 = vmatpush1.bf16.msra.mxu0 %v3181
    %3199 = vmatprep.subr.bf16.mxu0 0
    %3200 = vmatpush1.bf16.msra.mxu0 %v3182
    %3201 = vmatprep.subr.bf16.mxu0 0
    %3202 = vmatpush1.bf16.msra.mxu0 %v3183
    %3203 = vmatprep.subr.bf16.mxu0 0
    %3204 = vmatpush1.bf16.msra.mxu0 %v3184
    %3205 = vmatprep.subr.bf16.mxu0 0
    %3206 = vmatpush1.bf16.msra.mxu0 %v3185
    %3207 = vmatprep.subr.bf16.mxu0 0
    %3208 = vmatpush1.bf16.msra.mxu0 %v3186
    %3209 = vmatprep.subr.bf16.mxu0 0
    %3210 = vmatpush1.bf16.msra.mxu0 %v3187
    %3211 = vmatprep.subr.bf16.mxu0 0
    %3212 = vmatpush1.bf16.msra.mxu0 %v3188
    %3213 = vmatprep.subr.bf16.mxu0 0
    %3214 = vmatpush1.bf16.msra.mxu0 0
    %3215 = vmatprep.subr.bf16.mxu0 0
    %3216 = vmatpush1.bf16.msra.mxu0 0
    %3217 = vmatprep.subr.bf16.mxu0 0
    %3218 = vmatpush1.bf16.msra.mxu0 0
    %3219 = vmatprep.subr.bf16.mxu0 0
    %3220 = vmatpush1.bf16.msra.mxu0 0
    %3221 = vmatprep.subr.bf16.mxu0 0
    %3222 = vmatpush1.bf16.msra.mxu0 0
    %3223 = vmatprep.subr.bf16.mxu0 0
    %3224 = vmatpush1.bf16.msra.mxu0 0
    %3225 = vmatprep.subr.bf16.mxu0 0
    %3226 = vmatpush1.bf16.msra.mxu0 0
    %3227 = vmatprep.subr.bf16.mxu0 0
    %3228 = vmatpush1.bf16.msra.mxu0 0
    %3229 = vmatprep.mubr.bf16.mxu0 0
    %3230 = vmatmul.mubr.bf16.gmra.mrb[0].mxu0 %v3147
    %v3231 = vpop.f32.mrb[0].mxu0
    %v3232 = vadd.f32 0.0, %v3231
    %v3233 = vpop.f32.mrb[0].mxu0
    %v3234 = vpop.f32.mrb[0].mxu0
    %v3235 = vadd.f32 0.0, %v3234
    %v3236 = vpop.f32.mrb[0].mxu0
    %3237 = vmatprep.mubr.bf16.mxu0 0
    %3238 = vmatmul.mubr.bf16.gmra.mrb[0].mxu0 %v3148
    %v3239 = vpop.f32.mrb[0].mxu0
    %v3240 = vadd.f32 0.0, %v3239
    %v3241 = vpop.f32.mrb[0].mxu0
    %v3242 = vpop.f32.mrb[0].mxu0
    %v3243 = vadd.f32 0.0, %v3242
    %v3244 = vpop.f32.mrb[0].mxu0
    %3245 = vdwg.mxu0
    %v3262 = vunpack.c.l.b16 %v3086
    %v3263 = vunpack.c.l.b16 %v3087
    %v3264 = vunpack.c.l.b16 %v3088
    %v3265 = vunpack.c.l.b16 %v3089
    %v3266 = vunpack.c.l.b16 %v3090
    %v3267 = vunpack.c.l.b16 %v3091
    %v3268 = vunpack.c.l.b16 %v3092
    %v3269 = vunpack.c.l.b16 %v3093
    %v3270 = vunpack.c.l.b16 %v3094
    %v3271 = vunpack.c.l.b16 %v3095
    %v3272 = vunpack.c.l.b16 %v3096
    %v3273 = vunpack.c.l.b16 %v3097
    %v3274 = vunpack.c.l.b16 %v3098
    %v3275 = vunpack.c.l.b16 %v3099
    %v3276 = vunpack.c.l.b16 %v3100
    %v3277 = vunpack.c.l.b16 %v3101
    %v3278 = vpack.c.b16 %v3263, %v3262
    %v3279 = vpack.c.b16 %v3265, %v3264
    %v3280 = vpack.c.b16 %v3267, %v3266
    %v3281 = vpack.c.b16 %v3269, %v3268
    %v3282 = vpack.c.b16 %v3271, %v3270
    %v3283 = vpack.c.b16 %v3273, %v3272
    %v3284 = vpack.c.b16 %v3275, %v3274
    %v3285 = vpack.c.b16 %v3277, %v3276
    %3294 = vmatprep.subr.bf16.mxu0 0
    %3295 = vmatpush1.bf16.msra.mxu0 %v3278
    %3296 = vmatprep.subr.bf16.mxu0 0
    %3297 = vmatpush1.bf16.msra.mxu0 %v3279
    %3298 = vmatprep.subr.bf16.mxu0 0
    %3299 = vmatpush1.bf16.msra.mxu0 %v3280
    %3300 = vmatprep.subr.bf16.mxu0 0
    %3301 = vmatpush1.bf16.msra.mxu0 %v3281
    %3302 = vmatprep.subr.bf16.mxu0 0
    %3303 = vmatpush1.bf16.msra.mxu0 %v3282
    %3304 = vmatprep.subr.bf16.mxu0 0
    %3305 = vmatpush1.bf16.msra.mxu0 %v3283
    %3306 = vmatprep.subr.bf16.mxu0 0
    %3307 = vmatpush1.bf16.msra.mxu0 %v3284
    %3308 = vmatprep.subr.bf16.mxu0 0
    %3309 = vmatpush1.bf16.msra.mxu0 %v3285
    %3310 = vmatprep.subr.bf16.mxu0 0
    %3311 = vmatpush1.bf16.msra.mxu0 0
    %3312 = vmatprep.subr.bf16.mxu0 0
    %3313 = vmatpush1.bf16.msra.mxu0 0
    %3314 = vmatprep.subr.bf16.mxu0 0
    %3315 = vmatpush1.bf16.msra.mxu0 0
    %3316 = vmatprep.subr.bf16.mxu0 0
    %3317 = vmatpush1.bf16.msra.mxu0 0
    %3318 = vmatprep.subr.bf16.mxu0 0
    %3319 = vmatpush1.bf16.msra.mxu0 0
    %3320 = vmatprep.subr.bf16.mxu0 0
    %3321 = vmatpush1.bf16.msra.mxu0 0
    %3322 = vmatprep.subr.bf16.mxu0 0
    %3323 = vmatpush1.bf16.msra.mxu0 0
    %3324 = vmatprep.subr.bf16.mxu0 0
    %3325 = vmatpush1.bf16.msra.mxu0 0
    %3326 = vmatprep.mubr.bf16.mxu0 0
    %3327 = vmatmul.mubr.bf16.gmra.mrb[0].mxu0 %v3141
    %v3328 = vpop.f32.mrb[0].mxu0
    %v3329 = vadd.f32 %v3232, %v3328
    %v3330 = vpop.f32.mrb[0].mxu0
    %v3331 = vpop.f32.mrb[0].mxu0
    %v3332 = vadd.f32 %v3235, %v3331
    %v3333 = vpop.f32.mrb[0].mxu0
    %3334 = vmatprep.mubr.bf16.mxu0 0
    %3335 = vmatmul.mubr.bf16.gmra.mrb[0].mxu0 %v3142
    %v3336 = vpop.f32.mrb[0].mxu0
    %v3337 = vadd.f32 %v3240, %v3336
    %v3338 = vpop.f32.mrb[0].mxu0
    %v3339 = vpop.f32.mrb[0].mxu0
    %v3340 = vadd.f32 %v3243, %v3339
    %v3341 = vpop.f32.mrb[0].mxu0
    %3342 = vdwg.mxu0
    %v3343 = vld [vmem:[#allocation2 + $0x9] sm:$0xff]
    %v3344 = vld [vmem:[#allocation2 + $0x11] sm:$0xff]
    %v3345 = vld [vmem:[#allocation2 + $0x19] sm:$0xff]
    %v3346 = vld [vmem:[#allocation2 + $0x21] sm:$0xff]
    %v3347 = vpack.c.bf16 %v3344, %v3343
    %v3348 = vpack.c.bf16 %v3346, %v3345
    %v3365 = vunpack.c.l.b16 %v3120
    %v3366 = vunpack.c.l.b16 %v3121
    %v3367 = vunpack.c.l.b16 %v3122
    %v3368 = vunpack.c.l.b16 %v3123
    %v3369 = vunpack.c.l.b16 %v3124
    %v3370 = vunpack.c.l.b16 %v3125
    %v3371 = vunpack.c.l.b16 %v3126
    %v3372 = vunpack.c.l.b16 %v3127
    %v3373 = vunpack.c.l.b16 %v3128
    %v3374 = vunpack.c.l.b16 %v3129
    %v3375 = vunpack.c.l.b16 %v3130
    %v3376 = vunpack.c.l.b16 %v3131
    %v3377 = vunpack.c.l.b16 %v3132
    %v3378 = vunpack.c.l.b16 %v3133
    %v3379 = vunpack.c.l.b16 %v3134
    %v3380 = vunpack.c.l.b16 %v3135
    %v3381 = vpack.c.b16 %v3366, %v3365
    %v3382 = vpack.c.b16 %v3368, %v3367
    %v3383 = vpack.c.b16 %v3370, %v3369
    %v3384 = vpack.c.b16 %v3372, %v3371
    %v3385 = vpack.c.b16 %v3374, %v3373
    %v3386 = vpack.c.b16 %v3376, %v3375
    %v3387 = vpack.c.b16 %v3378, %v3377
    %v3388 = vpack.c.b16 %v3380, %v3379
    %3397 = vmatprep.subr.bf16.mxu0 0
    %3398 = vmatpush1.bf16.msra.mxu0 %v3381
    %3399 = vmatprep.subr.bf16.mxu0 0
    %3400 = vmatpush1.bf16.msra.mxu0 %v3382
    %3401 = vmatprep.subr.bf16.mxu0 0
    %3402 = vmatpush1.bf16.msra.mxu0 %v3383
    %3403 = vmatprep.subr.bf16.mxu0 0
    %3404 = vmatpush1.bf16.msra.mxu0 %v3384
    %3405 = vmatprep.subr.bf16.mxu0 0
    %3406 = vmatpush1.bf16.msra.mxu0 %v3385
    %3407 = vmatprep.subr.bf16.mxu0 0
    %3408 = vmatpush1.bf16.msra.mxu0 %v3386
    %3409 = vmatprep.subr.bf16.mxu0 0
    %3410 = vmatpush1.bf16.msra.mxu0 %v3387
    %3411 = vmatprep.subr.bf16.mxu0 0
    %3412 = vmatpush1.bf16.msra.mxu0 %v3388
    %3413 = vmatprep.subr.bf16.mxu0 0
    %3414 = vmatpush1.bf16.msra.mxu0 0
    %3415 = vmatprep.subr.bf16.mxu0 0
    %3416 = vmatpush1.bf16.msra.mxu0 0
    %3417 = vmatprep.subr.bf16.mxu0 0
    %3418 = vmatpush1.bf16.msra.mxu0 0
    %3419 = vmatprep.subr.bf16.mxu0 0
    %3420 = vmatpush1.bf16.msra.mxu0 0
    %3421 = vmatprep.subr.bf16.mxu0 0
    %3422 = vmatpush1.bf16.msra.mxu0 0
    %3423 = vmatprep.subr.bf16.mxu0 0
    %3424 = vmatpush1.bf16.msra.mxu0 0
    %3425 = vmatprep.subr.bf16.mxu0 0
    %3426 = vmatpush1.bf16.msra.mxu0 0
    %3427 = vmatprep.subr.bf16.mxu0 0
    %3428 = vmatpush1.bf16.msra.mxu0 0
    %3429 = vmatprep.mubr.bf16.mxu0 0
    %3430 = vmatmul.mubr.bf16.gmra.mrb[0].mxu0 %v3347
    %v3431 = vpop.f32.mrb[0].mxu0
    %v3432 = vadd.f32 0.0, %v3431
    %v3433 = vpop.f32.mrb[0].mxu0
    %v3434 = vpop.f32.mrb[0].mxu0
    %v3435 = vadd.f32 0.0, %v3434
    %v3436 = vpop.f32.mrb[0].mxu0
    %3437 = vmatprep.mubr.bf16.mxu0 0
    %3438 = vmatmul.mubr.bf16.gmra.mrb[0].mxu0 %v3348
    %v3439 = vpop.f32.mrb[0].mxu0
    %v3440 = vadd.f32 0.0, %v3439
    %v3441 = vpop.f32.mrb[0].mxu0
    %v3442 = vpop.f32.mrb[0].mxu0
    %v3443 = vadd.f32 0.0, %v3442
    %v3444 = vpop.f32.mrb[0].mxu0
    %3445 = vdwg.mxu0
    %v3446 = vadd.f32 %v3329, %v3432
    %v3447 = vadd.f32 %v3332, %v3435
    %v3448 = vadd.f32 %v3337, %v3440
    %v3449 = vadd.f32 %v3340, %v3443
    %v3450 = vlaneseq
    %v3451 = vshrl.u32 %v3450, 7
    %v3452 = vsub.s32 0, %v3451
    %v3453 = vrot.slane %v3136, %v3452
    %v3454 = vadd.f32 %v3446, %v3453
    %v3455 = vadd.f32 %v3447, %v3453
    %v3456 = vadd.f32 %v3448, %v3453
    %v3457 = vadd.f32 %v3449, %v3453
    %v3458 = vmax.f32 %v3454, 0.0
    %v3459 = vmax.f32 %v3455, 0.0
    %v3460 = vmax.f32 %v3456, 0.0
    %v3461 = vmax.f32 %v3457, 0.0
    %3462 = vst [vmem:[#allocation2 + $0x8] sm:$0xff] %v3458
    %3463 = vst [vmem:[#allocation2 + $0x10] sm:$0xff] %v3459
    %3464 = vst [vmem:[#allocation2 + $0x18] sm:$0xff] %v3460
    %3465 = vst [vmem:[#allocation2 + $0x20] sm:$0xff] %v3461
    %v3466 = vld [vmem:[%s8] sm:$0x1]
    %v3467 = vld [vmem:[#allocation2 + $0x7] sm:$0xff]
    %v3468 = vld [vmem:[#allocation2 + $0xf] sm:$0xff]
    %v3469 = vld [vmem:[#allocation2 + $0x17] sm:$0xff]
    %v3470 = vld [vmem:[#allocation2 + $0x1f] sm:$0xff]
    %v3471 = vpack.c.bf16 %v3468, %v3467
    %v3472 = vpack.c.bf16 %v3470, %v3469
    %v3473 = vld [vmem:[#allocation2 + $0x8] sm:$0xff]
    %v3474 = vld [vmem:[#allocation2 + $0x10] sm:$0xff]
    %v3475 = vld [vmem:[#allocation2 + $0x18] sm:$0xff]
    %v3476 = vld [vmem:[#allocation2 + $0x20] sm:$0xff]
    %v3477 = vpack.c.bf16 %v3474, %v3473
    %v3478 = vpack.c.bf16 %v3476, %v3475
    %v3495 = vunpack.c.l.b16 %v169
    %v3496 = vunpack.c.l.b16 %v170
    %v3497 = vunpack.c.l.b16 %v171
    %v3498 = vunpack.c.l.b16 %v172
    %v3499 = vunpack.c.l.b16 %v173
    %v3500 = vunpack.c.l.b16 %v174
    %v3501 = vunpack.c.l.b16 %v175
    %v3502 = vunpack.c.l.b16 %v176
    %v3503 = vunpack.c.l.b16 %v177
    %v3504 = vunpack.c.l.b16 %v178
    %v3505 = vunpack.c.l.b16 %v179
    %v3506 = vunpack.c.l.b16 %v180
    %v3507 = vunpack.c.l.b16 %v181
    %v3508 = vunpack.c.l.b16 %v182
    %v3509 = vunpack.c.l.b16 %v183
    %v3510 = vunpack.c.l.b16 %v184
    %v3511 = vpack.c.b16 %v3496, %v3495
    %v3512 = vpack.c.b16 %v3498, %v3497
    %v3513 = vpack.c.b16 %v3500, %v3499
    %v3514 = vpack.c.b16 %v3502, %v3501
    %v3515 = vpack.c.b16 %v3504, %v3503
    %v3516 = vpack.c.b16 %v3506, %v3505
    %v3517 = vpack.c.b16 %v3508, %v3507
    %v3518 = vpack.c.b16 %v3510, %v3509
    %3527 = vmatprep.subr.bf16.mxu0 0
    %3528 = vmatpush1.bf16.msra.mxu0 %v3511
    %3529 = vmatprep.subr.bf16.mxu0 0
    %3530 = vmatpush1.bf16.msra.mxu0 %v3512
    %3531 = vmatprep.subr.bf16.mxu0 0
    %3532 = vmatpush1.bf16.msra.mxu0 %v3513
    %3533 = vmatprep.subr.bf16.mxu0 0
    %3534 = vmatpush1.bf16.msra.mxu0 %v3514
    %3535 = vmatprep.subr.bf16.mxu0 0
    %3536 = vmatpush1.bf16.msra.mxu0 %v3515
    %3537 = vmatprep.subr.bf16.mxu0 0
    %3538 = vmatpush1.bf16.msra.mxu0 %v3516
    %3539 = vmatprep.subr.bf16.mxu0 0
    %3540 = vmatpush1.bf16.msra.mxu0 %v3517
    %3541 = vmatprep.subr.bf16.mxu0 0
    %3542 = vmatpush1.bf16.msra.mxu0 %v3518
    %3543 = vmatprep.subr.bf16.mxu0 0
    %3544 = vmatpush1.bf16.msra.mxu0 0
    %3545 = vmatprep.subr.bf16.mxu0 0
    %3546 = vmatpush1.bf16.msra.mxu0 0
    %3547 = vmatprep.subr.bf16.mxu0 0
    %3548 = vmatpush1.bf16.msra.mxu0 0
    %3549 = vmatprep.subr.bf16.mxu0 0
    %3550 = vmatpush1.bf16.msra.mxu0 0
    %3551 = vmatprep.subr.bf16.mxu0 0
    %3552 = vmatpush1.bf16.msra.mxu0 0
    %3553 = vmatprep.subr.bf16.mxu0 0
    %3554 = vmatpush1.bf16.msra.mxu0 0
    %3555 = vmatprep.subr.bf16.mxu0 0
    %3556 = vmatpush1.bf16.msra.mxu0 0
    %3557 = vmatprep.subr.bf16.mxu0 0
    %3558 = vmatpush1.bf16.msra.mxu0 0
    %3559 = vmatprep.mubr.bf16.mxu0 0
    %3560 = vmatmul.mubr.bf16.gmra.mrb[0].mxu0 %v3477
    %v3561 = vpop.f32.mrb[0].mxu0
    %v3562 = vadd.f32 0.0, %v3561
    %v3563 = vpop.f32.mrb[0].mxu0
    %v3564 = vpop.f32.mrb[0].mxu0
    %v3565 = vadd.f32 0.0, %v3564
    %v3566 = vpop.f32.mrb[0].mxu0
    %3567 = vmatprep.mubr.bf16.mxu0 0
    %3568 = vmatmul.mubr.bf16.gmra.mrb[0].mxu0 %v3478
    %v3569 = vpop.f32.mrb[0].mxu0
    %v3570 = vadd.f32 0.0, %v3569
    %v3571 = vpop.f32.mrb[0].mxu0
    %v3572 = vpop.f32.mrb[0].mxu0
    %v3573 = vadd.f32 0.0, %v3572
    %v3574 = vpop.f32.mrb[0].mxu0
    %3575 = vdwg.mxu0
    %v3592 = vunpack.c.l.b16 %v152
    %v3593 = vunpack.c.l.b16 %v153
    %v3594 = vunpack.c.l.b16 %v154
    %v3595 = vunpack.c.l.b16 %v155
    %v3596 = vunpack.c.l.b16 %v156
    %v3597 = vunpack.c.l.b16 %v157
    %v3598 = vunpack.c.l.b16 %v158
    %v3599 = vunpack.c.l.b16 %v159
    %v3600 = vunpack.c.l.b16 %v160
    %v3601 = vunpack.c.l.b16 %v161
    %v3602 = vunpack.c.l.b16 %v162
    %v3603 = vunpack.c.l.b16 %v163
    %v3604 = vunpack.c.l.b16 %v164
    %v3605 = vunpack.c.l.b16 %v165
    %v3606 = vunpack.c.l.b16 %v166
    %v3607 = vunpack.c.l.b16 %v167
    %v3608 = vpack.c.b16 %v3593, %v3592
    %v3609 = vpack.c.b16 %v3595, %v3594
    %v3610 = vpack.c.b16 %v3597, %v3596
    %v3611 = vpack.c.b16 %v3599, %v3598
    %v3612 = vpack.c.b16 %v3601, %v3600
    %v3613 = vpack.c.b16 %v3603, %v3602
    %v3614 = vpack.c.b16 %v3605, %v3604
    %v3615 = vpack.c.b16 %v3607, %v3606
    %3624 = vmatprep.subr.bf16.mxu0 0
    %3625 = vmatpush1.bf16.msra.mxu0 %v3608
    %3626 = vmatprep.subr.bf16.mxu0 0
    %3627 = vmatpush1.bf16.msra.mxu0 %v3609
    %3628 = vmatprep.subr.bf16.mxu0 0
    %3629 = vmatpush1.bf16.msra.mxu0 %v3610
    %3630 = vmatprep.subr.bf16.mxu0 0
    %3631 = vmatpush1.bf16.msra.mxu0 %v3611
    %3632 = vmatprep.subr.bf16.mxu0 0
    %3633 = vmatpush1.bf16.msra.mxu0 %v3612
    %3634 = vmatprep.subr.bf16.mxu0 0
    %3635 = vmatpush1.bf16.msra.mxu0 %v3613
    %3636 = vmatprep.subr.bf16.mxu0 0
    %3637 = vmatpush1.bf16.msra.mxu0 %v3614
    %3638 = vmatprep.subr.bf16.mxu0 0
    %3639 = vmatpush1.bf16.msra.mxu0 %v3615
    %3640 = vmatprep.subr.bf16.mxu0 0
    %3641 = vmatpush1.bf16.msra.mxu0 0
    %3642 = vmatprep.subr.bf16.mxu0 0
    %3643 = vmatpush1.bf16.msra.mxu0 0
    %3644 = vmatprep.subr.bf16.mxu0 0
    %3645 = vmatpush1.bf16.msra.mxu0 0
    %3646 = vmatprep.subr.bf16.mxu0 0
    %3647 = vmatpush1.bf16.msra.mxu0 0
    %3648 = vmatprep.subr.bf16.mxu0 0
    %3649 = vmatpush1.bf16.msra.mxu0 0
    %3650 = vmatprep.subr.bf16.mxu0 0
    %3651 = vmatpush1.bf16.msra.mxu0 0
    %3652 = vmatprep.subr.bf16.mxu0 0
    %3653 = vmatpush1.bf16.msra.mxu0 0
    %3654 = vmatprep.subr.bf16.mxu0 0
    %3655 = vmatpush1.bf16.msra.mxu0 0
    %3656 = vmatprep.mubr.bf16.mxu0 0
    %3657 = vmatmul.mubr.bf16.gmra.mrb[0].mxu0 %v3471
    %v3658 = vpop.f32.mrb[0].mxu0
    %v3659 = vadd.f32 %v3562, %v3658
    %v3660 = vpop.f32.mrb[0].mxu0
    %v3661 = vpop.f32.mrb[0].mxu0
    %v3662 = vadd.f32 %v3565, %v3661
    %v3663 = vpop.f32.mrb[0].mxu0
    %3664 = vmatprep.mubr.bf16.mxu0 0
    %3665 = vmatmul.mubr.bf16.gmra.mrb[0].mxu0 %v3472
    %v3666 = vpop.f32.mrb[0].mxu0
    %v3667 = vadd.f32 %v3570, %v3666
    %v3668 = vpop.f32.mrb[0].mxu0
    %v3669 = vpop.f32.mrb[0].mxu0
    %v3670 = vadd.f32 %v3573, %v3669
    %v3671 = vpop.f32.mrb[0].mxu0
    %3672 = vdwg.mxu0
    %v3673 = vld [vmem:[#allocation2 + $0x9] sm:$0xff]
    %v3674 = vld [vmem:[#allocation2 + $0x11] sm:$0xff]
    %v3675 = vld [vmem:[#allocation2 + $0x19] sm:$0xff]
    %v3676 = vld [vmem:[#allocation2 + $0x21] sm:$0xff]
    %v3677 = vpack.c.bf16 %v3674, %v3673
    %v3678 = vpack.c.bf16 %v3676, %v3675
    %v3695 = vunpack.c.l.b16 %v186
    %v3696 = vunpack.c.l.b16 %v187
    %v3697 = vunpack.c.l.b16 %v188
    %v3698 = vunpack.c.l.b16 %v189
    %v3699 = vunpack.c.l.b16 %v190
    %v3700 = vunpack.c.l.b16 %v191
    %v3701 = vunpack.c.l.b16 %v192
    %v3702 = vunpack.c.l.b16 %v193
    %v3703 = vunpack.c.l.b16 %v194
    %v3704 = vunpack.c.l.b16 %v195
    %v3705 = vunpack.c.l.b16 %v196
    %v3706 = vunpack.c.l.b16 %v197
    %v3707 = vunpack.c.l.b16 %v198
    %v3708 = vunpack.c.l.b16 %v199
    %v3709 = vunpack.c.l.b16 %v200
    %v3710 = vunpack.c.l.b16 %v201
    %v3711 = vpack.c.b16 %v3696, %v3695
    %v3712 = vpack.c.b16 %v3698, %v3697
    %v3713 = vpack.c.b16 %v3700, %v3699
    %v3714 = vpack.c.b16 %v3702, %v3701
    %v3715 = vpack.c.b16 %v3704, %v3703
    %v3716 = vpack.c.b16 %v3706, %v3705
    %v3717 = vpack.c.b16 %v3708, %v3707
    %v3718 = vpack.c.b16 %v3710, %v3709
    %3727 = vmatprep.subr.bf16.mxu0 0
    %3728 = vmatpush1.bf16.msra.mxu0 %v3711
    %3729 = vmatprep.subr.bf16.mxu0 0
    %3730 = vmatpush1.bf16.msra.mxu0 %v3712
    %3731 = vmatprep.subr.bf16.mxu0 0
    %3732 = vmatpush1.bf16.msra.mxu0 %v3713
    %3733 = vmatprep.subr.bf16.mxu0 0
    %3734 = vmatpush1.bf16.msra.mxu0 %v3714
    %3735 = vmatprep.subr.bf16.mxu0 0
    %3736 = vmatpush1.bf16.msra.mxu0 %v3715
    %3737 = vmatprep.subr.bf16.mxu0 0
    %3738 = vmatpush1.bf16.msra.mxu0 %v3716
    %3739 = vmatprep.subr.bf16.mxu0 0
    %3740 = vmatpush1.bf16.msra.mxu0 %v3717
    %3741 = vmatprep.subr.bf16.mxu0 0
    %3742 = vmatpush1.bf16.msra.mxu0 %v3718
    %3743 = vmatprep.subr.bf16.mxu0 0
    %3744 = vmatpush1.bf16.msra.mxu0 0
    %3745 = vmatprep.subr.bf16.mxu0 0
    %3746 = vmatpush1.bf16.msra.mxu0 0
    %3747 = vmatprep.subr.bf16.mxu0 0
    %3748 = vmatpush1.bf16.msra.mxu0 0
    %3749 = vmatprep.subr.bf16.mxu0 0
    %3750 = vmatpush1.bf16.msra.mxu0 0
    %3751 = vmatprep.subr.bf16.mxu0 0
    %3752 = vmatpush1.bf16.msra.mxu0 0
    %3753 = vmatprep.subr.bf16.mxu0 0
    %3754 = vmatpush1.bf16.msra.mxu0 0
    %3755 = vmatprep.subr.bf16.mxu0 0
    %3756 = vmatpush1.bf16.msra.mxu0 0
    %3757 = vmatprep.subr.bf16.mxu0 0
    %3758 = vmatpush1.bf16.msra.mxu0 0
    %3759 = vmatprep.mubr.bf16.mxu0 0
    %3760 = vmatmul.mubr.bf16.gmra.mrb[0].mxu0 %v3677
    %v3761 = vpop.f32.mrb[0].mxu0
    %v3762 = vadd.f32 0.0, %v3761
    %v3763 = vpop.f32.mrb[0].mxu0
    %v3764 = vpop.f32.mrb[0].mxu0
    %v3765 = vadd.f32 0.0, %v3764
    %v3766 = vpop.f32.mrb[0].mxu0
    %3767 = vmatprep.mubr.bf16.mxu0 0
    %3768 = vmatmul.mubr.bf16.gmra.mrb[0].mxu0 %v3678
    %v3769 = vpop.f32.mrb[0].mxu0
    %v3770 = vadd.f32 0.0, %v3769
    %v3771 = vpop.f32.mrb[0].mxu0
    %v3772 = vpop.f32.mrb[0].mxu0
    %v3773 = vadd.f32 0.0, %v3772
    %v3774 = vpop.f32.mrb[0].mxu0
    %3775 = vdwg.mxu0
    %v3776 = vadd.f32 %v3659, %v3762
    %v3777 = vadd.f32 %v3662, %v3765
    %v3778 = vadd.f32 %v3667, %v3770
    %v3779 = vadd.f32 %v3670, %v3773
    %v3781 = vlaneseq
    %v3782 = vshrl.u32 %v3781, 7
    %v3783 = vsub.s32 0, %v3782
    %v3784 = vrot.slane %v3466, %v3783
    %v3786 = vadd.f32 %v3776, %v3784
    %v3787 = vadd.f32 %v3777, %v3784
    %v3788 = vadd.f32 %v3778, %v3784
    %v3789 = vadd.f32 %v3779, %v3784
    %3790 = vst [vmem:[#allocation12] sm:$0xff] %v3786
    %3791 = vst [vmem:[#allocation12 + $0x8] sm:$0xff] %v3787
    %3792 = vst [vmem:[#allocation12 + $0x10] sm:$0xff] %v3788
    %3793 = vst [vmem:[#allocation12 + $0x18] sm:$0xff] %v3789
    %s3794 = scalar_lea.vmem [#allocation2], 48
    %3795 = vst [vmem:[%s3794] sm:$0xff] 0.0
    %3796 = vst [vmem:[%s3794 + $0x10] sm:$0xff] 0.0
    %3797 = vst [vmem:[%s3794 + $0x18] sm:$0xff] 0.0
    %3798 = vst [vmem:[%s3794 + $0x20] sm:$0xff] 0.0
    %3799 = vst [vmem:[%s3794 + $0x28] sm:$0xff] 0.0
    %s3800 = scalar_lea.vmem [#allocation3], 8
    %v3801 = vld [vmem:[%s3800] sm:$0xff]
    %3802 = vst [vmem:[%s3794 + $0x8] sm:$0xff] %v3801
    %v3803 = vld [vmem:[%s2] sm:$0x1]
    %v3804 = vld [vmem:[%s3794 + $0x7] sm:$0xff]
    %v3805 = vpack.c.bf16 %v3804, %v3804
    %v3806 = vld [vmem:[%s3794 + $0x8] sm:$0xff]
    %v3807 = vpack.c.bf16 %v3806, %v3806
    %3808 = vmatprep.subr.bf16.mxu0 0
    %3809 = vmatpush1.bf16.msra.mxu0 %v246
    %3810 = vmatprep.subr.bf16.mxu0 0
    %3811 = vmatpush1.bf16.msra.mxu0 %v247
    %3812 = vmatprep.subr.bf16.mxu0 0
    %3813 = vmatpush1.bf16.msra.mxu0 %v248
    %3814 = vmatprep.subr.bf16.mxu0 0
    %3815 = vmatpush1.bf16.msra.mxu0 %v249
    %3816 = vmatprep.subr.bf16.mxu0 0
    %3817 = vmatpush1.bf16.msra.mxu0 %v250
    %3818 = vmatprep.subr.bf16.mxu0 0
    %3819 = vmatpush1.bf16.msra.mxu0 %v251
    %3820 = vmatprep.subr.bf16.mxu0 0
    %3821 = vmatpush1.bf16.msra.mxu0 %v252
    %3822 = vmatprep.subr.bf16.mxu0 0
    %3823 = vmatpush1.bf16.msra.mxu0 %v253
    %3824 = vmatprep.subr.bf16.mxu0 0
    %3825 = vmatpush1.bf16.msra.mxu0 0
    %3826 = vmatprep.subr.bf16.mxu0 0
    %3827 = vmatpush1.bf16.msra.mxu0 0
    %3828 = vmatprep.subr.bf16.mxu0 0
    %3829 = vmatpush1.bf16.msra.mxu0 0
    %3830 = vmatprep.subr.bf16.mxu0 0
    %3831 = vmatpush1.bf16.msra.mxu0 0
    %3832 = vmatprep.subr.bf16.mxu0 0
    %3833 = vmatpush1.bf16.msra.mxu0 0
    %3834 = vmatprep.subr.bf16.mxu0 0
    %3835 = vmatpush1.bf16.msra.mxu0 0
    %3836 = vmatprep.subr.bf16.mxu0 0
    %3837 = vmatpush1.bf16.msra.mxu0 0
    %3838 = vmatprep.subr.bf16.mxu0 0
    %3839 = vmatpush1.bf16.msra.mxu0 0
    %3840 = vmatprep.mubr.bf16.mxu0 0
    %3841 = vmatmul.mubr.bf16.gmra.mrb[0].mxu0 %v3807
    %v3842 = vpop.f32.mrb[0].mxu0
    %v3843 = vadd.f32 0.0, %v3842
    %v3844 = vpop.f32.mrb[0].mxu0
    %v3845 = vpop.f32.mrb[0].mxu0
    %v3846 = vpop.f32.mrb[0].mxu0
    %3847 = vdwg.mxu0
    %3848 = vmatprep.subr.bf16.mxu0 0
    %3849 = vmatpush1.bf16.msra.mxu0 %v334
    %3850 = vmatprep.subr.bf16.mxu0 0
    %3851 = vmatpush1.bf16.msra.mxu0 %v335
    %3852 = vmatprep.subr.bf16.mxu0 0
    %3853 = vmatpush1.bf16.msra.mxu0 %v336
    %3854 = vmatprep.subr.bf16.mxu0 0
    %3855 = vmatpush1.bf16.msra.mxu0 %v337
    %3856 = vmatprep.subr.bf16.mxu0 0
    %3857 = vmatpush1.bf16.msra.mxu0 %v338
    %3858 = vmatprep.subr.bf16.mxu0 0
    %3859 = vmatpush1.bf16.msra.mxu0 %v339
    %3860 = vmatprep.subr.bf16.mxu0 0
    %3861 = vmatpush1.bf16.msra.mxu0 %v340
    %3862 = vmatprep.subr.bf16.mxu0 0
    %3863 = vmatpush1.bf16.msra.mxu0 %v341
    %3864 = vmatprep.subr.bf16.mxu0 0
    %3865 = vmatpush1.bf16.msra.mxu0 0
    %3866 = vmatprep.subr.bf16.mxu0 0
    %3867 = vmatpush1.bf16.msra.mxu0 0
    %3868 = vmatprep.subr.bf16.mxu0 0
    %3869 = vmatpush1.bf16.msra.mxu0 0
    %3870 = vmatprep.subr.bf16.mxu0 0
    %3871 = vmatpush1.bf16.msra.mxu0 0
    %3872 = vmatprep.subr.bf16.mxu0 0
    %3873 = vmatpush1.bf16.msra.mxu0 0
    %3874 = vmatprep.subr.bf16.mxu0 0
    %3875 = vmatpush1.bf16.msra.mxu0 0
    %3876 = vmatprep.subr.bf16.mxu0 0
    %3877 = vmatpush1.bf16.msra.mxu0 0
    %3878 = vmatprep.subr.bf16.mxu0 0
    %3879 = vmatpush1.bf16.msra.mxu0 0
    %3880 = vmatprep.mubr.bf16.mxu0 0
    %3881 = vmatmul.mubr.bf16.gmra.mrb[0].mxu0 %v3805
    %v3882 = vpop.f32.mrb[0].mxu0
    %v3883 = vadd.f32 %v3843, %v3882
    %v3884 = vpop.f32.mrb[0].mxu0
    %v3885 = vpop.f32.mrb[0].mxu0
    %v3886 = vpop.f32.mrb[0].mxu0
    %3887 = vdwg.mxu0
    %v3888 = vld [vmem:[%s3794 + $0x9] sm:$0xff]
    %v3889 = vpack.c.bf16 %v3888, %v3888
    %3890 = vmatprep.subr.bf16.mxu0 0
    %3891 = vmatpush1.bf16.msra.mxu0 %v424
    %3892 = vmatprep.subr.bf16.mxu0 0
    %3893 = vmatpush1.bf16.msra.mxu0 %v425
    %3894 = vmatprep.subr.bf16.mxu0 0
    %3895 = vmatpush1.bf16.msra.mxu0 %v426
    %3896 = vmatprep.subr.bf16.mxu0 0
    %3897 = vmatpush1.bf16.msra.mxu0 %v427
    %3898 = vmatprep.subr.bf16.mxu0 0
    %3899 = vmatpush1.bf16.msra.mxu0 %v428
    %3900 = vmatprep.subr.bf16.mxu0 0
    %3901 = vmatpush1.bf16.msra.mxu0 %v429
    %3902 = vmatprep.subr.bf16.mxu0 0
    %3903 = vmatpush1.bf16.msra.mxu0 %v430
    %3904 = vmatprep.subr.bf16.mxu0 0
    %3905 = vmatpush1.bf16.msra.mxu0 %v431
    %3906 = vmatprep.subr.bf16.mxu0 0
    %3907 = vmatpush1.bf16.msra.mxu0 0
    %3908 = vmatprep.subr.bf16.mxu0 0
    %3909 = vmatpush1.bf16.msra.mxu0 0
    %3910 = vmatprep.subr.bf16.mxu0 0
    %3911 = vmatpush1.bf16.msra.mxu0 0
    %3912 = vmatprep.subr.bf16.mxu0 0
    %3913 = vmatpush1.bf16.msra.mxu0 0
    %3914 = vmatprep.subr.bf16.mxu0 0
    %3915 = vmatpush1.bf16.msra.mxu0 0
    %3916 = vmatprep.subr.bf16.mxu0 0
    %3917 = vmatpush1.bf16.msra.mxu0 0
    %3918 = vmatprep.subr.bf16.mxu0 0
    %3919 = vmatpush1.bf16.msra.mxu0 0
    %3920 = vmatprep.subr.bf16.mxu0 0
    %3921 = vmatpush1.bf16.msra.mxu0 0
    %3922 = vmatprep.mubr.bf16.mxu0 0
    %3923 = vmatmul.mubr.bf16.gmra.mrb[0].mxu0 %v3889
    %v3924 = vpop.f32.mrb[0].mxu0
    %v3925 = vadd.f32 0.0, %v3924
    %v3926 = vpop.f32.mrb[0].mxu0
    %v3927 = vpop.f32.mrb[0].mxu0
    %v3928 = vpop.f32.mrb[0].mxu0
    %3929 = vdwg.mxu0
    %v3930 = vadd.f32 %v3883, %v3925
    %v3932 = vlaneseq
    %v3933 = vshrl.u32 %v3932, 7
    %v3934 = vsub.s32 0, %v3933
    %v3935 = vrot.slane %v3803, %v3934
    %v3937 = vadd.f32 %v3930, %v3935
    %v3938 = vmax.f32 %v3937, 0.0
    %3939 = vst [vmem:[%s3794 + $0x8] sm:$0xff] %v3938
    %v3940 = vld [vmem:[%s3794 + $0x8] sm:$0xff]
    %v3941 = vld [vmem:[#allocation8] sm:$0xf]
    %v3942 = vld [vmem:[#allocation8 + $0x4] sm:$0xf]
    %v3943 = vld [vmem:[#allocation8 + $0x8] sm:$0xf]
    %v3944 = vld [vmem:[#allocation8 + $0xc] sm:$0xf]
    %v3945 = vld [vmem:[#allocation8 + $0x10] sm:$0xf]
    %v3946 = vld [vmem:[#allocation8 + $0x14] sm:$0xf]
    %v3947 = vld [vmem:[#allocation8 + $0x18] sm:$0xf]
    %v3948 = vld [vmem:[#allocation8 + $0x1c] sm:$0xf]
    %v3949 = vld [vmem:[#allocation8 + $0x20] sm:$0xf]
    %v3950 = vld [vmem:[#allocation8 + $0x24] sm:$0xf]
    %v3951 = vld [vmem:[#allocation8 + $0x28] sm:$0xf]
    %v3952 = vld [vmem:[#allocation8 + $0x2c] sm:$0xf]
    %v3953 = vld [vmem:[#allocation8 + $0x30] sm:$0xf]
    %v3954 = vld [vmem:[#allocation8 + $0x34] sm:$0xf]
    %v3955 = vld [vmem:[#allocation8 + $0x38] sm:$0xf]
    %v3956 = vld [vmem:[#allocation8 + $0x3c] sm:$0xf]
    %v3957 = vld [vmem:[%s507] sm:$0xf]
    %v3958 = vld [vmem:[%s507 + $0x4] sm:$0xf]
    %v3959 = vld [vmem:[%s507 + $0x8] sm:$0xf]
    %v3960 = vld [vmem:[%s507 + $0xc] sm:$0xf]
    %v3961 = vld [vmem:[%s507 + $0x10] sm:$0xf]
    %v3962 = vld [vmem:[%s507 + $0x14] sm:$0xf]
    %v3963 = vld [vmem:[%s507 + $0x18] sm:$0xf]
    %v3964 = vld [vmem:[%s507 + $0x1c] sm:$0xf]
    %v3965 = vld [vmem:[%s507 + $0x20] sm:$0xf]
    %v3966 = vld [vmem:[%s507 + $0x24] sm:$0xf]
    %v3967 = vld [vmem:[%s507 + $0x28] sm:$0xf]
    %v3968 = vld [vmem:[%s507 + $0x2c] sm:$0xf]
    %v3969 = vld [vmem:[%s507 + $0x30] sm:$0xf]
    %v3970 = vld [vmem:[%s507 + $0x34] sm:$0xf]
    %v3971 = vld [vmem:[%s507 + $0x38] sm:$0xf]
    %v3972 = vld [vmem:[%s507 + $0x3c] sm:$0xf]
    %v3973 = vld [vmem:[%s524] sm:$0xf]
    %v3974 = vld [vmem:[%s524 + $0x4] sm:$0xf]
    %v3975 = vld [vmem:[%s524 + $0x8] sm:$0xf]
    %v3976 = vld [vmem:[%s524 + $0xc] sm:$0xf]
    %v3977 = vld [vmem:[%s524 + $0x10] sm:$0xf]
    %v3978 = vld [vmem:[%s524 + $0x14] sm:$0xf]
    %v3979 = vld [vmem:[%s524 + $0x18] sm:$0xf]
    %v3980 = vld [vmem:[%s524 + $0x1c] sm:$0xf]
    %v3981 = vld [vmem:[%s524 + $0x20] sm:$0xf]
    %v3982 = vld [vmem:[%s524 + $0x24] sm:$0xf]
    %v3983 = vld [vmem:[%s524 + $0x28] sm:$0xf]
    %v3984 = vld [vmem:[%s524 + $0x2c] sm:$0xf]
    %v3985 = vld [vmem:[%s524 + $0x30] sm:$0xf]
    %v3986 = vld [vmem:[%s524 + $0x34] sm:$0xf]
    %v3987 = vld [vmem:[%s524 + $0x38] sm:$0xf]
    %v3988 = vld [vmem:[%s524 + $0x3c] sm:$0xf]
    %v3989 = vld [vmem:[%s4] sm:$0x1]
    %v3990 = vld [vmem:[%s3794 + $0x5] sm:$0xff]
    %v3991 = vmax.f32 %v3990, 0.0
    %v3992 = vpack.c.bf16 %v3991, %v3991
    %v3993 = vmax.f32 %v3940, 0.0
    %v3994 = vpack.c.bf16 %v3993, %v3993
    %v4011 = vunpack.c.l.b16 %v3957
    %v4012 = vunpack.c.l.b16 %v3958
    %v4013 = vunpack.c.l.b16 %v3959
    %v4014 = vunpack.c.l.b16 %v3960
    %v4015 = vunpack.c.l.b16 %v3961
    %v4016 = vunpack.c.l.b16 %v3962
    %v4017 = vunpack.c.l.b16 %v3963
    %v4018 = vunpack.c.l.b16 %v3964
    %v4019 = vunpack.c.l.b16 %v3965
    %v4020 = vunpack.c.l.b16 %v3966
    %v4021 = vunpack.c.l.b16 %v3967
    %v4022 = vunpack.c.l.b16 %v3968
    %v4023 = vunpack.c.l.b16 %v3969
    %v4024 = vunpack.c.l.b16 %v3970
    %v4025 = vunpack.c.l.b16 %v3971
    %v4026 = vunpack.c.l.b16 %v3972
    %v4027 = vpack.c.b16 %v4012, %v4011
    %v4028 = vpack.c.b16 %v4014, %v4013
    %v4029 = vpack.c.b16 %v4016, %v4015
    %v4030 = vpack.c.b16 %v4018, %v4017
    %v4031 = vpack.c.b16 %v4020, %v4019
    %v4032 = vpack.c.b16 %v4022, %v4021
    %v4033 = vpack.c.b16 %v4024, %v4023
    %v4034 = vpack.c.b16 %v4026, %v4025
    %4043 = vmatprep.subr.bf16.mxu0 0
    %4044 = vmatpush1.bf16.msra.mxu0 %v4027
    %4045 = vmatprep.subr.bf16.mxu0 0
    %4046 = vmatpush1.bf16.msra.mxu0 %v4028
    %4047 = vmatprep.subr.bf16.mxu0 0
    %4048 = vmatpush1.bf16.msra.mxu0 %v4029
    %4049 = vmatprep.subr.bf16.mxu0 0
    %4050 = vmatpush1.bf16.msra.mxu0 %v4030
    %4051 = vmatprep.subr.bf16.mxu0 0
    %4052 = vmatpush1.bf16.msra.mxu0 %v4031
    %4053 = vmatprep.subr.bf16.mxu0 0
    %4054 = vmatpush1.bf16.msra.mxu0 %v4032
    %4055 = vmatprep.subr.bf16.mxu0 0
    %4056 = vmatpush1.bf16.msra.mxu0 %v4033
    %4057 = vmatprep.subr.bf16.mxu0 0
    %4058 = vmatpush1.bf16.msra.mxu0 %v4034
    %4059 = vmatprep.subr.bf16.mxu0 0
    %4060 = vmatpush1.bf16.msra.mxu0 0
    %4061 = vmatprep.subr.bf16.mxu0 0
    %4062 = vmatpush1.bf16.msra.mxu0 0
    %4063 = vmatprep.subr.bf16.mxu0 0
    %4064 = vmatpush1.bf16.msra.mxu0 0
    %4065 = vmatprep.subr.bf16.mxu0 0
    %4066 = vmatpush1.bf16.msra.mxu0 0
    %4067 = vmatprep.subr.bf16.mxu0 0
    %4068 = vmatpush1.bf16.msra.mxu0 0
    %4069 = vmatprep.subr.bf16.mxu0 0
    %4070 = vmatpush1.bf16.msra.mxu0 0
    %4071 = vmatprep.subr.bf16.mxu0 0
    %4072 = vmatpush1.bf16.msra.mxu0 0
    %4073 = vmatprep.subr.bf16.mxu0 0
    %4074 = vmatpush1.bf16.msra.mxu0 0
    %4075 = vmatprep.mubr.bf16.mxu0 0
    %4076 = vmatmul.mubr.bf16.gmra.mrb[0].mxu0 %v3994
    %v4077 = vpop.f32.mrb[0].mxu0
    %v4078 = vadd.f32 0.0, %v4077
    %v4079 = vpop.f32.mrb[0].mxu0
    %v4080 = vpop.f32.mrb[0].mxu0
    %v4081 = vpop.f32.mrb[0].mxu0
    %4082 = vdwg.mxu0
    %v4099 = vunpack.c.l.b16 %v3941
    %v4100 = vunpack.c.l.b16 %v3942
    %v4101 = vunpack.c.l.b16 %v3943
    %v4102 = vunpack.c.l.b16 %v3944
    %v4103 = vunpack.c.l.b16 %v3945
    %v4104 = vunpack.c.l.b16 %v3946
    %v4105 = vunpack.c.l.b16 %v3947
    %v4106 = vunpack.c.l.b16 %v3948
    %v4107 = vunpack.c.l.b16 %v3949
    %v4108 = vunpack.c.l.b16 %v3950
    %v4109 = vunpack.c.l.b16 %v3951
    %v4110 = vunpack.c.l.b16 %v3952
    %v4111 = vunpack.c.l.b16 %v3953
    %v4112 = vunpack.c.l.b16 %v3954
    %v4113 = vunpack.c.l.b16 %v3955
    %v4114 = vunpack.c.l.b16 %v3956
    %v4115 = vpack.c.b16 %v4100, %v4099
    %v4116 = vpack.c.b16 %v4102, %v4101
    %v4117 = vpack.c.b16 %v4104, %v4103
    %v4118 = vpack.c.b16 %v4106, %v4105
    %v4119 = vpack.c.b16 %v4108, %v4107
    %v4120 = vpack.c.b16 %v4110, %v4109
    %v4121 = vpack.c.b16 %v4112, %v4111
    %v4122 = vpack.c.b16 %v4114, %v4113
    %4131 = vmatprep.subr.bf16.mxu0 0
    %4132 = vmatpush1.bf16.msra.mxu0 %v4115
    %4133 = vmatprep.subr.bf16.mxu0 0
    %4134 = vmatpush1.bf16.msra.mxu0 %v4116
    %4135 = vmatprep.subr.bf16.mxu0 0
    %4136 = vmatpush1.bf16.msra.mxu0 %v4117
    %4137 = vmatprep.subr.bf16.mxu0 0
    %4138 = vmatpush1.bf16.msra.mxu0 %v4118
    %4139 = vmatprep.subr.bf16.mxu0 0
    %4140 = vmatpush1.bf16.msra.mxu0 %v4119
    %4141 = vmatprep.subr.bf16.mxu0 0
    %4142 = vmatpush1.bf16.msra.mxu0 %v4120
    %4143 = vmatprep.subr.bf16.mxu0 0
    %4144 = vmatpush1.bf16.msra.mxu0 %v4121
    %4145 = vmatprep.subr.bf16.mxu0 0
    %4146 = vmatpush1.bf16.msra.mxu0 %v4122
    %4147 = vmatprep.subr.bf16.mxu0 0
    %4148 = vmatpush1.bf16.msra.mxu0 0
    %4149 = vmatprep.subr.bf16.mxu0 0
    %4150 = vmatpush1.bf16.msra.mxu0 0
    %4151 = vmatprep.subr.bf16.mxu0 0
    %4152 = vmatpush1.bf16.msra.mxu0 0
    %4153 = vmatprep.subr.bf16.mxu0 0
    %4154 = vmatpush1.bf16.msra.mxu0 0
    %4155 = vmatprep.subr.bf16.mxu0 0
    %4156 = vmatpush1.bf16.msra.mxu0 0
    %4157 = vmatprep.subr.bf16.mxu0 0
    %4158 = vmatpush1.bf16.msra.mxu0 0
    %4159 = vmatprep.subr.bf16.mxu0 0
    %4160 = vmatpush1.bf16.msra.mxu0 0
    %4161 = vmatprep.subr.bf16.mxu0 0
    %4162 = vmatpush1.bf16.msra.mxu0 0
    %4163 = vmatprep.mubr.bf16.mxu0 0
    %4164 = vmatmul.mubr.bf16.gmra.mrb[0].mxu0 %v3992
    %v4165 = vpop.f32.mrb[0].mxu0
    %v4166 = vadd.f32 %v4078, %v4165
    %v4167 = vpop.f32.mrb[0].mxu0
    %v4168 = vpop.f32.mrb[0].mxu0
    %v4169 = vpop.f32.mrb[0].mxu0
    %4170 = vdwg.mxu0
    %v4171 = vld [vmem:[%s3794 + $0xb] sm:$0xff]
    %v4172 = vmax.f32 %v4171, 0.0
    %v4173 = vpack.c.bf16 %v4172, %v4172
    %v4190 = vunpack.c.l.b16 %v3973
    %v4191 = vunpack.c.l.b16 %v3974
    %v4192 = vunpack.c.l.b16 %v3975
    %v4193 = vunpack.c.l.b16 %v3976
    %v4194 = vunpack.c.l.b16 %v3977
    %v4195 = vunpack.c.l.b16 %v3978
    %v4196 = vunpack.c.l.b16 %v3979
    %v4197 = vunpack.c.l.b16 %v3980
    %v4198 = vunpack.c.l.b16 %v3981
    %v4199 = vunpack.c.l.b16 %v3982
    %v4200 = vunpack.c.l.b16 %v3983
    %v4201 = vunpack.c.l.b16 %v3984
    %v4202 = vunpack.c.l.b16 %v3985
    %v4203 = vunpack.c.l.b16 %v3986
    %v4204 = vunpack.c.l.b16 %v3987
    %v4205 = vunpack.c.l.b16 %v3988
    %v4206 = vpack.c.b16 %v4191, %v4190
    %v4207 = vpack.c.b16 %v4193, %v4192
    %v4208 = vpack.c.b16 %v4195, %v4194
    %v4209 = vpack.c.b16 %v4197, %v4196
    %v4210 = vpack.c.b16 %v4199, %v4198
    %v4211 = vpack.c.b16 %v4201, %v4200
    %v4212 = vpack.c.b16 %v4203, %v4202
    %v4213 = vpack.c.b16 %v4205, %v4204
    %4222 = vmatprep.subr.bf16.mxu0 0
    %4223 = vmatpush1.bf16.msra.mxu0 %v4206
    %4224 = vmatprep.subr.bf16.mxu0 0
    %4225 = vmatpush1.bf16.msra.mxu0 %v4207
    %4226 = vmatprep.subr.bf16.mxu0 0
    %4227 = vmatpush1.bf16.msra.mxu0 %v4208
    %4228 = vmatprep.subr.bf16.mxu0 0
    %4229 = vmatpush1.bf16.msra.mxu0 %v4209
    %4230 = vmatprep.subr.bf16.mxu0 0
    %4231 = vmatpush1.bf16.msra.mxu0 %v4210
    %4232 = vmatprep.subr.bf16.mxu0 0
    %4233 = vmatpush1.bf16.msra.mxu0 %v4211
    %4234 = vmatprep.subr.bf16.mxu0 0
    %4235 = vmatpush1.bf16.msra.mxu0 %v4212
    %4236 = vmatprep.subr.bf16.mxu0 0
    %4237 = vmatpush1.bf16.msra.mxu0 %v4213
    %4238 = vmatprep.subr.bf16.mxu0 0
    %4239 = vmatpush1.bf16.msra.mxu0 0
    %4240 = vmatprep.subr.bf16.mxu0 0
    %4241 = vmatpush1.bf16.msra.mxu0 0
    %4242 = vmatprep.subr.bf16.mxu0 0
    %4243 = vmatpush1.bf16.msra.mxu0 0
    %4244 = vmatprep.subr.bf16.mxu0 0
    %4245 = vmatpush1.bf16.msra.mxu0 0
    %4246 = vmatprep.subr.bf16.mxu0 0
    %4247 = vmatpush1.bf16.msra.mxu0 0
    %4248 = vmatprep.subr.bf16.mxu0 0
    %4249 = vmatpush1.bf16.msra.mxu0 0
    %4250 = vmatprep.subr.bf16.mxu0 0
    %4251 = vmatpush1.bf16.msra.mxu0 0
    %4252 = vmatprep.subr.bf16.mxu0 0
    %4253 = vmatpush1.bf16.msra.mxu0 0
    %4254 = vmatprep.mubr.bf16.mxu0 0
    %4255 = vmatmul.mubr.bf16.gmra.mrb[0].mxu0 %v4173
    %v4256 = vpop.f32.mrb[0].mxu0
    %v4257 = vadd.f32 0.0, %v4256
    %v4258 = vpop.f32.mrb[0].mxu0
    %v4259 = vpop.f32.mrb[0].mxu0
    %v4260 = vpop.f32.mrb[0].mxu0
    %4261 = vdwg.mxu0
    %v4262 = vadd.f32 %v4166, %v4257
    %v4263 = vlaneseq
    %v4264 = vshrl.u32 %v4263, 7
    %v4265 = vsub.s32 0, %v4264
    %v4266 = vrot.slane %v3989, %v4265
    %v4267 = vadd.f32 %v4262, %v4266
    %v4268 = vmax.f32 %v4267, 0.0
    %v4269 = vpack.c.bf16 %v4268, %v4268
    %v4270 = vld [vmem:[#allocation9] sm:$0xf]
    %v4271 = vld [vmem:[#allocation9 + $0x4] sm:$0xf]
    %v4272 = vld [vmem:[#allocation9 + $0x8] sm:$0xf]
    %v4273 = vld [vmem:[#allocation9 + $0xc] sm:$0xf]
    %v4274 = vld [vmem:[#allocation9 + $0x10] sm:$0xf]
    %v4275 = vld [vmem:[#allocation9 + $0x14] sm:$0xf]
    %v4276 = vld [vmem:[#allocation9 + $0x18] sm:$0xf]
    %v4277 = vld [vmem:[#allocation9 + $0x1c] sm:$0xf]
    %v4278 = vld [vmem:[#allocation9 + $0x20] sm:$0xf]
    %v4279 = vld [vmem:[#allocation9 + $0x24] sm:$0xf]
    %v4280 = vld [vmem:[#allocation9 + $0x28] sm:$0xf]
    %v4281 = vld [vmem:[#allocation9 + $0x2c] sm:$0xf]
    %v4282 = vld [vmem:[#allocation9 + $0x30] sm:$0xf]
    %v4283 = vld [vmem:[#allocation9 + $0x34] sm:$0xf]
    %v4284 = vld [vmem:[#allocation9 + $0x38] sm:$0xf]
    %v4285 = vld [vmem:[#allocation9 + $0x3c] sm:$0xf]
    %v4286 = vld [vmem:[%s6] sm:$0x1]
    %v4287 = vlaneseq
    %v4288 = vshrl.u32 %v4287, 7
    %v4289 = vsub.s32 0, %v4288
    %v4290 = vrot.slane %v4286, %v4289
    %v4307 = vunpack.c.l.b16 %v4270
    %v4308 = vunpack.c.l.b16 %v4271
    %v4309 = vunpack.c.l.b16 %v4272
    %v4310 = vunpack.c.l.b16 %v4273
    %v4311 = vunpack.c.l.b16 %v4274
    %v4312 = vunpack.c.l.b16 %v4275
    %v4313 = vunpack.c.l.b16 %v4276
    %v4314 = vunpack.c.l.b16 %v4277
    %v4315 = vunpack.c.l.b16 %v4278
    %v4316 = vunpack.c.l.b16 %v4279
    %v4317 = vunpack.c.l.b16 %v4280
    %v4318 = vunpack.c.l.b16 %v4281
    %v4319 = vunpack.c.l.b16 %v4282
    %v4320 = vunpack.c.l.b16 %v4283
    %v4321 = vunpack.c.l.b16 %v4284
    %v4322 = vunpack.c.l.b16 %v4285
    %v4323 = vpack.c.b16 %v4308, %v4307
    %v4324 = vpack.c.b16 %v4310, %v4309
    %v4325 = vpack.c.b16 %v4312, %v4311
    %v4326 = vpack.c.b16 %v4314, %v4313
    %v4327 = vpack.c.b16 %v4316, %v4315
    %v4328 = vpack.c.b16 %v4318, %v4317
    %v4329 = vpack.c.b16 %v4320, %v4319
    %v4330 = vpack.c.b16 %v4322, %v4321
    %4339 = vmatprep.subr.bf16.mxu0 0
    %4340 = vmatpush1.bf16.msra.mxu0 %v4323
    %4341 = vmatprep.subr.bf16.mxu0 0
    %4342 = vmatpush1.bf16.msra.mxu0 %v4324
    %4343 = vmatprep.subr.bf16.mxu0 0
    %4344 = vmatpush1.bf16.msra.mxu0 %v4325
    %4345 = vmatprep.subr.bf16.mxu0 0
    %4346 = vmatpush1.bf16.msra.mxu0 %v4326
    %4347 = vmatprep.subr.bf16.mxu0 0
    %4348 = vmatpush1.bf16.msra.mxu0 %v4327
    %4349 = vmatprep.subr.bf16.mxu0 0
    %4350 = vmatpush1.bf16.msra.mxu0 %v4328
    %4351 = vmatprep.subr.bf16.mxu0 0
    %4352 = vmatpush1.bf16.msra.mxu0 %v4329
    %4353 = vmatprep.subr.bf16.mxu0 0
    %4354 = vmatpush1.bf16.msra.mxu0 %v4330
    %4355 = vmatprep.subr.bf16.mxu0 0
    %4356 = vmatpush1.bf16.msra.mxu0 0
    %4357 = vmatprep.subr.bf16.mxu0 0
    %4358 = vmatpush1.bf16.msra.mxu0 0
    %4359 = vmatprep.subr.bf16.mxu0 0
    %4360 = vmatpush1.bf16.msra.mxu0 0
    %4361 = vmatprep.subr.bf16.mxu0 0
    %4362 = vmatpush1.bf16.msra.mxu0 0
    %4363 = vmatprep.subr.bf16.mxu0 0
    %4364 = vmatpush1.bf16.msra.mxu0 0
    %4365 = vmatprep.subr.bf16.mxu0 0
    %4366 = vmatpush1.bf16.msra.mxu0 0
    %4367 = vmatprep.subr.bf16.mxu0 0
    %4368 = vmatpush1.bf16.msra.mxu0 0
    %4369 = vmatprep.subr.bf16.mxu0 0
    %4370 = vmatpush1.bf16.msra.mxu0 0
    %4371 = vmatprep.mubr.bf16.mxu0 0
    %4372 = vmatmul.mubr.bf16.gmra.mrb[0].mxu0 %v4269
    %v4373 = vpop.f32.mrb[0].mxu0
    %v4374 = vadd.f32 %v4290, %v4373
    %v4375 = vpop.f32.mrb[0].mxu0
    %v4376 = vpop.f32.mrb[0].mxu0
    %v4377 = vpop.f32.mrb[0].mxu0
    %4378 = vdwg.mxu0
    %v4379 = vadd.f32 %v4374, %v3940
    %4380 = vst [vmem:[%s3794 + $0x8] sm:$0xff] %v4379
    %v4381 = vld [vmem:[%s3794 + $0x8] sm:$0xff]
    %v4382 = vld [vmem:[%s934] sm:$0xf]
    %v4383 = vld [vmem:[%s934 + $0x4] sm:$0xf]
    %v4384 = vld [vmem:[%s934 + $0x8] sm:$0xf]
    %v4385 = vld [vmem:[%s934 + $0xc] sm:$0xf]
    %v4386 = vld [vmem:[%s934 + $0x10] sm:$0xf]
    %v4387 = vld [vmem:[%s934 + $0x14] sm:$0xf]
    %v4388 = vld [vmem:[%s934 + $0x18] sm:$0xf]
    %v4389 = vld [vmem:[%s934 + $0x1c] sm:$0xf]
    %v4390 = vld [vmem:[%s934 + $0x20] sm:$0xf]
    %v4391 = vld [vmem:[%s934 + $0x24] sm:$0xf]
    %v4392 = vld [vmem:[%s934 + $0x28] sm:$0xf]
    %v4393 = vld [vmem:[%s934 + $0x2c] sm:$0xf]
    %v4394 = vld [vmem:[%s934 + $0x30] sm:$0xf]
    %v4395 = vld [vmem:[%s934 + $0x34] sm:$0xf]
    %v4396 = vld [vmem:[%s934 + $0x38] sm:$0xf]
    %v4397 = vld [vmem:[%s934 + $0x3c] sm:$0xf]
    %v4398 = vld [vmem:[%s951] sm:$0xf]
    %v4399 = vld [vmem:[%s951 + $0x4] sm:$0xf]
    %v4400 = vld [vmem:[%s951 + $0x8] sm:$0xf]
    %v4401 = vld [vmem:[%s951 + $0xc] sm:$0xf]
    %v4402 = vld [vmem:[%s951 + $0x10] sm:$0xf]
    %v4403 = vld [vmem:[%s951 + $0x14] sm:$0xf]
    %v4404 = vld [vmem:[%s951 + $0x18] sm:$0xf]
    %v4405 = vld [vmem:[%s951 + $0x1c] sm:$0xf]
    %v4406 = vld [vmem:[%s951 + $0x20] sm:$0xf]
    %v4407 = vld [vmem:[%s951 + $0x24] sm:$0xf]
    %v4408 = vld [vmem:[%s951 + $0x28] sm:$0xf]
    %v4409 = vld [vmem:[%s951 + $0x2c] sm:$0xf]
    %v4410 = vld [vmem:[%s951 + $0x30] sm:$0xf]
    %v4411 = vld [vmem:[%s951 + $0x34] sm:$0xf]
    %v4412 = vld [vmem:[%s951 + $0x38] sm:$0xf]
    %v4413 = vld [vmem:[%s951 + $0x3c] sm:$0xf]
    %v4414 = vld [vmem:[%s968] sm:$0xf]
    %v4415 = vld [vmem:[%s968 + $0x4] sm:$0xf]
    %v4416 = vld [vmem:[%s968 + $0x8] sm:$0xf]
    %v4417 = vld [vmem:[%s968 + $0xc] sm:$0xf]
    %v4418 = vld [vmem:[%s968 + $0x10] sm:$0xf]
    %v4419 = vld [vmem:[%s968 + $0x14] sm:$0xf]
    %v4420 = vld [vmem:[%s968 + $0x18] sm:$0xf]
    %v4421 = vld [vmem:[%s968 + $0x1c] sm:$0xf]
    %v4422 = vld [vmem:[%s968 + $0x20] sm:$0xf]
    %v4423 = vld [vmem:[%s968 + $0x24] sm:$0xf]
    %v4424 = vld [vmem:[%s968 + $0x28] sm:$0xf]
    %v4425 = vld [vmem:[%s968 + $0x2c] sm:$0xf]
    %v4426 = vld [vmem:[%s968 + $0x30] sm:$0xf]
    %v4427 = vld [vmem:[%s968 + $0x34] sm:$0xf]
    %v4428 = vld [vmem:[%s968 + $0x38] sm:$0xf]
    %v4429 = vld [vmem:[%s968 + $0x3c] sm:$0xf]
    %v4430 = vld [vmem:[%s4 + $0x1] sm:$0x1]
    %v4431 = vld [vmem:[%s3794 + $0x7] sm:$0xff]
    %v4432 = vmax.f32 %v4431, 0.0
    %v4433 = vpack.c.bf16 %v4432, %v4432
    %v4434 = vmax.f32 %v4381, 0.0
    %v4435 = vpack.c.bf16 %v4434, %v4434
    %v4452 = vunpack.c.l.b16 %v4398
    %v4453 = vunpack.c.l.b16 %v4399
    %v4454 = vunpack.c.l.b16 %v4400
    %v4455 = vunpack.c.l.b16 %v4401
    %v4456 = vunpack.c.l.b16 %v4402
    %v4457 = vunpack.c.l.b16 %v4403
    %v4458 = vunpack.c.l.b16 %v4404
    %v4459 = vunpack.c.l.b16 %v4405
    %v4460 = vunpack.c.l.b16 %v4406
    %v4461 = vunpack.c.l.b16 %v4407
    %v4462 = vunpack.c.l.b16 %v4408
    %v4463 = vunpack.c.l.b16 %v4409
    %v4464 = vunpack.c.l.b16 %v4410
    %v4465 = vunpack.c.l.b16 %v4411
    %v4466 = vunpack.c.l.b16 %v4412
    %v4467 = vunpack.c.l.b16 %v4413
    %v4468 = vpack.c.b16 %v4453, %v4452
    %v4469 = vpack.c.b16 %v4455, %v4454
    %v4470 = vpack.c.b16 %v4457, %v4456
    %v4471 = vpack.c.b16 %v4459, %v4458
    %v4472 = vpack.c.b16 %v4461, %v4460
    %v4473 = vpack.c.b16 %v4463, %v4462
    %v4474 = vpack.c.b16 %v4465, %v4464
    %v4475 = vpack.c.b16 %v4467, %v4466
    %4484 = vmatprep.subr.bf16.mxu0 0
    %4485 = vmatpush1.bf16.msra.mxu0 %v4468
    %4486 = vmatprep.subr.bf16.mxu0 0
    %4487 = vmatpush1.bf16.msra.mxu0 %v4469
    %4488 = vmatprep.subr.bf16.mxu0 0
    %4489 = vmatpush1.bf16.msra.mxu0 %v4470
    %4490 = vmatprep.subr.bf16.mxu0 0
    %4491 = vmatpush1.bf16.msra.mxu0 %v4471
    %4492 = vmatprep.subr.bf16.mxu0 0
    %4493 = vmatpush1.bf16.msra.mxu0 %v4472
    %4494 = vmatprep.subr.bf16.mxu0 0
    %4495 = vmatpush1.bf16.msra.mxu0 %v4473
    %4496 = vmatprep.subr.bf16.mxu0 0
    %4497 = vmatpush1.bf16.msra.mxu0 %v4474
    %4498 = vmatprep.subr.bf16.mxu0 0
    %4499 = vmatpush1.bf16.msra.mxu0 %v4475
    %4500 = vmatprep.subr.bf16.mxu0 0
    %4501 = vmatpush1.bf16.msra.mxu0 0
    %4502 = vmatprep.subr.bf16.mxu0 0
    %4503 = vmatpush1.bf16.msra.mxu0 0
    %4504 = vmatprep.subr.bf16.mxu0 0
    %4505 = vmatpush1.bf16.msra.mxu0 0
    %4506 = vmatprep.subr.bf16.mxu0 0
    %4507 = vmatpush1.bf16.msra.mxu0 0
    %4508 = vmatprep.subr.bf16.mxu0 0
    %4509 = vmatpush1.bf16.msra.mxu0 0
    %4510 = vmatprep.subr.bf16.mxu0 0
    %4511 = vmatpush1.bf16.msra.mxu0 0
    %4512 = vmatprep.subr.bf16.mxu0 0
    %4513 = vmatpush1.bf16.msra.mxu0 0
    %4514 = vmatprep.subr.bf16.mxu0 0
    %4515 = vmatpush1.bf16.msra.mxu0 0
    %4516 = vmatprep.mubr.bf16.mxu0 0
    %4517 = vmatmul.mubr.bf16.gmra.mrb[0].mxu0 %v4435
    %v4518 = vpop.f32.mrb[0].mxu0
    %v4519 = vadd.f32 0.0, %v4518
    %v4520 = vpop.f32.mrb[0].mxu0
    %v4521 = vpop.f32.mrb[0].mxu0
    %v4522 = vpop.f32.mrb[0].mxu0
    %4523 = vdwg.mxu0
    %v4540 = vunpack.c.l.b16 %v4382
    %v4541 = vunpack.c.l.b16 %v4383
    %v4542 = vunpack.c.l.b16 %v4384
    %v4543 = vunpack.c.l.b16 %v4385
    %v4544 = vunpack.c.l.b16 %v4386
    %v4545 = vunpack.c.l.b16 %v4387
    %v4546 = vunpack.c.l.b16 %v4388
    %v4547 = vunpack.c.l.b16 %v4389
    %v4548 = vunpack.c.l.b16 %v4390
    %v4549 = vunpack.c.l.b16 %v4391
    %v4550 = vunpack.c.l.b16 %v4392
    %v4551 = vunpack.c.l.b16 %v4393
    %v4552 = vunpack.c.l.b16 %v4394
    %v4553 = vunpack.c.l.b16 %v4395
    %v4554 = vunpack.c.l.b16 %v4396
    %v4555 = vunpack.c.l.b16 %v4397
    %v4556 = vpack.c.b16 %v4541, %v4540
    %v4557 = vpack.c.b16 %v4543, %v4542
    %v4558 = vpack.c.b16 %v4545, %v4544
    %v4559 = vpack.c.b16 %v4547, %v4546
    %v4560 = vpack.c.b16 %v4549, %v4548
    %v4561 = vpack.c.b16 %v4551, %v4550
    %v4562 = vpack.c.b16 %v4553, %v4552
    %v4563 = vpack.c.b16 %v4555, %v4554
    %4572 = vmatprep.subr.bf16.mxu0 0
    %4573 = vmatpush1.bf16.msra.mxu0 %v4556
    %4574 = vmatprep.subr.bf16.mxu0 0
    %4575 = vmatpush1.bf16.msra.mxu0 %v4557
    %4576 = vmatprep.subr.bf16.mxu0 0
    %4577 = vmatpush1.bf16.msra.mxu0 %v4558
    %4578 = vmatprep.subr.bf16.mxu0 0
    %4579 = vmatpush1.bf16.msra.mxu0 %v4559
    %4580 = vmatprep.subr.bf16.mxu0 0
    %4581 = vmatpush1.bf16.msra.mxu0 %v4560
    %4582 = vmatprep.subr.bf16.mxu0 0
    %4583 = vmatpush1.bf16.msra.mxu0 %v4561
    %4584 = vmatprep.subr.bf16.mxu0 0
    %4585 = vmatpush1.bf16.msra.mxu0 %v4562
    %4586 = vmatprep.subr.bf16.mxu0 0
    %4587 = vmatpush1.bf16.msra.mxu0 %v4563
    %4588 = vmatprep.subr.bf16.mxu0 0
    %4589 = vmatpush1.bf16.msra.mxu0 0
    %4590 = vmatprep.subr.bf16.mxu0 0
    %4591 = vmatpush1.bf16.msra.mxu0 0
    %4592 = vmatprep.subr.bf16.mxu0 0
    %4593 = vmatpush1.bf16.msra.mxu0 0
    %4594 = vmatprep.subr.bf16.mxu0 0
    %4595 = vmatpush1.bf16.msra.mxu0 0
    %4596 = vmatprep.subr.bf16.mxu0 0
    %4597 = vmatpush1.bf16.msra.mxu0 0
    %4598 = vmatprep.subr.bf16.mxu0 0
    %4599 = vmatpush1.bf16.msra.mxu0 0
    %4600 = vmatprep.subr.bf16.mxu0 0
    %4601 = vmatpush1.bf16.msra.mxu0 0
    %4602 = vmatprep.subr.bf16.mxu0 0
    %4603 = vmatpush1.bf16.msra.mxu0 0
    %4604 = vmatprep.mubr.bf16.mxu0 0
    %4605 = vmatmul.mubr.bf16.gmra.mrb[0].mxu0 %v4433
    %v4606 = vpop.f32.mrb[0].mxu0
    %v4607 = vadd.f32 %v4519, %v4606
    %v4608 = vpop.f32.mrb[0].mxu0
    %v4609 = vpop.f32.mrb[0].mxu0
    %v4610 = vpop.f32.mrb[0].mxu0
    %4611 = vdwg.mxu0
    %v4612 = vld [vmem:[%s3794 + $0x9] sm:$0xff]
    %v4613 = vmax.f32 %v4612, 0.0
    %v4614 = vpack.c.bf16 %v4613, %v4613
    %v4631 = vunpack.c.l.b16 %v4414
    %v4632 = vunpack.c.l.b16 %v4415
    %v4633 = vunpack.c.l.b16 %v4416
    %v4634 = vunpack.c.l.b16 %v4417
    %v4635 = vunpack.c.l.b16 %v4418
    %v4636 = vunpack.c.l.b16 %v4419
    %v4637 = vunpack.c.l.b16 %v4420
    %v4638 = vunpack.c.l.b16 %v4421
    %v4639 = vunpack.c.l.b16 %v4422
    %v4640 = vunpack.c.l.b16 %v4423
    %v4641 = vunpack.c.l.b16 %v4424
    %v4642 = vunpack.c.l.b16 %v4425
    %v4643 = vunpack.c.l.b16 %v4426
    %v4644 = vunpack.c.l.b16 %v4427
    %v4645 = vunpack.c.l.b16 %v4428
    %v4646 = vunpack.c.l.b16 %v4429
    %v4647 = vpack.c.b16 %v4632, %v4631
    %v4648 = vpack.c.b16 %v4634, %v4633
    %v4649 = vpack.c.b16 %v4636, %v4635
    %v4650 = vpack.c.b16 %v4638, %v4637
    %v4651 = vpack.c.b16 %v4640, %v4639
    %v4652 = vpack.c.b16 %v4642, %v4641
    %v4653 = vpack.c.b16 %v4644, %v4643
    %v4654 = vpack.c.b16 %v4646, %v4645
    %4663 = vmatprep.subr.bf16.mxu0 0
    %4664 = vmatpush1.bf16.msra.mxu0 %v4647
    %4665 = vmatprep.subr.bf16.mxu0 0
    %4666 = vmatpush1.bf16.msra.mxu0 %v4648
    %4667 = vmatprep.subr.bf16.mxu0 0
    %4668 = vmatpush1.bf16.msra.mxu0 %v4649
    %4669 = vmatprep.subr.bf16.mxu0 0
    %4670 = vmatpush1.bf16.msra.mxu0 %v4650
    %4671 = vmatprep.subr.bf16.mxu0 0
    %4672 = vmatpush1.bf16.msra.mxu0 %v4651
    %4673 = vmatprep.subr.bf16.mxu0 0
    %4674 = vmatpush1.bf16.msra.mxu0 %v4652
    %4675 = vmatprep.subr.bf16.mxu0 0
    %4676 = vmatpush1.bf16.msra.mxu0 %v4653
    %4677 = vmatprep.subr.bf16.mxu0 0
    %4678 = vmatpush1.bf16.msra.mxu0 %v4654
    %4679 = vmatprep.subr.bf16.mxu0 0
    %4680 = vmatpush1.bf16.msra.mxu0 0
    %4681 = vmatprep.subr.bf16.mxu0 0
    %4682 = vmatpush1.bf16.msra.mxu0 0
    %4683 = vmatprep.subr.bf16.mxu0 0
    %4684 = vmatpush1.bf16.msra.mxu0 0
    %4685 = vmatprep.subr.bf16.mxu0 0
    %4686 = vmatpush1.bf16.msra.mxu0 0
    %4687 = vmatprep.subr.bf16.mxu0 0
    %4688 = vmatpush1.bf16.msra.mxu0 0
    %4689 = vmatprep.subr.bf16.mxu0 0
    %4690 = vmatpush1.bf16.msra.mxu0 0
    %4691 = vmatprep.subr.bf16.mxu0 0
    %4692 = vmatpush1.bf16.msra.mxu0 0
    %4693 = vmatprep.subr.bf16.mxu0 0
    %4694 = vmatpush1.bf16.msra.mxu0 0
    %4695 = vmatprep.mubr.bf16.mxu0 0
    %4696 = vmatmul.mubr.bf16.gmra.mrb[0].mxu0 %v4614
    %v4697 = vpop.f32.mrb[0].mxu0
    %v4698 = vadd.f32 0.0, %v4697
    %v4699 = vpop.f32.mrb[0].mxu0
    %v4700 = vpop.f32.mrb[0].mxu0
    %v4701 = vpop.f32.mrb[0].mxu0
    %4702 = vdwg.mxu0
    %v4703 = vadd.f32 %v4607, %v4698
    %v4704 = vlaneseq
    %v4705 = vshrl.u32 %v4704, 7
    %v4706 = vsub.s32 0, %v4705
    %v4707 = vrot.slane %v4430, %v4706
    %v4708 = vadd.f32 %v4703, %v4707
    %v4709 = vmax.f32 %v4708, 0.0
    %v4710 = vpack.c.bf16 %v4709, %v4709
    %v4711 = vld [vmem:[%s1266] sm:$0xf]
    %v4712 = vld [vmem:[%s1266 + $0x4] sm:$0xf]
    %v4713 = vld [vmem:[%s1266 + $0x8] sm:$0xf]
    %v4714 = vld [vmem:[%s1266 + $0xc] sm:$0xf]
    %v4715 = vld [vmem:[%s1266 + $0x10] sm:$0xf]
    %v4716 = vld [vmem:[%s1266 + $0x14] sm:$0xf]
    %v4717 = vld [vmem:[%s1266 + $0x18] sm:$0xf]
    %v4718 = vld [vmem:[%s1266 + $0x1c] sm:$0xf]
    %v4719 = vld [vmem:[%s1266 + $0x20] sm:$0xf]
    %v4720 = vld [vmem:[%s1266 + $0x24] sm:$0xf]
    %v4721 = vld [vmem:[%s1266 + $0x28] sm:$0xf]
    %v4722 = vld [vmem:[%s1266 + $0x2c] sm:$0xf]
    %v4723 = vld [vmem:[%s1266 + $0x30] sm:$0xf]
    %v4724 = vld [vmem:[%s1266 + $0x34] sm:$0xf]
    %v4725 = vld [vmem:[%s1266 + $0x38] sm:$0xf]
    %v4726 = vld [vmem:[%s1266 + $0x3c] sm:$0xf]
    %v4727 = vld [vmem:[%s6 + $0x1] sm:$0x1]
    %v4728 = vlaneseq
    %v4729 = vshrl.u32 %v4728, 7
    %v4730 = vsub.s32 0, %v4729
    %v4731 = vrot.slane %v4727, %v4730
    %v4748 = vunpack.c.l.b16 %v4711
    %v4749 = vunpack.c.l.b16 %v4712
    %v4750 = vunpack.c.l.b16 %v4713
    %v4751 = vunpack.c.l.b16 %v4714
    %v4752 = vunpack.c.l.b16 %v4715
    %v4753 = vunpack.c.l.b16 %v4716
    %v4754 = vunpack.c.l.b16 %v4717
    %v4755 = vunpack.c.l.b16 %v4718
    %v4756 = vunpack.c.l.b16 %v4719
    %v4757 = vunpack.c.l.b16 %v4720
    %v4758 = vunpack.c.l.b16 %v4721
    %v4759 = vunpack.c.l.b16 %v4722
    %v4760 = vunpack.c.l.b16 %v4723
    %v4761 = vunpack.c.l.b16 %v4724
    %v4762 = vunpack.c.l.b16 %v4725
    %v4763 = vunpack.c.l.b16 %v4726
    %v4764 = vpack.c.b16 %v4749, %v4748
    %v4765 = vpack.c.b16 %v4751, %v4750
    %v4766 = vpack.c.b16 %v4753, %v4752
    %v4767 = vpack.c.b16 %v4755, %v4754
    %v4768 = vpack.c.b16 %v4757, %v4756
    %v4769 = vpack.c.b16 %v4759, %v4758
    %v4770 = vpack.c.b16 %v4761, %v4760
    %v4771 = vpack.c.b16 %v4763, %v4762
    %4780 = vmatprep.subr.bf16.mxu0 0
    %4781 = vmatpush1.bf16.msra.mxu0 %v4764
    %4782 = vmatprep.subr.bf16.mxu0 0
    %4783 = vmatpush1.bf16.msra.mxu0 %v4765
    %4784 = vmatprep.subr.bf16.mxu0 0
    %4785 = vmatpush1.bf16.msra.mxu0 %v4766
    %4786 = vmatprep.subr.bf16.mxu0 0
    %4787 = vmatpush1.bf16.msra.mxu0 %v4767
    %4788 = vmatprep.subr.bf16.mxu0 0
    %4789 = vmatpush1.bf16.msra.mxu0 %v4768
    %4790 = vmatprep.subr.bf16.mxu0 0
    %4791 = vmatpush1.bf16.msra.mxu0 %v4769
    %4792 = vmatprep.subr.bf16.mxu0 0
    %4793 = vmatpush1.bf16.msra.mxu0 %v4770
    %4794 = vmatprep.subr.bf16.mxu0 0
    %4795 = vmatpush1.bf16.msra.mxu0 %v4771
    %4796 = vmatprep.subr.bf16.mxu0 0
    %4797 = vmatpush1.bf16.msra.mxu0 0
    %4798 = vmatprep.subr.bf16.mxu0 0
    %4799 = vmatpush1.bf16.msra.mxu0 0
    %4800 = vmatprep.subr.bf16.mxu0 0
    %4801 = vmatpush1.bf16.msra.mxu0 0
    %4802 = vmatprep.subr.bf16.mxu0 0
    %4803 = vmatpush1.bf16.msra.mxu0 0
    %4804 = vmatprep.subr.bf16.mxu0 0
    %4805 = vmatpush1.bf16.msra.mxu0 0
    %4806 = vmatprep.subr.bf16.mxu0 0
    %4807 = vmatpush1.bf16.msra.mxu0 0
    %4808 = vmatprep.subr.bf16.mxu0 0
    %4809 = vmatpush1.bf16.msra.mxu0 0
    %4810 = vmatprep.subr.bf16.mxu0 0
    %4811 = vmatpush1.bf16.msra.mxu0 0
    %4812 = vmatprep.mubr.bf16.mxu0 0
    %4813 = vmatmul.mubr.bf16.gmra.mrb[0].mxu0 %v4710
    %v4814 = vpop.f32.mrb[0].mxu0
    %v4815 = vadd.f32 %v4731, %v4814
    %v4816 = vpop.f32.mrb[0].mxu0
    %v4817 = vpop.f32.mrb[0].mxu0
    %v4818 = vpop.f32.mrb[0].mxu0
    %4819 = vdwg.mxu0
    %v4820 = vadd.f32 %v4815, %v4381
    %4821 = vst [vmem:[%s3794 + $0x8] sm:$0xff] %v4820
    %v4822 = vld [vmem:[%s3794 + $0xf] sm:$0x1]
    %4823 = vst [vmem:[%s3794 + $0x16] sm:$0x1] %v4822
    %4824 = vst [vmem:[%s3794 + $0x17] sm:$0x1] %v4822
    %v4825 = vld [vmem:[%s3794 + $0xe] sm:$0x1]
    %4826 = vst [vmem:[%s3794 + $0x14] sm:$0x1] %v4825
    %4827 = vst [vmem:[%s3794 + $0x15] sm:$0x1] %v4825
    %v4828 = vld [vmem:[%s3794 + $0xd] sm:$0x1]
    %4829 = vst [vmem:[%s3794 + $0x12] sm:$0x1] %v4828
    %4830 = vst [vmem:[%s3794 + $0x13] sm:$0x1] %v4828
    %v4831 = vld [vmem:[%s3794 + $0xc] sm:$0x1]
    %4832 = vst [vmem:[%s3794 + $0x10] sm:$0x1] %v4831
    %4833 = vst [vmem:[%s3794 + $0x11] sm:$0x1] %v4831
    %v4834 = vld [vmem:[%s3794 + $0xb] sm:$0x1]
    %4835 = vst [vmem:[%s3794 + $0xe] sm:$0x1] %v4834
    %4836 = vst [vmem:[%s3794 + $0xf] sm:$0x1] %v4834
    %v4837 = vld [vmem:[%s3794 + $0xa] sm:$0x1]
    %4838 = vst [vmem:[%s3794 + $0xc] sm:$0x1] %v4837
    %4839 = vst [vmem:[%s3794 + $0xd] sm:$0x1] %v4837
    %v4840 = vld [vmem:[%s3794 + $0x9] sm:$0x1]
    %4841 = vst [vmem:[%s3794 + $0xa] sm:$0x1] %v4840
    %4842 = vst [vmem:[%s3794 + $0xb] sm:$0x1] %v4840
    %v4843 = vld [vmem:[%s3794 + $0x8] sm:$0x1]
    %4844 = vst [vmem:[%s3794 + $0x8] sm:$0x1] %v4843
    %4845 = vst [vmem:[%s3794 + $0x9] sm:$0x1] %v4843
    %v4846 = vld [vmem:[%s1402] sm:$0xf]
    %v4847 = vld [vmem:[%s1402 + $0x4] sm:$0xf]
    %v4848 = vld [vmem:[%s1402 + $0x8] sm:$0xf]
    %v4849 = vld [vmem:[%s1402 + $0xc] sm:$0xf]
    %v4850 = vld [vmem:[%s1402 + $0x10] sm:$0xf]
    %v4851 = vld [vmem:[%s1402 + $0x14] sm:$0xf]
    %v4852 = vld [vmem:[%s1402 + $0x18] sm:$0xf]
    %v4853 = vld [vmem:[%s1402 + $0x1c] sm:$0xf]
    %v4854 = vld [vmem:[%s1402 + $0x20] sm:$0xf]
    %v4855 = vld [vmem:[%s1402 + $0x24] sm:$0xf]
    %v4856 = vld [vmem:[%s1402 + $0x28] sm:$0xf]
    %v4857 = vld [vmem:[%s1402 + $0x2c] sm:$0xf]
    %v4858 = vld [vmem:[%s1402 + $0x30] sm:$0xf]
    %v4859 = vld [vmem:[%s1402 + $0x34] sm:$0xf]
    %v4860 = vld [vmem:[%s1402 + $0x38] sm:$0xf]
    %v4861 = vld [vmem:[%s1402 + $0x3c] sm:$0xf]
    %v4862 = vld [vmem:[%s1419] sm:$0xf]
    %v4863 = vld [vmem:[%s1419 + $0x4] sm:$0xf]
    %v4864 = vld [vmem:[%s1419 + $0x8] sm:$0xf]
    %v4865 = vld [vmem:[%s1419 + $0xc] sm:$0xf]
    %v4866 = vld [vmem:[%s1419 + $0x10] sm:$0xf]
    %v4867 = vld [vmem:[%s1419 + $0x14] sm:$0xf]
    %v4868 = vld [vmem:[%s1419 + $0x18] sm:$0xf]
    %v4869 = vld [vmem:[%s1419 + $0x1c] sm:$0xf]
    %v4870 = vld [vmem:[%s1419 + $0x20] sm:$0xf]
    %v4871 = vld [vmem:[%s1419 + $0x24] sm:$0xf]
    %v4872 = vld [vmem:[%s1419 + $0x28] sm:$0xf]
    %v4873 = vld [vmem:[%s1419 + $0x2c] sm:$0xf]
    %v4874 = vld [vmem:[%s1419 + $0x30] sm:$0xf]
    %v4875 = vld [vmem:[%s1419 + $0x34] sm:$0xf]
    %v4876 = vld [vmem:[%s1419 + $0x38] sm:$0xf]
    %v4877 = vld [vmem:[%s1419 + $0x3c] sm:$0xf]
    %v4878 = vld [vmem:[%s1436] sm:$0xf]
    %v4879 = vld [vmem:[%s1436 + $0x4] sm:$0xf]
    %v4880 = vld [vmem:[%s1436 + $0x8] sm:$0xf]
    %v4881 = vld [vmem:[%s1436 + $0xc] sm:$0xf]
    %v4882 = vld [vmem:[%s1436 + $0x10] sm:$0xf]
    %v4883 = vld [vmem:[%s1436 + $0x14] sm:$0xf]
    %v4884 = vld [vmem:[%s1436 + $0x18] sm:$0xf]
    %v4885 = vld [vmem:[%s1436 + $0x1c] sm:$0xf]
    %v4886 = vld [vmem:[%s1436 + $0x20] sm:$0xf]
    %v4887 = vld [vmem:[%s1436 + $0x24] sm:$0xf]
    %v4888 = vld [vmem:[%s1436 + $0x28] sm:$0xf]
    %v4889 = vld [vmem:[%s1436 + $0x2c] sm:$0xf]
    %v4890 = vld [vmem:[%s1436 + $0x30] sm:$0xf]
    %v4891 = vld [vmem:[%s1436 + $0x34] sm:$0xf]
    %v4892 = vld [vmem:[%s1436 + $0x38] sm:$0xf]
    %v4893 = vld [vmem:[%s1436 + $0x3c] sm:$0xf]
    %v4894 = vld [vmem:[%s4 + $0x2] sm:$0x1]
    %v4895 = vld [vmem:[%s3794 + $0x7] sm:$0xff]
    %v4896 = vld [vmem:[%s3794 + $0xf] sm:$0xff]
    %v4897 = vpack.c.bf16 %v4896, %v4895
    %v4898 = vld [vmem:[%s3794 + $0x8] sm:$0xff]
    %v4899 = vld [vmem:[%s3794 + $0x10] sm:$0xff]
    %v4900 = vpack.c.bf16 %v4899, %v4898
    %v4917 = vunpack.c.l.b16 %v4862
    %v4918 = vunpack.c.l.b16 %v4863
    %v4919 = vunpack.c.l.b16 %v4864
    %v4920 = vunpack.c.l.b16 %v4865
    %v4921 = vunpack.c.l.b16 %v4866
    %v4922 = vunpack.c.l.b16 %v4867
    %v4923 = vunpack.c.l.b16 %v4868
    %v4924 = vunpack.c.l.b16 %v4869
    %v4925 = vunpack.c.l.b16 %v4870
    %v4926 = vunpack.c.l.b16 %v4871
    %v4927 = vunpack.c.l.b16 %v4872
    %v4928 = vunpack.c.l.b16 %v4873
    %v4929 = vunpack.c.l.b16 %v4874
    %v4930 = vunpack.c.l.b16 %v4875
    %v4931 = vunpack.c.l.b16 %v4876
    %v4932 = vunpack.c.l.b16 %v4877
    %v4933 = vpack.c.b16 %v4918, %v4917
    %v4934 = vpack.c.b16 %v4920, %v4919
    %v4935 = vpack.c.b16 %v4922, %v4921
    %v4936 = vpack.c.b16 %v4924, %v4923
    %v4937 = vpack.c.b16 %v4926, %v4925
    %v4938 = vpack.c.b16 %v4928, %v4927
    %v4939 = vpack.c.b16 %v4930, %v4929
    %v4940 = vpack.c.b16 %v4932, %v4931
    %4949 = vmatprep.subr.bf16.mxu0 0
    %4950 = vmatpush1.bf16.msra.mxu0 %v4933
    %4951 = vmatprep.subr.bf16.mxu0 0
    %4952 = vmatpush1.bf16.msra.mxu0 %v4934
    %4953 = vmatprep.subr.bf16.mxu0 0
    %4954 = vmatpush1.bf16.msra.mxu0 %v4935
    %4955 = vmatprep.subr.bf16.mxu0 0
    %4956 = vmatpush1.bf16.msra.mxu0 %v4936
    %4957 = vmatprep.subr.bf16.mxu0 0
    %4958 = vmatpush1.bf16.msra.mxu0 %v4937
    %4959 = vmatprep.subr.bf16.mxu0 0
    %4960 = vmatpush1.bf16.msra.mxu0 %v4938
    %4961 = vmatprep.subr.bf16.mxu0 0
    %4962 = vmatpush1.bf16.msra.mxu0 %v4939
    %4963 = vmatprep.subr.bf16.mxu0 0
    %4964 = vmatpush1.bf16.msra.mxu0 %v4940
    %4965 = vmatprep.subr.bf16.mxu0 0
    %4966 = vmatpush1.bf16.msra.mxu0 0
    %4967 = vmatprep.subr.bf16.mxu0 0
    %4968 = vmatpush1.bf16.msra.mxu0 0
    %4969 = vmatprep.subr.bf16.mxu0 0
    %4970 = vmatpush1.bf16.msra.mxu0 0
    %4971 = vmatprep.subr.bf16.mxu0 0
    %4972 = vmatpush1.bf16.msra.mxu0 0
    %4973 = vmatprep.subr.bf16.mxu0 0
    %4974 = vmatpush1.bf16.msra.mxu0 0
    %4975 = vmatprep.subr.bf16.mxu0 0
    %4976 = vmatpush1.bf16.msra.mxu0 0
    %4977 = vmatprep.subr.bf16.mxu0 0
    %4978 = vmatpush1.bf16.msra.mxu0 0
    %4979 = vmatprep.subr.bf16.mxu0 0
    %4980 = vmatpush1.bf16.msra.mxu0 0
    %4981 = vmatprep.mubr.bf16.mxu0 0
    %4982 = vmatmul.mubr.bf16.gmra.mrb[0].mxu0 %v4900
    %v4983 = vpop.f32.mrb[0].mxu0
    %v4984 = vadd.f32 0.0, %v4983
    %v4985 = vpop.f32.mrb[0].mxu0
    %v4986 = vpop.f32.mrb[0].mxu0
    %v4987 = vadd.f32 0.0, %v4986
    %v4988 = vpop.f32.mrb[0].mxu0
    %4989 = vdwg.mxu0
    %v5006 = vunpack.c.l.b16 %v4846
    %v5007 = vunpack.c.l.b16 %v4847
    %v5008 = vunpack.c.l.b16 %v4848
    %v5009 = vunpack.c.l.b16 %v4849
    %v5010 = vunpack.c.l.b16 %v4850
    %v5011 = vunpack.c.l.b16 %v4851
    %v5012 = vunpack.c.l.b16 %v4852
    %v5013 = vunpack.c.l.b16 %v4853
    %v5014 = vunpack.c.l.b16 %v4854
    %v5015 = vunpack.c.l.b16 %v4855
    %v5016 = vunpack.c.l.b16 %v4856
    %v5017 = vunpack.c.l.b16 %v4857
    %v5018 = vunpack.c.l.b16 %v4858
    %v5019 = vunpack.c.l.b16 %v4859
    %v5020 = vunpack.c.l.b16 %v4860
    %v5021 = vunpack.c.l.b16 %v4861
    %v5022 = vpack.c.b16 %v5007, %v5006
    %v5023 = vpack.c.b16 %v5009, %v5008
    %v5024 = vpack.c.b16 %v5011, %v5010
    %v5025 = vpack.c.b16 %v5013, %v5012
    %v5026 = vpack.c.b16 %v5015, %v5014
    %v5027 = vpack.c.b16 %v5017, %v5016
    %v5028 = vpack.c.b16 %v5019, %v5018
    %v5029 = vpack.c.b16 %v5021, %v5020
    %5038 = vmatprep.subr.bf16.mxu0 0
    %5039 = vmatpush1.bf16.msra.mxu0 %v5022
    %5040 = vmatprep.subr.bf16.mxu0 0
    %5041 = vmatpush1.bf16.msra.mxu0 %v5023
    %5042 = vmatprep.subr.bf16.mxu0 0
    %5043 = vmatpush1.bf16.msra.mxu0 %v5024
    %5044 = vmatprep.subr.bf16.mxu0 0
    %5045 = vmatpush1.bf16.msra.mxu0 %v5025
    %5046 = vmatprep.subr.bf16.mxu0 0
    %5047 = vmatpush1.bf16.msra.mxu0 %v5026
    %5048 = vmatprep.subr.bf16.mxu0 0
    %5049 = vmatpush1.bf16.msra.mxu0 %v5027
    %5050 = vmatprep.subr.bf16.mxu0 0
    %5051 = vmatpush1.bf16.msra.mxu0 %v5028
    %5052 = vmatprep.subr.bf16.mxu0 0
    %5053 = vmatpush1.bf16.msra.mxu0 %v5029
    %5054 = vmatprep.subr.bf16.mxu0 0
    %5055 = vmatpush1.bf16.msra.mxu0 0
    %5056 = vmatprep.subr.bf16.mxu0 0
    %5057 = vmatpush1.bf16.msra.mxu0 0
    %5058 = vmatprep.subr.bf16.mxu0 0
    %5059 = vmatpush1.bf16.msra.mxu0 0
    %5060 = vmatprep.subr.bf16.mxu0 0
    %5061 = vmatpush1.bf16.msra.mxu0 0
    %5062 = vmatprep.subr.bf16.mxu0 0
    %5063 = vmatpush1.bf16.msra.mxu0 0
    %5064 = vmatprep.subr.bf16.mxu0 0
    %5065 = vmatpush1.bf16.msra.mxu0 0
    %5066 = vmatprep.subr.bf16.mxu0 0
    %5067 = vmatpush1.bf16.msra.mxu0 0
    %5068 = vmatprep.subr.bf16.mxu0 0
    %5069 = vmatpush1.bf16.msra.mxu0 0
    %5070 = vmatprep.mubr.bf16.mxu0 0
    %5071 = vmatmul.mubr.bf16.gmra.mrb[0].mxu0 %v4897
    %v5072 = vpop.f32.mrb[0].mxu0
    %v5073 = vadd.f32 %v4984, %v5072
    %v5074 = vpop.f32.mrb[0].mxu0
    %v5075 = vpop.f32.mrb[0].mxu0
    %v5076 = vadd.f32 %v4987, %v5075
    %v5077 = vpop.f32.mrb[0].mxu0
    %5078 = vdwg.mxu0
    %v5079 = vld [vmem:[%s3794 + $0x9] sm:$0xff]
    %v5080 = vld [vmem:[%s3794 + $0x11] sm:$0xff]
    %v5081 = vpack.c.bf16 %v5080, %v5079
    %v5098 = vunpack.c.l.b16 %v4878
    %v5099 = vunpack.c.l.b16 %v4879
    %v5100 = vunpack.c.l.b16 %v4880
    %v5101 = vunpack.c.l.b16 %v4881
    %v5102 = vunpack.c.l.b16 %v4882
    %v5103 = vunpack.c.l.b16 %v4883
    %v5104 = vunpack.c.l.b16 %v4884
    %v5105 = vunpack.c.l.b16 %v4885
    %v5106 = vunpack.c.l.b16 %v4886
    %v5107 = vunpack.c.l.b16 %v4887
    %v5108 = vunpack.c.l.b16 %v4888
    %v5109 = vunpack.c.l.b16 %v4889
    %v5110 = vunpack.c.l.b16 %v4890
    %v5111 = vunpack.c.l.b16 %v4891
    %v5112 = vunpack.c.l.b16 %v4892
    %v5113 = vunpack.c.l.b16 %v4893
    %v5114 = vpack.c.b16 %v5099, %v5098
    %v5115 = vpack.c.b16 %v5101, %v5100
    %v5116 = vpack.c.b16 %v5103, %v5102
    %v5117 = vpack.c.b16 %v5105, %v5104
    %v5118 = vpack.c.b16 %v5107, %v5106
    %v5119 = vpack.c.b16 %v5109, %v5108
    %v5120 = vpack.c.b16 %v5111, %v5110
    %v5121 = vpack.c.b16 %v5113, %v5112
    %5130 = vmatprep.subr.bf16.mxu0 0
    %5131 = vmatpush1.bf16.msra.mxu0 %v5114
    %5132 = vmatprep.subr.bf16.mxu0 0
    %5133 = vmatpush1.bf16.msra.mxu0 %v5115
    %5134 = vmatprep.subr.bf16.mxu0 0
    %5135 = vmatpush1.bf16.msra.mxu0 %v5116
    %5136 = vmatprep.subr.bf16.mxu0 0
    %5137 = vmatpush1.bf16.msra.mxu0 %v5117
    %5138 = vmatprep.subr.bf16.mxu0 0
    %5139 = vmatpush1.bf16.msra.mxu0 %v5118
    %5140 = vmatprep.subr.bf16.mxu0 0
    %5141 = vmatpush1.bf16.msra.mxu0 %v5119
    %5142 = vmatprep.subr.bf16.mxu0 0
    %5143 = vmatpush1.bf16.msra.mxu0 %v5120
    %5144 = vmatprep.subr.bf16.mxu0 0
    %5145 = vmatpush1.bf16.msra.mxu0 %v5121
    %5146 = vmatprep.subr.bf16.mxu0 0
    %5147 = vmatpush1.bf16.msra.mxu0 0
    %5148 = vmatprep.subr.bf16.mxu0 0
    %5149 = vmatpush1.bf16.msra.mxu0 0
    %5150 = vmatprep.subr.bf16.mxu0 0
    %5151 = vmatpush1.bf16.msra.mxu0 0
    %5152 = vmatprep.subr.bf16.mxu0 0
    %5153 = vmatpush1.bf16.msra.mxu0 0
    %5154 = vmatprep.subr.bf16.mxu0 0
    %5155 = vmatpush1.bf16.msra.mxu0 0
    %5156 = vmatprep.subr.bf16.mxu0 0
    %5157 = vmatpush1.bf16.msra.mxu0 0
    %5158 = vmatprep.subr.bf16.mxu0 0
    %5159 = vmatpush1.bf16.msra.mxu0 0
    %5160 = vmatprep.subr.bf16.mxu0 0
    %5161 = vmatpush1.bf16.msra.mxu0 0
    %5162 = vmatprep.mubr.bf16.mxu0 0
    %5163 = vmatmul.mubr.bf16.gmra.mrb[0].mxu0 %v5081
    %v5164 = vpop.f32.mrb[0].mxu0
    %v5165 = vadd.f32 0.0, %v5164
    %v5166 = vpop.f32.mrb[0].mxu0
    %v5167 = vpop.f32.mrb[0].mxu0
    %v5168 = vadd.f32 0.0, %v5167
    %v5169 = vpop.f32.mrb[0].mxu0
    %5170 = vdwg.mxu0
    %v5171 = vadd.f32 %v5073, %v5165
    %v5172 = vadd.f32 %v5076, %v5168
    %v5173 = vlaneseq
    %v5174 = vshrl.u32 %v5173, 7
    %v5175 = vsub.s32 0, %v5174
    %v5176 = vrot.slane %v4894, %v5175
    %v5177 = vadd.f32 %v5171, %v5176
    %v5178 = vadd.f32 %v5172, %v5176
    %5179 = vst [vmem:[%s3794 + $0x8] sm:$0xff] %v5177
    %5180 = vst [vmem:[%s3794 + $0x10] sm:$0xff] %v5178
    %v5181 = vld [vmem:[%s3794 + $0x8] sm:$0xff]
    %v5182 = vld [vmem:[%s3794 + $0x10] sm:$0xff]
    %v5183 = vld [vmem:[%s1742] sm:$0xf]
    %v5184 = vld [vmem:[%s1742 + $0x4] sm:$0xf]
    %v5185 = vld [vmem:[%s1742 + $0x8] sm:$0xf]
    %v5186 = vld [vmem:[%s1742 + $0xc] sm:$0xf]
    %v5187 = vld [vmem:[%s1742 + $0x10] sm:$0xf]
    %v5188 = vld [vmem:[%s1742 + $0x14] sm:$0xf]
    %v5189 = vld [vmem:[%s1742 + $0x18] sm:$0xf]
    %v5190 = vld [vmem:[%s1742 + $0x1c] sm:$0xf]
    %v5191 = vld [vmem:[%s1742 + $0x20] sm:$0xf]
    %v5192 = vld [vmem:[%s1742 + $0x24] sm:$0xf]
    %v5193 = vld [vmem:[%s1742 + $0x28] sm:$0xf]
    %v5194 = vld [vmem:[%s1742 + $0x2c] sm:$0xf]
    %v5195 = vld [vmem:[%s1742 + $0x30] sm:$0xf]
    %v5196 = vld [vmem:[%s1742 + $0x34] sm:$0xf]
    %v5197 = vld [vmem:[%s1742 + $0x38] sm:$0xf]
    %v5198 = vld [vmem:[%s1742 + $0x3c] sm:$0xf]
    %v5199 = vld [vmem:[%s1759] sm:$0xf]
    %v5200 = vld [vmem:[%s1759 + $0x4] sm:$0xf]
    %v5201 = vld [vmem:[%s1759 + $0x8] sm:$0xf]
    %v5202 = vld [vmem:[%s1759 + $0xc] sm:$0xf]
    %v5203 = vld [vmem:[%s1759 + $0x10] sm:$0xf]
    %v5204 = vld [vmem:[%s1759 + $0x14] sm:$0xf]
    %v5205 = vld [vmem:[%s1759 + $0x18] sm:$0xf]
    %v5206 = vld [vmem:[%s1759 + $0x1c] sm:$0xf]
    %v5207 = vld [vmem:[%s1759 + $0x20] sm:$0xf]
    %v5208 = vld [vmem:[%s1759 + $0x24] sm:$0xf]
    %v5209 = vld [vmem:[%s1759 + $0x28] sm:$0xf]
    %v5210 = vld [vmem:[%s1759 + $0x2c] sm:$0xf]
    %v5211 = vld [vmem:[%s1759 + $0x30] sm:$0xf]
    %v5212 = vld [vmem:[%s1759 + $0x34] sm:$0xf]
    %v5213 = vld [vmem:[%s1759 + $0x38] sm:$0xf]
    %v5214 = vld [vmem:[%s1759 + $0x3c] sm:$0xf]
    %v5215 = vld [vmem:[%s1776] sm:$0xf]
    %v5216 = vld [vmem:[%s1776 + $0x4] sm:$0xf]
    %v5217 = vld [vmem:[%s1776 + $0x8] sm:$0xf]
    %v5218 = vld [vmem:[%s1776 + $0xc] sm:$0xf]
    %v5219 = vld [vmem:[%s1776 + $0x10] sm:$0xf]
    %v5220 = vld [vmem:[%s1776 + $0x14] sm:$0xf]
    %v5221 = vld [vmem:[%s1776 + $0x18] sm:$0xf]
    %v5222 = vld [vmem:[%s1776 + $0x1c] sm:$0xf]
    %v5223 = vld [vmem:[%s1776 + $0x20] sm:$0xf]
    %v5224 = vld [vmem:[%s1776 + $0x24] sm:$0xf]
    %v5225 = vld [vmem:[%s1776 + $0x28] sm:$0xf]
    %v5226 = vld [vmem:[%s1776 + $0x2c] sm:$0xf]
    %v5227 = vld [vmem:[%s1776 + $0x30] sm:$0xf]
    %v5228 = vld [vmem:[%s1776 + $0x34] sm:$0xf]
    %v5229 = vld [vmem:[%s1776 + $0x38] sm:$0xf]
    %v5230 = vld [vmem:[%s1776 + $0x3c] sm:$0xf]
    %v5231 = vld [vmem:[%s4 + $0x3] sm:$0x1]
    %v5232 = vld [vmem:[%s3794 + $0x5] sm:$0xff]
    %v5233 = vld [vmem:[%s3794 + $0xd] sm:$0xff]
    %v5234 = vmax.f32 %v5232, 0.0
    %v5235 = vmax.f32 %v5233, 0.0
    %v5236 = vpack.c.bf16 %v5235, %v5234
    %v5237 = vmax.f32 %v5181, 0.0
    %v5238 = vmax.f32 %v5182, 0.0
    %v5239 = vpack.c.bf16 %v5238, %v5237
    %v5256 = vunpack.c.l.b16 %v5199
    %v5257 = vunpack.c.l.b16 %v5200
    %v5258 = vunpack.c.l.b16 %v5201
    %v5259 = vunpack.c.l.b16 %v5202
    %v5260 = vunpack.c.l.b16 %v5203
    %v5261 = vunpack.c.l.b16 %v5204
    %v5262 = vunpack.c.l.b16 %v5205
    %v5263 = vunpack.c.l.b16 %v5206
    %v5264 = vunpack.c.l.b16 %v5207
    %v5265 = vunpack.c.l.b16 %v5208
    %v5266 = vunpack.c.l.b16 %v5209
    %v5267 = vunpack.c.l.b16 %v5210
    %v5268 = vunpack.c.l.b16 %v5211
    %v5269 = vunpack.c.l.b16 %v5212
    %v5270 = vunpack.c.l.b16 %v5213
    %v5271 = vunpack.c.l.b16 %v5214
    %v5272 = vpack.c.b16 %v5257, %v5256
    %v5273 = vpack.c.b16 %v5259, %v5258
    %v5274 = vpack.c.b16 %v5261, %v5260
    %v5275 = vpack.c.b16 %v5263, %v5262
    %v5276 = vpack.c.b16 %v5265, %v5264
    %v5277 = vpack.c.b16 %v5267, %v5266
    %v5278 = vpack.c.b16 %v5269, %v5268
    %v5279 = vpack.c.b16 %v5271, %v5270
    %5288 = vmatprep.subr.bf16.mxu0 0
    %5289 = vmatpush1.bf16.msra.mxu0 %v5272
    %5290 = vmatprep.subr.bf16.mxu0 0
    %5291 = vmatpush1.bf16.msra.mxu0 %v5273
    %5292 = vmatprep.subr.bf16.mxu0 0
    %5293 = vmatpush1.bf16.msra.mxu0 %v5274
    %5294 = vmatprep.subr.bf16.mxu0 0
    %5295 = vmatpush1.bf16.msra.mxu0 %v5275
    %5296 = vmatprep.subr.bf16.mxu0 0
    %5297 = vmatpush1.bf16.msra.mxu0 %v5276
    %5298 = vmatprep.subr.bf16.mxu0 0
    %5299 = vmatpush1.bf16.msra.mxu0 %v5277
    %5300 = vmatprep.subr.bf16.mxu0 0
    %5301 = vmatpush1.bf16.msra.mxu0 %v5278
    %5302 = vmatprep.subr.bf16.mxu0 0
    %5303 = vmatpush1.bf16.msra.mxu0 %v5279
    %5304 = vmatprep.subr.bf16.mxu0 0
    %5305 = vmatpush1.bf16.msra.mxu0 0
    %5306 = vmatprep.subr.bf16.mxu0 0
    %5307 = vmatpush1.bf16.msra.mxu0 0
    %5308 = vmatprep.subr.bf16.mxu0 0
    %5309 = vmatpush1.bf16.msra.mxu0 0
    %5310 = vmatprep.subr.bf16.mxu0 0
    %5311 = vmatpush1.bf16.msra.mxu0 0
    %5312 = vmatprep.subr.bf16.mxu0 0
    %5313 = vmatpush1.bf16.msra.mxu0 0
    %5314 = vmatprep.subr.bf16.mxu0 0
    %5315 = vmatpush1.bf16.msra.mxu0 0
    %5316 = vmatprep.subr.bf16.mxu0 0
    %5317 = vmatpush1.bf16.msra.mxu0 0
    %5318 = vmatprep.subr.bf16.mxu0 0
    %5319 = vmatpush1.bf16.msra.mxu0 0
    %5320 = vmatprep.mubr.bf16.mxu0 0
    %5321 = vmatmul.mubr.bf16.gmra.mrb[0].mxu0 %v5239
    %v5322 = vpop.f32.mrb[0].mxu0
    %v5323 = vadd.f32 0.0, %v5322
    %v5324 = vpop.f32.mrb[0].mxu0
    %v5325 = vpop.f32.mrb[0].mxu0
    %v5326 = vadd.f32 0.0, %v5325
    %v5327 = vpop.f32.mrb[0].mxu0
    %5328 = vdwg.mxu0
    %v5345 = vunpack.c.l.b16 %v5183
    %v5346 = vunpack.c.l.b16 %v5184
    %v5347 = vunpack.c.l.b16 %v5185
    %v5348 = vunpack.c.l.b16 %v5186
    %v5349 = vunpack.c.l.b16 %v5187
    %v5350 = vunpack.c.l.b16 %v5188
    %v5351 = vunpack.c.l.b16 %v5189
    %v5352 = vunpack.c.l.b16 %v5190
    %v5353 = vunpack.c.l.b16 %v5191
    %v5354 = vunpack.c.l.b16 %v5192
    %v5355 = vunpack.c.l.b16 %v5193
    %v5356 = vunpack.c.l.b16 %v5194
    %v5357 = vunpack.c.l.b16 %v5195
    %v5358 = vunpack.c.l.b16 %v5196
    %v5359 = vunpack.c.l.b16 %v5197
    %v5360 = vunpack.c.l.b16 %v5198
    %v5361 = vpack.c.b16 %v5346, %v5345
    %v5362 = vpack.c.b16 %v5348, %v5347
    %v5363 = vpack.c.b16 %v5350, %v5349
    %v5364 = vpack.c.b16 %v5352, %v5351
    %v5365 = vpack.c.b16 %v5354, %v5353
    %v5366 = vpack.c.b16 %v5356, %v5355
    %v5367 = vpack.c.b16 %v5358, %v5357
    %v5368 = vpack.c.b16 %v5360, %v5359
    %5377 = vmatprep.subr.bf16.mxu0 0
    %5378 = vmatpush1.bf16.msra.mxu0 %v5361
    %5379 = vmatprep.subr.bf16.mxu0 0
    %5380 = vmatpush1.bf16.msra.mxu0 %v5362
    %5381 = vmatprep.subr.bf16.mxu0 0
    %5382 = vmatpush1.bf16.msra.mxu0 %v5363
    %5383 = vmatprep.subr.bf16.mxu0 0
    %5384 = vmatpush1.bf16.msra.mxu0 %v5364
    %5385 = vmatprep.subr.bf16.mxu0 0
    %5386 = vmatpush1.bf16.msra.mxu0 %v5365
    %5387 = vmatprep.subr.bf16.mxu0 0
    %5388 = vmatpush1.bf16.msra.mxu0 %v5366
    %5389 = vmatprep.subr.bf16.mxu0 0
    %5390 = vmatpush1.bf16.msra.mxu0 %v5367
    %5391 = vmatprep.subr.bf16.mxu0 0
    %5392 = vmatpush1.bf16.msra.mxu0 %v5368
    %5393 = vmatprep.subr.bf16.mxu0 0
    %5394 = vmatpush1.bf16.msra.mxu0 0
    %5395 = vmatprep.subr.bf16.mxu0 0
    %5396 = vmatpush1.bf16.msra.mxu0 0
    %5397 = vmatprep.subr.bf16.mxu0 0
    %5398 = vmatpush1.bf16.msra.mxu0 0
    %5399 = vmatprep.subr.bf16.mxu0 0
    %5400 = vmatpush1.bf16.msra.mxu0 0
    %5401 = vmatprep.subr.bf16.mxu0 0
    %5402 = vmatpush1.bf16.msra.mxu0 0
    %5403 = vmatprep.subr.bf16.mxu0 0
    %5404 = vmatpush1.bf16.msra.mxu0 0
    %5405 = vmatprep.subr.bf16.mxu0 0
    %5406 = vmatpush1.bf16.msra.mxu0 0
    %5407 = vmatprep.subr.bf16.mxu0 0
    %5408 = vmatpush1.bf16.msra.mxu0 0
    %5409 = vmatprep.mubr.bf16.mxu0 0
    %5410 = vmatmul.mubr.bf16.gmra.mrb[0].mxu0 %v5236
    %v5411 = vpop.f32.mrb[0].mxu0
    %v5412 = vadd.f32 %v5323, %v5411
    %v5413 = vpop.f32.mrb[0].mxu0
    %v5414 = vpop.f32.mrb[0].mxu0
    %v5415 = vadd.f32 %v5326, %v5414
    %v5416 = vpop.f32.mrb[0].mxu0
    %5417 = vdwg.mxu0
    %v5418 = vld [vmem:[%s3794 + $0xb] sm:$0xff]
    %v5419 = vld [vmem:[%s3794 + $0x13] sm:$0xff]
    %v5420 = vmax.f32 %v5418, 0.0
    %v5421 = vmax.f32 %v5419, 0.0
    %v5422 = vpack.c.bf16 %v5421, %v5420
    %v5439 = vunpack.c.l.b16 %v5215
    %v5440 = vunpack.c.l.b16 %v5216
    %v5441 = vunpack.c.l.b16 %v5217
    %v5442 = vunpack.c.l.b16 %v5218
    %v5443 = vunpack.c.l.b16 %v5219
    %v5444 = vunpack.c.l.b16 %v5220
    %v5445 = vunpack.c.l.b16 %v5221
    %v5446 = vunpack.c.l.b16 %v5222
    %v5447 = vunpack.c.l.b16 %v5223
    %v5448 = vunpack.c.l.b16 %v5224
    %v5449 = vunpack.c.l.b16 %v5225
    %v5450 = vunpack.c.l.b16 %v5226
    %v5451 = vunpack.c.l.b16 %v5227
    %v5452 = vunpack.c.l.b16 %v5228
    %v5453 = vunpack.c.l.b16 %v5229
    %v5454 = vunpack.c.l.b16 %v5230
    %v5455 = vpack.c.b16 %v5440, %v5439
    %v5456 = vpack.c.b16 %v5442, %v5441
    %v5457 = vpack.c.b16 %v5444, %v5443
    %v5458 = vpack.c.b16 %v5446, %v5445
    %v5459 = vpack.c.b16 %v5448, %v5447
    %v5460 = vpack.c.b16 %v5450, %v5449
    %v5461 = vpack.c.b16 %v5452, %v5451
    %v5462 = vpack.c.b16 %v5454, %v5453
    %5471 = vmatprep.subr.bf16.mxu0 0
    %5472 = vmatpush1.bf16.msra.mxu0 %v5455
    %5473 = vmatprep.subr.bf16.mxu0 0
    %5474 = vmatpush1.bf16.msra.mxu0 %v5456
    %5475 = vmatprep.subr.bf16.mxu0 0
    %5476 = vmatpush1.bf16.msra.mxu0 %v5457
    %5477 = vmatprep.subr.bf16.mxu0 0
    %5478 = vmatpush1.bf16.msra.mxu0 %v5458
    %5479 = vmatprep.subr.bf16.mxu0 0
    %5480 = vmatpush1.bf16.msra.mxu0 %v5459
    %5481 = vmatprep.subr.bf16.mxu0 0
    %5482 = vmatpush1.bf16.msra.mxu0 %v5460
    %5483 = vmatprep.subr.bf16.mxu0 0
    %5484 = vmatpush1.bf16.msra.mxu0 %v5461
    %5485 = vmatprep.subr.bf16.mxu0 0
    %5486 = vmatpush1.bf16.msra.mxu0 %v5462
    %5487 = vmatprep.subr.bf16.mxu0 0
    %5488 = vmatpush1.bf16.msra.mxu0 0
    %5489 = vmatprep.subr.bf16.mxu0 0
    %5490 = vmatpush1.bf16.msra.mxu0 0
    %5491 = vmatprep.subr.bf16.mxu0 0
    %5492 = vmatpush1.bf16.msra.mxu0 0
    %5493 = vmatprep.subr.bf16.mxu0 0
    %5494 = vmatpush1.bf16.msra.mxu0 0
    %5495 = vmatprep.subr.bf16.mxu0 0
    %5496 = vmatpush1.bf16.msra.mxu0 0
    %5497 = vmatprep.subr.bf16.mxu0 0
    %5498 = vmatpush1.bf16.msra.mxu0 0
    %5499 = vmatprep.subr.bf16.mxu0 0
    %5500 = vmatpush1.bf16.msra.mxu0 0
    %5501 = vmatprep.subr.bf16.mxu0 0
    %5502 = vmatpush1.bf16.msra.mxu0 0
    %5503 = vmatprep.mubr.bf16.mxu0 0
    %5504 = vmatmul.mubr.bf16.gmra.mrb[0].mxu0 %v5422
    %v5505 = vpop.f32.mrb[0].mxu0
    %v5506 = vadd.f32 0.0, %v5505
    %v5507 = vpop.f32.mrb[0].mxu0
    %v5508 = vpop.f32.mrb[0].mxu0
    %v5509 = vadd.f32 0.0, %v5508
    %v5510 = vpop.f32.mrb[0].mxu0
    %5511 = vdwg.mxu0
    %v5512 = vadd.f32 %v5412, %v5506
    %v5513 = vadd.f32 %v5415, %v5509
    %v5514 = vlaneseq
    %v5515 = vshrl.u32 %v5514, 7
    %v5516 = vsub.s32 0, %v5515
    %v5517 = vrot.slane %v5231, %v5516
    %v5518 = vadd.f32 %v5512, %v5517
    %v5519 = vadd.f32 %v5513, %v5517
    %v5520 = vmax.f32 %v5518, 0.0
    %v5521 = vmax.f32 %v5519, 0.0
    %v5522 = vpack.c.bf16 %v5521, %v5520
    %v5523 = vld [vmem:[%s2085] sm:$0xf]
    %v5524 = vld [vmem:[%s2085 + $0x4] sm:$0xf]
    %v5525 = vld [vmem:[%s2085 + $0x8] sm:$0xf]
    %v5526 = vld [vmem:[%s2085 + $0xc] sm:$0xf]
    %v5527 = vld [vmem:[%s2085 + $0x10] sm:$0xf]
    %v5528 = vld [vmem:[%s2085 + $0x14] sm:$0xf]
    %v5529 = vld [vmem:[%s2085 + $0x18] sm:$0xf]
    %v5530 = vld [vmem:[%s2085 + $0x1c] sm:$0xf]
    %v5531 = vld [vmem:[%s2085 + $0x20] sm:$0xf]
    %v5532 = vld [vmem:[%s2085 + $0x24] sm:$0xf]
    %v5533 = vld [vmem:[%s2085 + $0x28] sm:$0xf]
    %v5534 = vld [vmem:[%s2085 + $0x2c] sm:$0xf]
    %v5535 = vld [vmem:[%s2085 + $0x30] sm:$0xf]
    %v5536 = vld [vmem:[%s2085 + $0x34] sm:$0xf]
    %v5537 = vld [vmem:[%s2085 + $0x38] sm:$0xf]
    %v5538 = vld [vmem:[%s2085 + $0x3c] sm:$0xf]
    %v5539 = vld [vmem:[%s6 + $0x2] sm:$0x1]
    %v5540 = vlaneseq
    %v5541 = vshrl.u32 %v5540, 7
    %v5542 = vsub.s32 0, %v5541
    %v5543 = vrot.slane %v5539, %v5542
    %v5560 = vunpack.c.l.b16 %v5523
    %v5561 = vunpack.c.l.b16 %v5524
    %v5562 = vunpack.c.l.b16 %v5525
    %v5563 = vunpack.c.l.b16 %v5526
    %v5564 = vunpack.c.l.b16 %v5527
    %v5565 = vunpack.c.l.b16 %v5528
    %v5566 = vunpack.c.l.b16 %v5529
    %v5567 = vunpack.c.l.b16 %v5530
    %v5568 = vunpack.c.l.b16 %v5531
    %v5569 = vunpack.c.l.b16 %v5532
    %v5570 = vunpack.c.l.b16 %v5533
    %v5571 = vunpack.c.l.b16 %v5534
    %v5572 = vunpack.c.l.b16 %v5535
    %v5573 = vunpack.c.l.b16 %v5536
    %v5574 = vunpack.c.l.b16 %v5537
    %v5575 = vunpack.c.l.b16 %v5538
    %v5576 = vpack.c.b16 %v5561, %v5560
    %v5577 = vpack.c.b16 %v5563, %v5562
    %v5578 = vpack.c.b16 %v5565, %v5564
    %v5579 = vpack.c.b16 %v5567, %v5566
    %v5580 = vpack.c.b16 %v5569, %v5568
    %v5581 = vpack.c.b16 %v5571, %v5570
    %v5582 = vpack.c.b16 %v5573, %v5572
    %v5583 = vpack.c.b16 %v5575, %v5574
    %5592 = vmatprep.subr.bf16.mxu0 0
    %5593 = vmatpush1.bf16.msra.mxu0 %v5576
    %5594 = vmatprep.subr.bf16.mxu0 0
    %5595 = vmatpush1.bf16.msra.mxu0 %v5577
    %5596 = vmatprep.subr.bf16.mxu0 0
    %5597 = vmatpush1.bf16.msra.mxu0 %v5578
    %5598 = vmatprep.subr.bf16.mxu0 0
    %5599 = vmatpush1.bf16.msra.mxu0 %v5579
    %5600 = vmatprep.subr.bf16.mxu0 0
    %5601 = vmatpush1.bf16.msra.mxu0 %v5580
    %5602 = vmatprep.subr.bf16.mxu0 0
    %5603 = vmatpush1.bf16.msra.mxu0 %v5581
    %5604 = vmatprep.subr.bf16.mxu0 0
    %5605 = vmatpush1.bf16.msra.mxu0 %v5582
    %5606 = vmatprep.subr.bf16.mxu0 0
    %5607 = vmatpush1.bf16.msra.mxu0 %v5583
    %5608 = vmatprep.subr.bf16.mxu0 0
    %5609 = vmatpush1.bf16.msra.mxu0 0
    %5610 = vmatprep.subr.bf16.mxu0 0
    %5611 = vmatpush1.bf16.msra.mxu0 0
    %5612 = vmatprep.subr.bf16.mxu0 0
    %5613 = vmatpush1.bf16.msra.mxu0 0
    %5614 = vmatprep.subr.bf16.mxu0 0
    %5615 = vmatpush1.bf16.msra.mxu0 0
    %5616 = vmatprep.subr.bf16.mxu0 0
    %5617 = vmatpush1.bf16.msra.mxu0 0
    %5618 = vmatprep.subr.bf16.mxu0 0
    %5619 = vmatpush1.bf16.msra.mxu0 0
    %5620 = vmatprep.subr.bf16.mxu0 0
    %5621 = vmatpush1.bf16.msra.mxu0 0
    %5622 = vmatprep.subr.bf16.mxu0 0
    %5623 = vmatpush1.bf16.msra.mxu0 0
    %5624 = vmatprep.mubr.bf16.mxu0 0
    %5625 = vmatmul.mubr.bf16.gmra.mrb[0].mxu0 %v5522
    %v5626 = vpop.f32.mrb[0].mxu0
    %v5627 = vadd.f32 %v5543, %v5626
    %v5628 = vpop.f32.mrb[0].mxu0
    %v5629 = vpop.f32.mrb[0].mxu0
    %v5630 = vadd.f32 %v5543, %v5629
    %v5631 = vpop.f32.mrb[0].mxu0
    %5632 = vdwg.mxu0
    %v5633 = vadd.f32 %v5627, %v5181
    %v5634 = vadd.f32 %v5630, %v5182
    %5635 = vst [vmem:[%s3794 + $0x8] sm:$0xff] %v5633
    %5636 = vst [vmem:[%s3794 + $0x10] sm:$0xff] %v5634
    %v5637 = vld [vmem:[%s3794 + $0x8] sm:$0xff]
    %v5638 = vld [vmem:[%s3794 + $0x10] sm:$0xff]
    %v5639 = vld [vmem:[%s2202] sm:$0xf]
    %v5640 = vld [vmem:[%s2202 + $0x4] sm:$0xf]
    %v5641 = vld [vmem:[%s2202 + $0x8] sm:$0xf]
    %v5642 = vld [vmem:[%s2202 + $0xc] sm:$0xf]
    %v5643 = vld [vmem:[%s2202 + $0x10] sm:$0xf]
    %v5644 = vld [vmem:[%s2202 + $0x14] sm:$0xf]
    %v5645 = vld [vmem:[%s2202 + $0x18] sm:$0xf]
    %v5646 = vld [vmem:[%s2202 + $0x1c] sm:$0xf]
    %v5647 = vld [vmem:[%s2202 + $0x20] sm:$0xf]
    %v5648 = vld [vmem:[%s2202 + $0x24] sm:$0xf]
    %v5649 = vld [vmem:[%s2202 + $0x28] sm:$0xf]
    %v5650 = vld [vmem:[%s2202 + $0x2c] sm:$0xf]
    %v5651 = vld [vmem:[%s2202 + $0x30] sm:$0xf]
    %v5652 = vld [vmem:[%s2202 + $0x34] sm:$0xf]
    %v5653 = vld [vmem:[%s2202 + $0x38] sm:$0xf]
    %v5654 = vld [vmem:[%s2202 + $0x3c] sm:$0xf]
    %v5655 = vld [vmem:[%s2219] sm:$0xf]
    %v5656 = vld [vmem:[%s2219 + $0x4] sm:$0xf]
    %v5657 = vld [vmem:[%s2219 + $0x8] sm:$0xf]
    %v5658 = vld [vmem:[%s2219 + $0xc] sm:$0xf]
    %v5659 = vld [vmem:[%s2219 + $0x10] sm:$0xf]
    %v5660 = vld [vmem:[%s2219 + $0x14] sm:$0xf]
    %v5661 = vld [vmem:[%s2219 + $0x18] sm:$0xf]
    %v5662 = vld [vmem:[%s2219 + $0x1c] sm:$0xf]
    %v5663 = vld [vmem:[%s2219 + $0x20] sm:$0xf]
    %v5664 = vld [vmem:[%s2219 + $0x24] sm:$0xf]
    %v5665 = vld [vmem:[%s2219 + $0x28] sm:$0xf]
    %v5666 = vld [vmem:[%s2219 + $0x2c] sm:$0xf]
    %v5667 = vld [vmem:[%s2219 + $0x30] sm:$0xf]
    %v5668 = vld [vmem:[%s2219 + $0x34] sm:$0xf]
    %v5669 = vld [vmem:[%s2219 + $0x38] sm:$0xf]
    %v5670 = vld [vmem:[%s2219 + $0x3c] sm:$0xf]
    %v5671 = vld [vmem:[%s2236] sm:$0xf]
    %v5672 = vld [vmem:[%s2236 + $0x4] sm:$0xf]
    %v5673 = vld [vmem:[%s2236 + $0x8] sm:$0xf]
    %v5674 = vld [vmem:[%s2236 + $0xc] sm:$0xf]
    %v5675 = vld [vmem:[%s2236 + $0x10] sm:$0xf]
    %v5676 = vld [vmem:[%s2236 + $0x14] sm:$0xf]
    %v5677 = vld [vmem:[%s2236 + $0x18] sm:$0xf]
    %v5678 = vld [vmem:[%s2236 + $0x1c] sm:$0xf]
    %v5679 = vld [vmem:[%s2236 + $0x20] sm:$0xf]
    %v5680 = vld [vmem:[%s2236 + $0x24] sm:$0xf]
    %v5681 = vld [vmem:[%s2236 + $0x28] sm:$0xf]
    %v5682 = vld [vmem:[%s2236 + $0x2c] sm:$0xf]
    %v5683 = vld [vmem:[%s2236 + $0x30] sm:$0xf]
    %v5684 = vld [vmem:[%s2236 + $0x34] sm:$0xf]
    %v5685 = vld [vmem:[%s2236 + $0x38] sm:$0xf]
    %v5686 = vld [vmem:[%s2236 + $0x3c] sm:$0xf]
    %v5687 = vld [vmem:[%s4 + $0x4] sm:$0x1]
    %v5688 = vld [vmem:[%s3794 + $0x7] sm:$0xff]
    %v5689 = vld [vmem:[%s3794 + $0xf] sm:$0xff]
    %v5690 = vmax.f32 %v5688, 0.0
    %v5691 = vmax.f32 %v5689, 0.0
    %v5692 = vpack.c.bf16 %v5691, %v5690
    %v5693 = vmax.f32 %v5637, 0.0
    %v5694 = vmax.f32 %v5638, 0.0
    %v5695 = vpack.c.bf16 %v5694, %v5693
    %v5712 = vunpack.c.l.b16 %v5655
    %v5713 = vunpack.c.l.b16 %v5656
    %v5714 = vunpack.c.l.b16 %v5657
    %v5715 = vunpack.c.l.b16 %v5658
    %v5716 = vunpack.c.l.b16 %v5659
    %v5717 = vunpack.c.l.b16 %v5660
    %v5718 = vunpack.c.l.b16 %v5661
    %v5719 = vunpack.c.l.b16 %v5662
    %v5720 = vunpack.c.l.b16 %v5663
    %v5721 = vunpack.c.l.b16 %v5664
    %v5722 = vunpack.c.l.b16 %v5665
    %v5723 = vunpack.c.l.b16 %v5666
    %v5724 = vunpack.c.l.b16 %v5667
    %v5725 = vunpack.c.l.b16 %v5668
    %v5726 = vunpack.c.l.b16 %v5669
    %v5727 = vunpack.c.l.b16 %v5670
    %v5728 = vpack.c.b16 %v5713, %v5712
    %v5729 = vpack.c.b16 %v5715, %v5714
    %v5730 = vpack.c.b16 %v5717, %v5716
    %v5731 = vpack.c.b16 %v5719, %v5718
    %v5732 = vpack.c.b16 %v5721, %v5720
    %v5733 = vpack.c.b16 %v5723, %v5722
    %v5734 = vpack.c.b16 %v5725, %v5724
    %v5735 = vpack.c.b16 %v5727, %v5726
    %5744 = vmatprep.subr.bf16.mxu0 0
    %5745 = vmatpush1.bf16.msra.mxu0 %v5728
    %5746 = vmatprep.subr.bf16.mxu0 0
    %5747 = vmatpush1.bf16.msra.mxu0 %v5729
    %5748 = vmatprep.subr.bf16.mxu0 0
    %5749 = vmatpush1.bf16.msra.mxu0 %v5730
    %5750 = vmatprep.subr.bf16.mxu0 0
    %5751 = vmatpush1.bf16.msra.mxu0 %v5731
    %5752 = vmatprep.subr.bf16.mxu0 0
    %5753 = vmatpush1.bf16.msra.mxu0 %v5732
    %5754 = vmatprep.subr.bf16.mxu0 0
    %5755 = vmatpush1.bf16.msra.mxu0 %v5733
    %5756 = vmatprep.subr.bf16.mxu0 0
    %5757 = vmatpush1.bf16.msra.mxu0 %v5734
    %5758 = vmatprep.subr.bf16.mxu0 0
    %5759 = vmatpush1.bf16.msra.mxu0 %v5735
    %5760 = vmatprep.subr.bf16.mxu0 0
    %5761 = vmatpush1.bf16.msra.mxu0 0
    %5762 = vmatprep.subr.bf16.mxu0 0
    %5763 = vmatpush1.bf16.msra.mxu0 0
    %5764 = vmatprep.subr.bf16.mxu0 0
    %5765 = vmatpush1.bf16.msra.mxu0 0
    %5766 = vmatprep.subr.bf16.mxu0 0
    %5767 = vmatpush1.bf16.msra.mxu0 0
    %5768 = vmatprep.subr.bf16.mxu0 0
    %5769 = vmatpush1.bf16.msra.mxu0 0
    %5770 = vmatprep.subr.bf16.mxu0 0
    %5771 = vmatpush1.bf16.msra.mxu0 0
    %5772 = vmatprep.subr.bf16.mxu0 0
    %5773 = vmatpush1.bf16.msra.mxu0 0
    %5774 = vmatprep.subr.bf16.mxu0 0
    %5775 = vmatpush1.bf16.msra.mxu0 0
    %5776 = vmatprep.mubr.bf16.mxu0 0
    %5777 = vmatmul.mubr.bf16.gmra.mrb[0].mxu0 %v5695
    %v5778 = vpop.f32.mrb[0].mxu0
    %v5779 = vadd.f32 0.0, %v5778
    %v5780 = vpop.f32.mrb[0].mxu0
    %v5781 = vpop.f32.mrb[0].mxu0
    %v5782 = vadd.f32 0.0, %v5781
    %v5783 = vpop.f32.mrb[0].mxu0
    %5784 = vdwg.mxu0
    %v5801 = vunpack.c.l.b16 %v5639
    %v5802 = vunpack.c.l.b16 %v5640
    %v5803 = vunpack.c.l.b16 %v5641
    %v5804 = vunpack.c.l.b16 %v5642
    %v5805 = vunpack.c.l.b16 %v5643
    %v5806 = vunpack.c.l.b16 %v5644
    %v5807 = vunpack.c.l.b16 %v5645
    %v5808 = vunpack.c.l.b16 %v5646
    %v5809 = vunpack.c.l.b16 %v5647
    %v5810 = vunpack.c.l.b16 %v5648
    %v5811 = vunpack.c.l.b16 %v5649
    %v5812 = vunpack.c.l.b16 %v5650
    %v5813 = vunpack.c.l.b16 %v5651
    %v5814 = vunpack.c.l.b16 %v5652
    %v5815 = vunpack.c.l.b16 %v5653
    %v5816 = vunpack.c.l.b16 %v5654
    %v5817 = vpack.c.b16 %v5802, %v5801
    %v5818 = vpack.c.b16 %v5804, %v5803
    %v5819 = vpack.c.b16 %v5806, %v5805
    %v5820 = vpack.c.b16 %v5808, %v5807
    %v5821 = vpack.c.b16 %v5810, %v5809
    %v5822 = vpack.c.b16 %v5812, %v5811
    %v5823 = vpack.c.b16 %v5814, %v5813
    %v5824 = vpack.c.b16 %v5816, %v5815
    %5833 = vmatprep.subr.bf16.mxu0 0
    %5834 = vmatpush1.bf16.msra.mxu0 %v5817
    %5835 = vmatprep.subr.bf16.mxu0 0
    %5836 = vmatpush1.bf16.msra.mxu0 %v5818
    %5837 = vmatprep.subr.bf16.mxu0 0
    %5838 = vmatpush1.bf16.msra.mxu0 %v5819
    %5839 = vmatprep.subr.bf16.mxu0 0
    %5840 = vmatpush1.bf16.msra.mxu0 %v5820
    %5841 = vmatprep.subr.bf16.mxu0 0
    %5842 = vmatpush1.bf16.msra.mxu0 %v5821
    %5843 = vmatprep.subr.bf16.mxu0 0
    %5844 = vmatpush1.bf16.msra.mxu0 %v5822
    %5845 = vmatprep.subr.bf16.mxu0 0
    %5846 = vmatpush1.bf16.msra.mxu0 %v5823
    %5847 = vmatprep.subr.bf16.mxu0 0
    %5848 = vmatpush1.bf16.msra.mxu0 %v5824
    %5849 = vmatprep.subr.bf16.mxu0 0
    %5850 = vmatpush1.bf16.msra.mxu0 0
    %5851 = vmatprep.subr.bf16.mxu0 0
    %5852 = vmatpush1.bf16.msra.mxu0 0
    %5853 = vmatprep.subr.bf16.mxu0 0
    %5854 = vmatpush1.bf16.msra.mxu0 0
    %5855 = vmatprep.subr.bf16.mxu0 0
    %5856 = vmatpush1.bf16.msra.mxu0 0
    %5857 = vmatprep.subr.bf16.mxu0 0
    %5858 = vmatpush1.bf16.msra.mxu0 0
    %5859 = vmatprep.subr.bf16.mxu0 0
    %5860 = vmatpush1.bf16.msra.mxu0 0
    %5861 = vmatprep.subr.bf16.mxu0 0
    %5862 = vmatpush1.bf16.msra.mxu0 0
    %5863 = vmatprep.subr.bf16.mxu0 0
    %5864 = vmatpush1.bf16.msra.mxu0 0
    %5865 = vmatprep.mubr.bf16.mxu0 0
    %5866 = vmatmul.mubr.bf16.gmra.mrb[0].mxu0 %v5692
    %v5867 = vpop.f32.mrb[0].mxu0
    %v5868 = vadd.f32 %v5779, %v5867
    %v5869 = vpop.f32.mrb[0].mxu0
    %v5870 = vpop.f32.mrb[0].mxu0
    %v5871 = vadd.f32 %v5782, %v5870
    %v5872 = vpop.f32.mrb[0].mxu0
    %5873 = vdwg.mxu0
    %v5874 = vld [vmem:[%s3794 + $0x9] sm:$0xff]
    %v5875 = vld [vmem:[%s3794 + $0x11] sm:$0xff]
    %v5876 = vmax.f32 %v5874, 0.0
    %v5877 = vmax.f32 %v5875, 0.0
    %v5878 = vpack.c.bf16 %v5877, %v5876
    %v5895 = vunpack.c.l.b16 %v5671
    %v5896 = vunpack.c.l.b16 %v5672
    %v5897 = vunpack.c.l.b16 %v5673
    %v5898 = vunpack.c.l.b16 %v5674
    %v5899 = vunpack.c.l.b16 %v5675
    %v5900 = vunpack.c.l.b16 %v5676
    %v5901 = vunpack.c.l.b16 %v5677
    %v5902 = vunpack.c.l.b16 %v5678
    %v5903 = vunpack.c.l.b16 %v5679
    %v5904 = vunpack.c.l.b16 %v5680
    %v5905 = vunpack.c.l.b16 %v5681
    %v5906 = vunpack.c.l.b16 %v5682
    %v5907 = vunpack.c.l.b16 %v5683
    %v5908 = vunpack.c.l.b16 %v5684
    %v5909 = vunpack.c.l.b16 %v5685
    %v5910 = vunpack.c.l.b16 %v5686
    %v5911 = vpack.c.b16 %v5896, %v5895
    %v5912 = vpack.c.b16 %v5898, %v5897
    %v5913 = vpack.c.b16 %v5900, %v5899
    %v5914 = vpack.c.b16 %v5902, %v5901
    %v5915 = vpack.c.b16 %v5904, %v5903
    %v5916 = vpack.c.b16 %v5906, %v5905
    %v5917 = vpack.c.b16 %v5908, %v5907
    %v5918 = vpack.c.b16 %v5910, %v5909
    %5927 = vmatprep.subr.bf16.mxu0 0
    %5928 = vmatpush1.bf16.msra.mxu0 %v5911
    %5929 = vmatprep.subr.bf16.mxu0 0
    %5930 = vmatpush1.bf16.msra.mxu0 %v5912
    %5931 = vmatprep.subr.bf16.mxu0 0
    %5932 = vmatpush1.bf16.msra.mxu0 %v5913
    %5933 = vmatprep.subr.bf16.mxu0 0
    %5934 = vmatpush1.bf16.msra.mxu0 %v5914
    %5935 = vmatprep.subr.bf16.mxu0 0
    %5936 = vmatpush1.bf16.msra.mxu0 %v5915
    %5937 = vmatprep.subr.bf16.mxu0 0
    %5938 = vmatpush1.bf16.msra.mxu0 %v5916
    %5939 = vmatprep.subr.bf16.mxu0 0
    %5940 = vmatpush1.bf16.msra.mxu0 %v5917
    %5941 = vmatprep.subr.bf16.mxu0 0
    %5942 = vmatpush1.bf16.msra.mxu0 %v5918
    %5943 = vmatprep.subr.bf16.mxu0 0
    %5944 = vmatpush1.bf16.msra.mxu0 0
    %5945 = vmatprep.subr.bf16.mxu0 0
    %5946 = vmatpush1.bf16.msra.mxu0 0
    %5947 = vmatprep.subr.bf16.mxu0 0
    %5948 = vmatpush1.bf16.msra.mxu0 0
    %5949 = vmatprep.subr.bf16.mxu0 0
    %5950 = vmatpush1.bf16.msra.mxu0 0
    %5951 = vmatprep.subr.bf16.mxu0 0
    %5952 = vmatpush1.bf16.msra.mxu0 0
    %5953 = vmatprep.subr.bf16.mxu0 0
    %5954 = vmatpush1.bf16.msra.mxu0 0
    %5955 = vmatprep.subr.bf16.mxu0 0
    %5956 = vmatpush1.bf16.msra.mxu0 0
    %5957 = vmatprep.subr.bf16.mxu0 0
    %5958 = vmatpush1.bf16.msra.mxu0 0
    %5959 = vmatprep.mubr.bf16.mxu0 0
    %5960 = vmatmul.mubr.bf16.gmra.mrb[0].mxu0 %v5878
    %v5961 = vpop.f32.mrb[0].mxu0
    %v5962 = vadd.f32 0.0, %v5961
    %v5963 = vpop.f32.mrb[0].mxu0
    %v5964 = vpop.f32.mrb[0].mxu0
    %v5965 = vadd.f32 0.0, %v5964
    %v5966 = vpop.f32.mrb[0].mxu0
    %5967 = vdwg.mxu0
    %v5968 = vadd.f32 %v5868, %v5962
    %v5969 = vadd.f32 %v5871, %v5965
    %v5970 = vlaneseq
    %v5971 = vshrl.u32 %v5970, 7
    %v5972 = vsub.s32 0, %v5971
    %v5973 = vrot.slane %v5687, %v5972
    %v5974 = vadd.f32 %v5968, %v5973
    %v5975 = vadd.f32 %v5969, %v5973
    %v5976 = vmax.f32 %v5974, 0.0
    %v5977 = vmax.f32 %v5975, 0.0
    %v5978 = vpack.c.bf16 %v5977, %v5976
    %v5979 = vld [vmem:[%s2545] sm:$0xf]
    %v5980 = vld [vmem:[%s2545 + $0x4] sm:$0xf]
    %v5981 = vld [vmem:[%s2545 + $0x8] sm:$0xf]
    %v5982 = vld [vmem:[%s2545 + $0xc] sm:$0xf]
    %v5983 = vld [vmem:[%s2545 + $0x10] sm:$0xf]
    %v5984 = vld [vmem:[%s2545 + $0x14] sm:$0xf]
    %v5985 = vld [vmem:[%s2545 + $0x18] sm:$0xf]
    %v5986 = vld [vmem:[%s2545 + $0x1c] sm:$0xf]
    %v5987 = vld [vmem:[%s2545 + $0x20] sm:$0xf]
    %v5988 = vld [vmem:[%s2545 + $0x24] sm:$0xf]
    %v5989 = vld [vmem:[%s2545 + $0x28] sm:$0xf]
    %v5990 = vld [vmem:[%s2545 + $0x2c] sm:$0xf]
    %v5991 = vld [vmem:[%s2545 + $0x30] sm:$0xf]
    %v5992 = vld [vmem:[%s2545 + $0x34] sm:$0xf]
    %v5993 = vld [vmem:[%s2545 + $0x38] sm:$0xf]
    %v5994 = vld [vmem:[%s2545 + $0x3c] sm:$0xf]
    %v5995 = vld [vmem:[%s6 + $0x3] sm:$0x1]
    %v5996 = vlaneseq
    %v5997 = vshrl.u32 %v5996, 7
    %v5998 = vsub.s32 0, %v5997
    %v5999 = vrot.slane %v5995, %v5998
    %v6016 = vunpack.c.l.b16 %v5979
    %v6017 = vunpack.c.l.b16 %v5980
    %v6018 = vunpack.c.l.b16 %v5981
    %v6019 = vunpack.c.l.b16 %v5982
    %v6020 = vunpack.c.l.b16 %v5983
    %v6021 = vunpack.c.l.b16 %v5984
    %v6022 = vunpack.c.l.b16 %v5985
    %v6023 = vunpack.c.l.b16 %v5986
    %v6024 = vunpack.c.l.b16 %v5987
    %v6025 = vunpack.c.l.b16 %v5988
    %v6026 = vunpack.c.l.b16 %v5989
    %v6027 = vunpack.c.l.b16 %v5990
    %v6028 = vunpack.c.l.b16 %v5991
    %v6029 = vunpack.c.l.b16 %v5992
    %v6030 = vunpack.c.l.b16 %v5993
    %v6031 = vunpack.c.l.b16 %v5994
    %v6032 = vpack.c.b16 %v6017, %v6016
    %v6033 = vpack.c.b16 %v6019, %v6018
    %v6034 = vpack.c.b16 %v6021, %v6020
    %v6035 = vpack.c.b16 %v6023, %v6022
    %v6036 = vpack.c.b16 %v6025, %v6024
    %v6037 = vpack.c.b16 %v6027, %v6026
    %v6038 = vpack.c.b16 %v6029, %v6028
    %v6039 = vpack.c.b16 %v6031, %v6030
    %6048 = vmatprep.subr.bf16.mxu0 0
    %6049 = vmatpush1.bf16.msra.mxu0 %v6032
    %6050 = vmatprep.subr.bf16.mxu0 0
    %6051 = vmatpush1.bf16.msra.mxu0 %v6033
    %6052 = vmatprep.subr.bf16.mxu0 0
    %6053 = vmatpush1.bf16.msra.mxu0 %v6034
    %6054 = vmatprep.subr.bf16.mxu0 0
    %6055 = vmatpush1.bf16.msra.mxu0 %v6035
    %6056 = vmatprep.subr.bf16.mxu0 0
    %6057 = vmatpush1.bf16.msra.mxu0 %v6036
    %6058 = vmatprep.subr.bf16.mxu0 0
    %6059 = vmatpush1.bf16.msra.mxu0 %v6037
    %6060 = vmatprep.subr.bf16.mxu0 0
    %6061 = vmatpush1.bf16.msra.mxu0 %v6038
    %6062 = vmatprep.subr.bf16.mxu0 0
    %6063 = vmatpush1.bf16.msra.mxu0 %v6039
    %6064 = vmatprep.subr.bf16.mxu0 0
    %6065 = vmatpush1.bf16.msra.mxu0 0
    %6066 = vmatprep.subr.bf16.mxu0 0
    %6067 = vmatpush1.bf16.msra.mxu0 0
    %6068 = vmatprep.subr.bf16.mxu0 0
    %6069 = vmatpush1.bf16.msra.mxu0 0
    %6070 = vmatprep.subr.bf16.mxu0 0
    %6071 = vmatpush1.bf16.msra.mxu0 0
    %6072 = vmatprep.subr.bf16.mxu0 0
    %6073 = vmatpush1.bf16.msra.mxu0 0
    %6074 = vmatprep.subr.bf16.mxu0 0
    %6075 = vmatpush1.bf16.msra.mxu0 0
    %6076 = vmatprep.subr.bf16.mxu0 0
    %6077 = vmatpush1.bf16.msra.mxu0 0
    %6078 = vmatprep.subr.bf16.mxu0 0
    %6079 = vmatpush1.bf16.msra.mxu0 0
    %6080 = vmatprep.mubr.bf16.mxu0 0
    %6081 = vmatmul.mubr.bf16.gmra.mrb[0].mxu0 %v5978
    %v6082 = vpop.f32.mrb[0].mxu0
    %v6083 = vadd.f32 %v5999, %v6082
    %v6084 = vpop.f32.mrb[0].mxu0
    %v6085 = vpop.f32.mrb[0].mxu0
    %v6086 = vadd.f32 %v5999, %v6085
    %v6087 = vpop.f32.mrb[0].mxu0
    %6088 = vdwg.mxu0
    %v6089 = vadd.f32 %v6083, %v5637
    %v6090 = vadd.f32 %v6086, %v5638
    %6091 = vst [vmem:[%s3794 + $0x8] sm:$0xff] %v6089
    %6092 = vst [vmem:[%s3794 + $0x10] sm:$0xff] %v6090
    %v6093 = vld [vmem:[%s3794 + $0x17] sm:$0x1]
    %6094 = vst [vmem:[%s3794 + $0x26] sm:$0x1] %v6093
    %6095 = vst [vmem:[%s3794 + $0x27] sm:$0x1] %v6093
    %v6096 = vld [vmem:[%s3794 + $0x16] sm:$0x1]
    %6097 = vst [vmem:[%s3794 + $0x24] sm:$0x1] %v6096
    %6098 = vst [vmem:[%s3794 + $0x25] sm:$0x1] %v6096
    %v6099 = vld [vmem:[%s3794 + $0x15] sm:$0x1]
    %6100 = vst [vmem:[%s3794 + $0x22] sm:$0x1] %v6099
    %6101 = vst [vmem:[%s3794 + $0x23] sm:$0x1] %v6099
    %v6102 = vld [vmem:[%s3794 + $0x14] sm:$0x1]
    %6103 = vst [vmem:[%s3794 + $0x20] sm:$0x1] %v6102
    %6104 = vst [vmem:[%s3794 + $0x21] sm:$0x1] %v6102
    %v6105 = vld [vmem:[%s3794 + $0x13] sm:$0x1]
    %6106 = vst [vmem:[%s3794 + $0x1e] sm:$0x1] %v6105
    %6107 = vst [vmem:[%s3794 + $0x1f] sm:$0x1] %v6105
    %v6108 = vld [vmem:[%s3794 + $0x12] sm:$0x1]
    %6109 = vst [vmem:[%s3794 + $0x1c] sm:$0x1] %v6108
    %6110 = vst [vmem:[%s3794 + $0x1d] sm:$0x1] %v6108
    %v6111 = vld [vmem:[%s3794 + $0x11] sm:$0x1]
    %6112 = vst [vmem:[%s3794 + $0x1a] sm:$0x1] %v6111
    %6113 = vst [vmem:[%s3794 + $0x1b] sm:$0x1] %v6111
    %v6114 = vld [vmem:[%s3794 + $0x10] sm:$0x1]
    %6115 = vst [vmem:[%s3794 + $0x18] sm:$0x1] %v6114
    %6116 = vst [vmem:[%s3794 + $0x19] sm:$0x1] %v6114
    %v6117 = vld [vmem:[%s3794 + $0xf] sm:$0x1]
    %6118 = vst [vmem:[%s3794 + $0x16] sm:$0x1] %v6117
    %6119 = vst [vmem:[%s3794 + $0x17] sm:$0x1] %v6117
    %v6120 = vld [vmem:[%s3794 + $0xe] sm:$0x1]
    %6121 = vst [vmem:[%s3794 + $0x14] sm:$0x1] %v6120
    %6122 = vst [vmem:[%s3794 + $0x15] sm:$0x1] %v6120
    %v6123 = vld [vmem:[%s3794 + $0xd] sm:$0x1]
    %6124 = vst [vmem:[%s3794 + $0x12] sm:$0x1] %v6123
    %6125 = vst [vmem:[%s3794 + $0x13] sm:$0x1] %v6123
    %v6126 = vld [vmem:[%s3794 + $0xc] sm:$0x1]
    %6127 = vst [vmem:[%s3794 + $0x10] sm:$0x1] %v6126
    %6128 = vst [vmem:[%s3794 + $0x11] sm:$0x1] %v6126
    %v6129 = vld [vmem:[%s3794 + $0xb] sm:$0x1]
    %6130 = vst [vmem:[%s3794 + $0xe] sm:$0x1] %v6129
    %6131 = vst [vmem:[%s3794 + $0xf] sm:$0x1] %v6129
    %v6132 = vld [vmem:[%s3794 + $0xa] sm:$0x1]
    %6133 = vst [vmem:[%s3794 + $0xc] sm:$0x1] %v6132
    %6134 = vst [vmem:[%s3794 + $0xd] sm:$0x1] %v6132
    %v6135 = vld [vmem:[%s3794 + $0x9] sm:$0x1]
    %6136 = vst [vmem:[%s3794 + $0xa] sm:$0x1] %v6135
    %6137 = vst [vmem:[%s3794 + $0xb] sm:$0x1] %v6135
    %v6138 = vld [vmem:[%s3794 + $0x8] sm:$0x1]
    %6139 = vst [vmem:[%s3794 + $0x8] sm:$0x1] %v6138
    %6140 = vst [vmem:[%s3794 + $0x9] sm:$0x1] %v6138
    %v6141 = vld [vmem:[%s2708] sm:$0xf]
    %v6142 = vld [vmem:[%s2708 + $0x4] sm:$0xf]
    %v6143 = vld [vmem:[%s2708 + $0x8] sm:$0xf]
    %v6144 = vld [vmem:[%s2708 + $0xc] sm:$0xf]
    %v6145 = vld [vmem:[%s2708 + $0x10] sm:$0xf]
    %v6146 = vld [vmem:[%s2708 + $0x14] sm:$0xf]
    %v6147 = vld [vmem:[%s2708 + $0x18] sm:$0xf]
    %v6148 = vld [vmem:[%s2708 + $0x1c] sm:$0xf]
    %v6149 = vld [vmem:[%s2708 + $0x20] sm:$0xf]
    %v6150 = vld [vmem:[%s2708 + $0x24] sm:$0xf]
    %v6151 = vld [vmem:[%s2708 + $0x28] sm:$0xf]
    %v6152 = vld [vmem:[%s2708 + $0x2c] sm:$0xf]
    %v6153 = vld [vmem:[%s2708 + $0x30] sm:$0xf]
    %v6154 = vld [vmem:[%s2708 + $0x34] sm:$0xf]
    %v6155 = vld [vmem:[%s2708 + $0x38] sm:$0xf]
    %v6156 = vld [vmem:[%s2708 + $0x3c] sm:$0xf]
    %v6157 = vld [vmem:[%s2725] sm:$0xf]
    %v6158 = vld [vmem:[%s2725 + $0x4] sm:$0xf]
    %v6159 = vld [vmem:[%s2725 + $0x8] sm:$0xf]
    %v6160 = vld [vmem:[%s2725 + $0xc] sm:$0xf]
    %v6161 = vld [vmem:[%s2725 + $0x10] sm:$0xf]
    %v6162 = vld [vmem:[%s2725 + $0x14] sm:$0xf]
    %v6163 = vld [vmem:[%s2725 + $0x18] sm:$0xf]
    %v6164 = vld [vmem:[%s2725 + $0x1c] sm:$0xf]
    %v6165 = vld [vmem:[%s2725 + $0x20] sm:$0xf]
    %v6166 = vld [vmem:[%s2725 + $0x24] sm:$0xf]
    %v6167 = vld [vmem:[%s2725 + $0x28] sm:$0xf]
    %v6168 = vld [vmem:[%s2725 + $0x2c] sm:$0xf]
    %v6169 = vld [vmem:[%s2725 + $0x30] sm:$0xf]
    %v6170 = vld [vmem:[%s2725 + $0x34] sm:$0xf]
    %v6171 = vld [vmem:[%s2725 + $0x38] sm:$0xf]
    %v6172 = vld [vmem:[%s2725 + $0x3c] sm:$0xf]
    %v6173 = vld [vmem:[%s2742] sm:$0xf]
    %v6174 = vld [vmem:[%s2742 + $0x4] sm:$0xf]
    %v6175 = vld [vmem:[%s2742 + $0x8] sm:$0xf]
    %v6176 = vld [vmem:[%s2742 + $0xc] sm:$0xf]
    %v6177 = vld [vmem:[%s2742 + $0x10] sm:$0xf]
    %v6178 = vld [vmem:[%s2742 + $0x14] sm:$0xf]
    %v6179 = vld [vmem:[%s2742 + $0x18] sm:$0xf]
    %v6180 = vld [vmem:[%s2742 + $0x1c] sm:$0xf]
    %v6181 = vld [vmem:[%s2742 + $0x20] sm:$0xf]
    %v6182 = vld [vmem:[%s2742 + $0x24] sm:$0xf]
    %v6183 = vld [vmem:[%s2742 + $0x28] sm:$0xf]
    %v6184 = vld [vmem:[%s2742 + $0x2c] sm:$0xf]
    %v6185 = vld [vmem:[%s2742 + $0x30] sm:$0xf]
    %v6186 = vld [vmem:[%s2742 + $0x34] sm:$0xf]
    %v6187 = vld [vmem:[%s2742 + $0x38] sm:$0xf]
    %v6188 = vld [vmem:[%s2742 + $0x3c] sm:$0xf]
    %v6189 = vld [vmem:[%s4 + $0x5] sm:$0x1]
    %v6190 = vld [vmem:[%s3794 + $0x7] sm:$0xff]
    %v6191 = vld [vmem:[%s3794 + $0xf] sm:$0xff]
    %v6192 = vld [vmem:[%s3794 + $0x17] sm:$0xff]
    %v6193 = vld [vmem:[%s3794 + $0x1f] sm:$0xff]
    %v6194 = vpack.c.bf16 %v6191, %v6190
    %v6195 = vpack.c.bf16 %v6193, %v6192
    %v6196 = vld [vmem:[%s3794 + $0x8] sm:$0xff]
    %v6197 = vld [vmem:[%s3794 + $0x10] sm:$0xff]
    %v6198 = vld [vmem:[%s3794 + $0x18] sm:$0xff]
    %v6199 = vld [vmem:[%s3794 + $0x20] sm:$0xff]
    %v6200 = vpack.c.bf16 %v6197, %v6196
    %v6201 = vpack.c.bf16 %v6199, %v6198
    %v6218 = vunpack.c.l.b16 %v6157
    %v6219 = vunpack.c.l.b16 %v6158
    %v6220 = vunpack.c.l.b16 %v6159
    %v6221 = vunpack.c.l.b16 %v6160
    %v6222 = vunpack.c.l.b16 %v6161
    %v6223 = vunpack.c.l.b16 %v6162
    %v6224 = vunpack.c.l.b16 %v6163
    %v6225 = vunpack.c.l.b16 %v6164
    %v6226 = vunpack.c.l.b16 %v6165
    %v6227 = vunpack.c.l.b16 %v6166
    %v6228 = vunpack.c.l.b16 %v6167
    %v6229 = vunpack.c.l.b16 %v6168
    %v6230 = vunpack.c.l.b16 %v6169
    %v6231 = vunpack.c.l.b16 %v6170
    %v6232 = vunpack.c.l.b16 %v6171
    %v6233 = vunpack.c.l.b16 %v6172
    %v6234 = vpack.c.b16 %v6219, %v6218
    %v6235 = vpack.c.b16 %v6221, %v6220
    %v6236 = vpack.c.b16 %v6223, %v6222
    %v6237 = vpack.c.b16 %v6225, %v6224
    %v6238 = vpack.c.b16 %v6227, %v6226
    %v6239 = vpack.c.b16 %v6229, %v6228
    %v6240 = vpack.c.b16 %v6231, %v6230
    %v6241 = vpack.c.b16 %v6233, %v6232
    %6250 = vmatprep.subr.bf16.mxu0 0
    %6251 = vmatpush1.bf16.msra.mxu0 %v6234
    %6252 = vmatprep.subr.bf16.mxu0 0
    %6253 = vmatpush1.bf16.msra.mxu0 %v6235
    %6254 = vmatprep.subr.bf16.mxu0 0
    %6255 = vmatpush1.bf16.msra.mxu0 %v6236
    %6256 = vmatprep.subr.bf16.mxu0 0
    %6257 = vmatpush1.bf16.msra.mxu0 %v6237
    %6258 = vmatprep.subr.bf16.mxu0 0
    %6259 = vmatpush1.bf16.msra.mxu0 %v6238
    %6260 = vmatprep.subr.bf16.mxu0 0
    %6261 = vmatpush1.bf16.msra.mxu0 %v6239
    %6262 = vmatprep.subr.bf16.mxu0 0
    %6263 = vmatpush1.bf16.msra.mxu0 %v6240
    %6264 = vmatprep.subr.bf16.mxu0 0
    %6265 = vmatpush1.bf16.msra.mxu0 %v6241
    %6266 = vmatprep.subr.bf16.mxu0 0
    %6267 = vmatpush1.bf16.msra.mxu0 0
    %6268 = vmatprep.subr.bf16.mxu0 0
    %6269 = vmatpush1.bf16.msra.mxu0 0
    %6270 = vmatprep.subr.bf16.mxu0 0
    %6271 = vmatpush1.bf16.msra.mxu0 0
    %6272 = vmatprep.subr.bf16.mxu0 0
    %6273 = vmatpush1.bf16.msra.mxu0 0
    %6274 = vmatprep.subr.bf16.mxu0 0
    %6275 = vmatpush1.bf16.msra.mxu0 0
    %6276 = vmatprep.subr.bf16.mxu0 0
    %6277 = vmatpush1.bf16.msra.mxu0 0
    %6278 = vmatprep.subr.bf16.mxu0 0
    %6279 = vmatpush1.bf16.msra.mxu0 0
    %6280 = vmatprep.subr.bf16.mxu0 0
    %6281 = vmatpush1.bf16.msra.mxu0 0
    %6282 = vmatprep.mubr.bf16.mxu0 0
    %6283 = vmatmul.mubr.bf16.gmra.mrb[0].mxu0 %v6200
    %v6284 = vpop.f32.mrb[0].mxu0
    %v6285 = vadd.f32 0.0, %v6284
    %v6286 = vpop.f32.mrb[0].mxu0
    %v6287 = vpop.f32.mrb[0].mxu0
    %v6288 = vadd.f32 0.0, %v6287
    %v6289 = vpop.f32.mrb[0].mxu0
    %6290 = vmatprep.mubr.bf16.mxu0 0
    %6291 = vmatmul.mubr.bf16.gmra.mrb[0].mxu0 %v6201
    %v6292 = vpop.f32.mrb[0].mxu0
    %v6293 = vadd.f32 0.0, %v6292
    %v6294 = vpop.f32.mrb[0].mxu0
    %v6295 = vpop.f32.mrb[0].mxu0
    %v6296 = vadd.f32 0.0, %v6295
    %v6297 = vpop.f32.mrb[0].mxu0
    %6298 = vdwg.mxu0
    %v6315 = vunpack.c.l.b16 %v6141
    %v6316 = vunpack.c.l.b16 %v6142
    %v6317 = vunpack.c.l.b16 %v6143
    %v6318 = vunpack.c.l.b16 %v6144
    %v6319 = vunpack.c.l.b16 %v6145
    %v6320 = vunpack.c.l.b16 %v6146
    %v6321 = vunpack.c.l.b16 %v6147
    %v6322 = vunpack.c.l.b16 %v6148
    %v6323 = vunpack.c.l.b16 %v6149
    %v6324 = vunpack.c.l.b16 %v6150
    %v6325 = vunpack.c.l.b16 %v6151
    %v6326 = vunpack.c.l.b16 %v6152
    %v6327 = vunpack.c.l.b16 %v6153
    %v6328 = vunpack.c.l.b16 %v6154
    %v6329 = vunpack.c.l.b16 %v6155
    %v6330 = vunpack.c.l.b16 %v6156
    %v6331 = vpack.c.b16 %v6316, %v6315
    %v6332 = vpack.c.b16 %v6318, %v6317
    %v6333 = vpack.c.b16 %v6320, %v6319
    %v6334 = vpack.c.b16 %v6322, %v6321
    %v6335 = vpack.c.b16 %v6324, %v6323
    %v6336 = vpack.c.b16 %v6326, %v6325
    %v6337 = vpack.c.b16 %v6328, %v6327
    %v6338 = vpack.c.b16 %v6330, %v6329
    %6347 = vmatprep.subr.bf16.mxu0 0
    %6348 = vmatpush1.bf16.msra.mxu0 %v6331
    %6349 = vmatprep.subr.bf16.mxu0 0
    %6350 = vmatpush1.bf16.msra.mxu0 %v6332
    %6351 = vmatprep.subr.bf16.mxu0 0
    %6352 = vmatpush1.bf16.msra.mxu0 %v6333
    %6353 = vmatprep.subr.bf16.mxu0 0
    %6354 = vmatpush1.bf16.msra.mxu0 %v6334
    %6355 = vmatprep.subr.bf16.mxu0 0
    %6356 = vmatpush1.bf16.msra.mxu0 %v6335
    %6357 = vmatprep.subr.bf16.mxu0 0
    %6358 = vmatpush1.bf16.msra.mxu0 %v6336
    %6359 = vmatprep.subr.bf16.mxu0 0
    %6360 = vmatpush1.bf16.msra.mxu0 %v6337
    %6361 = vmatprep.subr.bf16.mxu0 0
    %6362 = vmatpush1.bf16.msra.mxu0 %v6338
    %6363 = vmatprep.subr.bf16.mxu0 0
    %6364 = vmatpush1.bf16.msra.mxu0 0
    %6365 = vmatprep.subr.bf16.mxu0 0
    %6366 = vmatpush1.bf16.msra.mxu0 0
    %6367 = vmatprep.subr.bf16.mxu0 0
    %6368 = vmatpush1.bf16.msra.mxu0 0
    %6369 = vmatprep.subr.bf16.mxu0 0
    %6370 = vmatpush1.bf16.msra.mxu0 0
    %6371 = vmatprep.subr.bf16.mxu0 0
    %6372 = vmatpush1.bf16.msra.mxu0 0
    %6373 = vmatprep.subr.bf16.mxu0 0
    %6374 = vmatpush1.bf16.msra.mxu0 0
    %6375 = vmatprep.subr.bf16.mxu0 0
    %6376 = vmatpush1.bf16.msra.mxu0 0
    %6377 = vmatprep.subr.bf16.mxu0 0
    %6378 = vmatpush1.bf16.msra.mxu0 0
    %6379 = vmatprep.mubr.bf16.mxu0 0
    %6380 = vmatmul.mubr.bf16.gmra.mrb[0].mxu0 %v6194
    %v6381 = vpop.f32.mrb[0].mxu0
    %v6382 = vadd.f32 %v6285, %v6381
    %v6383 = vpop.f32.mrb[0].mxu0
    %v6384 = vpop.f32.mrb[0].mxu0
    %v6385 = vadd.f32 %v6288, %v6384
    %v6386 = vpop.f32.mrb[0].mxu0
    %6387 = vmatprep.mubr.bf16.mxu0 0
    %6388 = vmatmul.mubr.bf16.gmra.mrb[0].mxu0 %v6195
    %v6389 = vpop.f32.mrb[0].mxu0
    %v6390 = vadd.f32 %v6293, %v6389
    %v6391 = vpop.f32.mrb[0].mxu0
    %v6392 = vpop.f32.mrb[0].mxu0
    %v6393 = vadd.f32 %v6296, %v6392
    %v6394 = vpop.f32.mrb[0].mxu0
    %6395 = vdwg.mxu0
    %v6396 = vld [vmem:[%s3794 + $0x9] sm:$0xff]
    %v6397 = vld [vmem:[%s3794 + $0x11] sm:$0xff]
    %v6398 = vld [vmem:[%s3794 + $0x19] sm:$0xff]
    %v6399 = vld [vmem:[%s3794 + $0x21] sm:$0xff]
    %v6400 = vpack.c.bf16 %v6397, %v6396
    %v6401 = vpack.c.bf16 %v6399, %v6398
    %v6418 = vunpack.c.l.b16 %v6173
    %v6419 = vunpack.c.l.b16 %v6174
    %v6420 = vunpack.c.l.b16 %v6175
    %v6421 = vunpack.c.l.b16 %v6176
    %v6422 = vunpack.c.l.b16 %v6177
    %v6423 = vunpack.c.l.b16 %v6178
    %v6424 = vunpack.c.l.b16 %v6179
    %v6425 = vunpack.c.l.b16 %v6180
    %v6426 = vunpack.c.l.b16 %v6181
    %v6427 = vunpack.c.l.b16 %v6182
    %v6428 = vunpack.c.l.b16 %v6183
    %v6429 = vunpack.c.l.b16 %v6184
    %v6430 = vunpack.c.l.b16 %v6185
    %v6431 = vunpack.c.l.b16 %v6186
    %v6432 = vunpack.c.l.b16 %v6187
    %v6433 = vunpack.c.l.b16 %v6188
    %v6434 = vpack.c.b16 %v6419, %v6418
    %v6435 = vpack.c.b16 %v6421, %v6420
    %v6436 = vpack.c.b16 %v6423, %v6422
    %v6437 = vpack.c.b16 %v6425, %v6424
    %v6438 = vpack.c.b16 %v6427, %v6426
    %v6439 = vpack.c.b16 %v6429, %v6428
    %v6440 = vpack.c.b16 %v6431, %v6430
    %v6441 = vpack.c.b16 %v6433, %v6432
    %6450 = vmatprep.subr.bf16.mxu0 0
    %6451 = vmatpush1.bf16.msra.mxu0 %v6434
    %6452 = vmatprep.subr.bf16.mxu0 0
    %6453 = vmatpush1.bf16.msra.mxu0 %v6435
    %6454 = vmatprep.subr.bf16.mxu0 0
    %6455 = vmatpush1.bf16.msra.mxu0 %v6436
    %6456 = vmatprep.subr.bf16.mxu0 0
    %6457 = vmatpush1.bf16.msra.mxu0 %v6437
    %6458 = vmatprep.subr.bf16.mxu0 0
    %6459 = vmatpush1.bf16.msra.mxu0 %v6438
    %6460 = vmatprep.subr.bf16.mxu0 0
    %6461 = vmatpush1.bf16.msra.mxu0 %v6439
    %6462 = vmatprep.subr.bf16.mxu0 0
    %6463 = vmatpush1.bf16.msra.mxu0 %v6440
    %6464 = vmatprep.subr.bf16.mxu0 0
    %6465 = vmatpush1.bf16.msra.mxu0 %v6441
    %6466 = vmatprep.subr.bf16.mxu0 0
    %6467 = vmatpush1.bf16.msra.mxu0 0
    %6468 = vmatprep.subr.bf16.mxu0 0
    %6469 = vmatpush1.bf16.msra.mxu0 0
    %6470 = vmatprep.subr.bf16.mxu0 0
    %6471 = vmatpush1.bf16.msra.mxu0 0
    %6472 = vmatprep.subr.bf16.mxu0 0
    %6473 = vmatpush1.bf16.msra.mxu0 0
    %6474 = vmatprep.subr.bf16.mxu0 0
    %6475 = vmatpush1.bf16.msra.mxu0 0
    %6476 = vmatprep.subr.bf16.mxu0 0
    %6477 = vmatpush1.bf16.msra.mxu0 0
    %6478 = vmatprep.subr.bf16.mxu0 0
    %6479 = vmatpush1.bf16.msra.mxu0 0
    %6480 = vmatprep.subr.bf16.mxu0 0
    %6481 = vmatpush1.bf16.msra.mxu0 0
    %6482 = vmatprep.mubr.bf16.mxu0 0
    %6483 = vmatmul.mubr.bf16.gmra.mrb[0].mxu0 %v6400
    %v6484 = vpop.f32.mrb[0].mxu0
    %v6485 = vadd.f32 0.0, %v6484
    %v6486 = vpop.f32.mrb[0].mxu0
    %v6487 = vpop.f32.mrb[0].mxu0
    %v6488 = vadd.f32 0.0, %v6487
    %v6489 = vpop.f32.mrb[0].mxu0
    %6490 = vmatprep.mubr.bf16.mxu0 0
    %6491 = vmatmul.mubr.bf16.gmra.mrb[0].mxu0 %v6401
    %v6492 = vpop.f32.mrb[0].mxu0
    %v6493 = vadd.f32 0.0, %v6492
    %v6494 = vpop.f32.mrb[0].mxu0
    %v6495 = vpop.f32.mrb[0].mxu0
    %v6496 = vadd.f32 0.0, %v6495
    %v6497 = vpop.f32.mrb[0].mxu0
    %6498 = vdwg.mxu0
    %v6499 = vadd.f32 %v6382, %v6485
    %v6500 = vadd.f32 %v6385, %v6488
    %v6501 = vadd.f32 %v6390, %v6493
    %v6502 = vadd.f32 %v6393, %v6496
    %v6503 = vlaneseq
    %v6504 = vshrl.u32 %v6503, 7
    %v6505 = vsub.s32 0, %v6504
    %v6506 = vrot.slane %v6189, %v6505
    %v6507 = vadd.f32 %v6499, %v6506
    %v6508 = vadd.f32 %v6500, %v6506
    %v6509 = vadd.f32 %v6501, %v6506
    %v6510 = vadd.f32 %v6502, %v6506
    %6511 = vst [vmem:[%s3794 + $0x8] sm:$0xff] %v6507
    %6512 = vst [vmem:[%s3794 + $0x10] sm:$0xff] %v6508
    %6513 = vst [vmem:[%s3794 + $0x18] sm:$0xff] %v6509
    %6514 = vst [vmem:[%s3794 + $0x20] sm:$0xff] %v6510
    %v6515 = vld [vmem:[%s3085] sm:$0xf]
    %v6516 = vld [vmem:[%s3085 + $0x4] sm:$0xf]
    %v6517 = vld [vmem:[%s3085 + $0x8] sm:$0xf]
    %v6518 = vld [vmem:[%s3085 + $0xc] sm:$0xf]
    %v6519 = vld [vmem:[%s3085 + $0x10] sm:$0xf]
    %v6520 = vld [vmem:[%s3085 + $0x14] sm:$0xf]
    %v6521 = vld [vmem:[%s3085 + $0x18] sm:$0xf]
    %v6522 = vld [vmem:[%s3085 + $0x1c] sm:$0xf]
    %v6523 = vld [vmem:[%s3085 + $0x20] sm:$0xf]
    %v6524 = vld [vmem:[%s3085 + $0x24] sm:$0xf]
    %v6525 = vld [vmem:[%s3085 + $0x28] sm:$0xf]
    %v6526 = vld [vmem:[%s3085 + $0x2c] sm:$0xf]
    %v6527 = vld [vmem:[%s3085 + $0x30] sm:$0xf]
    %v6528 = vld [vmem:[%s3085 + $0x34] sm:$0xf]
    %v6529 = vld [vmem:[%s3085 + $0x38] sm:$0xf]
    %v6530 = vld [vmem:[%s3085 + $0x3c] sm:$0xf]
    %v6531 = vld [vmem:[%s3102] sm:$0xf]
    %v6532 = vld [vmem:[%s3102 + $0x4] sm:$0xf]
    %v6533 = vld [vmem:[%s3102 + $0x8] sm:$0xf]
    %v6534 = vld [vmem:[%s3102 + $0xc] sm:$0xf]
    %v6535 = vld [vmem:[%s3102 + $0x10] sm:$0xf]
    %v6536 = vld [vmem:[%s3102 + $0x14] sm:$0xf]
    %v6537 = vld [vmem:[%s3102 + $0x18] sm:$0xf]
    %v6538 = vld [vmem:[%s3102 + $0x1c] sm:$0xf]
    %v6539 = vld [vmem:[%s3102 + $0x20] sm:$0xf]
    %v6540 = vld [vmem:[%s3102 + $0x24] sm:$0xf]
    %v6541 = vld [vmem:[%s3102 + $0x28] sm:$0xf]
    %v6542 = vld [vmem:[%s3102 + $0x2c] sm:$0xf]
    %v6543 = vld [vmem:[%s3102 + $0x30] sm:$0xf]
    %v6544 = vld [vmem:[%s3102 + $0x34] sm:$0xf]
    %v6545 = vld [vmem:[%s3102 + $0x38] sm:$0xf]
    %v6546 = vld [vmem:[%s3102 + $0x3c] sm:$0xf]
    %v6547 = vld [vmem:[%s3119] sm:$0xf]
    %v6548 = vld [vmem:[%s3119 + $0x4] sm:$0xf]
    %v6549 = vld [vmem:[%s3119 + $0x8] sm:$0xf]
    %v6550 = vld [vmem:[%s3119 + $0xc] sm:$0xf]
    %v6551 = vld [vmem:[%s3119 + $0x10] sm:$0xf]
    %v6552 = vld [vmem:[%s3119 + $0x14] sm:$0xf]
    %v6553 = vld [vmem:[%s3119 + $0x18] sm:$0xf]
    %v6554 = vld [vmem:[%s3119 + $0x1c] sm:$0xf]
    %v6555 = vld [vmem:[%s3119 + $0x20] sm:$0xf]
    %v6556 = vld [vmem:[%s3119 + $0x24] sm:$0xf]
    %v6557 = vld [vmem:[%s3119 + $0x28] sm:$0xf]
    %v6558 = vld [vmem:[%s3119 + $0x2c] sm:$0xf]
    %v6559 = vld [vmem:[%s3119 + $0x30] sm:$0xf]
    %v6560 = vld [vmem:[%s3119 + $0x34] sm:$0xf]
    %v6561 = vld [vmem:[%s3119 + $0x38] sm:$0xf]
    %v6562 = vld [vmem:[%s3119 + $0x3c] sm:$0xf]
    %v6563 = vld [vmem:[%s4 + $0x6] sm:$0x1]
    %v6564 = vld [vmem:[%s3794 + $0x7] sm:$0xff]
    %v6565 = vld [vmem:[%s3794 + $0xf] sm:$0xff]
    %v6566 = vld [vmem:[%s3794 + $0x17] sm:$0xff]
    %v6567 = vld [vmem:[%s3794 + $0x1f] sm:$0xff]
    %v6568 = vpack.c.bf16 %v6565, %v6564
    %v6569 = vpack.c.bf16 %v6567, %v6566
    %v6570 = vld [vmem:[%s3794 + $0x8] sm:$0xff]
    %v6571 = vld [vmem:[%s3794 + $0x10] sm:$0xff]
    %v6572 = vld [vmem:[%s3794 + $0x18] sm:$0xff]
    %v6573 = vld [vmem:[%s3794 + $0x20] sm:$0xff]
    %v6574 = vpack.c.bf16 %v6571, %v6570
    %v6575 = vpack.c.bf16 %v6573, %v6572
    %v6592 = vunpack.c.l.b16 %v6531
    %v6593 = vunpack.c.l.b16 %v6532
    %v6594 = vunpack.c.l.b16 %v6533
    %v6595 = vunpack.c.l.b16 %v6534
    %v6596 = vunpack.c.l.b16 %v6535
    %v6597 = vunpack.c.l.b16 %v6536
    %v6598 = vunpack.c.l.b16 %v6537
    %v6599 = vunpack.c.l.b16 %v6538
    %v6600 = vunpack.c.l.b16 %v6539
    %v6601 = vunpack.c.l.b16 %v6540
    %v6602 = vunpack.c.l.b16 %v6541
    %v6603 = vunpack.c.l.b16 %v6542
    %v6604 = vunpack.c.l.b16 %v6543
    %v6605 = vunpack.c.l.b16 %v6544
    %v6606 = vunpack.c.l.b16 %v6545
    %v6607 = vunpack.c.l.b16 %v6546
    %v6608 = vpack.c.b16 %v6593, %v6592
    %v6609 = vpack.c.b16 %v6595, %v6594
    %v6610 = vpack.c.b16 %v6597, %v6596
    %v6611 = vpack.c.b16 %v6599, %v6598
    %v6612 = vpack.c.b16 %v6601, %v6600
    %v6613 = vpack.c.b16 %v6603, %v6602
    %v6614 = vpack.c.b16 %v6605, %v6604
    %v6615 = vpack.c.b16 %v6607, %v6606
    %6624 = vmatprep.subr.bf16.mxu0 0
    %6625 = vmatpush1.bf16.msra.mxu0 %v6608
    %6626 = vmatprep.subr.bf16.mxu0 0
    %6627 = vmatpush1.bf16.msra.mxu0 %v6609
    %6628 = vmatprep.subr.bf16.mxu0 0
    %6629 = vmatpush1.bf16.msra.mxu0 %v6610
    %6630 = vmatprep.subr.bf16.mxu0 0
    %6631 = vmatpush1.bf16.msra.mxu0 %v6611
    %6632 = vmatprep.subr.bf16.mxu0 0
    %6633 = vmatpush1.bf16.msra.mxu0 %v6612
    %6634 = vmatprep.subr.bf16.mxu0 0
    %6635 = vmatpush1.bf16.msra.mxu0 %v6613
    %6636 = vmatprep.subr.bf16.mxu0 0
    %6637 = vmatpush1.bf16.msra.mxu0 %v6614
    %6638 = vmatprep.subr.bf16.mxu0 0
    %6639 = vmatpush1.bf16.msra.mxu0 %v6615
    %6640 = vmatprep.subr.bf16.mxu0 0
    %6641 = vmatpush1.bf16.msra.mxu0 0
    %6642 = vmatprep.subr.bf16.mxu0 0
    %6643 = vmatpush1.bf16.msra.mxu0 0
    %6644 = vmatprep.subr.bf16.mxu0 0
    %6645 = vmatpush1.bf16.msra.mxu0 0
    %6646 = vmatprep.subr.bf16.mxu0 0
    %6647 = vmatpush1.bf16.msra.mxu0 0
    %6648 = vmatprep.subr.bf16.mxu0 0
    %6649 = vmatpush1.bf16.msra.mxu0 0
    %6650 = vmatprep.subr.bf16.mxu0 0
    %6651 = vmatpush1.bf16.msra.mxu0 0
    %6652 = vmatprep.subr.bf16.mxu0 0
    %6653 = vmatpush1.bf16.msra.mxu0 0
    %6654 = vmatprep.subr.bf16.mxu0 0
    %6655 = vmatpush1.bf16.msra.mxu0 0
    %6656 = vmatprep.mubr.bf16.mxu0 0
    %6657 = vmatmul.mubr.bf16.gmra.mrb[0].mxu0 %v6574
    %v6658 = vpop.f32.mrb[0].mxu0
    %v6659 = vadd.f32 0.0, %v6658
    %v6660 = vpop.f32.mrb[0].mxu0
    %v6661 = vpop.f32.mrb[0].mxu0
    %v6662 = vadd.f32 0.0, %v6661
    %v6663 = vpop.f32.mrb[0].mxu0
    %6664 = vmatprep.mubr.bf16.mxu0 0
    %6665 = vmatmul.mubr.bf16.gmra.mrb[0].mxu0 %v6575
    %v6666 = vpop.f32.mrb[0].mxu0
    %v6667 = vadd.f32 0.0, %v6666
    %v6668 = vpop.f32.mrb[0].mxu0
    %v6669 = vpop.f32.mrb[0].mxu0
    %v6670 = vadd.f32 0.0, %v6669
    %v6671 = vpop.f32.mrb[0].mxu0
    %6672 = vdwg.mxu0
    %v6689 = vunpack.c.l.b16 %v6515
    %v6690 = vunpack.c.l.b16 %v6516
    %v6691 = vunpack.c.l.b16 %v6517
    %v6692 = vunpack.c.l.b16 %v6518
    %v6693 = vunpack.c.l.b16 %v6519
    %v6694 = vunpack.c.l.b16 %v6520
    %v6695 = vunpack.c.l.b16 %v6521
    %v6696 = vunpack.c.l.b16 %v6522
    %v6697 = vunpack.c.l.b16 %v6523
    %v6698 = vunpack.c.l.b16 %v6524
    %v6699 = vunpack.c.l.b16 %v6525
    %v6700 = vunpack.c.l.b16 %v6526
    %v6701 = vunpack.c.l.b16 %v6527
    %v6702 = vunpack.c.l.b16 %v6528
    %v6703 = vunpack.c.l.b16 %v6529
    %v6704 = vunpack.c.l.b16 %v6530
    %v6705 = vpack.c.b16 %v6690, %v6689
    %v6706 = vpack.c.b16 %v6692, %v6691
    %v6707 = vpack.c.b16 %v6694, %v6693
    %v6708 = vpack.c.b16 %v6696, %v6695
    %v6709 = vpack.c.b16 %v6698, %v6697
    %v6710 = vpack.c.b16 %v6700, %v6699
    %v6711 = vpack.c.b16 %v6702, %v6701
    %v6712 = vpack.c.b16 %v6704, %v6703
    %6721 = vmatprep.subr.bf16.mxu0 0
    %6722 = vmatpush1.bf16.msra.mxu0 %v6705
    %6723 = vmatprep.subr.bf16.mxu0 0
    %6724 = vmatpush1.bf16.msra.mxu0 %v6706
    %6725 = vmatprep.subr.bf16.mxu0 0
    %6726 = vmatpush1.bf16.msra.mxu0 %v6707
    %6727 = vmatprep.subr.bf16.mxu0 0
    %6728 = vmatpush1.bf16.msra.mxu0 %v6708
    %6729 = vmatprep.subr.bf16.mxu0 0
    %6730 = vmatpush1.bf16.msra.mxu0 %v6709
    %6731 = vmatprep.subr.bf16.mxu0 0
    %6732 = vmatpush1.bf16.msra.mxu0 %v6710
    %6733 = vmatprep.subr.bf16.mxu0 0
    %6734 = vmatpush1.bf16.msra.mxu0 %v6711
    %6735 = vmatprep.subr.bf16.mxu0 0
    %6736 = vmatpush1.bf16.msra.mxu0 %v6712
    %6737 = vmatprep.subr.bf16.mxu0 0
    %6738 = vmatpush1.bf16.msra.mxu0 0
    %6739 = vmatprep.subr.bf16.mxu0 0
    %6740 = vmatpush1.bf16.msra.mxu0 0
    %6741 = vmatprep.subr.bf16.mxu0 0
    %6742 = vmatpush1.bf16.msra.mxu0 0
    %6743 = vmatprep.subr.bf16.mxu0 0
    %6744 = vmatpush1.bf16.msra.mxu0 0
    %6745 = vmatprep.subr.bf16.mxu0 0
    %6746 = vmatpush1.bf16.msra.mxu0 0
    %6747 = vmatprep.subr.bf16.mxu0 0
    %6748 = vmatpush1.bf16.msra.mxu0 0
    %6749 = vmatprep.subr.bf16.mxu0 0
    %6750 = vmatpush1.bf16.msra.mxu0 0
    %6751 = vmatprep.subr.bf16.mxu0 0
    %6752 = vmatpush1.bf16.msra.mxu0 0
    %6753 = vmatprep.mubr.bf16.mxu0 0
    %6754 = vmatmul.mubr.bf16.gmra.mrb[0].mxu0 %v6568
    %v6755 = vpop.f32.mrb[0].mxu0
    %v6756 = vadd.f32 %v6659, %v6755
    %v6757 = vpop.f32.mrb[0].mxu0
    %v6758 = vpop.f32.mrb[0].mxu0
    %v6759 = vadd.f32 %v6662, %v6758
    %v6760 = vpop.f32.mrb[0].mxu0
    %6761 = vmatprep.mubr.bf16.mxu0 0
    %6762 = vmatmul.mubr.bf16.gmra.mrb[0].mxu0 %v6569
    %v6763 = vpop.f32.mrb[0].mxu0
    %v6764 = vadd.f32 %v6667, %v6763
    %v6765 = vpop.f32.mrb[0].mxu0
    %v6766 = vpop.f32.mrb[0].mxu0
    %v6767 = vadd.f32 %v6670, %v6766
    %v6768 = vpop.f32.mrb[0].mxu0
    %6769 = vdwg.mxu0
    %v6770 = vld [vmem:[%s3794 + $0x9] sm:$0xff]
    %v6771 = vld [vmem:[%s3794 + $0x11] sm:$0xff]
    %v6772 = vld [vmem:[%s3794 + $0x19] sm:$0xff]
    %v6773 = vld [vmem:[%s3794 + $0x21] sm:$0xff]
    %v6774 = vpack.c.bf16 %v6771, %v6770
    %v6775 = vpack.c.bf16 %v6773, %v6772
    %v6792 = vunpack.c.l.b16 %v6547
    %v6793 = vunpack.c.l.b16 %v6548
    %v6794 = vunpack.c.l.b16 %v6549
    %v6795 = vunpack.c.l.b16 %v6550
    %v6796 = vunpack.c.l.b16 %v6551
    %v6797 = vunpack.c.l.b16 %v6552
    %v6798 = vunpack.c.l.b16 %v6553
    %v6799 = vunpack.c.l.b16 %v6554
    %v6800 = vunpack.c.l.b16 %v6555
    %v6801 = vunpack.c.l.b16 %v6556
    %v6802 = vunpack.c.l.b16 %v6557
    %v6803 = vunpack.c.l.b16 %v6558
    %v6804 = vunpack.c.l.b16 %v6559
    %v6805 = vunpack.c.l.b16 %v6560
    %v6806 = vunpack.c.l.b16 %v6561
    %v6807 = vunpack.c.l.b16 %v6562
    %v6808 = vpack.c.b16 %v6793, %v6792
    %v6809 = vpack.c.b16 %v6795, %v6794
    %v6810 = vpack.c.b16 %v6797, %v6796
    %v6811 = vpack.c.b16 %v6799, %v6798
    %v6812 = vpack.c.b16 %v6801, %v6800
    %v6813 = vpack.c.b16 %v6803, %v6802
    %v6814 = vpack.c.b16 %v6805, %v6804
    %v6815 = vpack.c.b16 %v6807, %v6806
    %6824 = vmatprep.subr.bf16.mxu0 0
    %6825 = vmatpush1.bf16.msra.mxu0 %v6808
    %6826 = vmatprep.subr.bf16.mxu0 0
    %6827 = vmatpush1.bf16.msra.mxu0 %v6809
    %6828 = vmatprep.subr.bf16.mxu0 0
    %6829 = vmatpush1.bf16.msra.mxu0 %v6810
    %6830 = vmatprep.subr.bf16.mxu0 0
    %6831 = vmatpush1.bf16.msra.mxu0 %v6811
    %6832 = vmatprep.subr.bf16.mxu0 0
    %6833 = vmatpush1.bf16.msra.mxu0 %v6812
    %6834 = vmatprep.subr.bf16.mxu0 0
    %6835 = vmatpush1.bf16.msra.mxu0 %v6813
    %6836 = vmatprep.subr.bf16.mxu0 0
    %6837 = vmatpush1.bf16.msra.mxu0 %v6814
    %6838 = vmatprep.subr.bf16.mxu0 0
    %6839 = vmatpush1.bf16.msra.mxu0 %v6815
    %6840 = vmatprep.subr.bf16.mxu0 0
    %6841 = vmatpush1.bf16.msra.mxu0 0
    %6842 = vmatprep.subr.bf16.mxu0 0
    %6843 = vmatpush1.bf16.msra.mxu0 0
    %6844 = vmatprep.subr.bf16.mxu0 0
    %6845 = vmatpush1.bf16.msra.mxu0 0
    %6846 = vmatprep.subr.bf16.mxu0 0
    %6847 = vmatpush1.bf16.msra.mxu0 0
    %6848 = vmatprep.subr.bf16.mxu0 0
    %6849 = vmatpush1.bf16.msra.mxu0 0
    %6850 = vmatprep.subr.bf16.mxu0 0
    %6851 = vmatpush1.bf16.msra.mxu0 0
    %6852 = vmatprep.subr.bf16.mxu0 0
    %6853 = vmatpush1.bf16.msra.mxu0 0
    %6854 = vmatprep.subr.bf16.mxu0 0
    %6855 = vmatpush1.bf16.msra.mxu0 0
    %6856 = vmatprep.mubr.bf16.mxu0 0
    %6857 = vmatmul.mubr.bf16.gmra.mrb[0].mxu0 %v6774
    %v6858 = vpop.f32.mrb[0].mxu0
    %v6859 = vadd.f32 0.0, %v6858
    %v6860 = vpop.f32.mrb[0].mxu0
    %v6861 = vpop.f32.mrb[0].mxu0
    %v6862 = vadd.f32 0.0, %v6861
    %v6863 = vpop.f32.mrb[0].mxu0
    %6864 = vmatprep.mubr.bf16.mxu0 0
    %6865 = vmatmul.mubr.bf16.gmra.mrb[0].mxu0 %v6775
    %v6866 = vpop.f32.mrb[0].mxu0
    %v6867 = vadd.f32 0.0, %v6866
    %v6868 = vpop.f32.mrb[0].mxu0
    %v6869 = vpop.f32.mrb[0].mxu0
    %v6870 = vadd.f32 0.0, %v6869
    %v6871 = vpop.f32.mrb[0].mxu0
    %6872 = vdwg.mxu0
    %v6873 = vadd.f32 %v6756, %v6859
    %v6874 = vadd.f32 %v6759, %v6862
    %v6875 = vadd.f32 %v6764, %v6867
    %v6876 = vadd.f32 %v6767, %v6870
    %v6877 = vlaneseq
    %v6878 = vshrl.u32 %v6877, 7
    %v6879 = vsub.s32 0, %v6878
    %v6880 = vrot.slane %v6563, %v6879
    %v6881 = vadd.f32 %v6873, %v6880
    %v6882 = vadd.f32 %v6874, %v6880
    %v6883 = vadd.f32 %v6875, %v6880
    %v6884 = vadd.f32 %v6876, %v6880
    %v6885 = vmax.f32 %v6881, 0.0
    %v6886 = vmax.f32 %v6882, 0.0
    %v6887 = vmax.f32 %v6883, 0.0
    %v6888 = vmax.f32 %v6884, 0.0
    %6889 = vst [vmem:[%s3794 + $0x8] sm:$0xff] %v6885
    %6890 = vst [vmem:[%s3794 + $0x10] sm:$0xff] %v6886
    %6891 = vst [vmem:[%s3794 + $0x18] sm:$0xff] %v6887
    %6892 = vst [vmem:[%s3794 + $0x20] sm:$0xff] %v6888
    %v6893 = vld [vmem:[%s8] sm:$0x1]
    %v6894 = vld [vmem:[%s3794 + $0x7] sm:$0xff]
    %v6895 = vld [vmem:[%s3794 + $0xf] sm:$0xff]
    %v6896 = vld [vmem:[%s3794 + $0x17] sm:$0xff]
    %v6897 = vld [vmem:[%s3794 + $0x1f] sm:$0xff]
    %v6898 = vpack.c.bf16 %v6895, %v6894
    %v6899 = vpack.c.bf16 %v6897, %v6896
    %v6900 = vld [vmem:[%s3794 + $0x8] sm:$0xff]
    %v6901 = vld [vmem:[%s3794 + $0x10] sm:$0xff]
    %v6902 = vld [vmem:[%s3794 + $0x18] sm:$0xff]
    %v6903 = vld [vmem:[%s3794 + $0x20] sm:$0xff]
    %v6904 = vpack.c.bf16 %v6901, %v6900
    %v6905 = vpack.c.bf16 %v6903, %v6902
    %6906 = vmatprep.subr.bf16.mxu0 0
    %6907 = vmatpush1.bf16.msra.mxu0 %v3511
    %6908 = vmatprep.subr.bf16.mxu0 0
    %6909 = vmatpush1.bf16.msra.mxu0 %v3512
    %6910 = vmatprep.subr.bf16.mxu0 0
    %6911 = vmatpush1.bf16.msra.mxu0 %v3513
    %6912 = vmatprep.subr.bf16.mxu0 0
    %6913 = vmatpush1.bf16.msra.mxu0 %v3514
    %6914 = vmatprep.subr.bf16.mxu0 0
    %6915 = vmatpush1.bf16.msra.mxu0 %v3515
    %6916 = vmatprep.subr.bf16.mxu0 0
    %6917 = vmatpush1.bf16.msra.mxu0 %v3516
    %6918 = vmatprep.subr.bf16.mxu0 0
    %6919 = vmatpush1.bf16.msra.mxu0 %v3517
    %6920 = vmatprep.subr.bf16.mxu0 0
    %6921 = vmatpush1.bf16.msra.mxu0 %v3518
    %6922 = vmatprep.subr.bf16.mxu0 0
    %6923 = vmatpush1.bf16.msra.mxu0 0
    %6924 = vmatprep.subr.bf16.mxu0 0
    %6925 = vmatpush1.bf16.msra.mxu0 0
    %6926 = vmatprep.subr.bf16.mxu0 0
    %6927 = vmatpush1.bf16.msra.mxu0 0
    %6928 = vmatprep.subr.bf16.mxu0 0
    %6929 = vmatpush1.bf16.msra.mxu0 0
    %6930 = vmatprep.subr.bf16.mxu0 0
    %6931 = vmatpush1.bf16.msra.mxu0 0
    %6932 = vmatprep.subr.bf16.mxu0 0
    %6933 = vmatpush1.bf16.msra.mxu0 0
    %6934 = vmatprep.subr.bf16.mxu0 0
    %6935 = vmatpush1.bf16.msra.mxu0 0
    %6936 = vmatprep.subr.bf16.mxu0 0
    %6937 = vmatpush1.bf16.msra.mxu0 0
    %6938 = vmatprep.mubr.bf16.mxu0 0
    %6939 = vmatmul.mubr.bf16.gmra.mrb[0].mxu0 %v6904
    %v6940 = vpop.f32.mrb[0].mxu0
    %v6941 = vadd.f32 0.0, %v6940
    %v6942 = vpop.f32.mrb[0].mxu0
    %v6943 = vpop.f32.mrb[0].mxu0
    %v6944 = vadd.f32 0.0, %v6943
    %v6945 = vpop.f32.mrb[0].mxu0
    %6946 = vmatprep.mubr.bf16.mxu0 0
    %6947 = vmatmul.mubr.bf16.gmra.mrb[0].mxu0 %v6905
    %v6948 = vpop.f32.mrb[0].mxu0
    %v6949 = vadd.f32 0.0, %v6948
    %v6950 = vpop.f32.mrb[0].mxu0
    %v6951 = vpop.f32.mrb[0].mxu0
    %v6952 = vadd.f32 0.0, %v6951
    %v6953 = vpop.f32.mrb[0].mxu0
    %6954 = vdwg.mxu0
    %6955 = vmatprep.subr.bf16.mxu0 0
    %6956 = vmatpush1.bf16.msra.mxu0 %v3608
    %6957 = vmatprep.subr.bf16.mxu0 0
    %6958 = vmatpush1.bf16.msra.mxu0 %v3609
    %6959 = vmatprep.subr.bf16.mxu0 0
    %6960 = vmatpush1.bf16.msra.mxu0 %v3610
    %6961 = vmatprep.subr.bf16.mxu0 0
    %6962 = vmatpush1.bf16.msra.mxu0 %v3611
    %6963 = vmatprep.subr.bf16.mxu0 0
    %6964 = vmatpush1.bf16.msra.mxu0 %v3612
    %6965 = vmatprep.subr.bf16.mxu0 0
    %6966 = vmatpush1.bf16.msra.mxu0 %v3613
    %6967 = vmatprep.subr.bf16.mxu0 0
    %6968 = vmatpush1.bf16.msra.mxu0 %v3614
    %6969 = vmatprep.subr.bf16.mxu0 0
    %6970 = vmatpush1.bf16.msra.mxu0 %v3615
    %6971 = vmatprep.subr.bf16.mxu0 0
    %6972 = vmatpush1.bf16.msra.mxu0 0
    %6973 = vmatprep.subr.bf16.mxu0 0
    %6974 = vmatpush1.bf16.msra.mxu0 0
    %6975 = vmatprep.subr.bf16.mxu0 0
    %6976 = vmatpush1.bf16.msra.mxu0 0
    %6977 = vmatprep.subr.bf16.mxu0 0
    %6978 = vmatpush1.bf16.msra.mxu0 0
    %6979 = vmatprep.subr.bf16.mxu0 0
    %6980 = vmatpush1.bf16.msra.mxu0 0
    %6981 = vmatprep.subr.bf16.mxu0 0
    %6982 = vmatpush1.bf16.msra.mxu0 0
    %6983 = vmatprep.subr.bf16.mxu0 0
    %6984 = vmatpush1.bf16.msra.mxu0 0
    %6985 = vmatprep.subr.bf16.mxu0 0
    %6986 = vmatpush1.bf16.msra.mxu0 0
    %6987 = vmatprep.mubr.bf16.mxu0 0
    %6988 = vmatmul.mubr.bf16.gmra.mrb[0].mxu0 %v6898
    %v6989 = vpop.f32.mrb[0].mxu0
    %v6990 = vadd.f32 %v6941, %v6989
    %v6991 = vpop.f32.mrb[0].mxu0
    %v6992 = vpop.f32.mrb[0].mxu0
    %v6993 = vadd.f32 %v6944, %v6992
    %v6994 = vpop.f32.mrb[0].mxu0
    %6995 = vmatprep.mubr.bf16.mxu0 0
    %6996 = vmatmul.mubr.bf16.gmra.mrb[0].mxu0 %v6899
    %v6997 = vpop.f32.mrb[0].mxu0
    %v6998 = vadd.f32 %v6949, %v6997
    %v6999 = vpop.f32.mrb[0].mxu0
    %v7000 = vpop.f32.mrb[0].mxu0
    %v7001 = vadd.f32 %v6952, %v7000
    %v7002 = vpop.f32.mrb[0].mxu0
    %7003 = vdwg.mxu0
    %v7004 = vld [vmem:[%s3794 + $0x9] sm:$0xff]
    %v7005 = vld [vmem:[%s3794 + $0x11] sm:$0xff]
    %v7006 = vld [vmem:[%s3794 + $0x19] sm:$0xff]
    %v7007 = vld [vmem:[%s3794 + $0x21] sm:$0xff]
    %v7008 = vpack.c.bf16 %v7005, %v7004
    %v7009 = vpack.c.bf16 %v7007, %v7006
    %7010 = vmatprep.subr.bf16.mxu0 0
    %7011 = vmatpush1.bf16.msra.mxu0 %v3711
    %7012 = vmatprep.subr.bf16.mxu0 0
    %7013 = vmatpush1.bf16.msra.mxu0 %v3712
    %7014 = vmatprep.subr.bf16.mxu0 0
    %7015 = vmatpush1.bf16.msra.mxu0 %v3713
    %7016 = vmatprep.subr.bf16.mxu0 0
    %7017 = vmatpush1.bf16.msra.mxu0 %v3714
    %7018 = vmatprep.subr.bf16.mxu0 0
    %7019 = vmatpush1.bf16.msra.mxu0 %v3715
    %7020 = vmatprep.subr.bf16.mxu0 0
    %7021 = vmatpush1.bf16.msra.mxu0 %v3716
    %7022 = vmatprep.subr.bf16.mxu0 0
    %7023 = vmatpush1.bf16.msra.mxu0 %v3717
    %7024 = vmatprep.subr.bf16.mxu0 0
    %7025 = vmatpush1.bf16.msra.mxu0 %v3718
    %7026 = vmatprep.subr.bf16.mxu0 0
    %7027 = vmatpush1.bf16.msra.mxu0 0
    %7028 = vmatprep.subr.bf16.mxu0 0
    %7029 = vmatpush1.bf16.msra.mxu0 0
    %7030 = vmatprep.subr.bf16.mxu0 0
    %7031 = vmatpush1.bf16.msra.mxu0 0
    %7032 = vmatprep.subr.bf16.mxu0 0
    %7033 = vmatpush1.bf16.msra.mxu0 0
    %7034 = vmatprep.subr.bf16.mxu0 0
    %7035 = vmatpush1.bf16.msra.mxu0 0
    %7036 = vmatprep.subr.bf16.mxu0 0
    %7037 = vmatpush1.bf16.msra.mxu0 0
    %7038 = vmatprep.subr.bf16.mxu0 0
    %7039 = vmatpush1.bf16.msra.mxu0 0
    %7040 = vmatprep.subr.bf16.mxu0 0
    %7041 = vmatpush1.bf16.msra.mxu0 0
    %7042 = vmatprep.mubr.bf16.mxu0 0
    %7043 = vmatmul.mubr.bf16.gmra.mrb[0].mxu0 %v7008
    %v7044 = vpop.f32.mrb[0].mxu0
    %v7045 = vadd.f32 0.0, %v7044
    %v7046 = vpop.f32.mrb[0].mxu0
    %v7047 = vpop.f32.mrb[0].mxu0
    %v7048 = vadd.f32 0.0, %v7047
    %v7049 = vpop.f32.mrb[0].mxu0
    %7050 = vmatprep.mubr.bf16.mxu0 0
    %7051 = vmatmul.mubr.bf16.gmra.mrb[0].mxu0 %v7009
    %v7052 = vpop.f32.mrb[0].mxu0
    %v7053 = vadd.f32 0.0, %v7052
    %v7054 = vpop.f32.mrb[0].mxu0
    %v7055 = vpop.f32.mrb[0].mxu0
    %v7056 = vadd.f32 0.0, %v7055
    %v7057 = vpop.f32.mrb[0].mxu0
    %7058 = vdwg.mxu0
    %v7059 = vadd.f32 %v6990, %v7045
    %v7060 = vadd.f32 %v6993, %v7048
    %v7061 = vadd.f32 %v6998, %v7053
    %v7062 = vadd.f32 %v7001, %v7056
    %v7064 = vlaneseq
    %v7065 = vshrl.u32 %v7064, 7
    %v7066 = vsub.s32 0, %v7065
    %v7067 = vrot.slane %v6893, %v7066
    %v7069 = vadd.f32 %v7059, %v7067
    %v7070 = vadd.f32 %v7060, %v7067
    %v7071 = vadd.f32 %v7061, %v7067
    %v7072 = vadd.f32 %v7062, %v7067
    %s7073 = scalar_lea.vmem [#allocation12], 32
    %7074 = vst [vmem:[%s7073] sm:$0xff] %v7069
    %7075 = vst [vmem:[%s7073 + $0x8] sm:$0xff] %v7070
    %7076 = vst [vmem:[%s7073 + $0x10] sm:$0xff] %v7071
    %7077 = vst [vmem:[%s7073 + $0x18] sm:$0xff] %v7072
    // Predicated region
    $region58: #{tpu_custom_call.1} parent=1 // pred_check
      _
    $region59: #{tpu_custom_call.1} parent=1 // pred_check_branch
      %7079 = sbr.rel (0) target = $region61
    $region60: #{tpu_custom_call.1} parent=1 // pred_region
      %s7081 = ssub.s32 1024, 1024
      %7082 = vsyncadd [#allocation5], %s7081
      %s7083 = sshll.u32 [#allocation12], 4
      %s7084 = int_to_ptr.vmem [resolvable:$true] %s7083
      %7089 = dma.vmem_to_hbm [thread:$0]  %s7084, 1024, %s9, [#allocation5], 128, 128, 8
    $region61: #{tpu_custom_call.1} parent=1 // pred_fallthru
      _
    // Predicated region
    $region62: #{tpu_custom_call.1} parent=1 // pred_check
      _
    $region63: #{tpu_custom_call.1} parent=1 // pred_check_branch
      %7091 = sbr.rel (0) target = $region65
    $region64: #{tpu_custom_call.1} parent=1 // pred_region
      %7092 = dma.done [#allocation5], 1024
    $region65: #{tpu_custom_call.1} parent=1 // pred_fallthru
      _
    %7093 = vsyncpa [#allocation4], 1
    %7094 = vsyncpa [#allocation7], 1
    %7095 = vsyncpa [#allocation10], 1
    %7096 = vsyncpa [#allocation5], 1

</llo_original>
